<compile_context>
chip_gen: v7x
topology: tpu7x:2x2x1
jax: 0.10.0
libtpu: 0.0.40
codegen_flags: <defaults>
</compile_context>

<pallas_src>
import jax
import jax.numpy as jnp
from jax.experimental import pallas as pl
from jax.experimental.pallas import tpu as pltpu


def _zero_halo(ref, h, w, c):
    """Zero only the 1-pixel halo ring of a (h+2, w+2, c) padded scratch."""
    zrow = jnp.zeros((1, w + 2, c), ref.dtype)
    ref[0:1, :, :] = zrow
    ref[h + 1:h + 2, :, :] = zrow
    zcol = jnp.zeros((h + 2, 1, c), ref.dtype)
    ref[:, 0:1, :] = zcol
    ref[:, w + 1:w + 2, :] = zcol


def _im2col(pad_ref, col_ref, ho, wo, c, s):
    """col[j, i, (3*dh+dw)*c + k] = pad[j*s + dh, i*s + dw, k] for the 9 taps."""
    for dh in range(3):
        for dw in range(3):
            if s == 1:
                patch = pad_ref[dh:dh + ho, dw:dw + wo, :]
            else:
                # stride > 1: strided window reads from the padded scratch
                patch = pad_ref[pl.ds(dh, ho, s), pl.ds(dw, wo, s), :]
            t = dh * 3 + dw
            col_ref[:, :, t * c:(t + 1) * c] = patch


def _make_kernel(equal, stride, dims):
    """Builds the fused block kernel for a static configuration."""
    H, W, Cin, Cout, Ho, Wo = dims

    def _body(scal_ref, x_ref, w1_ref, w2_ref, ws_ref, out_ref,
              pad1_ref, col1_ref, pad2_ref, col2_ref):
        b1 = scal_ref[0]
        b2 = scal_ref[1]
        b3 = scal_ref[2]
        b4 = scal_ref[3]
        sc = scal_ref[4]

        x = x_ref[...]                               # (H, W, Cin) f32
        act = jnp.maximum(x + b1, 0.0)               # relu1(bias1(x)), f32

        # ---- conv1 (3x3, stride, pad=1): pad -> im2col -> one K=9*Cin matmul ----
        _zero_halo(pad1_ref, H, W, Cin)
        pad1_ref[1:H + 1, 1:W + 1, :] = act.astype(jnp.bfloat16)
        _im2col(pad1_ref, col1_ref, Ho, Wo, Cin, stride)
        h = jnp.dot(col1_ref[...].reshape(Ho * Wo, 9 * Cin), w1_ref[...],
                    preferred_element_type=jnp.float32)          # (Ho*Wo, Cout) f32
        h = jnp.maximum(h + b2, 0.0) + b3            # bias3(relu2(bias2(.))), f32
        # TODO(synk): F.dropout for dropRate > 0 is not implemented here.

        # ---- conv2 (3x3, stride=1, pad=1) ----
        _zero_halo(pad2_ref, Ho, Wo, Cout)
        pad2_ref[1:Ho + 1, 1:Wo + 1, :] = h.reshape(Ho, Wo, Cout).astype(jnp.bfloat16)
        _im2col(pad2_ref, col2_ref, Ho, Wo, Cout, 1)
        h2 = jnp.dot(col2_ref[...].reshape(Ho * Wo, 9 * Cout), w2_ref[...],
                     preferred_element_type=jnp.float32)         # (Ho*Wo, Cout) f32
        h2 = h2 * sc + b4                            # bias4(scale1(.)), f32

        if equal:
            out_ref[...] = x + h2.reshape(Ho, Wo, Cout)          # identity shortcut
        else:
            # 1x1 stride-`stride` shortcut conv on relu(bias1(x)); read it back from
            # the padded scratch at offset (1, 1).
            if stride == 1:
                sp = pad1_ref[1:H + 1, 1:W + 1, :]
            else:
                sp = pad1_ref[pl.ds(1, Ho, stride), pl.ds(1, Wo, stride), :]
            shortcut = jnp.dot(sp.reshape(Ho * Wo, Cin), ws_ref[...],
                               preferred_element_type=jnp.float32)
            out_ref[...] = (shortcut + h2).reshape(Ho, Wo, Cout)

    if equal:
        def kernel(scal_ref, x_ref, w1_ref, w2_ref, out_ref, p1, c1, p2, c2):
            _body(scal_ref, x_ref, w1_ref, w2_ref, None, out_ref, p1, c1, p2, c2)
    else:
        def kernel(scal_ref, x_ref, w1_ref, w2_ref, ws_ref, out_ref, p1, c1, p2, c2):
            _body(scal_ref, x_ref, w1_ref, w2_ref, ws_ref, out_ref, p1, c1, p2, c2)
    return kernel


def fixup_basic_block(x, w1, w2, w_shortcut, scalars, *, stride=1, drop_rate=0.0):
    """FixupBasicBlock forward pass (NHWC).

    x:          (N, H, W, Cin) float32, NHWC
    w1:         (3, 3, Cin, Cout) HWIO
    w2:         (3, 3, Cout, Cout) HWIO
    w_shortcut: (Cin, Cout) for the 1x1 shortcut conv, or None when in_planes == out_planes
    scalars:    (5,) float32 = [bias1, bias2, bias3, bias4, scale1]
    """
    assert drop_rate == 0.0, "TODO(synk): dropout (dropRate > 0) not implemented"
    x = x.astype(jnp.float32)
    N, H, W, Cin = x.shape
    Cout = w1.shape[-1]
    equal = w_shortcut is None
    if equal:
        assert Cin == Cout and stride == 1, \
            "identity residual requires equal planes and stride=1 (as in the PyTorch module)"
    Ho = (H + 2 - 3) // stride + 1
    Wo = (W + 2 - 3) // stride + 1

    # MXU operands in bf16; fold the 3x3 taps into the contraction dim (K = 9*C).
    w1_2d = w1.astype(jnp.bfloat16).reshape(9 * Cin, Cout)
    w2_2d = w2.astype(jnp.bfloat16).reshape(9 * Cout, Cout)
    scalars = scalars.astype(jnp.float32)

    kernel = _make_kernel(equal, stride, (H, W, Cin, Cout, Ho, Wo))

    operands = [scalars, x, w1_2d, w2_2d]
    in_specs = [
        pl.BlockSpec((None, H, W, Cin), lambda i, s: (i, 0, 0, 0)),   # one image / step
        pl.BlockSpec((9 * Cin, Cout), lambda i, s: (0, 0)),           # resident weights
        pl.BlockSpec((9 * Cout, Cout), lambda i, s: (0, 0)),
    ]
    if not equal:
        operands.append(w_shortcut.astype(jnp.bfloat16))
        in_specs.append(pl.BlockSpec((Cin, Cout), lambda i, s: (0, 0)))

    out_spec = pl.BlockSpec((None, Ho, Wo, Cout), lambda i, s: (i, 0, 0, 0))

    scratch_shapes = [
        pltpu.VMEM((H + 2, W + 2, Cin), jnp.bfloat16),      # conv1 padded input
        pltpu.VMEM((Ho, Wo, 9 * Cin), jnp.bfloat16),        # conv1 im2col buffer
        pltpu.VMEM((Ho + 2, Wo + 2, Cout), jnp.bfloat16),   # conv2 padded input
        pltpu.VMEM((Ho, Wo, 9 * Cout), jnp.bfloat16),       # conv2 im2col buffer
    ]

    def nbytes(shape, dtype):
        n = 1
        for d in shape:
            n *= d
        return n * jnp.dtype(dtype).itemsize

    blk_bytes = (nbytes((H, W, Cin), jnp.float32)
                 + nbytes((Ho, Wo, Cout), jnp.float32)
                 + nbytes((9 * Cin, Cout), jnp.bfloat16)
                 + nbytes((9 * Cout, Cout), jnp.bfloat16)
                 + (0 if equal else nbytes((Cin, Cout), jnp.bfloat16)))
    scratch_bytes = sum(nbytes(s, jnp.bfloat16) for s in
                        [(H + 2, W + 2, Cin), (Ho, Wo, 9 * Cin),
                         (Ho + 2, Wo + 2, Cout), (Ho, Wo, 9 * Cout)])
    # 2x for double-buffered pipelined blocks + scratch + slack; cap at v7x's 64 MiB.
    vmem_bytes = int(min(64 * 1024 * 1024,
                         max(32 * 1024 * 1024, 2 * blk_bytes + scratch_bytes + (8 << 20))))

    flops = 2 * N * Ho * Wo * (9 * Cin * Cout + 9 * Cout * Cout
                               + (0 if equal else Cin * Cout))
    bytes_accessed = (N * H * W * Cin * 4 + N * Ho * Wo * Cout * 4
                      + 9 * Cin * Cout * 2 + 9 * Cout * Cout * 2
                      + (0 if equal else Cin * Cout * 2) + 5 * 4)

    out = pl.pallas_call(
        kernel,
        out_shape=jax.ShapeDtypeStruct((N, Ho, Wo, Cout), jnp.float32),
        grid_spec=pltpu.PrefetchScalarGridSpec(
            num_scalar_prefetch=1,            # [bias1, bias2, bias3, bias4, scale1] in SMEM
            grid=(N,),
            in_specs=in_specs,
            out_specs=out_spec,
            scratch_shapes=scratch_shapes,
        ),
        compiler_params=pltpu.CompilerParams(
            dimension_semantics=("parallel",),
            vmem_limit_bytes=vmem_bytes,
        ),
        cost_estimate=pl.CostEstimate(
            flops=int(flops), transcendentals=0, bytes_accessed=int(bytes_accessed)),
    )(*operands)
    return out


def _reference_nhwc(x, w1, w2, w_shortcut, scalars, stride):
    """Pure-JAX reference mirroring the PyTorch forward (and the kernel's bf16 MXU operands)."""
    b1, b2, b3, b4, sc = [scalars[i] for i in range(5)]

    def conv(inp, w, s, p):
        return jax.lax.conv_general_dilated(
            inp.astype(jnp.bfloat16), w.astype(jnp.bfloat16),
            (s, s), ((p, p), (p, p)),
            dimension_numbers=("NHWC", "HWIO", "NHWC"),
            preferred_element_type=jnp.float32)

    act = jax.nn.relu(x + b1)
    h = conv(act, w1, stride, 1)
    h = jax.nn.relu(h + b2) + b3
    h = conv(h, w2, 1, 1)
    h = h * sc + b4
    if w_shortcut is None:
        return x + h
    ws = w_shortcut.reshape(1, 1, *w_shortcut.shape)
    return conv(act, ws, stride, 0) + h


if __name__ == "__main__":
    key = jax.random.PRNGKey(0)
    ks = jax.random.split(key, 8)

    # ---- config 1: equalInOut (in_planes == out_planes == 4), stride 1 ----
    N, H, W, C = 2, 16, 16, 4
    x1 = jax.random.normal(ks[0], (N, H, W, C), jnp.float32)
    w1a = jax.random.normal(ks[1], (3, 3, C, C), jnp.float32) * 0.1
    w2a = jax.random.normal(ks[2], (3, 3, C, C), jnp.float32) * 0.1
    scal1 = jnp.array([0.10, -0.20, 0.05, 0.30, 1.50], jnp.float32)

    out1 = jax.block_until_ready(fixup_basic_block(x1, w1a, w2a, None, scal1, stride=1))
    ref1 = _reference_nhwc(x1, w1a, w2a, None, scal1, 1)
    err1 = float(jnp.max(jnp.abs(out1 - ref1)))
    assert err1 < 2e-3, f"equalInOut path: max abs error too large: {err1}"

    # ---- config 2: in_planes != out_planes (4 -> 8), stride 1, 1x1 conv shortcut ----
    Cout = 8
    x2 = jax.random.normal(ks[3], (N, H, W, C), jnp.float32)
    w1b = jax.random.normal(ks[4], (3, 3, C, Cout), jnp.float32) * 0.1
    w2b = jax.random.normal(ks[5], (3, 3, Cout, Cout), jnp.float32) * 0.1
    wsb = jax.random.normal(ks[6], (C, Cout), jnp.float32) * 0.1
    scal2 = jnp.array([-0.05, 0.15, -0.10, 0.20, 0.80], jnp.float32)

    out2 = jax.block_until_ready(fixup_basic_block(x2, w1b, w2b, wsb, scal2, stride=1))
    ref2 = _reference_nhwc(x2, w1b, w2b, wsb, scal2, 1)
    err2 = float(jnp.max(jnp.abs(out2 - ref2)))
    assert err2 < 2e-3, f"conv-shortcut path: max abs error too large: {err2}"

    print("KERNEL_OK")
</pallas_src>

<mosaic_0001>
module attributes {stable_mosaic.version = 11 : i64} {
  func.func @kernel(%arg0: i32, %arg1: memref<5xf32, #tpu.memory_space<smem>>, %arg2: memref<1x16x16x4xf32, #tpu.memory_space<vmem>>, %arg3: memref<36x4xbf16, #tpu.memory_space<vmem>>, %arg4: memref<36x4xbf16, #tpu.memory_space<vmem>>, %arg5: memref<1x16x16x4xf32, #tpu.memory_space<vmem>>, %arg6: memref<18x18x4xbf16, #tpu.memory_space<vmem>>, %arg7: memref<16x16x36xbf16, #tpu.memory_space<vmem>>, %arg8: memref<18x18x4xbf16, #tpu.memory_space<vmem>>, %arg9: memref<16x16x36xbf16, #tpu.memory_space<vmem>>) attributes {dimension_semantics = [#tpu.dimension_semantics<parallel>], iteration_bounds = array<i64: 2>, scalar_prefetch = 1 : i64, scratch_operands = 4 : i64, tpu.core_type = #tpu.core_type<tc>, window_params = [{transform_indices = @transform_0, window_bounds = array<i64: 1, 16, 16, 4>}, {pipeline_mode = #tpu.pipeline_mode<synchronous>, transform_indices = @transform_1, window_bounds = array<i64: 36, 4>}, {pipeline_mode = #tpu.pipeline_mode<synchronous>, transform_indices = @transform_2, window_bounds = array<i64: 36, 4>}, {transform_indices = @transform_3, window_bounds = array<i64: 1, 16, 16, 4>}]} {
    %c0 = arith.constant 0 : index
    %0 = memref.load %arg1[%c0] : memref<5xf32, #tpu.memory_space<smem>>
    %c1 = arith.constant 1 : index
    %1 = memref.load %arg1[%c1] : memref<5xf32, #tpu.memory_space<smem>>
    %c2 = arith.constant 2 : index
    %2 = memref.load %arg1[%c2] : memref<5xf32, #tpu.memory_space<smem>>
    %c3 = arith.constant 3 : index
    %3 = memref.load %arg1[%c3] : memref<5xf32, #tpu.memory_space<smem>>
    %c4 = arith.constant 4 : index
    %4 = memref.load %arg1[%c4] : memref<5xf32, #tpu.memory_space<smem>>
    %c0_0 = arith.constant 0 : index
    %c0_1 = arith.constant 0 : index
    %c0_2 = arith.constant 0 : index
    %c0_3 = arith.constant 0 : index
    %5 = vector.load %arg2[%c0_0, %c0_1, %c0_2, %c0_3] : memref<1x16x16x4xf32, #tpu.memory_space<vmem>>, vector<1x16x16x4xf32>
    %6 = vector.shape_cast %5 : vector<1x16x16x4xf32> to vector<16x16x4xf32>
    %7 = vector.broadcast %0 : f32 to vector<16x16x4xf32>
    %8 = arith.addf %6, %7 : vector<16x16x4xf32>
    %cst = arith.constant 0.000000e+00 : f32
    %9 = vector.broadcast %cst : f32 to vector<16x16x4xf32>
    %10 = arith.maximumf %8, %9 : vector<16x16x4xf32>
    %cst_4 = arith.constant 0.000000e+00 : bf16
    %11 = vector.broadcast %cst_4 : bf16 to vector<1x18x4xbf16>
    %c0_5 = arith.constant 0 : index
    %c0_6 = arith.constant 0 : index
    %c0_7 = arith.constant 0 : index
    %12 = vector.load %arg6[%c0_5, %c0_6, %c0_7] : memref<18x18x4xbf16, #tpu.memory_space<vmem>>, vector<1x18x4xbf16>
    tpu.vector_store %arg6[%c0_5, %c0_6, %c0_7], %11 {strides = array<i32>} : memref<18x18x4xbf16, #tpu.memory_space<vmem>>, vector<1x18x4xbf16>,
    %c17 = arith.constant 17 : index
    %c0_8 = arith.constant 0 : index
    %c0_9 = arith.constant 0 : index
    %13 = vector.load %arg6[%c17, %c0_8, %c0_9] : memref<18x18x4xbf16, #tpu.memory_space<vmem>>, vector<1x18x4xbf16>
    tpu.vector_store %arg6[%c17, %c0_8, %c0_9], %11 {strides = array<i32>} : memref<18x18x4xbf16, #tpu.memory_space<vmem>>, vector<1x18x4xbf16>,
    %cst_10 = arith.constant 0.000000e+00 : bf16
    %14 = vector.broadcast %cst_10 : bf16 to vector<18x1x4xbf16>
    %c0_11 = arith.constant 0 : index
    %c0_12 = arith.constant 0 : index
    %c0_13 = arith.constant 0 : index
    %15 = vector.load %arg6[%c0_11, %c0_12, %c0_13] : memref<18x18x4xbf16, #tpu.memory_space<vmem>>, vector<18x1x4xbf16>
    tpu.vector_store %arg6[%c0_11, %c0_12, %c0_13], %14 {strides = array<i32>} : memref<18x18x4xbf16, #tpu.memory_space<vmem>>, vector<18x1x4xbf16>,
    %c0_14 = arith.constant 0 : index
    %c17_15 = arith.constant 17 : index
    %c0_16 = arith.constant 0 : index
    %16 = vector.load %arg6[%c0_14, %c17_15, %c0_16] : memref<18x18x4xbf16, #tpu.memory_space<vmem>>, vector<18x1x4xbf16>
    tpu.vector_store %arg6[%c0_14, %c17_15, %c0_16], %14 {strides = array<i32>} : memref<18x18x4xbf16, #tpu.memory_space<vmem>>, vector<18x1x4xbf16>,
    %17 = arith.truncf %10 : vector<16x16x4xf32> to vector<16x16x4xbf16>
    %c1_17 = arith.constant 1 : index
    %c1_18 = arith.constant 1 : index
    %c0_19 = arith.constant 0 : index
    %18 = vector.load %arg6[%c1_17, %c1_18, %c0_19] : memref<18x18x4xbf16, #tpu.memory_space<vmem>>, vector<16x16x4xbf16>
    tpu.vector_store %arg6[%c1_17, %c1_18, %c0_19], %17 {strides = array<i32>} : memref<18x18x4xbf16, #tpu.memory_space<vmem>>, vector<16x16x4xbf16>,
    %c0_20 = arith.constant 0 : index
    %c0_21 = arith.constant 0 : index
    %c0_22 = arith.constant 0 : index
    %19 = vector.load %arg6[%c0_20, %c0_21, %c0_22] : memref<18x18x4xbf16, #tpu.memory_space<vmem>>, vector<16x16x4xbf16>
    %c0_23 = arith.constant 0 : index
    %c0_24 = arith.constant 0 : index
    %c0_25 = arith.constant 0 : index
    %20 = vector.load %arg7[%c0_23, %c0_24, %c0_25] : memref<16x16x36xbf16, #tpu.memory_space<vmem>>, vector<16x16x4xbf16>
    tpu.vector_store %arg7[%c0_23, %c0_24, %c0_25], %19 {strides = array<i32>} : memref<16x16x36xbf16, #tpu.memory_space<vmem>>, vector<16x16x4xbf16>,
    %c0_26 = arith.constant 0 : index
    %c1_27 = arith.constant 1 : index
    %c0_28 = arith.constant 0 : index
    %21 = vector.load %arg6[%c0_26, %c1_27, %c0_28] : memref<18x18x4xbf16, #tpu.memory_space<vmem>>, vector<16x16x4xbf16>
    %c0_29 = arith.constant 0 : index
    %c0_30 = arith.constant 0 : index
    %c4_31 = arith.constant 4 : index
    %22 = vector.load %arg7[%c0_29, %c0_30, %c4_31] : memref<16x16x36xbf16, #tpu.memory_space<vmem>>, vector<16x16x4xbf16>
    tpu.vector_store %arg7[%c0_29, %c0_30, %c4_31], %21 {strides = array<i32>} : memref<16x16x36xbf16, #tpu.memory_space<vmem>>, vector<16x16x4xbf16>,
    %c0_32 = arith.constant 0 : index
    %c2_33 = arith.constant 2 : index
    %c0_34 = arith.constant 0 : index
    %23 = vector.load %arg6[%c0_32, %c2_33, %c0_34] : memref<18x18x4xbf16, #tpu.memory_space<vmem>>, vector<16x16x4xbf16>
    %c0_35 = arith.constant 0 : index
    %c0_36 = arith.constant 0 : index
    %c8 = arith.constant 8 : index
    %24 = vector.load %arg7[%c0_35, %c0_36, %c8] : memref<16x16x36xbf16, #tpu.memory_space<vmem>>, vector<16x16x4xbf16>
    tpu.vector_store %arg7[%c0_35, %c0_36, %c8], %23 {strides = array<i32>} : memref<16x16x36xbf16, #tpu.memory_space<vmem>>, vector<16x16x4xbf16>,
    %c1_37 = arith.constant 1 : index
    %c0_38 = arith.constant 0 : index
    %c0_39 = arith.constant 0 : index
    %25 = vector.load %arg6[%c1_37, %c0_38, %c0_39] : memref<18x18x4xbf16, #tpu.memory_space<vmem>>, vector<16x16x4xbf16>
    %c0_40 = arith.constant 0 : index
    %c0_41 = arith.constant 0 : index
    %c12 = arith.constant 12 : index
    %26 = vector.load %arg7[%c0_40, %c0_41, %c12] : memref<16x16x36xbf16, #tpu.memory_space<vmem>>, vector<16x16x4xbf16>
    tpu.vector_store %arg7[%c0_40, %c0_41, %c12], %25 {strides = array<i32>} : memref<16x16x36xbf16, #tpu.memory_space<vmem>>, vector<16x16x4xbf16>,
    %c1_42 = arith.constant 1 : index
    %c1_43 = arith.constant 1 : index
    %c0_44 = arith.constant 0 : index
    %27 = vector.load %arg6[%c1_42, %c1_43, %c0_44] : memref<18x18x4xbf16, #tpu.memory_space<vmem>>, vector<16x16x4xbf16>
    %c0_45 = arith.constant 0 : index
    %c0_46 = arith.constant 0 : index
    %c16 = arith.constant 16 : index
    %28 = vector.load %arg7[%c0_45, %c0_46, %c16] : memref<16x16x36xbf16, #tpu.memory_space<vmem>>, vector<16x16x4xbf16>
    tpu.vector_store %arg7[%c0_45, %c0_46, %c16], %27 {strides = array<i32>} : memref<16x16x36xbf16, #tpu.memory_space<vmem>>, vector<16x16x4xbf16>,
    %c1_47 = arith.constant 1 : index
    %c2_48 = arith.constant 2 : index
    %c0_49 = arith.constant 0 : index
    %29 = vector.load %arg6[%c1_47, %c2_48, %c0_49] : memref<18x18x4xbf16, #tpu.memory_space<vmem>>, vector<16x16x4xbf16>
    %c0_50 = arith.constant 0 : index
    %c0_51 = arith.constant 0 : index
    %c20 = arith.constant 20 : index
    %30 = vector.load %arg7[%c0_50, %c0_51, %c20] : memref<16x16x36xbf16, #tpu.memory_space<vmem>>, vector<16x16x4xbf16>
    tpu.vector_store %arg7[%c0_50, %c0_51, %c20], %29 {strides = array<i32>} : memref<16x16x36xbf16, #tpu.memory_space<vmem>>, vector<16x16x4xbf16>,
    %c2_52 = arith.constant 2 : index
    %c0_53 = arith.constant 0 : index
    %c0_54 = arith.constant 0 : index
    %31 = vector.load %arg6[%c2_52, %c0_53, %c0_54] : memref<18x18x4xbf16, #tpu.memory_space<vmem>>, vector<16x16x4xbf16>
    %c0_55 = arith.constant 0 : index
    %c0_56 = arith.constant 0 : index
    %c24 = arith.constant 24 : index
    %32 = vector.load %arg7[%c0_55, %c0_56, %c24] : memref<16x16x36xbf16, #tpu.memory_space<vmem>>, vector<16x16x4xbf16>
    tpu.vector_store %arg7[%c0_55, %c0_56, %c24], %31 {strides = array<i32>} : memref<16x16x36xbf16, #tpu.memory_space<vmem>>, vector<16x16x4xbf16>,
    %c2_57 = arith.constant 2 : index
    %c1_58 = arith.constant 1 : index
    %c0_59 = arith.constant 0 : index
    %33 = vector.load %arg6[%c2_57, %c1_58, %c0_59] : memref<18x18x4xbf16, #tpu.memory_space<vmem>>, vector<16x16x4xbf16>
    %c0_60 = arith.constant 0 : index
    %c0_61 = arith.constant 0 : index
    %c28 = arith.constant 28 : index
    %34 = vector.load %arg7[%c0_60, %c0_61, %c28] : memref<16x16x36xbf16, #tpu.memory_space<vmem>>, vector<16x16x4xbf16>
    tpu.vector_store %arg7[%c0_60, %c0_61, %c28], %33 {strides = array<i32>} : memref<16x16x36xbf16, #tpu.memory_space<vmem>>, vector<16x16x4xbf16>,
    %c2_62 = arith.constant 2 : index
    %c2_63 = arith.constant 2 : index
    %c0_64 = arith.constant 0 : index
    %35 = vector.load %arg6[%c2_62, %c2_63, %c0_64] : memref<18x18x4xbf16, #tpu.memory_space<vmem>>, vector<16x16x4xbf16>
    %c0_65 = arith.constant 0 : index
    %c0_66 = arith.constant 0 : index
    %c32 = arith.constant 32 : index
    %36 = vector.load %arg7[%c0_65, %c0_66, %c32] : memref<16x16x36xbf16, #tpu.memory_space<vmem>>, vector<16x16x4xbf16>
    tpu.vector_store %arg7[%c0_65, %c0_66, %c32], %35 {strides = array<i32>} : memref<16x16x36xbf16, #tpu.memory_space<vmem>>, vector<16x16x4xbf16>,
    %c0_67 = arith.constant 0 : index
    %c0_68 = arith.constant 0 : index
    %c0_69 = arith.constant 0 : index
    %37 = vector.load %arg7[%c0_67, %c0_68, %c0_69] : memref<16x16x36xbf16, #tpu.memory_space<vmem>>, vector<16x16x36xbf16>
    %38 = vector.shape_cast %37 : vector<16x16x36xbf16> to vector<256x36xbf16>
    %c0_70 = arith.constant 0 : index
    %c0_71 = arith.constant 0 : index
    %39 = vector.load %arg3[%c0_70, %c0_71] : memref<36x4xbf16, #tpu.memory_space<vmem>>, vector<36x4xbf16>
    %cst_72 = arith.constant dense<0.000000e+00> : vector<256x4xf32>
    %40 = tpu.matmul %38, %39, %cst_72 {dimension_numbers = #tpu.dot_dimension_numbers<[1], [0], [0], [1], [0, 0, 1, 1], [], []>} : vector<256x36xbf16>, vector<36x4xbf16>, vector<256x4xf32> -> vector<256x4xf32>
    %41 = vector.broadcast %1 : f32 to vector<256x4xf32>
    %42 = arith.addf %40, %41 : vector<256x4xf32>
    %cst_73 = arith.constant 0.000000e+00 : f32
    %43 = vector.broadcast %cst_73 : f32 to vector<256x4xf32>
    %44 = arith.maximumf %42, %43 : vector<256x4xf32>
    %45 = vector.broadcast %2 : f32 to vector<256x4xf32>
    %46 = arith.addf %44, %45 : vector<256x4xf32>
    %cst_74 = arith.constant 0.000000e+00 : bf16
    %47 = vector.broadcast %cst_74 : bf16 to vector<1x18x4xbf16>
    %c0_75 = arith.constant 0 : index
    %c0_76 = arith.constant 0 : index
    %c0_77 = arith.constant 0 : index
    %48 = vector.load %arg8[%c0_75, %c0_76, %c0_77] : memref<18x18x4xbf16, #tpu.memory_space<vmem>>, vector<1x18x4xbf16>
    tpu.vector_store %arg8[%c0_75, %c0_76, %c0_77], %47 {strides = array<i32>} : memref<18x18x4xbf16, #tpu.memory_space<vmem>>, vector<1x18x4xbf16>,
    %c17_78 = arith.constant 17 : index
    %c0_79 = arith.constant 0 : index
    %c0_80 = arith.constant 0 : index
    %49 = vector.load %arg8[%c17_78, %c0_79, %c0_80] : memref<18x18x4xbf16, #tpu.memory_space<vmem>>, vector<1x18x4xbf16>
    tpu.vector_store %arg8[%c17_78, %c0_79, %c0_80], %47 {strides = array<i32>} : memref<18x18x4xbf16, #tpu.memory_space<vmem>>, vector<1x18x4xbf16>,
    %cst_81 = arith.constant 0.000000e+00 : bf16
    %50 = vector.broadcast %cst_81 : bf16 to vector<18x1x4xbf16>
    %c0_82 = arith.constant 0 : index
    %c0_83 = arith.constant 0 : index
    %c0_84 = arith.constant 0 : index
    %51 = vector.load %arg8[%c0_82, %c0_83, %c0_84] : memref<18x18x4xbf16, #tpu.memory_space<vmem>>, vector<18x1x4xbf16>
    tpu.vector_store %arg8[%c0_82, %c0_83, %c0_84], %50 {strides = array<i32>} : memref<18x18x4xbf16, #tpu.memory_space<vmem>>, vector<18x1x4xbf16>,
    %c0_85 = arith.constant 0 : index
    %c17_86 = arith.constant 17 : index
    %c0_87 = arith.constant 0 : index
    %52 = vector.load %arg8[%c0_85, %c17_86, %c0_87] : memref<18x18x4xbf16, #tpu.memory_space<vmem>>, vector<18x1x4xbf16>
    tpu.vector_store %arg8[%c0_85, %c17_86, %c0_87], %50 {strides = array<i32>} : memref<18x18x4xbf16, #tpu.memory_space<vmem>>, vector<18x1x4xbf16>,
    %53 = vector.shape_cast %46 : vector<256x4xf32> to vector<16x16x4xf32>
    %54 = arith.truncf %53 : vector<16x16x4xf32> to vector<16x16x4xbf16>
    %c1_88 = arith.constant 1 : index
    %c1_89 = arith.constant 1 : index
    %c0_90 = arith.constant 0 : index
    %55 = vector.load %arg8[%c1_88, %c1_89, %c0_90] : memref<18x18x4xbf16, #tpu.memory_space<vmem>>, vector<16x16x4xbf16>
    tpu.vector_store %arg8[%c1_88, %c1_89, %c0_90], %54 {strides = array<i32>} : memref<18x18x4xbf16, #tpu.memory_space<vmem>>, vector<16x16x4xbf16>,
    %c0_91 = arith.constant 0 : index
    %c0_92 = arith.constant 0 : index
    %c0_93 = arith.constant 0 : index
    %56 = vector.load %arg8[%c0_91, %c0_92, %c0_93] : memref<18x18x4xbf16, #tpu.memory_space<vmem>>, vector<16x16x4xbf16>
    %c0_94 = arith.constant 0 : index
    %c0_95 = arith.constant 0 : index
    %c0_96 = arith.constant 0 : index
    %57 = vector.load %arg9[%c0_94, %c0_95, %c0_96] : memref<16x16x36xbf16, #tpu.memory_space<vmem>>, vector<16x16x4xbf16>
    tpu.vector_store %arg9[%c0_94, %c0_95, %c0_96], %56 {strides = array<i32>} : memref<16x16x36xbf16, #tpu.memory_space<vmem>>, vector<16x16x4xbf16>,
    %c0_97 = arith.constant 0 : index
    %c1_98 = arith.constant 1 : index
    %c0_99 = arith.constant 0 : index
    %58 = vector.load %arg8[%c0_97, %c1_98, %c0_99] : memref<18x18x4xbf16, #tpu.memory_space<vmem>>, vector<16x16x4xbf16>
    %c0_100 = arith.constant 0 : index
    %c0_101 = arith.constant 0 : index
    %c4_102 = arith.constant 4 : index
    %59 = vector.load %arg9[%c0_100, %c0_101, %c4_102] : memref<16x16x36xbf16, #tpu.memory_space<vmem>>, vector<16x16x4xbf16>
    tpu.vector_store %arg9[%c0_100, %c0_101, %c4_102], %58 {strides = array<i32>} : memref<16x16x36xbf16, #tpu.memory_space<vmem>>, vector<16x16x4xbf16>,
    %c0_103 = arith.constant 0 : index
    %c2_104 = arith.constant 2 : index
    %c0_105 = arith.constant 0 : index
    %60 = vector.load %arg8[%c0_103, %c2_104, %c0_105] : memref<18x18x4xbf16, #tpu.memory_space<vmem>>, vector<16x16x4xbf16>
    %c0_106 = arith.constant 0 : index
    %c0_107 = arith.constant 0 : index
    %c8_108 = arith.constant 8 : index
    %61 = vector.load %arg9[%c0_106, %c0_107, %c8_108] : memref<16x16x36xbf16, #tpu.memory_space<vmem>>, vector<16x16x4xbf16>
    tpu.vector_store %arg9[%c0_106, %c0_107, %c8_108], %60 {strides = array<i32>} : memref<16x16x36xbf16, #tpu.memory_space<vmem>>, vector<16x16x4xbf16>,
    %c1_109 = arith.constant 1 : index
    %c0_110 = arith.constant 0 : index
    %c0_111 = arith.constant 0 : index
    %62 = vector.load %arg8[%c1_109, %c0_110, %c0_111] : memref<18x18x4xbf16, #tpu.memory_space<vmem>>, vector<16x16x4xbf16>
    %c0_112 = arith.constant 0 : index
    %c0_113 = arith.constant 0 : index
    %c12_114 = arith.constant 12 : index
    %63 = vector.load %arg9[%c0_112, %c0_113, %c12_114] : memref<16x16x36xbf16, #tpu.memory_space<vmem>>, vector<16x16x4xbf16>
    tpu.vector_store %arg9[%c0_112, %c0_113, %c12_114], %62 {strides = array<i32>} : memref<16x16x36xbf16, #tpu.memory_space<vmem>>, vector<16x16x4xbf16>,
    %c1_115 = arith.constant 1 : index
    %c1_116 = arith.constant 1 : index
    %c0_117 = arith.constant 0 : index
    %64 = vector.load %arg8[%c1_115, %c1_116, %c0_117] : memref<18x18x4xbf16, #tpu.memory_space<vmem>>, vector<16x16x4xbf16>
    %c0_118 = arith.constant 0 : index
    %c0_119 = arith.constant 0 : index
    %c16_120 = arith.constant 16 : index
    %65 = vector.load %arg9[%c0_118, %c0_119, %c16_120] : memref<16x16x36xbf16, #tpu.memory_space<vmem>>, vector<16x16x4xbf16>
    tpu.vector_store %arg9[%c0_118, %c0_119, %c16_120], %64 {strides = array<i32>} : memref<16x16x36xbf16, #tpu.memory_space<vmem>>, vector<16x16x4xbf16>,
    %c1_121 = arith.constant 1 : index
    %c2_122 = arith.constant 2 : index
    %c0_123 = arith.constant 0 : index
    %66 = vector.load %arg8[%c1_121, %c2_122, %c0_123] : memref<18x18x4xbf16, #tpu.memory_space<vmem>>, vector<16x16x4xbf16>
    %c0_124 = arith.constant 0 : index
    %c0_125 = arith.constant 0 : index
    %c20_126 = arith.constant 20 : index
    %67 = vector.load %arg9[%c0_124, %c0_125, %c20_126] : memref<16x16x36xbf16, #tpu.memory_space<vmem>>, vector<16x16x4xbf16>
    tpu.vector_store %arg9[%c0_124, %c0_125, %c20_126], %66 {strides = array<i32>} : memref<16x16x36xbf16, #tpu.memory_space<vmem>>, vector<16x16x4xbf16>,
    %c2_127 = arith.constant 2 : index
    %c0_128 = arith.constant 0 : index
    %c0_129 = arith.constant 0 : index
    %68 = vector.load %arg8[%c2_127, %c0_128, %c0_129] : memref<18x18x4xbf16, #tpu.memory_space<vmem>>, vector<16x16x4xbf16>
    %c0_130 = arith.constant 0 : index
    %c0_131 = arith.constant 0 : index
    %c24_132 = arith.constant 24 : index
    %69 = vector.load %arg9[%c0_130, %c0_131, %c24_132] : memref<16x16x36xbf16, #tpu.memory_space<vmem>>, vector<16x16x4xbf16>
    tpu.vector_store %arg9[%c0_130, %c0_131, %c24_132], %68 {strides = array<i32>} : memref<16x16x36xbf16, #tpu.memory_space<vmem>>, vector<16x16x4xbf16>,
    %c2_133 = arith.constant 2 : index
    %c1_134 = arith.constant 1 : index
    %c0_135 = arith.constant 0 : index
    %70 = vector.load %arg8[%c2_133, %c1_134, %c0_135] : memref<18x18x4xbf16, #tpu.memory_space<vmem>>, vector<16x16x4xbf16>
    %c0_136 = arith.constant 0 : index
    %c0_137 = arith.constant 0 : index
    %c28_138 = arith.constant 28 : index
    %71 = vector.load %arg9[%c0_136, %c0_137, %c28_138] : memref<16x16x36xbf16, #tpu.memory_space<vmem>>, vector<16x16x4xbf16>
    tpu.vector_store %arg9[%c0_136, %c0_137, %c28_138], %70 {strides = array<i32>} : memref<16x16x36xbf16, #tpu.memory_space<vmem>>, vector<16x16x4xbf16>,
    %c2_139 = arith.constant 2 : index
    %c2_140 = arith.constant 2 : index
    %c0_141 = arith.constant 0 : index
    %72 = vector.load %arg8[%c2_139, %c2_140, %c0_141] : memref<18x18x4xbf16, #tpu.memory_space<vmem>>, vector<16x16x4xbf16>
    %c0_142 = arith.constant 0 : index
    %c0_143 = arith.constant 0 : index
    %c32_144 = arith.constant 32 : index
    %73 = vector.load %arg9[%c0_142, %c0_143, %c32_144] : memref<16x16x36xbf16, #tpu.memory_space<vmem>>, vector<16x16x4xbf16>
    tpu.vector_store %arg9[%c0_142, %c0_143, %c32_144], %72 {strides = array<i32>} : memref<16x16x36xbf16, #tpu.memory_space<vmem>>, vector<16x16x4xbf16>,
    %c0_145 = arith.constant 0 : index
    %c0_146 = arith.constant 0 : index
    %c0_147 = arith.constant 0 : index
    %74 = vector.load %arg9[%c0_145, %c0_146, %c0_147] : memref<16x16x36xbf16, #tpu.memory_space<vmem>>, vector<16x16x36xbf16>
    %75 = vector.shape_cast %74 : vector<16x16x36xbf16> to vector<256x36xbf16>
    %c0_148 = arith.constant 0 : index
    %c0_149 = arith.constant 0 : index
    %76 = vector.load %arg4[%c0_148, %c0_149] : memref<36x4xbf16, #tpu.memory_space<vmem>>, vector<36x4xbf16>
    %cst_150 = arith.constant dense<0.000000e+00> : vector<256x4xf32>
    %77 = tpu.matmul %75, %76, %cst_150 {dimension_numbers = #tpu.dot_dimension_numbers<[1], [0], [0], [1], [0, 0, 1, 1], [], []>} : vector<256x36xbf16>, vector<36x4xbf16>, vector<256x4xf32> -> vector<256x4xf32>
    %78 = vector.broadcast %4 : f32 to vector<256x4xf32>
    %79 = arith.mulf %77, %78 : vector<256x4xf32>
    %80 = vector.broadcast %3 : f32 to vector<256x4xf32>
    %81 = arith.addf %79, %80 : vector<256x4xf32>
    %82 = vector.shape_cast %81 : vector<256x4xf32> to vector<16x16x4xf32>
    %83 = arith.addf %6, %82 : vector<16x16x4xf32>
    %c0_151 = arith.constant 0 : index
    %c0_152 = arith.constant 0 : index
    %c0_153 = arith.constant 0 : index
    %c0_154 = arith.constant 0 : index
    %84 = vector.load %arg5[%c0_151, %c0_152, %c0_153, %c0_154] : memref<1x16x16x4xf32, #tpu.memory_space<vmem>>, vector<1x16x16x4xf32>
    %85 = vector.shape_cast %84 : vector<1x16x16x4xf32> to vector<16x16x4xf32>
    %86 = vector.shape_cast %83 : vector<16x16x4xf32> to vector<1x16x16x4xf32>
    tpu.vector_store %arg5[%c0_151, %c0_152, %c0_153, %c0_154], %86 {strides = array<i32>} : memref<1x16x16x4xf32, #tpu.memory_space<vmem>>, vector<1x16x16x4xf32>,
    return
  }
  func.func @transform_0(%arg0: i32, %arg1: memref<5xf32, #tpu.memory_space<smem>>) -> (i32, i32, i32, i32) {
    %c0_i32 = arith.constant 0 : i32
    %c0_i32_0 = arith.constant 0 : i32
    %c0_i32_1 = arith.constant 0 : i32
    %c0_i32_2 = arith.constant 0 : i32
    return %arg0, %c0_i32, %c0_i32_0, %c0_i32_1 : i32, i32, i32, i32
  }
  func.func @transform_1(%arg0: i32, %arg1: memref<5xf32, #tpu.memory_space<smem>>) -> (i32, i32) {
    %c0_i32 = arith.constant 0 : i32
    %c0_i32_0 = arith.constant 0 : i32
    %c0_i32_1 = arith.constant 0 : i32
    return %c0_i32, %c0_i32_0 : i32, i32
  }
  func.func @transform_2(%arg0: i32, %arg1: memref<5xf32, #tpu.memory_space<smem>>) -> (i32, i32) {
    %c0_i32 = arith.constant 0 : i32
    %c0_i32_0 = arith.constant 0 : i32
    %c0_i32_1 = arith.constant 0 : i32
    return %c0_i32, %c0_i32_0 : i32, i32
  }
  func.func @transform_3(%arg0: i32, %arg1: memref<5xf32, #tpu.memory_space<smem>>) -> (i32, i32, i32, i32) {
    %c0_i32 = arith.constant 0 : i32
    %c0_i32_0 = arith.constant 0 : i32
    %c0_i32_1 = arith.constant 0 : i32
    %c0_i32_2 = arith.constant 0 : i32
    return %arg0, %c0_i32, %c0_i32_0, %c0_i32_1 : i32, i32, i32, i32
  }
}

</mosaic_0001>

<llo_original>
// kernel: tpu_custom_call.1
$region0: #{tpu_custom_call.1}
  #allocation0 [shape = 'u32[]', space=smem, size = 0x4, offset = 0x4, fixed_abs, tag = 'smem constant byte address 0x4 - core index']
  #allocation1 [shape = 'u32[144,128]{1,0:T(1,128)}', space=vmem, size = 0x12000, scoped, tag = 'internal scratch']
  #allocation2 [shape = 'bf16[18,18,4]{2,1,0:T(8,128)(2,1)}', space=vmem, size = 0x1b000, scoped, tag = 'scratch operand']
  #allocation3 [shape = 'bf16[16,16,36]{2,1,0:T(16,128)(2,1)}', space=vmem, size = 0x10000, scoped, tag = 'scratch operand']
  #allocation4 [shape = 'bf16[18,18,4]{2,1,0:T(8,128)(2,1)}', space=vmem, size = 0x1b000, scoped, tag = 'scratch operand']
  #allocation5 [shape = 'bf16[16,16,36]{2,1,0:T(16,128)(2,1)}', space=vmem, size = 0x10000, scoped, tag = 'scratch operand']
  #allocation6 [shape = 's32[1]{0}', space=sflag, size = 0x4, scoped, tag = 'scoped memory for tpu_custom_call.1']
  #allocation7 [shape = 'u8[512]{0}', space=smem, size = 0x200, scoped, tag = 'prefetched SMEM operand 0']
  %s0 = inlined_call_operand.vmem [shape: f32[5], index: 0, kind: input, shape index: {}]
  %s1 = inlined_call_operand.vmem [shape: f32[2,16,16,4], index: 1, kind: input, shape index: {}]
  %s2 = inlined_call_operand.vmem [shape: bf16[36,4], index: 2, kind: input, shape index: {}]
  %s3 = inlined_call_operand.vmem [shape: bf16[36,4], index: 3, kind: input, shape index: {}]
  %s4 = inlined_call_operand.vmem [shape: f32[2,16,16,4], index: 4, kind: output, shape index: {}]
  %s5 = sld [smem:[#allocation0]]
  $region45: #{tpu_custom_call.1} parent=0
    _
  %s7 = ssub.s32 1, %s5
  %s8 = scalar_select 0, %s7, %s5
  %s9 = sshll.u32 %s0, 4
  %s10 = int_to_ptr.vmem [resolvable:$true] %s9
  %12 = dma.vmem_to_smem %s10, 16, [#allocation7], [#allocation6]
  %13 = dma.done [#allocation6], 16
  %14 = sfence
  loop: start=0, step=1, limit=4
  $region2: #{tpu_custom_call.1} parent=0 // loop_pre_header
    _
  $region3: #{tpu_custom_call.1} parent=0 // loop_header
    %s16 = sphi 0, %s20
    %p17 = scmp.ge.s32.totalorder %s16, 4
    %s26 = sphi 0, %s28
    %s29 = sphi 0, %s26
    %s30 = sphi 0, %s29
    %s46 = sphi 0, %s30
    %s50 = sphi 0, %s50
    %s52 = sphi 0, %s50
    %s53 = sphi 0, %s52
    %s67 = sphi 0, %s53
    %s71 = sphi 0, %s71
    %s73 = sphi 0, %s71
    %s74 = sphi 0, %s73
    %s88 = sphi 0, %s74
    %s94 = sphi 0, %s96
    %s97 = sphi 0, %s94
    %s98 = sphi 0, %s97
    %s114 = sphi 0, %s98
  $region4: #{tpu_custom_call.1} parent=0 // loop_header_branch
    %19 = sbr.rel (%p17) target = $region8
  $region5: #{tpu_custom_call.1} parent=0 // loop_body
    %s21 = ssub.s32 %s16, 1
    %s22 = ssub.s32 %s16, 2
    %s23 = sadd.s32 %s16, 1
    %s24 = ssub.s32 %s16, %s23
    %p25 = scmp.eq.s32.totalorder %s24, 0
    %s27 = sadd.s32 %s26, 1
    %s28 = scalar_select %p25, %s26, %s27
    %p31 = pneg %p25
    %p32 = scmp.eq.s32.totalorder %s16, 1
    %p33 = por %p31, %p32
    %p34 = scmp.ne.s32.totalorder %s26, %s29
    %p35 = scmp.eq.s32.totalorder %s16, 0
    %p36 = por %p34, %p35
    %p37 = scmp.ne.s32.totalorder %s26, %s29
    %p38 = scmp.eq.s32.totalorder %s21, 1
    %p39 = por %p37, %p38
    %p40 = scmp.ne.s32.totalorder %s29, %s30
    %p41 = scmp.eq.s32.totalorder %s21, 0
    %p42 = por %p40, %p41
    %p43 = scmp.ne.s32.totalorder %s29, %s30
    %p44 = scmp.eq.s32.totalorder %s22, 1
    %p45 = por %p43, %p44
    %p47 = scmp.ne.s32.totalorder %s30, %s46
    %p48 = scmp.eq.s32.totalorder %s22, 0
    %p49 = por %p47, %p48
    %s51 = sadd.s32 %s50, 1
    %p54 = scmp.eq.s32.totalorder %s16, 1
    %p55 = scmp.ne.s32.totalorder %s50, %s52
    %p56 = scmp.eq.s32.totalorder %s16, 0
    %p57 = por %p55, %p56
    %p58 = scmp.ne.s32.totalorder %s50, %s52
    %p59 = scmp.eq.s32.totalorder %s21, 1
    %p60 = por %p58, %p59
    %p61 = scmp.ne.s32.totalorder %s52, %s53
    %p62 = scmp.eq.s32.totalorder %s21, 0
    %p63 = por %p61, %p62
    %p64 = scmp.ne.s32.totalorder %s52, %s53
    %p65 = scmp.eq.s32.totalorder %s22, 1
    %p66 = por %p64, %p65
    %p68 = scmp.ne.s32.totalorder %s53, %s67
    %p69 = scmp.eq.s32.totalorder %s22, 0
    %p70 = por %p68, %p69
    %s72 = sadd.s32 %s71, 1
    %p75 = scmp.eq.s32.totalorder %s16, 1
    %p76 = scmp.ne.s32.totalorder %s71, %s73
    %p77 = scmp.eq.s32.totalorder %s16, 0
    %p78 = por %p76, %p77
    %p79 = scmp.ne.s32.totalorder %s71, %s73
    %p80 = scmp.eq.s32.totalorder %s21, 1
    %p81 = por %p79, %p80
    %p82 = scmp.ne.s32.totalorder %s73, %s74
    %p83 = scmp.eq.s32.totalorder %s21, 0
    %p84 = por %p82, %p83
    %p85 = scmp.ne.s32.totalorder %s73, %s74
    %p86 = scmp.eq.s32.totalorder %s22, 1
    %p87 = por %p85, %p86
    %p89 = scmp.ne.s32.totalorder %s74, %s88
    %p90 = scmp.eq.s32.totalorder %s22, 0
    %p91 = por %p89, %p90
    %s92 = ssub.s32 %s16, %s23
    %p93 = scmp.eq.s32.totalorder %s92, 0
    %s95 = sadd.s32 %s94, 1
    %s96 = scalar_select %p93, %s94, %s95
    %p99 = pneg %p93
    %p100 = scmp.eq.s32.totalorder %s16, 1
    %p101 = por %p99, %p100
    %p102 = scmp.ne.s32.totalorder %s94, %s97
    %p103 = scmp.eq.s32.totalorder %s16, 0
    %p104 = por %p102, %p103
    %p105 = scmp.ne.s32.totalorder %s94, %s97
    %p106 = scmp.eq.s32.totalorder %s21, 1
    %p107 = por %p105, %p106
    %p108 = scmp.ne.s32.totalorder %s97, %s98
    %p109 = scmp.eq.s32.totalorder %s21, 0
    %p110 = por %p108, %p109
    %p111 = scmp.ne.s32.totalorder %s97, %s98
    %p112 = scmp.eq.s32.totalorder %s22, 1
    %p113 = por %p111, %p112
    %p115 = scmp.ne.s32.totalorder %s98, %s114
    %p116 = scmp.eq.s32.totalorder %s22, 0
    %p117 = por %p115, %p116
    %p118 = scmp.le.s32.totalorder 1, %s16
    %p119 = scmp.lt.s32.totalorder %s16, 3
    %p120 = pnand %p118, %p119
    %p121 = pneg %p120
    // Predicated region
    $region9: #{tpu_custom_call.1} parent=5 // pred_check
      _
    $region10: #{tpu_custom_call.1} parent=5 // pred_check_branch
      %123 = sbr.rel (%p120) target = $region12
    $region11: #{tpu_custom_call.1} parent=5 // pred_region
      %s124 = ssub.s32 %s16, 1
      // Predicated region
      $region13: #{tpu_custom_call.1} parent=11 // pred_check
        %p125 = pneg %p63
      $region14: #{tpu_custom_call.1} parent=11 // pred_check_branch
        %127 = sbr.rel (%p125) target = $region16
      $region15: #{tpu_custom_call.1} parent=11 // pred_region
        _
      $region16: #{tpu_custom_call.1} parent=11 // pred_fallthru
        _
      // Predicated region
      $region17: #{tpu_custom_call.1} parent=11 // pred_check
        %p128 = pneg %p84
      $region18: #{tpu_custom_call.1} parent=11 // pred_check_branch
        %130 = sbr.rel (%p128) target = $region20
      $region19: #{tpu_custom_call.1} parent=11 // pred_region
        _
      $region20: #{tpu_custom_call.1} parent=11 // pred_fallthru
        _
    $region12: #{tpu_custom_call.1} parent=5 // pred_fallthru
      _
    %p131 = scmp.lt.s32.totalorder %s16, 2
    // Predicated region
    $region21: #{tpu_custom_call.1} parent=5 // pred_check
      %p132 = pneg %p131
    $region22: #{tpu_custom_call.1} parent=5 // pred_check_branch
      %134 = sbr.rel (%p132) target = $region24
    $region23: #{tpu_custom_call.1} parent=5 // pred_region
      // Predicated region
      $region25: #{tpu_custom_call.1} parent=23 // pred_check
        %p135 = pneg %p36
      $region26: #{tpu_custom_call.1} parent=23 // pred_check_branch
        %137 = sbr.rel (%p135) target = $region28
      $region27: #{tpu_custom_call.1} parent=23 // pred_region
        %p138 = scmp.lt.s32.totalorder %s16, 1
        %s139 = scalar_select %p138, %s16, 1
        %s140 = smul.addr %s139, 32
        %s141 = smul.addr %s140, 8
        %s142 = scalar_lea.vmem %s1, %s141
      $region28: #{tpu_custom_call.1} parent=23 // pred_fallthru
        _
    $region24: #{tpu_custom_call.1} parent=5 // pred_fallthru
      _
    %p143 = scmp.le.s32.totalorder 1, %s16
    %p144 = scmp.lt.s32.totalorder %s16, 3
    %p145 = pnand %p143, %p144
    %p146 = pneg %p145
    // Predicated region
    $region29: #{tpu_custom_call.1} parent=5 // pred_check
      _
    $region30: #{tpu_custom_call.1} parent=5 // pred_check_branch
      %148 = sbr.rel (%p145) target = $region32
    $region31: #{tpu_custom_call.1} parent=5 // pred_region
      %s149 = ssub.s32 %s16, 1
      %p150 = scmp.lt.s32.totalorder %s21, 1
      %s151 = scalar_select %p150, %s21, 1
      %s152 = smul.addr %s151, 32
      %s153 = smul.addr %s152, 8
      %s154 = scalar_lea.vmem %s1, %s153
      %p155 = pneg %p42
      %p156 = pneg %p39
      %p157 = pneg %p63
      %p158 = pneg %p60
      %p159 = pneg %p84
      %p160 = pneg %p81
      %p161 = pneg %p110
      %p162 = pneg %p107
      %p163 = scmp.lt.s32.totalorder %s21, 1
      %s164 = scalar_select %p163, %s21, 1
      %s165 = smul.addr %s164, 32
      %s166 = smul.addr %s165, 8
      %s167 = scalar_lea.vmem %s4, %s166
      %p168 = scmp.lt.s32.totalorder %s21, 1
      %s169 = scalar_select %p168, %s21, 1
      %s170 = smul.addr %s169, 32
      %s171 = smul.addr %s170, 8
      %s172 = scalar_lea.vmem %s1, %s171
      %p173 = scmp.lt.s32.totalorder %s21, 1
      %s174 = scalar_select %p173, %s21, 1
      %s175 = smul.addr %s174, 32
      %s176 = smul.addr %s175, 8
      %s177 = scalar_lea.vmem %s4, %s176
      %s179 = sld [smem:[#allocation7]]
      %s180 = sld [smem:[#allocation7 + $0x1]]
      %s181 = sld [smem:[#allocation7 + $0x2]]
      %s182 = sld [smem:[#allocation7 + $0x3]]
      %s183 = sld [smem:[#allocation7 + $0x4]]
      %v184 = vld [vmem:[%s172] sm:$0xff]
      %v185 = vld [vmem:[%s172 + $0x8] sm:$0xff]
      %v186 = vld [vmem:[%s172 + $0x10] sm:$0xff]
      %v187 = vld [vmem:[%s172 + $0x18] sm:$0xff]
      %v188 = vld [vmem:[%s172 + $0x20] sm:$0xff]
      %v189 = vld [vmem:[%s172 + $0x28] sm:$0xff]
      %v190 = vld [vmem:[%s172 + $0x30] sm:$0xff]
      %v191 = vld [vmem:[%s172 + $0x38] sm:$0xff]
      %v192 = vld [vmem:[%s172 + $0x40] sm:$0xff]
      %v193 = vld [vmem:[%s172 + $0x48] sm:$0xff]
      %v194 = vld [vmem:[%s172 + $0x50] sm:$0xff]
      %v195 = vld [vmem:[%s172 + $0x58] sm:$0xff]
      %v196 = vld [vmem:[%s172 + $0x60] sm:$0xff]
      %v197 = vld [vmem:[%s172 + $0x68] sm:$0xff]
      %v198 = vld [vmem:[%s172 + $0x70] sm:$0xff]
      %v199 = vld [vmem:[%s172 + $0x78] sm:$0xff]
      %v200 = vld [vmem:[%s172 + $0x80] sm:$0xff]
      %v201 = vld [vmem:[%s172 + $0x88] sm:$0xff]
      %v202 = vld [vmem:[%s172 + $0x90] sm:$0xff]
      %v203 = vld [vmem:[%s172 + $0x98] sm:$0xff]
      %v204 = vld [vmem:[%s172 + $0xa0] sm:$0xff]
      %v205 = vld [vmem:[%s172 + $0xa8] sm:$0xff]
      %v206 = vld [vmem:[%s172 + $0xb0] sm:$0xff]
      %v207 = vld [vmem:[%s172 + $0xb8] sm:$0xff]
      %v208 = vld [vmem:[%s172 + $0xc0] sm:$0xff]
      %v209 = vld [vmem:[%s172 + $0xc8] sm:$0xff]
      %v210 = vld [vmem:[%s172 + $0xd0] sm:$0xff]
      %v211 = vld [vmem:[%s172 + $0xd8] sm:$0xff]
      %v212 = vld [vmem:[%s172 + $0xe0] sm:$0xff]
      %v213 = vld [vmem:[%s172 + $0xe8] sm:$0xff]
      %v214 = vld [vmem:[%s172 + $0xf0] sm:$0xff]
      %v215 = vld [vmem:[%s172 + $0xf8] sm:$0xff]
      %v216 = vstv %s179
      %v217 = vadd.f32 %v184, %v216
      %v218 = vadd.f32 %v185, %v216
      %v219 = vadd.f32 %v186, %v216
      %v220 = vadd.f32 %v187, %v216
      %v221 = vadd.f32 %v188, %v216
      %v222 = vadd.f32 %v189, %v216
      %v223 = vadd.f32 %v190, %v216
      %v224 = vadd.f32 %v191, %v216
      %v225 = vadd.f32 %v192, %v216
      %v226 = vadd.f32 %v193, %v216
      %v227 = vadd.f32 %v194, %v216
      %v228 = vadd.f32 %v195, %v216
      %v229 = vadd.f32 %v196, %v216
      %v230 = vadd.f32 %v197, %v216
      %v231 = vadd.f32 %v198, %v216
      %v232 = vadd.f32 %v199, %v216
      %v233 = vadd.f32 %v200, %v216
      %v234 = vadd.f32 %v201, %v216
      %v235 = vadd.f32 %v202, %v216
      %v236 = vadd.f32 %v203, %v216
      %v237 = vadd.f32 %v204, %v216
      %v238 = vadd.f32 %v205, %v216
      %v239 = vadd.f32 %v206, %v216
      %v240 = vadd.f32 %v207, %v216
      %v241 = vadd.f32 %v208, %v216
      %v242 = vadd.f32 %v209, %v216
      %v243 = vadd.f32 %v210, %v216
      %v244 = vadd.f32 %v211, %v216
      %v245 = vadd.f32 %v212, %v216
      %v246 = vadd.f32 %v213, %v216
      %v247 = vadd.f32 %v214, %v216
      %v248 = vadd.f32 %v215, %v216
      %v249 = vmax.f32 %v217, 0.0
      %v250 = vmax.f32 %v218, 0.0
      %v251 = vmax.f32 %v219, 0.0
      %v252 = vmax.f32 %v220, 0.0
      %v253 = vmax.f32 %v221, 0.0
      %v254 = vmax.f32 %v222, 0.0
      %v255 = vmax.f32 %v223, 0.0
      %v256 = vmax.f32 %v224, 0.0
      %v257 = vmax.f32 %v225, 0.0
      %v258 = vmax.f32 %v226, 0.0
      %v259 = vmax.f32 %v227, 0.0
      %v260 = vmax.f32 %v228, 0.0
      %v261 = vmax.f32 %v229, 0.0
      %v262 = vmax.f32 %v230, 0.0
      %v263 = vmax.f32 %v231, 0.0
      %v264 = vmax.f32 %v232, 0.0
      %v265 = vmax.f32 %v233, 0.0
      %v266 = vmax.f32 %v234, 0.0
      %v267 = vmax.f32 %v235, 0.0
      %v268 = vmax.f32 %v236, 0.0
      %v269 = vmax.f32 %v237, 0.0
      %v270 = vmax.f32 %v238, 0.0
      %v271 = vmax.f32 %v239, 0.0
      %v272 = vmax.f32 %v240, 0.0
      %v273 = vmax.f32 %v241, 0.0
      %v274 = vmax.f32 %v242, 0.0
      %v275 = vmax.f32 %v243, 0.0
      %v276 = vmax.f32 %v244, 0.0
      %v277 = vmax.f32 %v245, 0.0
      %v278 = vmax.f32 %v246, 0.0
      %v279 = vmax.f32 %v247, 0.0
      %v280 = vmax.f32 %v248, 0.0
      %vm281 = vcmask 27648
      %282 = vst.msk [vmem:[#allocation2] sm:$0xf] %vm281, 0
      %283 = vst.msk [vmem:[#allocation2 + $0x4] sm:$0xf] %vm281, 0
      %vm284 = vcmask 24576
      %285 = vst.msk [vmem:[#allocation2 + $0x8] sm:$0x1] %vm284, 0
      %s286 = scalar_lea.vmem [#allocation2], 204
      %287 = vst.msk [vmem:[%s286] sm:$0xf] %vm281, 0
      %288 = vst.msk [vmem:[%s286 + $0x4] sm:$0xf] %vm281, 0
      %289 = vst.msk [vmem:[%s286 + $0x8] sm:$0x1] %vm284, 0
      %vm290 = vcmask 24576
      %vm291 = vsmask.f32 256
      %vm292 = vmand %vm290, %vm291
      %v293 = vld [vmem:[#allocation2] sm:$0x1]
      %v294 = vsel %vm292, 0, %v293
      %295 = vst [vmem:[#allocation2] sm:$0x1] %v294
      %v296 = vld [vmem:[#allocation2 + $0xc] sm:$0x1]
      %v297 = vsel %vm292, 0, %v296
      %298 = vst [vmem:[#allocation2 + $0xc] sm:$0x1] %v297
      %v299 = vld [vmem:[#allocation2 + $0x18] sm:$0x1]
      %v300 = vsel %vm292, 0, %v299
      %301 = vst [vmem:[#allocation2 + $0x18] sm:$0x1] %v300
      %v302 = vld [vmem:[#allocation2 + $0x24] sm:$0x1]
      %v303 = vsel %vm292, 0, %v302
      %304 = vst [vmem:[#allocation2 + $0x24] sm:$0x1] %v303
      %v305 = vld [vmem:[#allocation2 + $0x30] sm:$0x1]
      %v306 = vsel %vm292, 0, %v305
      %307 = vst [vmem:[#allocation2 + $0x30] sm:$0x1] %v306
      %v308 = vld [vmem:[#allocation2 + $0x3c] sm:$0x1]
      %v309 = vsel %vm292, 0, %v308
      %310 = vst [vmem:[#allocation2 + $0x3c] sm:$0x1] %v309
      %v311 = vld [vmem:[#allocation2 + $0x48] sm:$0x1]
      %v312 = vsel %vm292, 0, %v311
      %313 = vst [vmem:[#allocation2 + $0x48] sm:$0x1] %v312
      %v314 = vld [vmem:[#allocation2 + $0x54] sm:$0x1]
      %v315 = vsel %vm292, 0, %v314
      %316 = vst [vmem:[#allocation2 + $0x54] sm:$0x1] %v315
      %v317 = vld [vmem:[#allocation2 + $0x60] sm:$0x1]
      %v318 = vsel %vm292, 0, %v317
      %319 = vst [vmem:[#allocation2 + $0x60] sm:$0x1] %v318
      %v320 = vld [vmem:[#allocation2 + $0x6c] sm:$0x1]
      %v321 = vsel %vm292, 0, %v320
      %322 = vst [vmem:[#allocation2 + $0x6c] sm:$0x1] %v321
      %v323 = vld [vmem:[#allocation2 + $0x78] sm:$0x1]
      %v324 = vsel %vm292, 0, %v323
      %325 = vst [vmem:[#allocation2 + $0x78] sm:$0x1] %v324
      %v326 = vld [vmem:[#allocation2 + $0x84] sm:$0x1]
      %v327 = vsel %vm292, 0, %v326
      %328 = vst [vmem:[#allocation2 + $0x84] sm:$0x1] %v327
      %v329 = vld [vmem:[#allocation2 + $0x90] sm:$0x1]
      %v330 = vsel %vm292, 0, %v329
      %331 = vst [vmem:[#allocation2 + $0x90] sm:$0x1] %v330
      %v332 = vld [vmem:[#allocation2 + $0x9c] sm:$0x1]
      %v333 = vsel %vm292, 0, %v332
      %334 = vst [vmem:[#allocation2 + $0x9c] sm:$0x1] %v333
      %v335 = vld [vmem:[#allocation2 + $0xa8] sm:$0x1]
      %v336 = vsel %vm292, 0, %v335
      %337 = vst [vmem:[#allocation2 + $0xa8] sm:$0x1] %v336
      %v338 = vld [vmem:[#allocation2 + $0xb4] sm:$0x1]
      %v339 = vsel %vm292, 0, %v338
      %340 = vst [vmem:[#allocation2 + $0xb4] sm:$0x1] %v339
      %v341 = vld [vmem:[#allocation2 + $0xc0] sm:$0x1]
      %v342 = vsel %vm292, 0, %v341
      %343 = vst [vmem:[#allocation2 + $0xc0] sm:$0x1] %v342
      %v344 = vld [vmem:[#allocation2 + $0xcc] sm:$0x1]
      %v345 = vsel %vm292, 0, %v344
      %346 = vst [vmem:[#allocation2 + $0xcc] sm:$0x1] %v345
      %vm347 = vsmask.f32 7938
      %vm348 = vmand %vm290, %vm347
      %v349 = vld [vmem:[#allocation2 + $0x8] sm:$0x1]
      %v350 = vsel %vm348, 0, %v349
      %351 = vst [vmem:[#allocation2 + $0x8] sm:$0x1] %v350
      %v352 = vld [vmem:[#allocation2 + $0x14] sm:$0x1]
      %v353 = vsel %vm348, 0, %v352
      %354 = vst [vmem:[#allocation2 + $0x14] sm:$0x1] %v353
      %v355 = vld [vmem:[#allocation2 + $0x20] sm:$0x1]
      %v356 = vsel %vm348, 0, %v355
      %357 = vst [vmem:[#allocation2 + $0x20] sm:$0x1] %v356
      %v358 = vld [vmem:[#allocation2 + $0x2c] sm:$0x1]
      %v359 = vsel %vm348, 0, %v358
      %360 = vst [vmem:[#allocation2 + $0x2c] sm:$0x1] %v359
      %v361 = vld [vmem:[#allocation2 + $0x38] sm:$0x1]
      %v362 = vsel %vm348, 0, %v361
      %363 = vst [vmem:[#allocation2 + $0x38] sm:$0x1] %v362
      %v364 = vld [vmem:[#allocation2 + $0x44] sm:$0x1]
      %v365 = vsel %vm348, 0, %v364
      %366 = vst [vmem:[#allocation2 + $0x44] sm:$0x1] %v365
      %v367 = vld [vmem:[#allocation2 + $0x50] sm:$0x1]
      %v368 = vsel %vm348, 0, %v367
      %369 = vst [vmem:[#allocation2 + $0x50] sm:$0x1] %v368
      %v370 = vld [vmem:[#allocation2 + $0x5c] sm:$0x1]
      %v371 = vsel %vm348, 0, %v370
      %372 = vst [vmem:[#allocation2 + $0x5c] sm:$0x1] %v371
      %v373 = vld [vmem:[#allocation2 + $0x68] sm:$0x1]
      %v374 = vsel %vm348, 0, %v373
      %375 = vst [vmem:[#allocation2 + $0x68] sm:$0x1] %v374
      %v376 = vld [vmem:[#allocation2 + $0x74] sm:$0x1]
      %v377 = vsel %vm348, 0, %v376
      %378 = vst [vmem:[#allocation2 + $0x74] sm:$0x1] %v377
      %v379 = vld [vmem:[#allocation2 + $0x80] sm:$0x1]
      %v380 = vsel %vm348, 0, %v379
      %381 = vst [vmem:[#allocation2 + $0x80] sm:$0x1] %v380
      %v382 = vld [vmem:[#allocation2 + $0x8c] sm:$0x1]
      %v383 = vsel %vm348, 0, %v382
      %384 = vst [vmem:[#allocation2 + $0x8c] sm:$0x1] %v383
      %v385 = vld [vmem:[#allocation2 + $0x98] sm:$0x1]
      %v386 = vsel %vm348, 0, %v385
      %387 = vst [vmem:[#allocation2 + $0x98] sm:$0x1] %v386
      %v388 = vld [vmem:[#allocation2 + $0xa4] sm:$0x1]
      %v389 = vsel %vm348, 0, %v388
      %390 = vst [vmem:[#allocation2 + $0xa4] sm:$0x1] %v389
      %v391 = vld [vmem:[#allocation2 + $0xb0] sm:$0x1]
      %v392 = vsel %vm348, 0, %v391
      %393 = vst [vmem:[#allocation2 + $0xb0] sm:$0x1] %v392
      %v394 = vld [vmem:[#allocation2 + $0xbc] sm:$0x1]
      %v395 = vsel %vm348, 0, %v394
      %396 = vst [vmem:[#allocation2 + $0xbc] sm:$0x1] %v395
      %v397 = vld [vmem:[#allocation2 + $0xc8] sm:$0x1]
      %v398 = vsel %vm348, 0, %v397
      %399 = vst [vmem:[#allocation2 + $0xc8] sm:$0x1] %v398
      %v400 = vld [vmem:[#allocation2 + $0xd4] sm:$0x1]
      %v401 = vsel %vm348, 0, %v400
      %402 = vst [vmem:[#allocation2 + $0xd4] sm:$0x1] %v401
      %v403 = vpack.c.bf16 %v250, %v249
      %v404 = vpack.c.bf16 %v252, %v251
      %v405 = vpack.c.bf16 %v254, %v253
      %v406 = vpack.c.bf16 %v256, %v255
      %v407 = vpack.c.bf16 %v258, %v257
      %v408 = vpack.c.bf16 %v260, %v259
      %v409 = vpack.c.bf16 %v262, %v261
      %v410 = vpack.c.bf16 %v264, %v263
      %v411 = vpack.c.bf16 %v266, %v265
      %v412 = vpack.c.bf16 %v268, %v267
      %v413 = vpack.c.bf16 %v270, %v269
      %v414 = vpack.c.bf16 %v272, %v271
      %v415 = vpack.c.bf16 %v274, %v273
      %v416 = vpack.c.bf16 %v276, %v275
      %v417 = vpack.c.bf16 %v278, %v277
      %v418 = vpack.c.bf16 %v280, %v279
      %v435 = vunpack.c.l.b16 %v403
      %v436 = vunpack.c.h.b16 %v403
      %v437 = vunpack.c.l.b16 %v404
      %v438 = vunpack.c.h.b16 %v404
      %v439 = vunpack.c.l.b16 %v405
      %v440 = vunpack.c.h.b16 %v405
      %v441 = vunpack.c.l.b16 %v406
      %v442 = vunpack.c.h.b16 %v406
      %v443 = vunpack.c.l.b16 %v407
      %v444 = vunpack.c.h.b16 %v407
      %v445 = vunpack.c.l.b16 %v408
      %v446 = vunpack.c.h.b16 %v408
      %v447 = vunpack.c.l.b16 %v409
      %v448 = vunpack.c.h.b16 %v409
      %v449 = vunpack.c.l.b16 %v410
      %v450 = vunpack.c.h.b16 %v410
      %v451 = vunpack.c.l.b16 %v411
      %v452 = vunpack.c.h.b16 %v411
      %v453 = vunpack.c.l.b16 %v412
      %v454 = vunpack.c.h.b16 %v412
      %v455 = vunpack.c.l.b16 %v413
      %v456 = vunpack.c.h.b16 %v413
      %v457 = vunpack.c.l.b16 %v414
      %v458 = vunpack.c.h.b16 %v414
      %v459 = vunpack.c.l.b16 %v415
      %v460 = vunpack.c.h.b16 %v415
      %v461 = vunpack.c.l.b16 %v416
      %v462 = vunpack.c.h.b16 %v416
      %v463 = vunpack.c.l.b16 %v417
      %v464 = vunpack.c.h.b16 %v417
      %v465 = vunpack.c.l.b16 %v418
      %v466 = vunpack.c.h.b16 %v418
      %v467 = vpack.c.b16 %v435, %v435
      %v468 = vpack.c.b16 %v436, %v436
      %v469 = vpack.c.b16 %v437, %v437
      %v470 = vpack.c.b16 %v438, %v438
      %v471 = vpack.c.b16 %v439, %v439
      %v472 = vpack.c.b16 %v440, %v440
      %v473 = vpack.c.b16 %v441, %v441
      %v474 = vpack.c.b16 %v442, %v442
      %v475 = vpack.c.b16 %v443, %v443
      %v476 = vpack.c.b16 %v444, %v444
      %v477 = vpack.c.b16 %v445, %v445
      %v478 = vpack.c.b16 %v446, %v446
      %v479 = vpack.c.b16 %v447, %v447
      %v480 = vpack.c.b16 %v448, %v448
      %v481 = vpack.c.b16 %v449, %v449
      %v482 = vpack.c.b16 %v450, %v450
      %v483 = vpack.c.b16 %v451, %v451
      %v484 = vpack.c.b16 %v452, %v452
      %v485 = vpack.c.b16 %v453, %v453
      %v486 = vpack.c.b16 %v454, %v454
      %v487 = vpack.c.b16 %v455, %v455
      %v488 = vpack.c.b16 %v456, %v456
      %v489 = vpack.c.b16 %v457, %v457
      %v490 = vpack.c.b16 %v458, %v458
      %v491 = vpack.c.b16 %v459, %v459
      %v492 = vpack.c.b16 %v460, %v460
      %v493 = vpack.c.b16 %v461, %v461
      %v494 = vpack.c.b16 %v462, %v462
      %v495 = vpack.c.b16 %v463, %v463
      %v496 = vpack.c.b16 %v464, %v464
      %v497 = vpack.c.b16 %v465, %v465
      %v498 = vpack.c.b16 %v466, %v466
      %vm499 = vsmask.f32 4368
      %vm500 = vmor %vm291, %vm499
      %v502 = vshrl.u32 %v467, 16
      %v504 = vrot.slane %v502, 7
      %v505 = vshll.u32 %v467, 16
      %v507 = vor.u32 %v504, %v505
      %v508 = vrot.slane %v504, 4
      %v510 = vshrl.u32 %v468, 16
      %v512 = vrot.slane %v510, 7
      %v513 = vshll.u32 %v468, 16
      %v515 = vor.u32 %v512, %v513
      %v516 = vsel %vm500, %v508, %v515
      %v517 = vrot.slane %v512, 4
      %v519 = vshrl.u32 %v469, 16
      %v521 = vrot.slane %v519, 7
      %v522 = vshll.u32 %v469, 16
      %v524 = vor.u32 %v521, %v522
      %v525 = vrot.slane %v521, 4
      %v527 = vshrl.u32 %v470, 16
      %v529 = vrot.slane %v527, 7
      %v530 = vshll.u32 %v470, 16
      %v532 = vor.u32 %v529, %v530
      %v533 = vsel %vm500, %v525, %v532
      %v534 = vrot.slane %v529, 4
      %v536 = vshrl.u32 %v471, 16
      %v538 = vrot.slane %v536, 7
      %v539 = vshll.u32 %v471, 16
      %v541 = vor.u32 %v538, %v539
      %v542 = vrot.slane %v538, 4
      %v544 = vshrl.u32 %v472, 16
      %v546 = vrot.slane %v544, 7
      %v547 = vshll.u32 %v472, 16
      %v549 = vor.u32 %v546, %v547
      %v550 = vsel %vm500, %v542, %v549
      %v551 = vrot.slane %v546, 4
      %v553 = vshrl.u32 %v473, 16
      %v555 = vrot.slane %v553, 7
      %v556 = vshll.u32 %v473, 16
      %v558 = vor.u32 %v555, %v556
      %v559 = vrot.slane %v555, 4
      %v561 = vshrl.u32 %v474, 16
      %v563 = vrot.slane %v561, 7
      %v564 = vshll.u32 %v474, 16
      %v566 = vor.u32 %v563, %v564
      %v567 = vsel %vm500, %v559, %v566
      %v568 = vrot.slane %v563, 4
      %v570 = vshrl.u32 %v475, 16
      %v572 = vrot.slane %v570, 7
      %v573 = vshll.u32 %v475, 16
      %v575 = vor.u32 %v572, %v573
      %v576 = vrot.slane %v572, 4
      %v578 = vshrl.u32 %v476, 16
      %v580 = vrot.slane %v578, 7
      %v581 = vshll.u32 %v476, 16
      %v583 = vor.u32 %v580, %v581
      %v584 = vsel %vm500, %v576, %v583
      %v585 = vrot.slane %v580, 4
      %v587 = vshrl.u32 %v477, 16
      %v589 = vrot.slane %v587, 7
      %v590 = vshll.u32 %v477, 16
      %v592 = vor.u32 %v589, %v590
      %v593 = vrot.slane %v589, 4
      %v595 = vshrl.u32 %v478, 16
      %v597 = vrot.slane %v595, 7
      %v598 = vshll.u32 %v478, 16
      %v600 = vor.u32 %v597, %v598
      %v601 = vsel %vm500, %v593, %v600
      %v602 = vrot.slane %v597, 4
      %v604 = vshrl.u32 %v479, 16
      %v606 = vrot.slane %v604, 7
      %v607 = vshll.u32 %v479, 16
      %v609 = vor.u32 %v606, %v607
      %v610 = vrot.slane %v606, 4
      %v612 = vshrl.u32 %v480, 16
      %v614 = vrot.slane %v612, 7
      %v615 = vshll.u32 %v480, 16
      %v617 = vor.u32 %v614, %v615
      %v618 = vsel %vm500, %v610, %v617
      %v619 = vrot.slane %v614, 4
      %v621 = vshrl.u32 %v481, 16
      %v623 = vrot.slane %v621, 7
      %v624 = vshll.u32 %v481, 16
      %v626 = vor.u32 %v623, %v624
      %v627 = vrot.slane %v623, 4
      %v629 = vshrl.u32 %v482, 16
      %v631 = vrot.slane %v629, 7
      %v632 = vshll.u32 %v482, 16
      %v634 = vor.u32 %v631, %v632
      %v635 = vsel %vm500, %v627, %v634
      %v636 = vrot.slane %v631, 4
      %v638 = vshrl.u32 %v483, 16
      %v640 = vrot.slane %v638, 7
      %v641 = vshll.u32 %v483, 16
      %v643 = vor.u32 %v640, %v641
      %v644 = vrot.slane %v640, 4
      %v646 = vshrl.u32 %v484, 16
      %v648 = vrot.slane %v646, 7
      %v649 = vshll.u32 %v484, 16
      %v651 = vor.u32 %v648, %v649
      %v652 = vsel %vm500, %v644, %v651
      %v653 = vrot.slane %v648, 4
      %v655 = vshrl.u32 %v485, 16
      %v657 = vrot.slane %v655, 7
      %v658 = vshll.u32 %v485, 16
      %v660 = vor.u32 %v657, %v658
      %v661 = vrot.slane %v657, 4
      %v663 = vshrl.u32 %v486, 16
      %v665 = vrot.slane %v663, 7
      %v666 = vshll.u32 %v486, 16
      %v668 = vor.u32 %v665, %v666
      %v669 = vsel %vm500, %v661, %v668
      %v670 = vrot.slane %v665, 4
      %v672 = vshrl.u32 %v487, 16
      %v674 = vrot.slane %v672, 7
      %v675 = vshll.u32 %v487, 16
      %v677 = vor.u32 %v674, %v675
      %v678 = vrot.slane %v674, 4
      %v680 = vshrl.u32 %v488, 16
      %v682 = vrot.slane %v680, 7
      %v683 = vshll.u32 %v488, 16
      %v685 = vor.u32 %v682, %v683
      %v686 = vsel %vm500, %v678, %v685
      %v687 = vrot.slane %v682, 4
      %v689 = vshrl.u32 %v489, 16
      %v691 = vrot.slane %v689, 7
      %v692 = vshll.u32 %v489, 16
      %v694 = vor.u32 %v691, %v692
      %v695 = vrot.slane %v691, 4
      %v697 = vshrl.u32 %v490, 16
      %v699 = vrot.slane %v697, 7
      %v700 = vshll.u32 %v490, 16
      %v702 = vor.u32 %v699, %v700
      %v703 = vsel %vm500, %v695, %v702
      %v704 = vrot.slane %v699, 4
      %v706 = vshrl.u32 %v491, 16
      %v708 = vrot.slane %v706, 7
      %v709 = vshll.u32 %v491, 16
      %v711 = vor.u32 %v708, %v709
      %v712 = vrot.slane %v708, 4
      %v714 = vshrl.u32 %v492, 16
      %v716 = vrot.slane %v714, 7
      %v717 = vshll.u32 %v492, 16
      %v719 = vor.u32 %v716, %v717
      %v720 = vsel %vm500, %v712, %v719
      %v721 = vrot.slane %v716, 4
      %v723 = vshrl.u32 %v493, 16
      %v725 = vrot.slane %v723, 7
      %v726 = vshll.u32 %v493, 16
      %v728 = vor.u32 %v725, %v726
      %v729 = vrot.slane %v725, 4
      %v731 = vshrl.u32 %v494, 16
      %v733 = vrot.slane %v731, 7
      %v734 = vshll.u32 %v494, 16
      %v736 = vor.u32 %v733, %v734
      %v737 = vsel %vm500, %v729, %v736
      %v738 = vrot.slane %v733, 4
      %v740 = vshrl.u32 %v495, 16
      %v742 = vrot.slane %v740, 7
      %v743 = vshll.u32 %v495, 16
      %v745 = vor.u32 %v742, %v743
      %v746 = vrot.slane %v742, 4
      %v748 = vshrl.u32 %v496, 16
      %v750 = vrot.slane %v748, 7
      %v751 = vshll.u32 %v496, 16
      %v753 = vor.u32 %v750, %v751
      %v754 = vsel %vm500, %v746, %v753
      %v755 = vrot.slane %v750, 4
      %v757 = vshrl.u32 %v497, 16
      %v759 = vrot.slane %v757, 7
      %v760 = vshll.u32 %v497, 16
      %v762 = vor.u32 %v759, %v760
      %v763 = vrot.slane %v759, 4
      %v765 = vshrl.u32 %v498, 16
      %v767 = vrot.slane %v765, 7
      %v768 = vshll.u32 %v498, 16
      %v770 = vor.u32 %v767, %v768
      %v771 = vsel %vm500, %v763, %v770
      %v772 = vrot.slane %v767, 4
      %s821 = scalar_lea.vmem [#allocation2], 12
      %vm822 = vcmask 27648
      %vm823 = vmand %vm822, %vm347
      %v824 = vld [vmem:[%s821] sm:$0xf]
      %v825 = vsel %vm823, %v507, %v824
      %826 = vst [vmem:[%s821] sm:$0xf] %v825
      %827 = vst.msk [vmem:[%s821 + $0x4] sm:$0xf] %vm281, %v516
      %v828 = vld [vmem:[%s821 + $0x8] sm:$0x1]
      %v829 = vsel %vm292, %v517, %v828
      %830 = vst [vmem:[%s821 + $0x8] sm:$0x1] %v829
      %v831 = vld [vmem:[%s821 + $0xc] sm:$0xf]
      %v832 = vsel %vm823, %v524, %v831
      %833 = vst [vmem:[%s821 + $0xc] sm:$0xf] %v832
      %834 = vst.msk [vmem:[%s821 + $0x10] sm:$0xf] %vm281, %v533
      %v835 = vld [vmem:[%s821 + $0x14] sm:$0x1]
      %v836 = vsel %vm292, %v534, %v835
      %837 = vst [vmem:[%s821 + $0x14] sm:$0x1] %v836
      %v838 = vld [vmem:[%s821 + $0x18] sm:$0xf]
      %v839 = vsel %vm823, %v541, %v838
      %840 = vst [vmem:[%s821 + $0x18] sm:$0xf] %v839
      %841 = vst.msk [vmem:[%s821 + $0x1c] sm:$0xf] %vm281, %v550
      %v842 = vld [vmem:[%s821 + $0x20] sm:$0x1]
      %v843 = vsel %vm292, %v551, %v842
      %844 = vst [vmem:[%s821 + $0x20] sm:$0x1] %v843
      %v845 = vld [vmem:[%s821 + $0x24] sm:$0xf]
      %v846 = vsel %vm823, %v558, %v845
      %847 = vst [vmem:[%s821 + $0x24] sm:$0xf] %v846
      %848 = vst.msk [vmem:[%s821 + $0x28] sm:$0xf] %vm281, %v567
      %v849 = vld [vmem:[%s821 + $0x2c] sm:$0x1]
      %v850 = vsel %vm292, %v568, %v849
      %851 = vst [vmem:[%s821 + $0x2c] sm:$0x1] %v850
      %v852 = vld [vmem:[%s821 + $0x30] sm:$0xf]
      %v853 = vsel %vm823, %v575, %v852
      %854 = vst [vmem:[%s821 + $0x30] sm:$0xf] %v853
      %855 = vst.msk [vmem:[%s821 + $0x34] sm:$0xf] %vm281, %v584
      %v856 = vld [vmem:[%s821 + $0x38] sm:$0x1]
      %v857 = vsel %vm292, %v585, %v856
      %858 = vst [vmem:[%s821 + $0x38] sm:$0x1] %v857
      %v859 = vld [vmem:[%s821 + $0x3c] sm:$0xf]
      %v860 = vsel %vm823, %v592, %v859
      %861 = vst [vmem:[%s821 + $0x3c] sm:$0xf] %v860
      %862 = vst.msk [vmem:[%s821 + $0x40] sm:$0xf] %vm281, %v601
      %v863 = vld [vmem:[%s821 + $0x44] sm:$0x1]
      %v864 = vsel %vm292, %v602, %v863
      %865 = vst [vmem:[%s821 + $0x44] sm:$0x1] %v864
      %v866 = vld [vmem:[%s821 + $0x48] sm:$0xf]
      %v867 = vsel %vm823, %v609, %v866
      %868 = vst [vmem:[%s821 + $0x48] sm:$0xf] %v867
      %869 = vst.msk [vmem:[%s821 + $0x4c] sm:$0xf] %vm281, %v618
      %v870 = vld [vmem:[%s821 + $0x50] sm:$0x1]
      %v871 = vsel %vm292, %v619, %v870
      %872 = vst [vmem:[%s821 + $0x50] sm:$0x1] %v871
      %v873 = vld [vmem:[%s821 + $0x54] sm:$0xf]
      %v874 = vsel %vm823, %v626, %v873
      %875 = vst [vmem:[%s821 + $0x54] sm:$0xf] %v874
      %876 = vst.msk [vmem:[%s821 + $0x58] sm:$0xf] %vm281, %v635
      %v877 = vld [vmem:[%s821 + $0x5c] sm:$0x1]
      %v878 = vsel %vm292, %v636, %v877
      %879 = vst [vmem:[%s821 + $0x5c] sm:$0x1] %v878
      %v880 = vld [vmem:[%s821 + $0x60] sm:$0xf]
      %v881 = vsel %vm823, %v643, %v880
      %882 = vst [vmem:[%s821 + $0x60] sm:$0xf] %v881
      %883 = vst.msk [vmem:[%s821 + $0x64] sm:$0xf] %vm281, %v652
      %v884 = vld [vmem:[%s821 + $0x68] sm:$0x1]
      %v885 = vsel %vm292, %v653, %v884
      %886 = vst [vmem:[%s821 + $0x68] sm:$0x1] %v885
      %v887 = vld [vmem:[%s821 + $0x6c] sm:$0xf]
      %v888 = vsel %vm823, %v660, %v887
      %889 = vst [vmem:[%s821 + $0x6c] sm:$0xf] %v888
      %890 = vst.msk [vmem:[%s821 + $0x70] sm:$0xf] %vm281, %v669
      %v891 = vld [vmem:[%s821 + $0x74] sm:$0x1]
      %v892 = vsel %vm292, %v670, %v891
      %893 = vst [vmem:[%s821 + $0x74] sm:$0x1] %v892
      %v894 = vld [vmem:[%s821 + $0x78] sm:$0xf]
      %v895 = vsel %vm823, %v677, %v894
      %896 = vst [vmem:[%s821 + $0x78] sm:$0xf] %v895
      %897 = vst.msk [vmem:[%s821 + $0x7c] sm:$0xf] %vm281, %v686
      %v898 = vld [vmem:[%s821 + $0x80] sm:$0x1]
      %v899 = vsel %vm292, %v687, %v898
      %900 = vst [vmem:[%s821 + $0x80] sm:$0x1] %v899
      %v901 = vld [vmem:[%s821 + $0x84] sm:$0xf]
      %v902 = vsel %vm823, %v694, %v901
      %903 = vst [vmem:[%s821 + $0x84] sm:$0xf] %v902
      %904 = vst.msk [vmem:[%s821 + $0x88] sm:$0xf] %vm281, %v703
      %v905 = vld [vmem:[%s821 + $0x8c] sm:$0x1]
      %v906 = vsel %vm292, %v704, %v905
      %907 = vst [vmem:[%s821 + $0x8c] sm:$0x1] %v906
      %v908 = vld [vmem:[%s821 + $0x90] sm:$0xf]
      %v909 = vsel %vm823, %v711, %v908
      %910 = vst [vmem:[%s821 + $0x90] sm:$0xf] %v909
      %911 = vst.msk [vmem:[%s821 + $0x94] sm:$0xf] %vm281, %v720
      %v912 = vld [vmem:[%s821 + $0x98] sm:$0x1]
      %v913 = vsel %vm292, %v721, %v912
      %914 = vst [vmem:[%s821 + $0x98] sm:$0x1] %v913
      %v915 = vld [vmem:[%s821 + $0x9c] sm:$0xf]
      %v916 = vsel %vm823, %v728, %v915
      %917 = vst [vmem:[%s821 + $0x9c] sm:$0xf] %v916
      %918 = vst.msk [vmem:[%s821 + $0xa0] sm:$0xf] %vm281, %v737
      %v919 = vld [vmem:[%s821 + $0xa4] sm:$0x1]
      %v920 = vsel %vm292, %v738, %v919
      %921 = vst [vmem:[%s821 + $0xa4] sm:$0x1] %v920
      %v922 = vld [vmem:[%s821 + $0xa8] sm:$0xf]
      %v923 = vsel %vm823, %v745, %v922
      %924 = vst [vmem:[%s821 + $0xa8] sm:$0xf] %v923
      %925 = vst.msk [vmem:[%s821 + $0xac] sm:$0xf] %vm281, %v754
      %v926 = vld [vmem:[%s821 + $0xb0] sm:$0x1]
      %v927 = vsel %vm292, %v755, %v926
      %928 = vst [vmem:[%s821 + $0xb0] sm:$0x1] %v927
      %v929 = vld [vmem:[%s821 + $0xb4] sm:$0xf]
      %v930 = vsel %vm823, %v762, %v929
      %931 = vst [vmem:[%s821 + $0xb4] sm:$0xf] %v930
      %932 = vst.msk [vmem:[%s821 + $0xb8] sm:$0xf] %vm281, %v771
      %v933 = vld [vmem:[%s821 + $0xbc] sm:$0x1]
      %v934 = vsel %vm292, %v772, %v933
      %935 = vst [vmem:[%s821 + $0xbc] sm:$0x1] %v934
      %v936 = vld [vmem:[#allocation2] sm:$0xf]
      %v937 = vld [vmem:[#allocation2 + $0x4] sm:$0xf]
      %v938 = vld [vmem:[#allocation2 + $0xc] sm:$0xf]
      %v939 = vld [vmem:[#allocation2 + $0x10] sm:$0xf]
      %v940 = vld [vmem:[#allocation2 + $0x18] sm:$0xf]
      %v941 = vld [vmem:[#allocation2 + $0x1c] sm:$0xf]
      %v942 = vld [vmem:[#allocation2 + $0x24] sm:$0xf]
      %v943 = vld [vmem:[#allocation2 + $0x28] sm:$0xf]
      %v944 = vld [vmem:[#allocation2 + $0x30] sm:$0xf]
      %v945 = vld [vmem:[#allocation2 + $0x34] sm:$0xf]
      %v946 = vld [vmem:[#allocation2 + $0x3c] sm:$0xf]
      %v947 = vld [vmem:[#allocation2 + $0x40] sm:$0xf]
      %v948 = vld [vmem:[#allocation2 + $0x48] sm:$0xf]
      %v949 = vld [vmem:[#allocation2 + $0x4c] sm:$0xf]
      %v950 = vld [vmem:[#allocation2 + $0x54] sm:$0xf]
      %v951 = vld [vmem:[#allocation2 + $0x58] sm:$0xf]
      %v952 = vld [vmem:[#allocation2 + $0x60] sm:$0xf]
      %v953 = vld [vmem:[#allocation2 + $0x64] sm:$0xf]
      %v954 = vld [vmem:[#allocation2 + $0x6c] sm:$0xf]
      %v955 = vld [vmem:[#allocation2 + $0x70] sm:$0xf]
      %v956 = vld [vmem:[#allocation2 + $0x78] sm:$0xf]
      %v957 = vld [vmem:[#allocation2 + $0x7c] sm:$0xf]
      %v958 = vld [vmem:[#allocation2 + $0x84] sm:$0xf]
      %v959 = vld [vmem:[#allocation2 + $0x88] sm:$0xf]
      %v960 = vld [vmem:[#allocation2 + $0x90] sm:$0xf]
      %v961 = vld [vmem:[#allocation2 + $0x94] sm:$0xf]
      %v962 = vld [vmem:[#allocation2 + $0x9c] sm:$0xf]
      %v963 = vld [vmem:[#allocation2 + $0xa0] sm:$0xf]
      %v964 = vld [vmem:[#allocation2 + $0xa8] sm:$0xf]
      %v965 = vld [vmem:[#allocation2 + $0xac] sm:$0xf]
      %v966 = vld [vmem:[#allocation2 + $0xb4] sm:$0xf]
      %v967 = vld [vmem:[#allocation2 + $0xb8] sm:$0xf]
      %v1000 = vunpack.c.l.b16 %v936
      %v1001 = vunpack.c.l.b16 %v937
      %v1002 = vunpack.c.l.b16 %v938
      %v1003 = vunpack.c.l.b16 %v939
      %v1004 = vunpack.c.l.b16 %v940
      %v1005 = vunpack.c.l.b16 %v941
      %v1006 = vunpack.c.l.b16 %v942
      %v1007 = vunpack.c.l.b16 %v943
      %v1008 = vunpack.c.l.b16 %v944
      %v1009 = vunpack.c.l.b16 %v945
      %v1010 = vunpack.c.l.b16 %v946
      %v1011 = vunpack.c.l.b16 %v947
      %v1012 = vunpack.c.l.b16 %v948
      %v1013 = vunpack.c.l.b16 %v949
      %v1014 = vunpack.c.l.b16 %v950
      %v1015 = vunpack.c.l.b16 %v951
      %v1016 = vunpack.c.l.b16 %v952
      %v1017 = vunpack.c.l.b16 %v953
      %v1018 = vunpack.c.l.b16 %v954
      %v1019 = vunpack.c.l.b16 %v955
      %v1020 = vunpack.c.l.b16 %v956
      %v1021 = vunpack.c.l.b16 %v957
      %v1022 = vunpack.c.l.b16 %v958
      %v1023 = vunpack.c.l.b16 %v959
      %v1024 = vunpack.c.l.b16 %v960
      %v1025 = vunpack.c.l.b16 %v961
      %v1026 = vunpack.c.l.b16 %v962
      %v1027 = vunpack.c.l.b16 %v963
      %v1028 = vunpack.c.l.b16 %v964
      %v1029 = vunpack.c.l.b16 %v965
      %v1030 = vunpack.c.l.b16 %v966
      %v1031 = vunpack.c.l.b16 %v967
      %v1032 = vpack.c.b16 %v1001, %v1000
      %v1033 = vpack.c.b16 %v1003, %v1002
      %v1034 = vpack.c.b16 %v1005, %v1004
      %v1035 = vpack.c.b16 %v1007, %v1006
      %v1036 = vpack.c.b16 %v1009, %v1008
      %v1037 = vpack.c.b16 %v1011, %v1010
      %v1038 = vpack.c.b16 %v1013, %v1012
      %v1039 = vpack.c.b16 %v1015, %v1014
      %v1040 = vpack.c.b16 %v1017, %v1016
      %v1041 = vpack.c.b16 %v1019, %v1018
      %v1042 = vpack.c.b16 %v1021, %v1020
      %v1043 = vpack.c.b16 %v1023, %v1022
      %v1044 = vpack.c.b16 %v1025, %v1024
      %v1045 = vpack.c.b16 %v1027, %v1026
      %v1046 = vpack.c.b16 %v1029, %v1028
      %v1047 = vpack.c.b16 %v1031, %v1030
      %vm1064 = vcmask 31744
      %1065 = vst.msk [vmem:[#allocation3] sm:$0xff] %vm1064, %v1032
      %1066 = vst.msk [vmem:[#allocation3 + $0x8] sm:$0xff] %vm1064, %v1033
      %1067 = vst.msk [vmem:[#allocation3 + $0x10] sm:$0xff] %vm1064, %v1034
      %1068 = vst.msk [vmem:[#allocation3 + $0x18] sm:$0xff] %vm1064, %v1035
      %1069 = vst.msk [vmem:[#allocation3 + $0x20] sm:$0xff] %vm1064, %v1036
      %1070 = vst.msk [vmem:[#allocation3 + $0x28] sm:$0xff] %vm1064, %v1037
      %1071 = vst.msk [vmem:[#allocation3 + $0x30] sm:$0xff] %vm1064, %v1038
      %1072 = vst.msk [vmem:[#allocation3 + $0x38] sm:$0xff] %vm1064, %v1039
      %1073 = vst.msk [vmem:[#allocation3 + $0x40] sm:$0xff] %vm1064, %v1040
      %1074 = vst.msk [vmem:[#allocation3 + $0x48] sm:$0xff] %vm1064, %v1041
      %1075 = vst.msk [vmem:[#allocation3 + $0x50] sm:$0xff] %vm1064, %v1042
      %1076 = vst.msk [vmem:[#allocation3 + $0x58] sm:$0xff] %vm1064, %v1043
      %1077 = vst.msk [vmem:[#allocation3 + $0x60] sm:$0xff] %vm1064, %v1044
      %1078 = vst.msk [vmem:[#allocation3 + $0x68] sm:$0xff] %vm1064, %v1045
      %1079 = vst.msk [vmem:[#allocation3 + $0x70] sm:$0xff] %vm1064, %v1046
      %1080 = vst.msk [vmem:[#allocation3 + $0x78] sm:$0xff] %vm1064, %v1047
      %v1081 = vld [vmem:[#allocation2] sm:$0xf]
      %v1082 = vld [vmem:[#allocation2 + $0x4] sm:$0xf]
      %v1083 = vld [vmem:[#allocation2 + $0x8] sm:$0x1]
      %v1084 = vld [vmem:[#allocation2 + $0xc] sm:$0xf]
      %v1085 = vld [vmem:[#allocation2 + $0x10] sm:$0xf]
      %v1086 = vld [vmem:[#allocation2 + $0x14] sm:$0x1]
      %v1087 = vld [vmem:[#allocation2 + $0x18] sm:$0xf]
      %v1088 = vld [vmem:[#allocation2 + $0x1c] sm:$0xf]
      %v1089 = vld [vmem:[#allocation2 + $0x20] sm:$0x1]
      %v1090 = vld [vmem:[#allocation2 + $0x24] sm:$0xf]
      %v1091 = vld [vmem:[#allocation2 + $0x28] sm:$0xf]
      %v1092 = vld [vmem:[#allocation2 + $0x2c] sm:$0x1]
      %v1093 = vld [vmem:[#allocation2 + $0x30] sm:$0xf]
      %v1094 = vld [vmem:[#allocation2 + $0x34] sm:$0xf]
      %v1095 = vld [vmem:[#allocation2 + $0x38] sm:$0x1]
      %v1096 = vld [vmem:[#allocation2 + $0x3c] sm:$0xf]
      %v1097 = vld [vmem:[#allocation2 + $0x40] sm:$0xf]
      %v1098 = vld [vmem:[#allocation2 + $0x44] sm:$0x1]
      %v1099 = vld [vmem:[#allocation2 + $0x48] sm:$0xf]
      %v1100 = vld [vmem:[#allocation2 + $0x4c] sm:$0xf]
      %v1101 = vld [vmem:[#allocation2 + $0x50] sm:$0x1]
      %v1102 = vld [vmem:[#allocation2 + $0x54] sm:$0xf]
      %v1103 = vld [vmem:[#allocation2 + $0x58] sm:$0xf]
      %v1104 = vld [vmem:[#allocation2 + $0x5c] sm:$0x1]
      %v1105 = vld [vmem:[#allocation2 + $0x60] sm:$0xf]
      %v1106 = vld [vmem:[#allocation2 + $0x64] sm:$0xf]
      %v1107 = vld [vmem:[#allocation2 + $0x68] sm:$0x1]
      %v1108 = vld [vmem:[#allocation2 + $0x6c] sm:$0xf]
      %v1109 = vld [vmem:[#allocation2 + $0x70] sm:$0xf]
      %v1110 = vld [vmem:[#allocation2 + $0x74] sm:$0x1]
      %v1111 = vld [vmem:[#allocation2 + $0x78] sm:$0xf]
      %v1112 = vld [vmem:[#allocation2 + $0x7c] sm:$0xf]
      %v1113 = vld [vmem:[#allocation2 + $0x80] sm:$0x1]
      %v1114 = vld [vmem:[#allocation2 + $0x84] sm:$0xf]
      %v1115 = vld [vmem:[#allocation2 + $0x88] sm:$0xf]
      %v1116 = vld [vmem:[#allocation2 + $0x8c] sm:$0x1]
      %v1117 = vld [vmem:[#allocation2 + $0x90] sm:$0xf]
      %v1118 = vld [vmem:[#allocation2 + $0x94] sm:$0xf]
      %v1119 = vld [vmem:[#allocation2 + $0x98] sm:$0x1]
      %v1120 = vld [vmem:[#allocation2 + $0x9c] sm:$0xf]
      %v1121 = vld [vmem:[#allocation2 + $0xa0] sm:$0xf]
      %v1122 = vld [vmem:[#allocation2 + $0xa4] sm:$0x1]
      %v1123 = vld [vmem:[#allocation2 + $0xa8] sm:$0xf]
      %v1124 = vld [vmem:[#allocation2 + $0xac] sm:$0xf]
      %v1125 = vld [vmem:[#allocation2 + $0xb0] sm:$0x1]
      %v1126 = vld [vmem:[#allocation2 + $0xb4] sm:$0xf]
      %v1127 = vld [vmem:[#allocation2 + $0xb8] sm:$0xf]
      %v1128 = vld [vmem:[#allocation2 + $0xbc] sm:$0x1]
      %v1177 = vunpack.c.l.b16 %v1081
      %v1178 = vunpack.c.l.b16 %v1082
      %v1179 = vunpack.c.l.b16 %v1083
      %v1180 = vunpack.c.l.b16 %v1084
      %v1181 = vunpack.c.l.b16 %v1085
      %v1182 = vunpack.c.l.b16 %v1086
      %v1183 = vunpack.c.l.b16 %v1087
      %v1184 = vunpack.c.l.b16 %v1088
      %v1185 = vunpack.c.l.b16 %v1089
      %v1186 = vunpack.c.l.b16 %v1090
      %v1187 = vunpack.c.l.b16 %v1091
      %v1188 = vunpack.c.l.b16 %v1092
      %v1189 = vunpack.c.l.b16 %v1093
      %v1190 = vunpack.c.l.b16 %v1094
      %v1191 = vunpack.c.l.b16 %v1095
      %v1192 = vunpack.c.l.b16 %v1096
      %v1193 = vunpack.c.l.b16 %v1097
      %v1194 = vunpack.c.l.b16 %v1098
      %v1195 = vunpack.c.l.b16 %v1099
      %v1196 = vunpack.c.l.b16 %v1100
      %v1197 = vunpack.c.l.b16 %v1101
      %v1198 = vunpack.c.l.b16 %v1102
      %v1199 = vunpack.c.l.b16 %v1103
      %v1200 = vunpack.c.l.b16 %v1104
      %v1201 = vunpack.c.l.b16 %v1105
      %v1202 = vunpack.c.l.b16 %v1106
      %v1203 = vunpack.c.l.b16 %v1107
      %v1204 = vunpack.c.l.b16 %v1108
      %v1205 = vunpack.c.l.b16 %v1109
      %v1206 = vunpack.c.l.b16 %v1110
      %v1207 = vunpack.c.l.b16 %v1111
      %v1208 = vunpack.c.l.b16 %v1112
      %v1209 = vunpack.c.l.b16 %v1113
      %v1210 = vunpack.c.l.b16 %v1114
      %v1211 = vunpack.c.l.b16 %v1115
      %v1212 = vunpack.c.l.b16 %v1116
      %v1213 = vunpack.c.l.b16 %v1117
      %v1214 = vunpack.c.l.b16 %v1118
      %v1215 = vunpack.c.l.b16 %v1119
      %v1216 = vunpack.c.l.b16 %v1120
      %v1217 = vunpack.c.l.b16 %v1121
      %v1218 = vunpack.c.l.b16 %v1122
      %v1219 = vunpack.c.l.b16 %v1123
      %v1220 = vunpack.c.l.b16 %v1124
      %v1221 = vunpack.c.l.b16 %v1125
      %v1222 = vunpack.c.l.b16 %v1126
      %v1223 = vunpack.c.l.b16 %v1127
      %v1224 = vunpack.c.l.b16 %v1128
      %v1225 = vpack.c.b16 %v1178, %v1177
      %v1226 = vpack.c.b16 %v1179, %v1179
      %v1227 = vpack.c.b16 %v1181, %v1180
      %v1228 = vpack.c.b16 %v1182, %v1182
      %v1229 = vpack.c.b16 %v1184, %v1183
      %v1230 = vpack.c.b16 %v1185, %v1185
      %v1231 = vpack.c.b16 %v1187, %v1186
      %v1232 = vpack.c.b16 %v1188, %v1188
      %v1233 = vpack.c.b16 %v1190, %v1189
      %v1234 = vpack.c.b16 %v1191, %v1191
      %v1235 = vpack.c.b16 %v1193, %v1192
      %v1236 = vpack.c.b16 %v1194, %v1194
      %v1237 = vpack.c.b16 %v1196, %v1195
      %v1238 = vpack.c.b16 %v1197, %v1197
      %v1239 = vpack.c.b16 %v1199, %v1198
      %v1240 = vpack.c.b16 %v1200, %v1200
      %v1241 = vpack.c.b16 %v1202, %v1201
      %v1242 = vpack.c.b16 %v1203, %v1203
      %v1243 = vpack.c.b16 %v1205, %v1204
      %v1244 = vpack.c.b16 %v1206, %v1206
      %v1245 = vpack.c.b16 %v1208, %v1207
      %v1246 = vpack.c.b16 %v1209, %v1209
      %v1247 = vpack.c.b16 %v1211, %v1210
      %v1248 = vpack.c.b16 %v1212, %v1212
      %v1249 = vpack.c.b16 %v1214, %v1213
      %v1250 = vpack.c.b16 %v1215, %v1215
      %v1251 = vpack.c.b16 %v1217, %v1216
      %v1252 = vpack.c.b16 %v1218, %v1218
      %v1253 = vpack.c.b16 %v1220, %v1219
      %v1254 = vpack.c.b16 %v1221, %v1221
      %v1255 = vpack.c.b16 %v1223, %v1222
      %v1256 = vpack.c.b16 %v1224, %v1224
      %vm1257 = vsmask.f32 7424
      %v1259 = vshrl.u32 %v1225, 16
      %v1261 = vshll.u32 %v1225, 16
      %v1263 = vrot.slane %v1261, 1
      %v1264 = vor.u32 %v1259, %v1263
      %v1266 = vshll.u32 %v1226, 16
      %v1268 = vrot.slane %v1266, 1
      %v1269 = vsel %vm1257, %v1264, %v1268
      %v1271 = vshrl.u32 %v1227, 16
      %v1273 = vshll.u32 %v1227, 16
      %v1275 = vrot.slane %v1273, 1
      %v1276 = vor.u32 %v1271, %v1275
      %v1278 = vshll.u32 %v1228, 16
      %v1280 = vrot.slane %v1278, 1
      %v1281 = vsel %vm1257, %v1276, %v1280
      %v1283 = vshrl.u32 %v1229, 16
      %v1285 = vshll.u32 %v1229, 16
      %v1287 = vrot.slane %v1285, 1
      %v1288 = vor.u32 %v1283, %v1287
      %v1290 = vshll.u32 %v1230, 16
      %v1292 = vrot.slane %v1290, 1
      %v1293 = vsel %vm1257, %v1288, %v1292
      %v1295 = vshrl.u32 %v1231, 16
      %v1297 = vshll.u32 %v1231, 16
      %v1299 = vrot.slane %v1297, 1
      %v1300 = vor.u32 %v1295, %v1299
      %v1302 = vshll.u32 %v1232, 16
      %v1304 = vrot.slane %v1302, 1
      %v1305 = vsel %vm1257, %v1300, %v1304
      %v1307 = vshrl.u32 %v1233, 16
      %v1309 = vshll.u32 %v1233, 16
      %v1311 = vrot.slane %v1309, 1
      %v1312 = vor.u32 %v1307, %v1311
      %v1314 = vshll.u32 %v1234, 16
      %v1316 = vrot.slane %v1314, 1
      %v1317 = vsel %vm1257, %v1312, %v1316
      %v1319 = vshrl.u32 %v1235, 16
      %v1321 = vshll.u32 %v1235, 16
      %v1323 = vrot.slane %v1321, 1
      %v1324 = vor.u32 %v1319, %v1323
      %v1326 = vshll.u32 %v1236, 16
      %v1328 = vrot.slane %v1326, 1
      %v1329 = vsel %vm1257, %v1324, %v1328
      %v1331 = vshrl.u32 %v1237, 16
      %v1333 = vshll.u32 %v1237, 16
      %v1335 = vrot.slane %v1333, 1
      %v1336 = vor.u32 %v1331, %v1335
      %v1338 = vshll.u32 %v1238, 16
      %v1340 = vrot.slane %v1338, 1
      %v1341 = vsel %vm1257, %v1336, %v1340
      %v1343 = vshrl.u32 %v1239, 16
      %v1345 = vshll.u32 %v1239, 16
      %v1347 = vrot.slane %v1345, 1
      %v1348 = vor.u32 %v1343, %v1347
      %v1350 = vshll.u32 %v1240, 16
      %v1352 = vrot.slane %v1350, 1
      %v1353 = vsel %vm1257, %v1348, %v1352
      %v1355 = vshrl.u32 %v1241, 16
      %v1357 = vshll.u32 %v1241, 16
      %v1359 = vrot.slane %v1357, 1
      %v1360 = vor.u32 %v1355, %v1359
      %v1362 = vshll.u32 %v1242, 16
      %v1364 = vrot.slane %v1362, 1
      %v1365 = vsel %vm1257, %v1360, %v1364
      %v1367 = vshrl.u32 %v1243, 16
      %v1369 = vshll.u32 %v1243, 16
      %v1371 = vrot.slane %v1369, 1
      %v1372 = vor.u32 %v1367, %v1371
      %v1374 = vshll.u32 %v1244, 16
      %v1376 = vrot.slane %v1374, 1
      %v1377 = vsel %vm1257, %v1372, %v1376
      %v1379 = vshrl.u32 %v1245, 16
      %v1381 = vshll.u32 %v1245, 16
      %v1383 = vrot.slane %v1381, 1
      %v1384 = vor.u32 %v1379, %v1383
      %v1386 = vshll.u32 %v1246, 16
      %v1388 = vrot.slane %v1386, 1
      %v1389 = vsel %vm1257, %v1384, %v1388
      %v1391 = vshrl.u32 %v1247, 16
      %v1393 = vshll.u32 %v1247, 16
      %v1395 = vrot.slane %v1393, 1
      %v1396 = vor.u32 %v1391, %v1395
      %v1398 = vshll.u32 %v1248, 16
      %v1400 = vrot.slane %v1398, 1
      %v1401 = vsel %vm1257, %v1396, %v1400
      %v1403 = vshrl.u32 %v1249, 16
      %v1405 = vshll.u32 %v1249, 16
      %v1407 = vrot.slane %v1405, 1
      %v1408 = vor.u32 %v1403, %v1407
      %v1410 = vshll.u32 %v1250, 16
      %v1412 = vrot.slane %v1410, 1
      %v1413 = vsel %vm1257, %v1408, %v1412
      %v1415 = vshrl.u32 %v1251, 16
      %v1417 = vshll.u32 %v1251, 16
      %v1419 = vrot.slane %v1417, 1
      %v1420 = vor.u32 %v1415, %v1419
      %v1422 = vshll.u32 %v1252, 16
      %v1424 = vrot.slane %v1422, 1
      %v1425 = vsel %vm1257, %v1420, %v1424
      %v1427 = vshrl.u32 %v1253, 16
      %v1429 = vshll.u32 %v1253, 16
      %v1431 = vrot.slane %v1429, 1
      %v1432 = vor.u32 %v1427, %v1431
      %v1434 = vshll.u32 %v1254, 16
      %v1436 = vrot.slane %v1434, 1
      %v1437 = vsel %vm1257, %v1432, %v1436
      %v1439 = vshrl.u32 %v1255, 16
      %v1441 = vshll.u32 %v1255, 16
      %v1443 = vrot.slane %v1441, 1
      %v1444 = vor.u32 %v1439, %v1443
      %v1446 = vshll.u32 %v1256, 16
      %v1448 = vrot.slane %v1446, 1
      %v1449 = vsel %vm1257, %v1444, %v1448
      %1450 = vrot.lane.b32.xlu0 %v1269, 4
      %v1451 = vpop.permute.xlu0 %1450
      %1452 = vrot.lane.b32.xlu0 %v1281, 4
      %v1453 = vpop.permute.xlu0 %1452
      %1454 = vrot.lane.b32.xlu0 %v1293, 4
      %v1455 = vpop.permute.xlu0 %1454
      %1456 = vrot.lane.b32.xlu0 %v1305, 4
      %v1457 = vpop.permute.xlu0 %1456
      %1458 = vrot.lane.b32.xlu0 %v1317, 4
      %v1459 = vpop.permute.xlu0 %1458
      %1460 = vrot.lane.b32.xlu0 %v1329, 4
      %v1461 = vpop.permute.xlu0 %1460
      %1462 = vrot.lane.b32.xlu0 %v1341, 4
      %v1463 = vpop.permute.xlu0 %1462
      %1464 = vrot.lane.b32.xlu0 %v1353, 4
      %v1465 = vpop.permute.xlu0 %1464
      %1466 = vrot.lane.b32.xlu0 %v1365, 4
      %v1467 = vpop.permute.xlu0 %1466
      %1468 = vrot.lane.b32.xlu0 %v1377, 4
      %v1469 = vpop.permute.xlu0 %1468
      %1470 = vrot.lane.b32.xlu0 %v1389, 4
      %v1471 = vpop.permute.xlu0 %1470
      %1472 = vrot.lane.b32.xlu0 %v1401, 4
      %v1473 = vpop.permute.xlu0 %1472
      %1474 = vrot.lane.b32.xlu0 %v1413, 4
      %v1475 = vpop.permute.xlu0 %1474
      %1476 = vrot.lane.b32.xlu0 %v1425, 4
      %v1477 = vpop.permute.xlu0 %1476
      %1478 = vrot.lane.b32.xlu0 %v1437, 4
      %v1479 = vpop.permute.xlu0 %1478
      %1480 = vrot.lane.b32.xlu0 %v1449, 4
      %v1481 = vpop.permute.xlu0 %1480
      %vm1498 = vcmask 64544
      %1499 = vst.msk [vmem:[#allocation3] sm:$0xff] %vm1498, %v1451
      %1500 = vst.msk [vmem:[#allocation3 + $0x8] sm:$0xff] %vm1498, %v1453
      %1501 = vst.msk [vmem:[#allocation3 + $0x10] sm:$0xff] %vm1498, %v1455
      %1502 = vst.msk [vmem:[#allocation3 + $0x18] sm:$0xff] %vm1498, %v1457
      %1503 = vst.msk [vmem:[#allocation3 + $0x20] sm:$0xff] %vm1498, %v1459
      %1504 = vst.msk [vmem:[#allocation3 + $0x28] sm:$0xff] %vm1498, %v1461
      %1505 = vst.msk [vmem:[#allocation3 + $0x30] sm:$0xff] %vm1498, %v1463
      %1506 = vst.msk [vmem:[#allocation3 + $0x38] sm:$0xff] %vm1498, %v1465
      %1507 = vst.msk [vmem:[#allocation3 + $0x40] sm:$0xff] %vm1498, %v1467
      %1508 = vst.msk [vmem:[#allocation3 + $0x48] sm:$0xff] %vm1498, %v1469
      %1509 = vst.msk [vmem:[#allocation3 + $0x50] sm:$0xff] %vm1498, %v1471
      %1510 = vst.msk [vmem:[#allocation3 + $0x58] sm:$0xff] %vm1498, %v1473
      %1511 = vst.msk [vmem:[#allocation3 + $0x60] sm:$0xff] %vm1498, %v1475
      %1512 = vst.msk [vmem:[#allocation3 + $0x68] sm:$0xff] %vm1498, %v1477
      %1513 = vst.msk [vmem:[#allocation3 + $0x70] sm:$0xff] %vm1498, %v1479
      %1514 = vst.msk [vmem:[#allocation3 + $0x78] sm:$0xff] %vm1498, %v1481
      %v1515 = vld [vmem:[#allocation2] sm:$0xe]
      %v1516 = vld [vmem:[#allocation2 + $0x4] sm:$0xf]
      %v1517 = vld [vmem:[#allocation2 + $0x8] sm:$0x1]
      %v1518 = vld [vmem:[#allocation2 + $0xc] sm:$0xe]
      %v1519 = vld [vmem:[#allocation2 + $0x10] sm:$0xf]
      %v1520 = vld [vmem:[#allocation2 + $0x14] sm:$0x1]
      %v1521 = vld [vmem:[#allocation2 + $0x18] sm:$0xe]
      %v1522 = vld [vmem:[#allocation2 + $0x1c] sm:$0xf]
      %v1523 = vld [vmem:[#allocation2 + $0x20] sm:$0x1]
      %v1524 = vld [vmem:[#allocation2 + $0x24] sm:$0xe]
      %v1525 = vld [vmem:[#allocation2 + $0x28] sm:$0xf]
      %v1526 = vld [vmem:[#allocation2 + $0x2c] sm:$0x1]
      %v1527 = vld [vmem:[#allocation2 + $0x30] sm:$0xe]
      %v1528 = vld [vmem:[#allocation2 + $0x34] sm:$0xf]
      %v1529 = vld [vmem:[#allocation2 + $0x38] sm:$0x1]
      %v1530 = vld [vmem:[#allocation2 + $0x3c] sm:$0xe]
      %v1531 = vld [vmem:[#allocation2 + $0x40] sm:$0xf]
      %v1532 = vld [vmem:[#allocation2 + $0x44] sm:$0x1]
      %v1533 = vld [vmem:[#allocation2 + $0x48] sm:$0xe]
      %v1534 = vld [vmem:[#allocation2 + $0x4c] sm:$0xf]
      %v1535 = vld [vmem:[#allocation2 + $0x50] sm:$0x1]
      %v1536 = vld [vmem:[#allocation2 + $0x54] sm:$0xe]
      %v1537 = vld [vmem:[#allocation2 + $0x58] sm:$0xf]
      %v1538 = vld [vmem:[#allocation2 + $0x5c] sm:$0x1]
      %v1539 = vld [vmem:[#allocation2 + $0x60] sm:$0xe]
      %v1540 = vld [vmem:[#allocation2 + $0x64] sm:$0xf]
      %v1541 = vld [vmem:[#allocation2 + $0x68] sm:$0x1]
      %v1542 = vld [vmem:[#allocation2 + $0x6c] sm:$0xe]
      %v1543 = vld [vmem:[#allocation2 + $0x70] sm:$0xf]
      %v1544 = vld [vmem:[#allocation2 + $0x74] sm:$0x1]
      %v1545 = vld [vmem:[#allocation2 + $0x78] sm:$0xe]
      %v1546 = vld [vmem:[#allocation2 + $0x7c] sm:$0xf]
      %v1547 = vld [vmem:[#allocation2 + $0x80] sm:$0x1]
      %v1548 = vld [vmem:[#allocation2 + $0x84] sm:$0xe]
      %v1549 = vld [vmem:[#allocation2 + $0x88] sm:$0xf]
      %v1550 = vld [vmem:[#allocation2 + $0x8c] sm:$0x1]
      %v1551 = vld [vmem:[#allocation2 + $0x90] sm:$0xe]
      %v1552 = vld [vmem:[#allocation2 + $0x94] sm:$0xf]
      %v1553 = vld [vmem:[#allocation2 + $0x98] sm:$0x1]
      %v1554 = vld [vmem:[#allocation2 + $0x9c] sm:$0xe]
      %v1555 = vld [vmem:[#allocation2 + $0xa0] sm:$0xf]
      %v1556 = vld [vmem:[#allocation2 + $0xa4] sm:$0x1]
      %v1557 = vld [vmem:[#allocation2 + $0xa8] sm:$0xe]
      %v1558 = vld [vmem:[#allocation2 + $0xac] sm:$0xf]
      %v1559 = vld [vmem:[#allocation2 + $0xb0] sm:$0x1]
      %v1560 = vld [vmem:[#allocation2 + $0xb4] sm:$0xe]
      %v1561 = vld [vmem:[#allocation2 + $0xb8] sm:$0xf]
      %v1562 = vld [vmem:[#allocation2 + $0xbc] sm:$0x1]
      %v1611 = vunpack.c.l.b16 %v1515
      %v1612 = vunpack.c.l.b16 %v1516
      %v1613 = vunpack.c.l.b16 %v1517
      %v1614 = vunpack.c.l.b16 %v1518
      %v1615 = vunpack.c.l.b16 %v1519
      %v1616 = vunpack.c.l.b16 %v1520
      %v1617 = vunpack.c.l.b16 %v1521
      %v1618 = vunpack.c.l.b16 %v1522
      %v1619 = vunpack.c.l.b16 %v1523
      %v1620 = vunpack.c.l.b16 %v1524
      %v1621 = vunpack.c.l.b16 %v1525
      %v1622 = vunpack.c.l.b16 %v1526
      %v1623 = vunpack.c.l.b16 %v1527
      %v1624 = vunpack.c.l.b16 %v1528
      %v1625 = vunpack.c.l.b16 %v1529
      %v1626 = vunpack.c.l.b16 %v1530
      %v1627 = vunpack.c.l.b16 %v1531
      %v1628 = vunpack.c.l.b16 %v1532
      %v1629 = vunpack.c.l.b16 %v1533
      %v1630 = vunpack.c.l.b16 %v1534
      %v1631 = vunpack.c.l.b16 %v1535
      %v1632 = vunpack.c.l.b16 %v1536
      %v1633 = vunpack.c.l.b16 %v1537
      %v1634 = vunpack.c.l.b16 %v1538
      %v1635 = vunpack.c.l.b16 %v1539
      %v1636 = vunpack.c.l.b16 %v1540
      %v1637 = vunpack.c.l.b16 %v1541
      %v1638 = vunpack.c.l.b16 %v1542
      %v1639 = vunpack.c.l.b16 %v1543
      %v1640 = vunpack.c.l.b16 %v1544
      %v1641 = vunpack.c.l.b16 %v1545
      %v1642 = vunpack.c.l.b16 %v1546
      %v1643 = vunpack.c.l.b16 %v1547
      %v1644 = vunpack.c.l.b16 %v1548
      %v1645 = vunpack.c.l.b16 %v1549
      %v1646 = vunpack.c.l.b16 %v1550
      %v1647 = vunpack.c.l.b16 %v1551
      %v1648 = vunpack.c.l.b16 %v1552
      %v1649 = vunpack.c.l.b16 %v1553
      %v1650 = vunpack.c.l.b16 %v1554
      %v1651 = vunpack.c.l.b16 %v1555
      %v1652 = vunpack.c.l.b16 %v1556
      %v1653 = vunpack.c.l.b16 %v1557
      %v1654 = vunpack.c.l.b16 %v1558
      %v1655 = vunpack.c.l.b16 %v1559
      %v1656 = vunpack.c.l.b16 %v1560
      %v1657 = vunpack.c.l.b16 %v1561
      %v1658 = vunpack.c.l.b16 %v1562
      %v1659 = vpack.c.b16 %v1612, %v1611
      %v1660 = vpack.c.b16 %v1613, %v1613
      %v1661 = vpack.c.b16 %v1615, %v1614
      %v1662 = vpack.c.b16 %v1616, %v1616
      %v1663 = vpack.c.b16 %v1618, %v1617
      %v1664 = vpack.c.b16 %v1619, %v1619
      %v1665 = vpack.c.b16 %v1621, %v1620
      %v1666 = vpack.c.b16 %v1622, %v1622
      %v1667 = vpack.c.b16 %v1624, %v1623
      %v1668 = vpack.c.b16 %v1625, %v1625
      %v1669 = vpack.c.b16 %v1627, %v1626
      %v1670 = vpack.c.b16 %v1628, %v1628
      %v1671 = vpack.c.b16 %v1630, %v1629
      %v1672 = vpack.c.b16 %v1631, %v1631
      %v1673 = vpack.c.b16 %v1633, %v1632
      %v1674 = vpack.c.b16 %v1634, %v1634
      %v1675 = vpack.c.b16 %v1636, %v1635
      %v1676 = vpack.c.b16 %v1637, %v1637
      %v1677 = vpack.c.b16 %v1639, %v1638
      %v1678 = vpack.c.b16 %v1640, %v1640
      %v1679 = vpack.c.b16 %v1642, %v1641
      %v1680 = vpack.c.b16 %v1643, %v1643
      %v1681 = vpack.c.b16 %v1645, %v1644
      %v1682 = vpack.c.b16 %v1646, %v1646
      %v1683 = vpack.c.b16 %v1648, %v1647
      %v1684 = vpack.c.b16 %v1649, %v1649
      %v1685 = vpack.c.b16 %v1651, %v1650
      %v1686 = vpack.c.b16 %v1652, %v1652
      %v1687 = vpack.c.b16 %v1654, %v1653
      %v1688 = vpack.c.b16 %v1655, %v1655
      %v1689 = vpack.c.b16 %v1657, %v1656
      %v1690 = vpack.c.b16 %v1658, %v1658
      %vm1691 = vcmask 1046528
      %v1692 = vrot.slane %v1659, 1
      %v1693 = vrot.slane %v1660, 1
      %v1694 = vsel %vm1691, %v1692, %v1693
      %v1695 = vrot.slane %v1661, 1
      %v1696 = vrot.slane %v1662, 1
      %v1697 = vsel %vm1691, %v1695, %v1696
      %v1698 = vrot.slane %v1663, 1
      %v1699 = vrot.slane %v1664, 1
      %v1700 = vsel %vm1691, %v1698, %v1699
      %v1701 = vrot.slane %v1665, 1
      %v1702 = vrot.slane %v1666, 1
      %v1703 = vsel %vm1691, %v1701, %v1702
      %v1704 = vrot.slane %v1667, 1
      %v1705 = vrot.slane %v1668, 1
      %v1706 = vsel %vm1691, %v1704, %v1705
      %v1707 = vrot.slane %v1669, 1
      %v1708 = vrot.slane %v1670, 1
      %v1709 = vsel %vm1691, %v1707, %v1708
      %v1710 = vrot.slane %v1671, 1
      %v1711 = vrot.slane %v1672, 1
      %v1712 = vsel %vm1691, %v1710, %v1711
      %v1713 = vrot.slane %v1673, 1
      %v1714 = vrot.slane %v1674, 1
      %v1715 = vsel %vm1691, %v1713, %v1714
      %v1716 = vrot.slane %v1675, 1
      %v1717 = vrot.slane %v1676, 1
      %v1718 = vsel %vm1691, %v1716, %v1717
      %v1719 = vrot.slane %v1677, 1
      %v1720 = vrot.slane %v1678, 1
      %v1721 = vsel %vm1691, %v1719, %v1720
      %v1722 = vrot.slane %v1679, 1
      %v1723 = vrot.slane %v1680, 1
      %v1724 = vsel %vm1691, %v1722, %v1723
      %v1725 = vrot.slane %v1681, 1
      %v1726 = vrot.slane %v1682, 1
      %v1727 = vsel %vm1691, %v1725, %v1726
      %v1728 = vrot.slane %v1683, 1
      %v1729 = vrot.slane %v1684, 1
      %v1730 = vsel %vm1691, %v1728, %v1729
      %v1731 = vrot.slane %v1685, 1
      %v1732 = vrot.slane %v1686, 1
      %v1733 = vsel %vm1691, %v1731, %v1732
      %v1734 = vrot.slane %v1687, 1
      %v1735 = vrot.slane %v1688, 1
      %v1736 = vsel %vm1691, %v1734, %v1735
      %v1737 = vrot.slane %v1689, 1
      %v1738 = vrot.slane %v1690, 1
      %v1739 = vsel %vm1691, %v1737, %v1738
      %1740 = vrot.lane.b32.xlu0 %v1694, 8
      %v1741 = vpop.permute.xlu0 %1740
      %1742 = vrot.lane.b32.xlu0 %v1697, 8
      %v1743 = vpop.permute.xlu0 %1742
      %1744 = vrot.lane.b32.xlu0 %v1700, 8
      %v1745 = vpop.permute.xlu0 %1744
      %1746 = vrot.lane.b32.xlu0 %v1703, 8
      %v1747 = vpop.permute.xlu0 %1746
      %1748 = vrot.lane.b32.xlu0 %v1706, 8
      %v1749 = vpop.permute.xlu0 %1748
      %1750 = vrot.lane.b32.xlu0 %v1709, 8
      %v1751 = vpop.permute.xlu0 %1750
      %1752 = vrot.lane.b32.xlu0 %v1712, 8
      %v1753 = vpop.permute.xlu0 %1752
      %1754 = vrot.lane.b32.xlu0 %v1715, 8
      %v1755 = vpop.permute.xlu0 %1754
      %1756 = vrot.lane.b32.xlu0 %v1718, 8
      %v1757 = vpop.permute.xlu0 %1756
      %1758 = vrot.lane.b32.xlu0 %v1721, 8
      %v1759 = vpop.permute.xlu0 %1758
      %1760 = vrot.lane.b32.xlu0 %v1724, 8
      %v1761 = vpop.permute.xlu0 %1760
      %1762 = vrot.lane.b32.xlu0 %v1727, 8
      %v1763 = vpop.permute.xlu0 %1762
      %1764 = vrot.lane.b32.xlu0 %v1730, 8
      %v1765 = vpop.permute.xlu0 %1764
      %1766 = vrot.lane.b32.xlu0 %v1733, 8
      %v1767 = vpop.permute.xlu0 %1766
      %1768 = vrot.lane.b32.xlu0 %v1736, 8
      %v1769 = vpop.permute.xlu0 %1768
      %1770 = vrot.lane.b32.xlu0 %v1739, 8
      %v1771 = vpop.permute.xlu0 %1770
      %vm1788 = vcmask 97344
      %1789 = vst.msk [vmem:[#allocation3] sm:$0xff] %vm1788, %v1741
      %1790 = vst.msk [vmem:[#allocation3 + $0x8] sm:$0xff] %vm1788, %v1743
      %1791 = vst.msk [vmem:[#allocation3 + $0x10] sm:$0xff] %vm1788, %v1745
      %1792 = vst.msk [vmem:[#allocation3 + $0x18] sm:$0xff] %vm1788, %v1747
      %1793 = vst.msk [vmem:[#allocation3 + $0x20] sm:$0xff] %vm1788, %v1749
      %1794 = vst.msk [vmem:[#allocation3 + $0x28] sm:$0xff] %vm1788, %v1751
      %1795 = vst.msk [vmem:[#allocation3 + $0x30] sm:$0xff] %vm1788, %v1753
      %1796 = vst.msk [vmem:[#allocation3 + $0x38] sm:$0xff] %vm1788, %v1755
      %1797 = vst.msk [vmem:[#allocation3 + $0x40] sm:$0xff] %vm1788, %v1757
      %1798 = vst.msk [vmem:[#allocation3 + $0x48] sm:$0xff] %vm1788, %v1759
      %1799 = vst.msk [vmem:[#allocation3 + $0x50] sm:$0xff] %vm1788, %v1761
      %1800 = vst.msk [vmem:[#allocation3 + $0x58] sm:$0xff] %vm1788, %v1763
      %1801 = vst.msk [vmem:[#allocation3 + $0x60] sm:$0xff] %vm1788, %v1765
      %1802 = vst.msk [vmem:[#allocation3 + $0x68] sm:$0xff] %vm1788, %v1767
      %1803 = vst.msk [vmem:[#allocation3 + $0x70] sm:$0xff] %vm1788, %v1769
      %1804 = vst.msk [vmem:[#allocation3 + $0x78] sm:$0xff] %vm1788, %v1771
      %v1805 = vld [vmem:[%s821] sm:$0xf]
      %v1806 = vld [vmem:[%s821 + $0x4] sm:$0xf]
      %v1807 = vld [vmem:[%s821 + $0xc] sm:$0xf]
      %v1808 = vld [vmem:[%s821 + $0x10] sm:$0xf]
      %v1809 = vld [vmem:[%s821 + $0x18] sm:$0xf]
      %v1810 = vld [vmem:[%s821 + $0x1c] sm:$0xf]
      %v1811 = vld [vmem:[%s821 + $0x24] sm:$0xf]
      %v1812 = vld [vmem:[%s821 + $0x28] sm:$0xf]
      %v1813 = vld [vmem:[%s821 + $0x30] sm:$0xf]
      %v1814 = vld [vmem:[%s821 + $0x34] sm:$0xf]
      %v1815 = vld [vmem:[%s821 + $0x3c] sm:$0xf]
      %v1816 = vld [vmem:[%s821 + $0x40] sm:$0xf]
      %v1817 = vld [vmem:[%s821 + $0x48] sm:$0xf]
      %v1818 = vld [vmem:[%s821 + $0x4c] sm:$0xf]
      %v1819 = vld [vmem:[%s821 + $0x54] sm:$0xf]
      %v1820 = vld [vmem:[%s821 + $0x58] sm:$0xf]
      %v1821 = vld [vmem:[%s821 + $0x60] sm:$0xf]
      %v1822 = vld [vmem:[%s821 + $0x64] sm:$0xf]
      %v1823 = vld [vmem:[%s821 + $0x6c] sm:$0xf]
      %v1824 = vld [vmem:[%s821 + $0x70] sm:$0xf]
      %v1825 = vld [vmem:[%s821 + $0x78] sm:$0xf]
      %v1826 = vld [vmem:[%s821 + $0x7c] sm:$0xf]
      %v1827 = vld [vmem:[%s821 + $0x84] sm:$0xf]
      %v1828 = vld [vmem:[%s821 + $0x88] sm:$0xf]
      %v1829 = vld [vmem:[%s821 + $0x90] sm:$0xf]
      %v1830 = vld [vmem:[%s821 + $0x94] sm:$0xf]
      %v1831 = vld [vmem:[%s821 + $0x9c] sm:$0xf]
      %v1832 = vld [vmem:[%s821 + $0xa0] sm:$0xf]
      %v1833 = vld [vmem:[%s821 + $0xa8] sm:$0xf]
      %v1834 = vld [vmem:[%s821 + $0xac] sm:$0xf]
      %v1835 = vld [vmem:[%s821 + $0xb4] sm:$0xf]
      %v1836 = vld [vmem:[%s821 + $0xb8] sm:$0xf]
      %v1869 = vunpack.c.l.b16 %v1805
      %v1870 = vunpack.c.l.b16 %v1806
      %v1871 = vunpack.c.l.b16 %v1807
      %v1872 = vunpack.c.l.b16 %v1808
      %v1873 = vunpack.c.l.b16 %v1809
      %v1874 = vunpack.c.l.b16 %v1810
      %v1875 = vunpack.c.l.b16 %v1811
      %v1876 = vunpack.c.l.b16 %v1812
      %v1877 = vunpack.c.l.b16 %v1813
      %v1878 = vunpack.c.l.b16 %v1814
      %v1879 = vunpack.c.l.b16 %v1815
      %v1880 = vunpack.c.l.b16 %v1816
      %v1881 = vunpack.c.l.b16 %v1817
      %v1882 = vunpack.c.l.b16 %v1818
      %v1883 = vunpack.c.l.b16 %v1819
      %v1884 = vunpack.c.l.b16 %v1820
      %v1885 = vunpack.c.l.b16 %v1821
      %v1886 = vunpack.c.l.b16 %v1822
      %v1887 = vunpack.c.l.b16 %v1823
      %v1888 = vunpack.c.l.b16 %v1824
      %v1889 = vunpack.c.l.b16 %v1825
      %v1890 = vunpack.c.l.b16 %v1826
      %v1891 = vunpack.c.l.b16 %v1827
      %v1892 = vunpack.c.l.b16 %v1828
      %v1893 = vunpack.c.l.b16 %v1829
      %v1894 = vunpack.c.l.b16 %v1830
      %v1895 = vunpack.c.l.b16 %v1831
      %v1896 = vunpack.c.l.b16 %v1832
      %v1897 = vunpack.c.l.b16 %v1833
      %v1898 = vunpack.c.l.b16 %v1834
      %v1899 = vunpack.c.l.b16 %v1835
      %v1900 = vunpack.c.l.b16 %v1836
      %v1901 = vpack.c.b16 %v1870, %v1869
      %v1902 = vpack.c.b16 %v1872, %v1871
      %v1903 = vpack.c.b16 %v1874, %v1873
      %v1904 = vpack.c.b16 %v1876, %v1875
      %v1905 = vpack.c.b16 %v1878, %v1877
      %v1906 = vpack.c.b16 %v1880, %v1879
      %v1907 = vpack.c.b16 %v1882, %v1881
      %v1908 = vpack.c.b16 %v1884, %v1883
      %v1909 = vpack.c.b16 %v1886, %v1885
      %v1910 = vpack.c.b16 %v1888, %v1887
      %v1911 = vpack.c.b16 %v1890, %v1889
      %v1912 = vpack.c.b16 %v1892, %v1891
      %v1913 = vpack.c.b16 %v1894, %v1893
      %v1914 = vpack.c.b16 %v1896, %v1895
      %v1915 = vpack.c.b16 %v1898, %v1897
      %v1916 = vpack.c.b16 %v1900, %v1899
      %1917 = vrot.lane.b32.xlu0 %v1901, 12
      %v1918 = vpop.permute.xlu0 %1917
      %1919 = vrot.lane.b32.xlu0 %v1902, 12
      %v1920 = vpop.permute.xlu0 %1919
      %1921 = vrot.lane.b32.xlu0 %v1903, 12
      %v1922 = vpop.permute.xlu0 %1921
      %1923 = vrot.lane.b32.xlu0 %v1904, 12
      %v1924 = vpop.permute.xlu0 %1923
      %1925 = vrot.lane.b32.xlu0 %v1905, 12
      %v1926 = vpop.permute.xlu0 %1925
      %1927 = vrot.lane.b32.xlu0 %v1906, 12
      %v1928 = vpop.permute.xlu0 %1927
      %1929 = vrot.lane.b32.xlu0 %v1907, 12
      %v1930 = vpop.permute.xlu0 %1929
      %1931 = vrot.lane.b32.xlu0 %v1908, 12
      %v1932 = vpop.permute.xlu0 %1931
      %1933 = vrot.lane.b32.xlu0 %v1909, 12
      %v1934 = vpop.permute.xlu0 %1933
      %1935 = vrot.lane.b32.xlu0 %v1910, 12
      %v1936 = vpop.permute.xlu0 %1935
      %1937 = vrot.lane.b32.xlu0 %v1911, 12
      %v1938 = vpop.permute.xlu0 %1937
      %1939 = vrot.lane.b32.xlu0 %v1912, 12
      %v1940 = vpop.permute.xlu0 %1939
      %1941 = vrot.lane.b32.xlu0 %v1913, 12
      %v1942 = vpop.permute.xlu0 %1941
      %1943 = vrot.lane.b32.xlu0 %v1914, 12
      %v1944 = vpop.permute.xlu0 %1943
      %1945 = vrot.lane.b32.xlu0 %v1915, 12
      %v1946 = vpop.permute.xlu0 %1945
      %1947 = vrot.lane.b32.xlu0 %v1916, 12
      %v1948 = vpop.permute.xlu0 %1947
      %vm1965 = vcmask 130144
      %1966 = vst.msk [vmem:[#allocation3] sm:$0xff] %vm1965, %v1918
      %1967 = vst.msk [vmem:[#allocation3 + $0x8] sm:$0xff] %vm1965, %v1920
      %1968 = vst.msk [vmem:[#allocation3 + $0x10] sm:$0xff] %vm1965, %v1922
      %1969 = vst.msk [vmem:[#allocation3 + $0x18] sm:$0xff] %vm1965, %v1924
      %1970 = vst.msk [vmem:[#allocation3 + $0x20] sm:$0xff] %vm1965, %v1926
      %1971 = vst.msk [vmem:[#allocation3 + $0x28] sm:$0xff] %vm1965, %v1928
      %1972 = vst.msk [vmem:[#allocation3 + $0x30] sm:$0xff] %vm1965, %v1930
      %1973 = vst.msk [vmem:[#allocation3 + $0x38] sm:$0xff] %vm1965, %v1932
      %1974 = vst.msk [vmem:[#allocation3 + $0x40] sm:$0xff] %vm1965, %v1934
      %1975 = vst.msk [vmem:[#allocation3 + $0x48] sm:$0xff] %vm1965, %v1936
      %1976 = vst.msk [vmem:[#allocation3 + $0x50] sm:$0xff] %vm1965, %v1938
      %1977 = vst.msk [vmem:[#allocation3 + $0x58] sm:$0xff] %vm1965, %v1940
      %1978 = vst.msk [vmem:[#allocation3 + $0x60] sm:$0xff] %vm1965, %v1942
      %1979 = vst.msk [vmem:[#allocation3 + $0x68] sm:$0xff] %vm1965, %v1944
      %1980 = vst.msk [vmem:[#allocation3 + $0x70] sm:$0xff] %vm1965, %v1946
      %1981 = vst.msk [vmem:[#allocation3 + $0x78] sm:$0xff] %vm1965, %v1948
      %v1982 = vld [vmem:[%s821] sm:$0xf]
      %v1983 = vld [vmem:[%s821 + $0x4] sm:$0xf]
      %v1984 = vld [vmem:[%s821 + $0x8] sm:$0x1]
      %v1985 = vld [vmem:[%s821 + $0xc] sm:$0xf]
      %v1986 = vld [vmem:[%s821 + $0x10] sm:$0xf]
      %v1987 = vld [vmem:[%s821 + $0x14] sm:$0x1]
      %v1988 = vld [vmem:[%s821 + $0x18] sm:$0xf]
      %v1989 = vld [vmem:[%s821 + $0x1c] sm:$0xf]
      %v1990 = vld [vmem:[%s821 + $0x20] sm:$0x1]
      %v1991 = vld [vmem:[%s821 + $0x24] sm:$0xf]
      %v1992 = vld [vmem:[%s821 + $0x28] sm:$0xf]
      %v1993 = vld [vmem:[%s821 + $0x2c] sm:$0x1]
      %v1994 = vld [vmem:[%s821 + $0x30] sm:$0xf]
      %v1995 = vld [vmem:[%s821 + $0x34] sm:$0xf]
      %v1996 = vld [vmem:[%s821 + $0x38] sm:$0x1]
      %v1997 = vld [vmem:[%s821 + $0x3c] sm:$0xf]
      %v1998 = vld [vmem:[%s821 + $0x40] sm:$0xf]
      %v1999 = vld [vmem:[%s821 + $0x44] sm:$0x1]
      %v2000 = vld [vmem:[%s821 + $0x48] sm:$0xf]
      %v2001 = vld [vmem:[%s821 + $0x4c] sm:$0xf]
      %v2002 = vld [vmem:[%s821 + $0x50] sm:$0x1]
      %v2003 = vld [vmem:[%s821 + $0x54] sm:$0xf]
      %v2004 = vld [vmem:[%s821 + $0x58] sm:$0xf]
      %v2005 = vld [vmem:[%s821 + $0x5c] sm:$0x1]
      %v2006 = vld [vmem:[%s821 + $0x60] sm:$0xf]
      %v2007 = vld [vmem:[%s821 + $0x64] sm:$0xf]
      %v2008 = vld [vmem:[%s821 + $0x68] sm:$0x1]
      %v2009 = vld [vmem:[%s821 + $0x6c] sm:$0xf]
      %v2010 = vld [vmem:[%s821 + $0x70] sm:$0xf]
      %v2011 = vld [vmem:[%s821 + $0x74] sm:$0x1]
      %v2012 = vld [vmem:[%s821 + $0x78] sm:$0xf]
      %v2013 = vld [vmem:[%s821 + $0x7c] sm:$0xf]
      %v2014 = vld [vmem:[%s821 + $0x80] sm:$0x1]
      %v2015 = vld [vmem:[%s821 + $0x84] sm:$0xf]
      %v2016 = vld [vmem:[%s821 + $0x88] sm:$0xf]
      %v2017 = vld [vmem:[%s821 + $0x8c] sm:$0x1]
      %v2018 = vld [vmem:[%s821 + $0x90] sm:$0xf]
      %v2019 = vld [vmem:[%s821 + $0x94] sm:$0xf]
      %v2020 = vld [vmem:[%s821 + $0x98] sm:$0x1]
      %v2021 = vld [vmem:[%s821 + $0x9c] sm:$0xf]
      %v2022 = vld [vmem:[%s821 + $0xa0] sm:$0xf]
      %v2023 = vld [vmem:[%s821 + $0xa4] sm:$0x1]
      %v2024 = vld [vmem:[%s821 + $0xa8] sm:$0xf]
      %v2025 = vld [vmem:[%s821 + $0xac] sm:$0xf]
      %v2026 = vld [vmem:[%s821 + $0xb0] sm:$0x1]
      %v2027 = vld [vmem:[%s821 + $0xb4] sm:$0xf]
      %v2028 = vld [vmem:[%s821 + $0xb8] sm:$0xf]
      %v2029 = vld [vmem:[%s821 + $0xbc] sm:$0x1]
      %v2078 = vunpack.c.l.b16 %v1982
      %v2079 = vunpack.c.l.b16 %v1983
      %v2080 = vunpack.c.l.b16 %v1984
      %v2081 = vunpack.c.l.b16 %v1985
      %v2082 = vunpack.c.l.b16 %v1986
      %v2083 = vunpack.c.l.b16 %v1987
      %v2084 = vunpack.c.l.b16 %v1988
      %v2085 = vunpack.c.l.b16 %v1989
      %v2086 = vunpack.c.l.b16 %v1990
      %v2087 = vunpack.c.l.b16 %v1991
      %v2088 = vunpack.c.l.b16 %v1992
      %v2089 = vunpack.c.l.b16 %v1993
      %v2090 = vunpack.c.l.b16 %v1994
      %v2091 = vunpack.c.l.b16 %v1995
      %v2092 = vunpack.c.l.b16 %v1996
      %v2093 = vunpack.c.l.b16 %v1997
      %v2094 = vunpack.c.l.b16 %v1998
      %v2095 = vunpack.c.l.b16 %v1999
      %v2096 = vunpack.c.l.b16 %v2000
      %v2097 = vunpack.c.l.b16 %v2001
      %v2098 = vunpack.c.l.b16 %v2002
      %v2099 = vunpack.c.l.b16 %v2003
      %v2100 = vunpack.c.l.b16 %v2004
      %v2101 = vunpack.c.l.b16 %v2005
      %v2102 = vunpack.c.l.b16 %v2006
      %v2103 = vunpack.c.l.b16 %v2007
      %v2104 = vunpack.c.l.b16 %v2008
      %v2105 = vunpack.c.l.b16 %v2009
      %v2106 = vunpack.c.l.b16 %v2010
      %v2107 = vunpack.c.l.b16 %v2011
      %v2108 = vunpack.c.l.b16 %v2012
      %v2109 = vunpack.c.l.b16 %v2013
      %v2110 = vunpack.c.l.b16 %v2014
      %v2111 = vunpack.c.l.b16 %v2015
      %v2112 = vunpack.c.l.b16 %v2016
      %v2113 = vunpack.c.l.b16 %v2017
      %v2114 = vunpack.c.l.b16 %v2018
      %v2115 = vunpack.c.l.b16 %v2019
      %v2116 = vunpack.c.l.b16 %v2020
      %v2117 = vunpack.c.l.b16 %v2021
      %v2118 = vunpack.c.l.b16 %v2022
      %v2119 = vunpack.c.l.b16 %v2023
      %v2120 = vunpack.c.l.b16 %v2024
      %v2121 = vunpack.c.l.b16 %v2025
      %v2122 = vunpack.c.l.b16 %v2026
      %v2123 = vunpack.c.l.b16 %v2027
      %v2124 = vunpack.c.l.b16 %v2028
      %v2125 = vunpack.c.l.b16 %v2029
      %v2126 = vpack.c.b16 %v2079, %v2078
      %v2127 = vpack.c.b16 %v2080, %v2080
      %v2128 = vpack.c.b16 %v2082, %v2081
      %v2129 = vpack.c.b16 %v2083, %v2083
      %v2130 = vpack.c.b16 %v2085, %v2084
      %v2131 = vpack.c.b16 %v2086, %v2086
      %v2132 = vpack.c.b16 %v2088, %v2087
      %v2133 = vpack.c.b16 %v2089, %v2089
      %v2134 = vpack.c.b16 %v2091, %v2090
      %v2135 = vpack.c.b16 %v2092, %v2092
      %v2136 = vpack.c.b16 %v2094, %v2093
      %v2137 = vpack.c.b16 %v2095, %v2095
      %v2138 = vpack.c.b16 %v2097, %v2096
      %v2139 = vpack.c.b16 %v2098, %v2098
      %v2140 = vpack.c.b16 %v2100, %v2099
      %v2141 = vpack.c.b16 %v2101, %v2101
      %v2142 = vpack.c.b16 %v2103, %v2102
      %v2143 = vpack.c.b16 %v2104, %v2104
      %v2144 = vpack.c.b16 %v2106, %v2105
      %v2145 = vpack.c.b16 %v2107, %v2107
      %v2146 = vpack.c.b16 %v2109, %v2108
      %v2147 = vpack.c.b16 %v2110, %v2110
      %v2148 = vpack.c.b16 %v2112, %v2111
      %v2149 = vpack.c.b16 %v2113, %v2113
      %v2150 = vpack.c.b16 %v2115, %v2114
      %v2151 = vpack.c.b16 %v2116, %v2116
      %v2152 = vpack.c.b16 %v2118, %v2117
      %v2153 = vpack.c.b16 %v2119, %v2119
      %v2154 = vpack.c.b16 %v2121, %v2120
      %v2155 = vpack.c.b16 %v2122, %v2122
      %v2156 = vpack.c.b16 %v2124, %v2123
      %v2157 = vpack.c.b16 %v2125, %v2125
      %v2159 = vshrl.u32 %v2126, 16
      %v2161 = vshll.u32 %v2126, 16
      %v2163 = vrot.slane %v2161, 1
      %v2164 = vor.u32 %v2159, %v2163
      %v2166 = vshll.u32 %v2127, 16
      %v2168 = vrot.slane %v2166, 1
      %v2169 = vsel %vm1257, %v2164, %v2168
      %v2171 = vshrl.u32 %v2128, 16
      %v2173 = vshll.u32 %v2128, 16
      %v2175 = vrot.slane %v2173, 1
      %v2176 = vor.u32 %v2171, %v2175
      %v2178 = vshll.u32 %v2129, 16
      %v2180 = vrot.slane %v2178, 1
      %v2181 = vsel %vm1257, %v2176, %v2180
      %v2183 = vshrl.u32 %v2130, 16
      %v2185 = vshll.u32 %v2130, 16
      %v2187 = vrot.slane %v2185, 1
      %v2188 = vor.u32 %v2183, %v2187
      %v2190 = vshll.u32 %v2131, 16
      %v2192 = vrot.slane %v2190, 1
      %v2193 = vsel %vm1257, %v2188, %v2192
      %v2195 = vshrl.u32 %v2132, 16
      %v2197 = vshll.u32 %v2132, 16
      %v2199 = vrot.slane %v2197, 1
      %v2200 = vor.u32 %v2195, %v2199
      %v2202 = vshll.u32 %v2133, 16
      %v2204 = vrot.slane %v2202, 1
      %v2205 = vsel %vm1257, %v2200, %v2204
      %v2207 = vshrl.u32 %v2134, 16
      %v2209 = vshll.u32 %v2134, 16
      %v2211 = vrot.slane %v2209, 1
      %v2212 = vor.u32 %v2207, %v2211
      %v2214 = vshll.u32 %v2135, 16
      %v2216 = vrot.slane %v2214, 1
      %v2217 = vsel %vm1257, %v2212, %v2216
      %v2219 = vshrl.u32 %v2136, 16
      %v2221 = vshll.u32 %v2136, 16
      %v2223 = vrot.slane %v2221, 1
      %v2224 = vor.u32 %v2219, %v2223
      %v2226 = vshll.u32 %v2137, 16
      %v2228 = vrot.slane %v2226, 1
      %v2229 = vsel %vm1257, %v2224, %v2228
      %v2231 = vshrl.u32 %v2138, 16
      %v2233 = vshll.u32 %v2138, 16
      %v2235 = vrot.slane %v2233, 1
      %v2236 = vor.u32 %v2231, %v2235
      %v2238 = vshll.u32 %v2139, 16
      %v2240 = vrot.slane %v2238, 1
      %v2241 = vsel %vm1257, %v2236, %v2240
      %v2243 = vshrl.u32 %v2140, 16
      %v2245 = vshll.u32 %v2140, 16
      %v2247 = vrot.slane %v2245, 1
      %v2248 = vor.u32 %v2243, %v2247
      %v2250 = vshll.u32 %v2141, 16
      %v2252 = vrot.slane %v2250, 1
      %v2253 = vsel %vm1257, %v2248, %v2252
      %v2255 = vshrl.u32 %v2142, 16
      %v2257 = vshll.u32 %v2142, 16
      %v2259 = vrot.slane %v2257, 1
      %v2260 = vor.u32 %v2255, %v2259
      %v2262 = vshll.u32 %v2143, 16
      %v2264 = vrot.slane %v2262, 1
      %v2265 = vsel %vm1257, %v2260, %v2264
      %v2267 = vshrl.u32 %v2144, 16
      %v2269 = vshll.u32 %v2144, 16
      %v2271 = vrot.slane %v2269, 1
      %v2272 = vor.u32 %v2267, %v2271
      %v2274 = vshll.u32 %v2145, 16
      %v2276 = vrot.slane %v2274, 1
      %v2277 = vsel %vm1257, %v2272, %v2276
      %v2279 = vshrl.u32 %v2146, 16
      %v2281 = vshll.u32 %v2146, 16
      %v2283 = vrot.slane %v2281, 1
      %v2284 = vor.u32 %v2279, %v2283
      %v2286 = vshll.u32 %v2147, 16
      %v2288 = vrot.slane %v2286, 1
      %v2289 = vsel %vm1257, %v2284, %v2288
      %v2291 = vshrl.u32 %v2148, 16
      %v2293 = vshll.u32 %v2148, 16
      %v2295 = vrot.slane %v2293, 1
      %v2296 = vor.u32 %v2291, %v2295
      %v2298 = vshll.u32 %v2149, 16
      %v2300 = vrot.slane %v2298, 1
      %v2301 = vsel %vm1257, %v2296, %v2300
      %v2303 = vshrl.u32 %v2150, 16
      %v2305 = vshll.u32 %v2150, 16
      %v2307 = vrot.slane %v2305, 1
      %v2308 = vor.u32 %v2303, %v2307
      %v2310 = vshll.u32 %v2151, 16
      %v2312 = vrot.slane %v2310, 1
      %v2313 = vsel %vm1257, %v2308, %v2312
      %v2315 = vshrl.u32 %v2152, 16
      %v2317 = vshll.u32 %v2152, 16
      %v2319 = vrot.slane %v2317, 1
      %v2320 = vor.u32 %v2315, %v2319
      %v2322 = vshll.u32 %v2153, 16
      %v2324 = vrot.slane %v2322, 1
      %v2325 = vsel %vm1257, %v2320, %v2324
      %v2327 = vshrl.u32 %v2154, 16
      %v2329 = vshll.u32 %v2154, 16
      %v2331 = vrot.slane %v2329, 1
      %v2332 = vor.u32 %v2327, %v2331
      %v2334 = vshll.u32 %v2155, 16
      %v2336 = vrot.slane %v2334, 1
      %v2337 = vsel %vm1257, %v2332, %v2336
      %v2339 = vshrl.u32 %v2156, 16
      %v2341 = vshll.u32 %v2156, 16
      %v2343 = vrot.slane %v2341, 1
      %v2344 = vor.u32 %v2339, %v2343
      %v2346 = vshll.u32 %v2157, 16
      %v2348 = vrot.slane %v2346, 1
      %v2349 = vsel %vm1257, %v2344, %v2348
      %2350 = vrot.lane.b32.xlu0 %v2169, 16
      %v2351 = vpop.permute.xlu0 %2350
      %2352 = vrot.lane.b32.xlu0 %v2181, 16
      %v2353 = vpop.permute.xlu0 %2352
      %2354 = vrot.lane.b32.xlu0 %v2193, 16
      %v2355 = vpop.permute.xlu0 %2354
      %2356 = vrot.lane.b32.xlu0 %v2205, 16
      %v2357 = vpop.permute.xlu0 %2356
      %2358 = vrot.lane.b32.xlu0 %v2217, 16
      %v2359 = vpop.permute.xlu0 %2358
      %2360 = vrot.lane.b32.xlu0 %v2229, 16
      %v2361 = vpop.permute.xlu0 %2360
      %2362 = vrot.lane.b32.xlu0 %v2241, 16
      %v2363 = vpop.permute.xlu0 %2362
      %2364 = vrot.lane.b32.xlu0 %v2253, 16
      %v2365 = vpop.permute.xlu0 %2364
      %2366 = vrot.lane.b32.xlu0 %v2265, 16
      %v2367 = vpop.permute.xlu0 %2366
      %2368 = vrot.lane.b32.xlu0 %v2277, 16
      %v2369 = vpop.permute.xlu0 %2368
      %2370 = vrot.lane.b32.xlu0 %v2289, 16
      %v2371 = vpop.permute.xlu0 %2370
      %2372 = vrot.lane.b32.xlu0 %v2301, 16
      %v2373 = vpop.permute.xlu0 %2372
      %2374 = vrot.lane.b32.xlu0 %v2313, 16
      %v2375 = vpop.permute.xlu0 %2374
      %2376 = vrot.lane.b32.xlu0 %v2325, 16
      %v2377 = vpop.permute.xlu0 %2376
      %2378 = vrot.lane.b32.xlu0 %v2337, 16
      %v2379 = vpop.permute.xlu0 %2378
      %2380 = vrot.lane.b32.xlu0 %v2349, 16
      %v2381 = vpop.permute.xlu0 %2380
      %vm2398 = vcmask 162944
      %2399 = vst.msk [vmem:[#allocation3] sm:$0xff] %vm2398, %v2351
      %2400 = vst.msk [vmem:[#allocation3 + $0x8] sm:$0xff] %vm2398, %v2353
      %2401 = vst.msk [vmem:[#allocation3 + $0x10] sm:$0xff] %vm2398, %v2355
      %2402 = vst.msk [vmem:[#allocation3 + $0x18] sm:$0xff] %vm2398, %v2357
      %2403 = vst.msk [vmem:[#allocation3 + $0x20] sm:$0xff] %vm2398, %v2359
      %2404 = vst.msk [vmem:[#allocation3 + $0x28] sm:$0xff] %vm2398, %v2361
      %2405 = vst.msk [vmem:[#allocation3 + $0x30] sm:$0xff] %vm2398, %v2363
      %2406 = vst.msk [vmem:[#allocation3 + $0x38] sm:$0xff] %vm2398, %v2365
      %2407 = vst.msk [vmem:[#allocation3 + $0x40] sm:$0xff] %vm2398, %v2367
      %2408 = vst.msk [vmem:[#allocation3 + $0x48] sm:$0xff] %vm2398, %v2369
      %2409 = vst.msk [vmem:[#allocation3 + $0x50] sm:$0xff] %vm2398, %v2371
      %2410 = vst.msk [vmem:[#allocation3 + $0x58] sm:$0xff] %vm2398, %v2373
      %2411 = vst.msk [vmem:[#allocation3 + $0x60] sm:$0xff] %vm2398, %v2375
      %2412 = vst.msk [vmem:[#allocation3 + $0x68] sm:$0xff] %vm2398, %v2377
      %2413 = vst.msk [vmem:[#allocation3 + $0x70] sm:$0xff] %vm2398, %v2379
      %2414 = vst.msk [vmem:[#allocation3 + $0x78] sm:$0xff] %vm2398, %v2381
      %v2415 = vld [vmem:[%s821] sm:$0xe]
      %v2416 = vld [vmem:[%s821 + $0x4] sm:$0xf]
      %v2417 = vld [vmem:[%s821 + $0x8] sm:$0x1]
      %v2418 = vld [vmem:[%s821 + $0xc] sm:$0xe]
      %v2419 = vld [vmem:[%s821 + $0x10] sm:$0xf]
      %v2420 = vld [vmem:[%s821 + $0x14] sm:$0x1]
      %v2421 = vld [vmem:[%s821 + $0x18] sm:$0xe]
      %v2422 = vld [vmem:[%s821 + $0x1c] sm:$0xf]
      %v2423 = vld [vmem:[%s821 + $0x20] sm:$0x1]
      %v2424 = vld [vmem:[%s821 + $0x24] sm:$0xe]
      %v2425 = vld [vmem:[%s821 + $0x28] sm:$0xf]
      %v2426 = vld [vmem:[%s821 + $0x2c] sm:$0x1]
      %v2427 = vld [vmem:[%s821 + $0x30] sm:$0xe]
      %v2428 = vld [vmem:[%s821 + $0x34] sm:$0xf]
      %v2429 = vld [vmem:[%s821 + $0x38] sm:$0x1]
      %v2430 = vld [vmem:[%s821 + $0x3c] sm:$0xe]
      %v2431 = vld [vmem:[%s821 + $0x40] sm:$0xf]
      %v2432 = vld [vmem:[%s821 + $0x44] sm:$0x1]
      %v2433 = vld [vmem:[%s821 + $0x48] sm:$0xe]
      %v2434 = vld [vmem:[%s821 + $0x4c] sm:$0xf]
      %v2435 = vld [vmem:[%s821 + $0x50] sm:$0x1]
      %v2436 = vld [vmem:[%s821 + $0x54] sm:$0xe]
      %v2437 = vld [vmem:[%s821 + $0x58] sm:$0xf]
      %v2438 = vld [vmem:[%s821 + $0x5c] sm:$0x1]
      %v2439 = vld [vmem:[%s821 + $0x60] sm:$0xe]
      %v2440 = vld [vmem:[%s821 + $0x64] sm:$0xf]
      %v2441 = vld [vmem:[%s821 + $0x68] sm:$0x1]
      %v2442 = vld [vmem:[%s821 + $0x6c] sm:$0xe]
      %v2443 = vld [vmem:[%s821 + $0x70] sm:$0xf]
      %v2444 = vld [vmem:[%s821 + $0x74] sm:$0x1]
      %v2445 = vld [vmem:[%s821 + $0x78] sm:$0xe]
      %v2446 = vld [vmem:[%s821 + $0x7c] sm:$0xf]
      %v2447 = vld [vmem:[%s821 + $0x80] sm:$0x1]
      %v2448 = vld [vmem:[%s821 + $0x84] sm:$0xe]
      %v2449 = vld [vmem:[%s821 + $0x88] sm:$0xf]
      %v2450 = vld [vmem:[%s821 + $0x8c] sm:$0x1]
      %v2451 = vld [vmem:[%s821 + $0x90] sm:$0xe]
      %v2452 = vld [vmem:[%s821 + $0x94] sm:$0xf]
      %v2453 = vld [vmem:[%s821 + $0x98] sm:$0x1]
      %v2454 = vld [vmem:[%s821 + $0x9c] sm:$0xe]
      %v2455 = vld [vmem:[%s821 + $0xa0] sm:$0xf]
      %v2456 = vld [vmem:[%s821 + $0xa4] sm:$0x1]
      %v2457 = vld [vmem:[%s821 + $0xa8] sm:$0xe]
      %v2458 = vld [vmem:[%s821 + $0xac] sm:$0xf]
      %v2459 = vld [vmem:[%s821 + $0xb0] sm:$0x1]
      %v2460 = vld [vmem:[%s821 + $0xb4] sm:$0xe]
      %v2461 = vld [vmem:[%s821 + $0xb8] sm:$0xf]
      %v2462 = vld [vmem:[%s821 + $0xbc] sm:$0x1]
      %v2511 = vunpack.c.l.b16 %v2415
      %v2512 = vunpack.c.l.b16 %v2416
      %v2513 = vunpack.c.l.b16 %v2417
      %v2514 = vunpack.c.l.b16 %v2418
      %v2515 = vunpack.c.l.b16 %v2419
      %v2516 = vunpack.c.l.b16 %v2420
      %v2517 = vunpack.c.l.b16 %v2421
      %v2518 = vunpack.c.l.b16 %v2422
      %v2519 = vunpack.c.l.b16 %v2423
      %v2520 = vunpack.c.l.b16 %v2424
      %v2521 = vunpack.c.l.b16 %v2425
      %v2522 = vunpack.c.l.b16 %v2426
      %v2523 = vunpack.c.l.b16 %v2427
      %v2524 = vunpack.c.l.b16 %v2428
      %v2525 = vunpack.c.l.b16 %v2429
      %v2526 = vunpack.c.l.b16 %v2430
      %v2527 = vunpack.c.l.b16 %v2431
      %v2528 = vunpack.c.l.b16 %v2432
      %v2529 = vunpack.c.l.b16 %v2433
      %v2530 = vunpack.c.l.b16 %v2434
      %v2531 = vunpack.c.l.b16 %v2435
      %v2532 = vunpack.c.l.b16 %v2436
      %v2533 = vunpack.c.l.b16 %v2437
      %v2534 = vunpack.c.l.b16 %v2438
      %v2535 = vunpack.c.l.b16 %v2439
      %v2536 = vunpack.c.l.b16 %v2440
      %v2537 = vunpack.c.l.b16 %v2441
      %v2538 = vunpack.c.l.b16 %v2442
      %v2539 = vunpack.c.l.b16 %v2443
      %v2540 = vunpack.c.l.b16 %v2444
      %v2541 = vunpack.c.l.b16 %v2445
      %v2542 = vunpack.c.l.b16 %v2446
      %v2543 = vunpack.c.l.b16 %v2447
      %v2544 = vunpack.c.l.b16 %v2448
      %v2545 = vunpack.c.l.b16 %v2449
      %v2546 = vunpack.c.l.b16 %v2450
      %v2547 = vunpack.c.l.b16 %v2451
      %v2548 = vunpack.c.l.b16 %v2452
      %v2549 = vunpack.c.l.b16 %v2453
      %v2550 = vunpack.c.l.b16 %v2454
      %v2551 = vunpack.c.l.b16 %v2455
      %v2552 = vunpack.c.l.b16 %v2456
      %v2553 = vunpack.c.l.b16 %v2457
      %v2554 = vunpack.c.l.b16 %v2458
      %v2555 = vunpack.c.l.b16 %v2459
      %v2556 = vunpack.c.l.b16 %v2460
      %v2557 = vunpack.c.l.b16 %v2461
      %v2558 = vunpack.c.l.b16 %v2462
      %v2559 = vpack.c.b16 %v2512, %v2511
      %v2560 = vpack.c.b16 %v2513, %v2513
      %v2561 = vpack.c.b16 %v2515, %v2514
      %v2562 = vpack.c.b16 %v2516, %v2516
      %v2563 = vpack.c.b16 %v2518, %v2517
      %v2564 = vpack.c.b16 %v2519, %v2519
      %v2565 = vpack.c.b16 %v2521, %v2520
      %v2566 = vpack.c.b16 %v2522, %v2522
      %v2567 = vpack.c.b16 %v2524, %v2523
      %v2568 = vpack.c.b16 %v2525, %v2525
      %v2569 = vpack.c.b16 %v2527, %v2526
      %v2570 = vpack.c.b16 %v2528, %v2528
      %v2571 = vpack.c.b16 %v2530, %v2529
      %v2572 = vpack.c.b16 %v2531, %v2531
      %v2573 = vpack.c.b16 %v2533, %v2532
      %v2574 = vpack.c.b16 %v2534, %v2534
      %v2575 = vpack.c.b16 %v2536, %v2535
      %v2576 = vpack.c.b16 %v2537, %v2537
      %v2577 = vpack.c.b16 %v2539, %v2538
      %v2578 = vpack.c.b16 %v2540, %v2540
      %v2579 = vpack.c.b16 %v2542, %v2541
      %v2580 = vpack.c.b16 %v2543, %v2543
      %v2581 = vpack.c.b16 %v2545, %v2544
      %v2582 = vpack.c.b16 %v2546, %v2546
      %v2583 = vpack.c.b16 %v2548, %v2547
      %v2584 = vpack.c.b16 %v2549, %v2549
      %v2585 = vpack.c.b16 %v2551, %v2550
      %v2586 = vpack.c.b16 %v2552, %v2552
      %v2587 = vpack.c.b16 %v2554, %v2553
      %v2588 = vpack.c.b16 %v2555, %v2555
      %v2589 = vpack.c.b16 %v2557, %v2556
      %v2590 = vpack.c.b16 %v2558, %v2558
      %v2591 = vrot.slane %v2559, 1
      %v2592 = vrot.slane %v2560, 1
      %v2593 = vsel %vm1691, %v2591, %v2592
      %v2594 = vrot.slane %v2561, 1
      %v2595 = vrot.slane %v2562, 1
      %v2596 = vsel %vm1691, %v2594, %v2595
      %v2597 = vrot.slane %v2563, 1
      %v2598 = vrot.slane %v2564, 1
      %v2599 = vsel %vm1691, %v2597, %v2598
      %v2600 = vrot.slane %v2565, 1
      %v2601 = vrot.slane %v2566, 1
      %v2602 = vsel %vm1691, %v2600, %v2601
      %v2603 = vrot.slane %v2567, 1
      %v2604 = vrot.slane %v2568, 1
      %v2605 = vsel %vm1691, %v2603, %v2604
      %v2606 = vrot.slane %v2569, 1
      %v2607 = vrot.slane %v2570, 1
      %v2608 = vsel %vm1691, %v2606, %v2607
      %v2609 = vrot.slane %v2571, 1
      %v2610 = vrot.slane %v2572, 1
      %v2611 = vsel %vm1691, %v2609, %v2610
      %v2612 = vrot.slane %v2573, 1
      %v2613 = vrot.slane %v2574, 1
      %v2614 = vsel %vm1691, %v2612, %v2613
      %v2615 = vrot.slane %v2575, 1
      %v2616 = vrot.slane %v2576, 1
      %v2617 = vsel %vm1691, %v2615, %v2616
      %v2618 = vrot.slane %v2577, 1
      %v2619 = vrot.slane %v2578, 1
      %v2620 = vsel %vm1691, %v2618, %v2619
      %v2621 = vrot.slane %v2579, 1
      %v2622 = vrot.slane %v2580, 1
      %v2623 = vsel %vm1691, %v2621, %v2622
      %v2624 = vrot.slane %v2581, 1
      %v2625 = vrot.slane %v2582, 1
      %v2626 = vsel %vm1691, %v2624, %v2625
      %v2627 = vrot.slane %v2583, 1
      %v2628 = vrot.slane %v2584, 1
      %v2629 = vsel %vm1691, %v2627, %v2628
      %v2630 = vrot.slane %v2585, 1
      %v2631 = vrot.slane %v2586, 1
      %v2632 = vsel %vm1691, %v2630, %v2631
      %v2633 = vrot.slane %v2587, 1
      %v2634 = vrot.slane %v2588, 1
      %v2635 = vsel %vm1691, %v2633, %v2634
      %v2636 = vrot.slane %v2589, 1
      %v2637 = vrot.slane %v2590, 1
      %v2638 = vsel %vm1691, %v2636, %v2637
      %2639 = vrot.lane.b32.xlu0 %v2593, 20
      %v2640 = vpop.permute.xlu0 %2639
      %2641 = vrot.lane.b32.xlu0 %v2596, 20
      %v2642 = vpop.permute.xlu0 %2641
      %2643 = vrot.lane.b32.xlu0 %v2599, 20
      %v2644 = vpop.permute.xlu0 %2643
      %2645 = vrot.lane.b32.xlu0 %v2602, 20
      %v2646 = vpop.permute.xlu0 %2645
      %2647 = vrot.lane.b32.xlu0 %v2605, 20
      %v2648 = vpop.permute.xlu0 %2647
      %2649 = vrot.lane.b32.xlu0 %v2608, 20
      %v2650 = vpop.permute.xlu0 %2649
      %2651 = vrot.lane.b32.xlu0 %v2611, 20
      %v2652 = vpop.permute.xlu0 %2651
      %2653 = vrot.lane.b32.xlu0 %v2614, 20
      %v2654 = vpop.permute.xlu0 %2653
      %2655 = vrot.lane.b32.xlu0 %v2617, 20
      %v2656 = vpop.permute.xlu0 %2655
      %2657 = vrot.lane.b32.xlu0 %v2620, 20
      %v2658 = vpop.permute.xlu0 %2657
      %2659 = vrot.lane.b32.xlu0 %v2623, 20
      %v2660 = vpop.permute.xlu0 %2659
      %2661 = vrot.lane.b32.xlu0 %v2626, 20
      %v2662 = vpop.permute.xlu0 %2661
      %2663 = vrot.lane.b32.xlu0 %v2629, 20
      %v2664 = vpop.permute.xlu0 %2663
      %2665 = vrot.lane.b32.xlu0 %v2632, 20
      %v2666 = vpop.permute.xlu0 %2665
      %2667 = vrot.lane.b32.xlu0 %v2635, 20
      %v2668 = vpop.permute.xlu0 %2667
      %2669 = vrot.lane.b32.xlu0 %v2638, 20
      %v2670 = vpop.permute.xlu0 %2669
      %vm2687 = vcmask 195744
      %2688 = vst.msk [vmem:[#allocation3] sm:$0xff] %vm2687, %v2640
      %2689 = vst.msk [vmem:[#allocation3 + $0x8] sm:$0xff] %vm2687, %v2642
      %2690 = vst.msk [vmem:[#allocation3 + $0x10] sm:$0xff] %vm2687, %v2644
      %2691 = vst.msk [vmem:[#allocation3 + $0x18] sm:$0xff] %vm2687, %v2646
      %2692 = vst.msk [vmem:[#allocation3 + $0x20] sm:$0xff] %vm2687, %v2648
      %2693 = vst.msk [vmem:[#allocation3 + $0x28] sm:$0xff] %vm2687, %v2650
      %2694 = vst.msk [vmem:[#allocation3 + $0x30] sm:$0xff] %vm2687, %v2652
      %2695 = vst.msk [vmem:[#allocation3 + $0x38] sm:$0xff] %vm2687, %v2654
      %2696 = vst.msk [vmem:[#allocation3 + $0x40] sm:$0xff] %vm2687, %v2656
      %2697 = vst.msk [vmem:[#allocation3 + $0x48] sm:$0xff] %vm2687, %v2658
      %2698 = vst.msk [vmem:[#allocation3 + $0x50] sm:$0xff] %vm2687, %v2660
      %2699 = vst.msk [vmem:[#allocation3 + $0x58] sm:$0xff] %vm2687, %v2662
      %2700 = vst.msk [vmem:[#allocation3 + $0x60] sm:$0xff] %vm2687, %v2664
      %2701 = vst.msk [vmem:[#allocation3 + $0x68] sm:$0xff] %vm2687, %v2666
      %2702 = vst.msk [vmem:[#allocation3 + $0x70] sm:$0xff] %vm2687, %v2668
      %2703 = vst.msk [vmem:[#allocation3 + $0x78] sm:$0xff] %vm2687, %v2670
      %s2704 = scalar_lea.vmem [#allocation2], 24
      %v2705 = vld [vmem:[%s2704] sm:$0xf]
      %v2706 = vld [vmem:[%s2704 + $0x4] sm:$0xf]
      %v2707 = vld [vmem:[%s2704 + $0xc] sm:$0xf]
      %v2708 = vld [vmem:[%s2704 + $0x10] sm:$0xf]
      %v2709 = vld [vmem:[%s2704 + $0x18] sm:$0xf]
      %v2710 = vld [vmem:[%s2704 + $0x1c] sm:$0xf]
      %v2711 = vld [vmem:[%s2704 + $0x24] sm:$0xf]
      %v2712 = vld [vmem:[%s2704 + $0x28] sm:$0xf]
      %v2713 = vld [vmem:[%s2704 + $0x30] sm:$0xf]
      %v2714 = vld [vmem:[%s2704 + $0x34] sm:$0xf]
      %v2715 = vld [vmem:[%s2704 + $0x3c] sm:$0xf]
      %v2716 = vld [vmem:[%s2704 + $0x40] sm:$0xf]
      %v2717 = vld [vmem:[%s2704 + $0x48] sm:$0xf]
      %v2718 = vld [vmem:[%s2704 + $0x4c] sm:$0xf]
      %v2719 = vld [vmem:[%s2704 + $0x54] sm:$0xf]
      %v2720 = vld [vmem:[%s2704 + $0x58] sm:$0xf]
      %v2721 = vld [vmem:[%s2704 + $0x60] sm:$0xf]
      %v2722 = vld [vmem:[%s2704 + $0x64] sm:$0xf]
      %v2723 = vld [vmem:[%s2704 + $0x6c] sm:$0xf]
      %v2724 = vld [vmem:[%s2704 + $0x70] sm:$0xf]
      %v2725 = vld [vmem:[%s2704 + $0x78] sm:$0xf]
      %v2726 = vld [vmem:[%s2704 + $0x7c] sm:$0xf]
      %v2727 = vld [vmem:[%s2704 + $0x84] sm:$0xf]
      %v2728 = vld [vmem:[%s2704 + $0x88] sm:$0xf]
      %v2729 = vld [vmem:[%s2704 + $0x90] sm:$0xf]
      %v2730 = vld [vmem:[%s2704 + $0x94] sm:$0xf]
      %v2731 = vld [vmem:[%s2704 + $0x9c] sm:$0xf]
      %v2732 = vld [vmem:[%s2704 + $0xa0] sm:$0xf]
      %v2733 = vld [vmem:[%s2704 + $0xa8] sm:$0xf]
      %v2734 = vld [vmem:[%s2704 + $0xac] sm:$0xf]
      %v2735 = vld [vmem:[%s2704 + $0xb4] sm:$0xf]
      %v2736 = vld [vmem:[%s2704 + $0xb8] sm:$0xf]
      %v2769 = vunpack.c.l.b16 %v2705
      %v2770 = vunpack.c.l.b16 %v2706
      %v2771 = vunpack.c.l.b16 %v2707
      %v2772 = vunpack.c.l.b16 %v2708
      %v2773 = vunpack.c.l.b16 %v2709
      %v2774 = vunpack.c.l.b16 %v2710
      %v2775 = vunpack.c.l.b16 %v2711
      %v2776 = vunpack.c.l.b16 %v2712
      %v2777 = vunpack.c.l.b16 %v2713
      %v2778 = vunpack.c.l.b16 %v2714
      %v2779 = vunpack.c.l.b16 %v2715
      %v2780 = vunpack.c.l.b16 %v2716
      %v2781 = vunpack.c.l.b16 %v2717
      %v2782 = vunpack.c.l.b16 %v2718
      %v2783 = vunpack.c.l.b16 %v2719
      %v2784 = vunpack.c.l.b16 %v2720
      %v2785 = vunpack.c.l.b16 %v2721
      %v2786 = vunpack.c.l.b16 %v2722
      %v2787 = vunpack.c.l.b16 %v2723
      %v2788 = vunpack.c.l.b16 %v2724
      %v2789 = vunpack.c.l.b16 %v2725
      %v2790 = vunpack.c.l.b16 %v2726
      %v2791 = vunpack.c.l.b16 %v2727
      %v2792 = vunpack.c.l.b16 %v2728
      %v2793 = vunpack.c.l.b16 %v2729
      %v2794 = vunpack.c.l.b16 %v2730
      %v2795 = vunpack.c.l.b16 %v2731
      %v2796 = vunpack.c.l.b16 %v2732
      %v2797 = vunpack.c.l.b16 %v2733
      %v2798 = vunpack.c.l.b16 %v2734
      %v2799 = vunpack.c.l.b16 %v2735
      %v2800 = vunpack.c.l.b16 %v2736
      %v2801 = vpack.c.b16 %v2770, %v2769
      %v2802 = vpack.c.b16 %v2772, %v2771
      %v2803 = vpack.c.b16 %v2774, %v2773
      %v2804 = vpack.c.b16 %v2776, %v2775
      %v2805 = vpack.c.b16 %v2778, %v2777
      %v2806 = vpack.c.b16 %v2780, %v2779
      %v2807 = vpack.c.b16 %v2782, %v2781
      %v2808 = vpack.c.b16 %v2784, %v2783
      %v2809 = vpack.c.b16 %v2786, %v2785
      %v2810 = vpack.c.b16 %v2788, %v2787
      %v2811 = vpack.c.b16 %v2790, %v2789
      %v2812 = vpack.c.b16 %v2792, %v2791
      %v2813 = vpack.c.b16 %v2794, %v2793
      %v2814 = vpack.c.b16 %v2796, %v2795
      %v2815 = vpack.c.b16 %v2798, %v2797
      %v2816 = vpack.c.b16 %v2800, %v2799
      %2817 = vrot.lane.b32.xlu0 %v2801, 24
      %v2818 = vpop.permute.xlu0 %2817
      %2819 = vrot.lane.b32.xlu0 %v2802, 24
      %v2820 = vpop.permute.xlu0 %2819
      %2821 = vrot.lane.b32.xlu0 %v2803, 24
      %v2822 = vpop.permute.xlu0 %2821
      %2823 = vrot.lane.b32.xlu0 %v2804, 24
      %v2824 = vpop.permute.xlu0 %2823
      %2825 = vrot.lane.b32.xlu0 %v2805, 24
      %v2826 = vpop.permute.xlu0 %2825
      %2827 = vrot.lane.b32.xlu0 %v2806, 24
      %v2828 = vpop.permute.xlu0 %2827
      %2829 = vrot.lane.b32.xlu0 %v2807, 24
      %v2830 = vpop.permute.xlu0 %2829
      %2831 = vrot.lane.b32.xlu0 %v2808, 24
      %v2832 = vpop.permute.xlu0 %2831
      %2833 = vrot.lane.b32.xlu0 %v2809, 24
      %v2834 = vpop.permute.xlu0 %2833
      %2835 = vrot.lane.b32.xlu0 %v2810, 24
      %v2836 = vpop.permute.xlu0 %2835
      %2837 = vrot.lane.b32.xlu0 %v2811, 24
      %v2838 = vpop.permute.xlu0 %2837
      %2839 = vrot.lane.b32.xlu0 %v2812, 24
      %v2840 = vpop.permute.xlu0 %2839
      %2841 = vrot.lane.b32.xlu0 %v2813, 24
      %v2842 = vpop.permute.xlu0 %2841
      %2843 = vrot.lane.b32.xlu0 %v2814, 24
      %v2844 = vpop.permute.xlu0 %2843
      %2845 = vrot.lane.b32.xlu0 %v2815, 24
      %v2846 = vpop.permute.xlu0 %2845
      %2847 = vrot.lane.b32.xlu0 %v2816, 24
      %v2848 = vpop.permute.xlu0 %2847
      %vm2865 = vcmask 228544
      %2866 = vst.msk [vmem:[#allocation3] sm:$0xff] %vm2865, %v2818
      %2867 = vst.msk [vmem:[#allocation3 + $0x8] sm:$0xff] %vm2865, %v2820
      %2868 = vst.msk [vmem:[#allocation3 + $0x10] sm:$0xff] %vm2865, %v2822
      %2869 = vst.msk [vmem:[#allocation3 + $0x18] sm:$0xff] %vm2865, %v2824
      %2870 = vst.msk [vmem:[#allocation3 + $0x20] sm:$0xff] %vm2865, %v2826
      %2871 = vst.msk [vmem:[#allocation3 + $0x28] sm:$0xff] %vm2865, %v2828
      %2872 = vst.msk [vmem:[#allocation3 + $0x30] sm:$0xff] %vm2865, %v2830
      %2873 = vst.msk [vmem:[#allocation3 + $0x38] sm:$0xff] %vm2865, %v2832
      %2874 = vst.msk [vmem:[#allocation3 + $0x40] sm:$0xff] %vm2865, %v2834
      %2875 = vst.msk [vmem:[#allocation3 + $0x48] sm:$0xff] %vm2865, %v2836
      %2876 = vst.msk [vmem:[#allocation3 + $0x50] sm:$0xff] %vm2865, %v2838
      %2877 = vst.msk [vmem:[#allocation3 + $0x58] sm:$0xff] %vm2865, %v2840
      %2878 = vst.msk [vmem:[#allocation3 + $0x60] sm:$0xff] %vm2865, %v2842
      %2879 = vst.msk [vmem:[#allocation3 + $0x68] sm:$0xff] %vm2865, %v2844
      %2880 = vst.msk [vmem:[#allocation3 + $0x70] sm:$0xff] %vm2865, %v2846
      %2881 = vst.msk [vmem:[#allocation3 + $0x78] sm:$0xff] %vm2865, %v2848
      %v2882 = vld [vmem:[%s2704] sm:$0xf]
      %v2883 = vld [vmem:[%s2704 + $0x4] sm:$0xf]
      %v2884 = vld [vmem:[%s2704 + $0x8] sm:$0x1]
      %v2885 = vld [vmem:[%s2704 + $0xc] sm:$0xf]
      %v2886 = vld [vmem:[%s2704 + $0x10] sm:$0xf]
      %v2887 = vld [vmem:[%s2704 + $0x14] sm:$0x1]
      %v2888 = vld [vmem:[%s2704 + $0x18] sm:$0xf]
      %v2889 = vld [vmem:[%s2704 + $0x1c] sm:$0xf]
      %v2890 = vld [vmem:[%s2704 + $0x20] sm:$0x1]
      %v2891 = vld [vmem:[%s2704 + $0x24] sm:$0xf]
      %v2892 = vld [vmem:[%s2704 + $0x28] sm:$0xf]
      %v2893 = vld [vmem:[%s2704 + $0x2c] sm:$0x1]
      %v2894 = vld [vmem:[%s2704 + $0x30] sm:$0xf]
      %v2895 = vld [vmem:[%s2704 + $0x34] sm:$0xf]
      %v2896 = vld [vmem:[%s2704 + $0x38] sm:$0x1]
      %v2897 = vld [vmem:[%s2704 + $0x3c] sm:$0xf]
      %v2898 = vld [vmem:[%s2704 + $0x40] sm:$0xf]
      %v2899 = vld [vmem:[%s2704 + $0x44] sm:$0x1]
      %v2900 = vld [vmem:[%s2704 + $0x48] sm:$0xf]
      %v2901 = vld [vmem:[%s2704 + $0x4c] sm:$0xf]
      %v2902 = vld [vmem:[%s2704 + $0x50] sm:$0x1]
      %v2903 = vld [vmem:[%s2704 + $0x54] sm:$0xf]
      %v2904 = vld [vmem:[%s2704 + $0x58] sm:$0xf]
      %v2905 = vld [vmem:[%s2704 + $0x5c] sm:$0x1]
      %v2906 = vld [vmem:[%s2704 + $0x60] sm:$0xf]
      %v2907 = vld [vmem:[%s2704 + $0x64] sm:$0xf]
      %v2908 = vld [vmem:[%s2704 + $0x68] sm:$0x1]
      %v2909 = vld [vmem:[%s2704 + $0x6c] sm:$0xf]
      %v2910 = vld [vmem:[%s2704 + $0x70] sm:$0xf]
      %v2911 = vld [vmem:[%s2704 + $0x74] sm:$0x1]
      %v2912 = vld [vmem:[%s2704 + $0x78] sm:$0xf]
      %v2913 = vld [vmem:[%s2704 + $0x7c] sm:$0xf]
      %v2914 = vld [vmem:[%s2704 + $0x80] sm:$0x1]
      %v2915 = vld [vmem:[%s2704 + $0x84] sm:$0xf]
      %v2916 = vld [vmem:[%s2704 + $0x88] sm:$0xf]
      %v2917 = vld [vmem:[%s2704 + $0x8c] sm:$0x1]
      %v2918 = vld [vmem:[%s2704 + $0x90] sm:$0xf]
      %v2919 = vld [vmem:[%s2704 + $0x94] sm:$0xf]
      %v2920 = vld [vmem:[%s2704 + $0x98] sm:$0x1]
      %v2921 = vld [vmem:[%s2704 + $0x9c] sm:$0xf]
      %v2922 = vld [vmem:[%s2704 + $0xa0] sm:$0xf]
      %v2923 = vld [vmem:[%s2704 + $0xa4] sm:$0x1]
      %v2924 = vld [vmem:[%s2704 + $0xa8] sm:$0xf]
      %v2925 = vld [vmem:[%s2704 + $0xac] sm:$0xf]
      %v2926 = vld [vmem:[%s2704 + $0xb0] sm:$0x1]
      %v2927 = vld [vmem:[%s2704 + $0xb4] sm:$0xf]
      %v2928 = vld [vmem:[%s2704 + $0xb8] sm:$0xf]
      %v2929 = vld [vmem:[%s2704 + $0xbc] sm:$0x1]
      %v2978 = vunpack.c.l.b16 %v2882
      %v2979 = vunpack.c.l.b16 %v2883
      %v2980 = vunpack.c.l.b16 %v2884
      %v2981 = vunpack.c.l.b16 %v2885
      %v2982 = vunpack.c.l.b16 %v2886
      %v2983 = vunpack.c.l.b16 %v2887
      %v2984 = vunpack.c.l.b16 %v2888
      %v2985 = vunpack.c.l.b16 %v2889
      %v2986 = vunpack.c.l.b16 %v2890
      %v2987 = vunpack.c.l.b16 %v2891
      %v2988 = vunpack.c.l.b16 %v2892
      %v2989 = vunpack.c.l.b16 %v2893
      %v2990 = vunpack.c.l.b16 %v2894
      %v2991 = vunpack.c.l.b16 %v2895
      %v2992 = vunpack.c.l.b16 %v2896
      %v2993 = vunpack.c.l.b16 %v2897
      %v2994 = vunpack.c.l.b16 %v2898
      %v2995 = vunpack.c.l.b16 %v2899
      %v2996 = vunpack.c.l.b16 %v2900
      %v2997 = vunpack.c.l.b16 %v2901
      %v2998 = vunpack.c.l.b16 %v2902
      %v2999 = vunpack.c.l.b16 %v2903
      %v3000 = vunpack.c.l.b16 %v2904
      %v3001 = vunpack.c.l.b16 %v2905
      %v3002 = vunpack.c.l.b16 %v2906
      %v3003 = vunpack.c.l.b16 %v2907
      %v3004 = vunpack.c.l.b16 %v2908
      %v3005 = vunpack.c.l.b16 %v2909
      %v3006 = vunpack.c.l.b16 %v2910
      %v3007 = vunpack.c.l.b16 %v2911
      %v3008 = vunpack.c.l.b16 %v2912
      %v3009 = vunpack.c.l.b16 %v2913
      %v3010 = vunpack.c.l.b16 %v2914
      %v3011 = vunpack.c.l.b16 %v2915
      %v3012 = vunpack.c.l.b16 %v2916
      %v3013 = vunpack.c.l.b16 %v2917
      %v3014 = vunpack.c.l.b16 %v2918
      %v3015 = vunpack.c.l.b16 %v2919
      %v3016 = vunpack.c.l.b16 %v2920
      %v3017 = vunpack.c.l.b16 %v2921
      %v3018 = vunpack.c.l.b16 %v2922
      %v3019 = vunpack.c.l.b16 %v2923
      %v3020 = vunpack.c.l.b16 %v2924
      %v3021 = vunpack.c.l.b16 %v2925
      %v3022 = vunpack.c.l.b16 %v2926
      %v3023 = vunpack.c.l.b16 %v2927
      %v3024 = vunpack.c.l.b16 %v2928
      %v3025 = vunpack.c.l.b16 %v2929
      %v3026 = vpack.c.b16 %v2979, %v2978
      %v3027 = vpack.c.b16 %v2980, %v2980
      %v3028 = vpack.c.b16 %v2982, %v2981
      %v3029 = vpack.c.b16 %v2983, %v2983
      %v3030 = vpack.c.b16 %v2985, %v2984
      %v3031 = vpack.c.b16 %v2986, %v2986
      %v3032 = vpack.c.b16 %v2988, %v2987
      %v3033 = vpack.c.b16 %v2989, %v2989
      %v3034 = vpack.c.b16 %v2991, %v2990
      %v3035 = vpack.c.b16 %v2992, %v2992
      %v3036 = vpack.c.b16 %v2994, %v2993
      %v3037 = vpack.c.b16 %v2995, %v2995
      %v3038 = vpack.c.b16 %v2997, %v2996
      %v3039 = vpack.c.b16 %v2998, %v2998
      %v3040 = vpack.c.b16 %v3000, %v2999
      %v3041 = vpack.c.b16 %v3001, %v3001
      %v3042 = vpack.c.b16 %v3003, %v3002
      %v3043 = vpack.c.b16 %v3004, %v3004
      %v3044 = vpack.c.b16 %v3006, %v3005
      %v3045 = vpack.c.b16 %v3007, %v3007
      %v3046 = vpack.c.b16 %v3009, %v3008
      %v3047 = vpack.c.b16 %v3010, %v3010
      %v3048 = vpack.c.b16 %v3012, %v3011
      %v3049 = vpack.c.b16 %v3013, %v3013
      %v3050 = vpack.c.b16 %v3015, %v3014
      %v3051 = vpack.c.b16 %v3016, %v3016
      %v3052 = vpack.c.b16 %v3018, %v3017
      %v3053 = vpack.c.b16 %v3019, %v3019
      %v3054 = vpack.c.b16 %v3021, %v3020
      %v3055 = vpack.c.b16 %v3022, %v3022
      %v3056 = vpack.c.b16 %v3024, %v3023
      %v3057 = vpack.c.b16 %v3025, %v3025
      %v3059 = vshrl.u32 %v3026, 16
      %v3061 = vshll.u32 %v3026, 16
      %v3063 = vrot.slane %v3061, 1
      %v3064 = vor.u32 %v3059, %v3063
      %v3066 = vshll.u32 %v3027, 16
      %v3068 = vrot.slane %v3066, 1
      %v3069 = vsel %vm1257, %v3064, %v3068
      %v3071 = vshrl.u32 %v3028, 16
      %v3073 = vshll.u32 %v3028, 16
      %v3075 = vrot.slane %v3073, 1
      %v3076 = vor.u32 %v3071, %v3075
      %v3078 = vshll.u32 %v3029, 16
      %v3080 = vrot.slane %v3078, 1
      %v3081 = vsel %vm1257, %v3076, %v3080
      %v3083 = vshrl.u32 %v3030, 16
      %v3085 = vshll.u32 %v3030, 16
      %v3087 = vrot.slane %v3085, 1
      %v3088 = vor.u32 %v3083, %v3087
      %v3090 = vshll.u32 %v3031, 16
      %v3092 = vrot.slane %v3090, 1
      %v3093 = vsel %vm1257, %v3088, %v3092
      %v3095 = vshrl.u32 %v3032, 16
      %v3097 = vshll.u32 %v3032, 16
      %v3099 = vrot.slane %v3097, 1
      %v3100 = vor.u32 %v3095, %v3099
      %v3102 = vshll.u32 %v3033, 16
      %v3104 = vrot.slane %v3102, 1
      %v3105 = vsel %vm1257, %v3100, %v3104
      %v3107 = vshrl.u32 %v3034, 16
      %v3109 = vshll.u32 %v3034, 16
      %v3111 = vrot.slane %v3109, 1
      %v3112 = vor.u32 %v3107, %v3111
      %v3114 = vshll.u32 %v3035, 16
      %v3116 = vrot.slane %v3114, 1
      %v3117 = vsel %vm1257, %v3112, %v3116
      %v3119 = vshrl.u32 %v3036, 16
      %v3121 = vshll.u32 %v3036, 16
      %v3123 = vrot.slane %v3121, 1
      %v3124 = vor.u32 %v3119, %v3123
      %v3126 = vshll.u32 %v3037, 16
      %v3128 = vrot.slane %v3126, 1
      %v3129 = vsel %vm1257, %v3124, %v3128
      %v3131 = vshrl.u32 %v3038, 16
      %v3133 = vshll.u32 %v3038, 16
      %v3135 = vrot.slane %v3133, 1
      %v3136 = vor.u32 %v3131, %v3135
      %v3138 = vshll.u32 %v3039, 16
      %v3140 = vrot.slane %v3138, 1
      %v3141 = vsel %vm1257, %v3136, %v3140
      %v3143 = vshrl.u32 %v3040, 16
      %v3145 = vshll.u32 %v3040, 16
      %v3147 = vrot.slane %v3145, 1
      %v3148 = vor.u32 %v3143, %v3147
      %v3150 = vshll.u32 %v3041, 16
      %v3152 = vrot.slane %v3150, 1
      %v3153 = vsel %vm1257, %v3148, %v3152
      %v3155 = vshrl.u32 %v3042, 16
      %v3157 = vshll.u32 %v3042, 16
      %v3159 = vrot.slane %v3157, 1
      %v3160 = vor.u32 %v3155, %v3159
      %v3162 = vshll.u32 %v3043, 16
      %v3164 = vrot.slane %v3162, 1
      %v3165 = vsel %vm1257, %v3160, %v3164
      %v3167 = vshrl.u32 %v3044, 16
      %v3169 = vshll.u32 %v3044, 16
      %v3171 = vrot.slane %v3169, 1
      %v3172 = vor.u32 %v3167, %v3171
      %v3174 = vshll.u32 %v3045, 16
      %v3176 = vrot.slane %v3174, 1
      %v3177 = vsel %vm1257, %v3172, %v3176
      %v3179 = vshrl.u32 %v3046, 16
      %v3181 = vshll.u32 %v3046, 16
      %v3183 = vrot.slane %v3181, 1
      %v3184 = vor.u32 %v3179, %v3183
      %v3186 = vshll.u32 %v3047, 16
      %v3188 = vrot.slane %v3186, 1
      %v3189 = vsel %vm1257, %v3184, %v3188
      %v3191 = vshrl.u32 %v3048, 16
      %v3193 = vshll.u32 %v3048, 16
      %v3195 = vrot.slane %v3193, 1
      %v3196 = vor.u32 %v3191, %v3195
      %v3198 = vshll.u32 %v3049, 16
      %v3200 = vrot.slane %v3198, 1
      %v3201 = vsel %vm1257, %v3196, %v3200
      %v3203 = vshrl.u32 %v3050, 16
      %v3205 = vshll.u32 %v3050, 16
      %v3207 = vrot.slane %v3205, 1
      %v3208 = vor.u32 %v3203, %v3207
      %v3210 = vshll.u32 %v3051, 16
      %v3212 = vrot.slane %v3210, 1
      %v3213 = vsel %vm1257, %v3208, %v3212
      %v3215 = vshrl.u32 %v3052, 16
      %v3217 = vshll.u32 %v3052, 16
      %v3219 = vrot.slane %v3217, 1
      %v3220 = vor.u32 %v3215, %v3219
      %v3222 = vshll.u32 %v3053, 16
      %v3224 = vrot.slane %v3222, 1
      %v3225 = vsel %vm1257, %v3220, %v3224
      %v3227 = vshrl.u32 %v3054, 16
      %v3229 = vshll.u32 %v3054, 16
      %v3231 = vrot.slane %v3229, 1
      %v3232 = vor.u32 %v3227, %v3231
      %v3234 = vshll.u32 %v3055, 16
      %v3236 = vrot.slane %v3234, 1
      %v3237 = vsel %vm1257, %v3232, %v3236
      %v3239 = vshrl.u32 %v3056, 16
      %v3241 = vshll.u32 %v3056, 16
      %v3243 = vrot.slane %v3241, 1
      %v3244 = vor.u32 %v3239, %v3243
      %v3246 = vshll.u32 %v3057, 16
      %v3248 = vrot.slane %v3246, 1
      %v3249 = vsel %vm1257, %v3244, %v3248
      %3250 = vrot.lane.b32.xlu0 %v3069, 28
      %v3251 = vpop.permute.xlu0 %3250
      %3252 = vrot.lane.b32.xlu0 %v3081, 28
      %v3253 = vpop.permute.xlu0 %3252
      %3254 = vrot.lane.b32.xlu0 %v3093, 28
      %v3255 = vpop.permute.xlu0 %3254
      %3256 = vrot.lane.b32.xlu0 %v3105, 28
      %v3257 = vpop.permute.xlu0 %3256
      %3258 = vrot.lane.b32.xlu0 %v3117, 28
      %v3259 = vpop.permute.xlu0 %3258
      %3260 = vrot.lane.b32.xlu0 %v3129, 28
      %v3261 = vpop.permute.xlu0 %3260
      %3262 = vrot.lane.b32.xlu0 %v3141, 28
      %v3263 = vpop.permute.xlu0 %3262
      %3264 = vrot.lane.b32.xlu0 %v3153, 28
      %v3265 = vpop.permute.xlu0 %3264
      %3266 = vrot.lane.b32.xlu0 %v3165, 28
      %v3267 = vpop.permute.xlu0 %3266
      %3268 = vrot.lane.b32.xlu0 %v3177, 28
      %v3269 = vpop.permute.xlu0 %3268
      %3270 = vrot.lane.b32.xlu0 %v3189, 28
      %v3271 = vpop.permute.xlu0 %3270
      %3272 = vrot.lane.b32.xlu0 %v3201, 28
      %v3273 = vpop.permute.xlu0 %3272
      %3274 = vrot.lane.b32.xlu0 %v3213, 28
      %v3275 = vpop.permute.xlu0 %3274
      %3276 = vrot.lane.b32.xlu0 %v3225, 28
      %v3277 = vpop.permute.xlu0 %3276
      %3278 = vrot.lane.b32.xlu0 %v3237, 28
      %v3279 = vpop.permute.xlu0 %3278
      %3280 = vrot.lane.b32.xlu0 %v3249, 28
      %v3281 = vpop.permute.xlu0 %3280
      %vm3298 = vcmask 261344
      %3299 = vst.msk [vmem:[#allocation3] sm:$0xff] %vm3298, %v3251
      %3300 = vst.msk [vmem:[#allocation3 + $0x8] sm:$0xff] %vm3298, %v3253
      %3301 = vst.msk [vmem:[#allocation3 + $0x10] sm:$0xff] %vm3298, %v3255
      %3302 = vst.msk [vmem:[#allocation3 + $0x18] sm:$0xff] %vm3298, %v3257
      %3303 = vst.msk [vmem:[#allocation3 + $0x20] sm:$0xff] %vm3298, %v3259
      %3304 = vst.msk [vmem:[#allocation3 + $0x28] sm:$0xff] %vm3298, %v3261
      %3305 = vst.msk [vmem:[#allocation3 + $0x30] sm:$0xff] %vm3298, %v3263
      %3306 = vst.msk [vmem:[#allocation3 + $0x38] sm:$0xff] %vm3298, %v3265
      %3307 = vst.msk [vmem:[#allocation3 + $0x40] sm:$0xff] %vm3298, %v3267
      %3308 = vst.msk [vmem:[#allocation3 + $0x48] sm:$0xff] %vm3298, %v3269
      %3309 = vst.msk [vmem:[#allocation3 + $0x50] sm:$0xff] %vm3298, %v3271
      %3310 = vst.msk [vmem:[#allocation3 + $0x58] sm:$0xff] %vm3298, %v3273
      %3311 = vst.msk [vmem:[#allocation3 + $0x60] sm:$0xff] %vm3298, %v3275
      %3312 = vst.msk [vmem:[#allocation3 + $0x68] sm:$0xff] %vm3298, %v3277
      %3313 = vst.msk [vmem:[#allocation3 + $0x70] sm:$0xff] %vm3298, %v3279
      %3314 = vst.msk [vmem:[#allocation3 + $0x78] sm:$0xff] %vm3298, %v3281
      %v3315 = vld [vmem:[%s2704] sm:$0xe]
      %v3316 = vld [vmem:[%s2704 + $0x4] sm:$0xf]
      %v3317 = vld [vmem:[%s2704 + $0x8] sm:$0x1]
      %v3318 = vld [vmem:[%s2704 + $0xc] sm:$0xe]
      %v3319 = vld [vmem:[%s2704 + $0x10] sm:$0xf]
      %v3320 = vld [vmem:[%s2704 + $0x14] sm:$0x1]
      %v3321 = vld [vmem:[%s2704 + $0x18] sm:$0xe]
      %v3322 = vld [vmem:[%s2704 + $0x1c] sm:$0xf]
      %v3323 = vld [vmem:[%s2704 + $0x20] sm:$0x1]
      %v3324 = vld [vmem:[%s2704 + $0x24] sm:$0xe]
      %v3325 = vld [vmem:[%s2704 + $0x28] sm:$0xf]
      %v3326 = vld [vmem:[%s2704 + $0x2c] sm:$0x1]
      %v3327 = vld [vmem:[%s2704 + $0x30] sm:$0xe]
      %v3328 = vld [vmem:[%s2704 + $0x34] sm:$0xf]
      %v3329 = vld [vmem:[%s2704 + $0x38] sm:$0x1]
      %v3330 = vld [vmem:[%s2704 + $0x3c] sm:$0xe]
      %v3331 = vld [vmem:[%s2704 + $0x40] sm:$0xf]
      %v3332 = vld [vmem:[%s2704 + $0x44] sm:$0x1]
      %v3333 = vld [vmem:[%s2704 + $0x48] sm:$0xe]
      %v3334 = vld [vmem:[%s2704 + $0x4c] sm:$0xf]
      %v3335 = vld [vmem:[%s2704 + $0x50] sm:$0x1]
      %v3336 = vld [vmem:[%s2704 + $0x54] sm:$0xe]
      %v3337 = vld [vmem:[%s2704 + $0x58] sm:$0xf]
      %v3338 = vld [vmem:[%s2704 + $0x5c] sm:$0x1]
      %v3339 = vld [vmem:[%s2704 + $0x60] sm:$0xe]
      %v3340 = vld [vmem:[%s2704 + $0x64] sm:$0xf]
      %v3341 = vld [vmem:[%s2704 + $0x68] sm:$0x1]
      %v3342 = vld [vmem:[%s2704 + $0x6c] sm:$0xe]
      %v3343 = vld [vmem:[%s2704 + $0x70] sm:$0xf]
      %v3344 = vld [vmem:[%s2704 + $0x74] sm:$0x1]
      %v3345 = vld [vmem:[%s2704 + $0x78] sm:$0xe]
      %v3346 = vld [vmem:[%s2704 + $0x7c] sm:$0xf]
      %v3347 = vld [vmem:[%s2704 + $0x80] sm:$0x1]
      %v3348 = vld [vmem:[%s2704 + $0x84] sm:$0xe]
      %v3349 = vld [vmem:[%s2704 + $0x88] sm:$0xf]
      %v3350 = vld [vmem:[%s2704 + $0x8c] sm:$0x1]
      %v3351 = vld [vmem:[%s2704 + $0x90] sm:$0xe]
      %v3352 = vld [vmem:[%s2704 + $0x94] sm:$0xf]
      %v3353 = vld [vmem:[%s2704 + $0x98] sm:$0x1]
      %v3354 = vld [vmem:[%s2704 + $0x9c] sm:$0xe]
      %v3355 = vld [vmem:[%s2704 + $0xa0] sm:$0xf]
      %v3356 = vld [vmem:[%s2704 + $0xa4] sm:$0x1]
      %v3357 = vld [vmem:[%s2704 + $0xa8] sm:$0xe]
      %v3358 = vld [vmem:[%s2704 + $0xac] sm:$0xf]
      %v3359 = vld [vmem:[%s2704 + $0xb0] sm:$0x1]
      %v3360 = vld [vmem:[%s2704 + $0xb4] sm:$0xe]
      %v3361 = vld [vmem:[%s2704 + $0xb8] sm:$0xf]
      %v3362 = vld [vmem:[%s2704 + $0xbc] sm:$0x1]
      %v3411 = vunpack.c.l.b16 %v3315
      %v3412 = vunpack.c.l.b16 %v3316
      %v3413 = vunpack.c.l.b16 %v3317
      %v3414 = vunpack.c.l.b16 %v3318
      %v3415 = vunpack.c.l.b16 %v3319
      %v3416 = vunpack.c.l.b16 %v3320
      %v3417 = vunpack.c.l.b16 %v3321
      %v3418 = vunpack.c.l.b16 %v3322
      %v3419 = vunpack.c.l.b16 %v3323
      %v3420 = vunpack.c.l.b16 %v3324
      %v3421 = vunpack.c.l.b16 %v3325
      %v3422 = vunpack.c.l.b16 %v3326
      %v3423 = vunpack.c.l.b16 %v3327
      %v3424 = vunpack.c.l.b16 %v3328
      %v3425 = vunpack.c.l.b16 %v3329
      %v3426 = vunpack.c.l.b16 %v3330
      %v3427 = vunpack.c.l.b16 %v3331
      %v3428 = vunpack.c.l.b16 %v3332
      %v3429 = vunpack.c.l.b16 %v3333
      %v3430 = vunpack.c.l.b16 %v3334
      %v3431 = vunpack.c.l.b16 %v3335
      %v3432 = vunpack.c.l.b16 %v3336
      %v3433 = vunpack.c.l.b16 %v3337
      %v3434 = vunpack.c.l.b16 %v3338
      %v3435 = vunpack.c.l.b16 %v3339
      %v3436 = vunpack.c.l.b16 %v3340
      %v3437 = vunpack.c.l.b16 %v3341
      %v3438 = vunpack.c.l.b16 %v3342
      %v3439 = vunpack.c.l.b16 %v3343
      %v3440 = vunpack.c.l.b16 %v3344
      %v3441 = vunpack.c.l.b16 %v3345
      %v3442 = vunpack.c.l.b16 %v3346
      %v3443 = vunpack.c.l.b16 %v3347
      %v3444 = vunpack.c.l.b16 %v3348
      %v3445 = vunpack.c.l.b16 %v3349
      %v3446 = vunpack.c.l.b16 %v3350
      %v3447 = vunpack.c.l.b16 %v3351
      %v3448 = vunpack.c.l.b16 %v3352
      %v3449 = vunpack.c.l.b16 %v3353
      %v3450 = vunpack.c.l.b16 %v3354
      %v3451 = vunpack.c.l.b16 %v3355
      %v3452 = vunpack.c.l.b16 %v3356
      %v3453 = vunpack.c.l.b16 %v3357
      %v3454 = vunpack.c.l.b16 %v3358
      %v3455 = vunpack.c.l.b16 %v3359
      %v3456 = vunpack.c.l.b16 %v3360
      %v3457 = vunpack.c.l.b16 %v3361
      %v3458 = vunpack.c.l.b16 %v3362
      %v3459 = vpack.c.b16 %v3412, %v3411
      %v3460 = vpack.c.b16 %v3413, %v3413
      %v3461 = vpack.c.b16 %v3415, %v3414
      %v3462 = vpack.c.b16 %v3416, %v3416
      %v3463 = vpack.c.b16 %v3418, %v3417
      %v3464 = vpack.c.b16 %v3419, %v3419
      %v3465 = vpack.c.b16 %v3421, %v3420
      %v3466 = vpack.c.b16 %v3422, %v3422
      %v3467 = vpack.c.b16 %v3424, %v3423
      %v3468 = vpack.c.b16 %v3425, %v3425
      %v3469 = vpack.c.b16 %v3427, %v3426
      %v3470 = vpack.c.b16 %v3428, %v3428
      %v3471 = vpack.c.b16 %v3430, %v3429
      %v3472 = vpack.c.b16 %v3431, %v3431
      %v3473 = vpack.c.b16 %v3433, %v3432
      %v3474 = vpack.c.b16 %v3434, %v3434
      %v3475 = vpack.c.b16 %v3436, %v3435
      %v3476 = vpack.c.b16 %v3437, %v3437
      %v3477 = vpack.c.b16 %v3439, %v3438
      %v3478 = vpack.c.b16 %v3440, %v3440
      %v3479 = vpack.c.b16 %v3442, %v3441
      %v3480 = vpack.c.b16 %v3443, %v3443
      %v3481 = vpack.c.b16 %v3445, %v3444
      %v3482 = vpack.c.b16 %v3446, %v3446
      %v3483 = vpack.c.b16 %v3448, %v3447
      %v3484 = vpack.c.b16 %v3449, %v3449
      %v3485 = vpack.c.b16 %v3451, %v3450
      %v3486 = vpack.c.b16 %v3452, %v3452
      %v3487 = vpack.c.b16 %v3454, %v3453
      %v3488 = vpack.c.b16 %v3455, %v3455
      %v3489 = vpack.c.b16 %v3457, %v3456
      %v3490 = vpack.c.b16 %v3458, %v3458
      %v3491 = vrot.slane %v3459, 1
      %v3492 = vrot.slane %v3460, 1
      %v3493 = vsel %vm1691, %v3491, %v3492
      %v3494 = vrot.slane %v3461, 1
      %v3495 = vrot.slane %v3462, 1
      %v3496 = vsel %vm1691, %v3494, %v3495
      %v3497 = vrot.slane %v3463, 1
      %v3498 = vrot.slane %v3464, 1
      %v3499 = vsel %vm1691, %v3497, %v3498
      %v3500 = vrot.slane %v3465, 1
      %v3501 = vrot.slane %v3466, 1
      %v3502 = vsel %vm1691, %v3500, %v3501
      %v3503 = vrot.slane %v3467, 1
      %v3504 = vrot.slane %v3468, 1
      %v3505 = vsel %vm1691, %v3503, %v3504
      %v3506 = vrot.slane %v3469, 1
      %v3507 = vrot.slane %v3470, 1
      %v3508 = vsel %vm1691, %v3506, %v3507
      %v3509 = vrot.slane %v3471, 1
      %v3510 = vrot.slane %v3472, 1
      %v3511 = vsel %vm1691, %v3509, %v3510
      %v3512 = vrot.slane %v3473, 1
      %v3513 = vrot.slane %v3474, 1
      %v3514 = vsel %vm1691, %v3512, %v3513
      %v3515 = vrot.slane %v3475, 1
      %v3516 = vrot.slane %v3476, 1
      %v3517 = vsel %vm1691, %v3515, %v3516
      %v3518 = vrot.slane %v3477, 1
      %v3519 = vrot.slane %v3478, 1
      %v3520 = vsel %vm1691, %v3518, %v3519
      %v3521 = vrot.slane %v3479, 1
      %v3522 = vrot.slane %v3480, 1
      %v3523 = vsel %vm1691, %v3521, %v3522
      %v3524 = vrot.slane %v3481, 1
      %v3525 = vrot.slane %v3482, 1
      %v3526 = vsel %vm1691, %v3524, %v3525
      %v3527 = vrot.slane %v3483, 1
      %v3528 = vrot.slane %v3484, 1
      %v3529 = vsel %vm1691, %v3527, %v3528
      %v3530 = vrot.slane %v3485, 1
      %v3531 = vrot.slane %v3486, 1
      %v3532 = vsel %vm1691, %v3530, %v3531
      %v3533 = vrot.slane %v3487, 1
      %v3534 = vrot.slane %v3488, 1
      %v3535 = vsel %vm1691, %v3533, %v3534
      %v3536 = vrot.slane %v3489, 1
      %v3537 = vrot.slane %v3490, 1
      %v3538 = vsel %vm1691, %v3536, %v3537
      %3539 = vrot.lane.b32.xlu0 %v3493, 32
      %v3540 = vpop.permute.xlu0 %3539
      %3541 = vrot.lane.b32.xlu0 %v3496, 32
      %v3542 = vpop.permute.xlu0 %3541
      %3543 = vrot.lane.b32.xlu0 %v3499, 32
      %v3544 = vpop.permute.xlu0 %3543
      %3545 = vrot.lane.b32.xlu0 %v3502, 32
      %v3546 = vpop.permute.xlu0 %3545
      %3547 = vrot.lane.b32.xlu0 %v3505, 32
      %v3548 = vpop.permute.xlu0 %3547
      %3549 = vrot.lane.b32.xlu0 %v3508, 32
      %v3550 = vpop.permute.xlu0 %3549
      %3551 = vrot.lane.b32.xlu0 %v3511, 32
      %v3552 = vpop.permute.xlu0 %3551
      %3553 = vrot.lane.b32.xlu0 %v3514, 32
      %v3554 = vpop.permute.xlu0 %3553
      %3555 = vrot.lane.b32.xlu0 %v3517, 32
      %v3556 = vpop.permute.xlu0 %3555
      %3557 = vrot.lane.b32.xlu0 %v3520, 32
      %v3558 = vpop.permute.xlu0 %3557
      %3559 = vrot.lane.b32.xlu0 %v3523, 32
      %v3560 = vpop.permute.xlu0 %3559
      %3561 = vrot.lane.b32.xlu0 %v3526, 32
      %v3562 = vpop.permute.xlu0 %3561
      %3563 = vrot.lane.b32.xlu0 %v3529, 32
      %v3564 = vpop.permute.xlu0 %3563
      %3565 = vrot.lane.b32.xlu0 %v3532, 32
      %v3566 = vpop.permute.xlu0 %3565
      %3567 = vrot.lane.b32.xlu0 %v3535, 32
      %v3568 = vpop.permute.xlu0 %3567
      %3569 = vrot.lane.b32.xlu0 %v3538, 32
      %v3570 = vpop.permute.xlu0 %3569
      %vm3587 = vcmask 294144
      %3588 = vst.msk [vmem:[#allocation3] sm:$0xff] %vm3587, %v3540
      %3589 = vst.msk [vmem:[#allocation3 + $0x8] sm:$0xff] %vm3587, %v3542
      %3590 = vst.msk [vmem:[#allocation3 + $0x10] sm:$0xff] %vm3587, %v3544
      %3591 = vst.msk [vmem:[#allocation3 + $0x18] sm:$0xff] %vm3587, %v3546
      %3592 = vst.msk [vmem:[#allocation3 + $0x20] sm:$0xff] %vm3587, %v3548
      %3593 = vst.msk [vmem:[#allocation3 + $0x28] sm:$0xff] %vm3587, %v3550
      %3594 = vst.msk [vmem:[#allocation3 + $0x30] sm:$0xff] %vm3587, %v3552
      %3595 = vst.msk [vmem:[#allocation3 + $0x38] sm:$0xff] %vm3587, %v3554
      %3596 = vst.msk [vmem:[#allocation3 + $0x40] sm:$0xff] %vm3587, %v3556
      %3597 = vst.msk [vmem:[#allocation3 + $0x48] sm:$0xff] %vm3587, %v3558
      %3598 = vst.msk [vmem:[#allocation3 + $0x50] sm:$0xff] %vm3587, %v3560
      %3599 = vst.msk [vmem:[#allocation3 + $0x58] sm:$0xff] %vm3587, %v3562
      %3600 = vst.msk [vmem:[#allocation3 + $0x60] sm:$0xff] %vm3587, %v3564
      %3601 = vst.msk [vmem:[#allocation3 + $0x68] sm:$0xff] %vm3587, %v3566
      %3602 = vst.msk [vmem:[#allocation3 + $0x70] sm:$0xff] %vm3587, %v3568
      %3603 = vst.msk [vmem:[#allocation3 + $0x78] sm:$0xff] %vm3587, %v3570
      %v3604 = vld [vmem:[#allocation3] sm:$0xff]
      %v3605 = vld [vmem:[#allocation3 + $0x8] sm:$0xff]
      %v3606 = vld [vmem:[#allocation3 + $0x10] sm:$0xff]
      %v3607 = vld [vmem:[#allocation3 + $0x18] sm:$0xff]
      %v3608 = vld [vmem:[#allocation3 + $0x20] sm:$0xff]
      %v3609 = vld [vmem:[#allocation3 + $0x28] sm:$0xff]
      %v3610 = vld [vmem:[#allocation3 + $0x30] sm:$0xff]
      %v3611 = vld [vmem:[#allocation3 + $0x38] sm:$0xff]
      %v3612 = vld [vmem:[#allocation3 + $0x40] sm:$0xff]
      %v3613 = vld [vmem:[#allocation3 + $0x48] sm:$0xff]
      %v3614 = vld [vmem:[#allocation3 + $0x50] sm:$0xff]
      %v3615 = vld [vmem:[#allocation3 + $0x58] sm:$0xff]
      %v3616 = vld [vmem:[#allocation3 + $0x60] sm:$0xff]
      %v3617 = vld [vmem:[#allocation3 + $0x68] sm:$0xff]
      %v3618 = vld [vmem:[#allocation3 + $0x70] sm:$0xff]
      %v3619 = vld [vmem:[#allocation3 + $0x78] sm:$0xff]
      %v3620 = vld [vmem:[%s2] sm:$0xf]
      %v3621 = vld [vmem:[%s2 + $0x4] sm:$0xf]
      %v3622 = vld [vmem:[%s2 + $0x8] sm:$0xf]
      %v3623 = vld [vmem:[%s2 + $0xc] sm:$0xf]
      %v3624 = vld [vmem:[%s2 + $0x10] sm:$0x3]
      %v3625 = vstv %s180
      %v3631 = vunpack.c.l.b16 %v3620
      %v3632 = vunpack.c.l.b16 %v3621
      %v3633 = vunpack.c.l.b16 %v3622
      %v3634 = vunpack.c.l.b16 %v3623
      %v3635 = vunpack.c.l.b16 %v3624
      %v3636 = vpack.c.b16 %v3632, %v3631
      %v3637 = vpack.c.b16 %v3634, %v3633
      %v3638 = vpack.c.b16 %v3635, %v3635
      %vm3641 = vcmask 293888
      %v3643 = vsel %vm3641, %v3604, 0
      %v3646 = vsel %vm3641, %v3605, 0
      %v3649 = vsel %vm3641, %v3606, 0
      %v3652 = vsel %vm3641, %v3607, 0
      %v3655 = vsel %vm3641, %v3608, 0
      %v3658 = vsel %vm3641, %v3609, 0
      %v3661 = vsel %vm3641, %v3610, 0
      %v3664 = vsel %vm3641, %v3611, 0
      %v3667 = vsel %vm3641, %v3612, 0
      %v3670 = vsel %vm3641, %v3613, 0
      %v3673 = vsel %vm3641, %v3614, 0
      %v3676 = vsel %vm3641, %v3615, 0
      %v3679 = vsel %vm3641, %v3616, 0
      %v3682 = vsel %vm3641, %v3617, 0
      %v3685 = vsel %vm3641, %v3618, 0
      %v3688 = vsel %vm3641, %v3619, 0
      %vm3690 = vcmask 1041408
      %v3692 = vsel %vm3690, %v3638, 0
      %3694 = vmatprep.subr.bf16.mxu0 0
      %3695 = vmatpush1.bf16.msra.mxu0 %v3636
      %3696 = vmatprep.subr.bf16.mxu0 0
      %3697 = vmatpush1.bf16.msra.mxu0 %v3637
      %3698 = vmatprep.subr.bf16.mxu0 0
      %3699 = vmatpush1.bf16.msra.mxu0 %v3692
      %3700 = vmatprep.subr.bf16.mxu0 0
      %3701 = vmatpush1.bf16.msra.mxu0 0
      %3702 = vmatprep.subr.bf16.mxu0 0
      %3703 = vmatpush1.bf16.msra.mxu0 0
      %3704 = vmatprep.subr.bf16.mxu0 0
      %3705 = vmatpush1.bf16.msra.mxu0 0
      %3706 = vmatprep.subr.bf16.mxu0 0
      %3707 = vmatpush1.bf16.msra.mxu0 0
      %3708 = vmatprep.subr.bf16.mxu0 0
      %3709 = vmatpush1.bf16.msra.mxu0 0
      %3710 = vmatprep.subr.bf16.mxu0 0
      %3711 = vmatpush1.bf16.msra.mxu0 0
      %3712 = vmatprep.subr.bf16.mxu0 0
      %3713 = vmatpush1.bf16.msra.mxu0 0
      %3714 = vmatprep.subr.bf16.mxu0 0
      %3715 = vmatpush1.bf16.msra.mxu0 0
      %3716 = vmatprep.subr.bf16.mxu0 0
      %3717 = vmatpush1.bf16.msra.mxu0 0
      %3718 = vmatprep.subr.bf16.mxu0 0
      %3719 = vmatpush1.bf16.msra.mxu0 0
      %3720 = vmatprep.subr.bf16.mxu0 0
      %3721 = vmatpush1.bf16.msra.mxu0 0
      %3722 = vmatprep.subr.bf16.mxu0 0
      %3723 = vmatpush1.bf16.msra.mxu0 0
      %3724 = vmatprep.subr.bf16.mxu0 0
      %3725 = vmatpush1.bf16.msra.mxu0 0
      %3726 = vmatprep.mubr.bf16.mxu0 0
      %3727 = vmatmul.mubr.bf16.gmra.mrb[0].mxu0 %v3643
      %v3728 = vpop.f32.mrb[0].mxu0
      %v3729 = vadd.f32 %v3625, %v3728
      %v3730 = vpop.f32.mrb[0].mxu0
      %v3731 = vpop.f32.mrb[0].mxu0
      %v3732 = vadd.f32 %v3625, %v3731
      %v3733 = vpop.f32.mrb[0].mxu0
      %3734 = vmatprep.mubr.bf16.mxu0 0
      %3735 = vmatmul.mubr.bf16.gmra.mrb[0].mxu0 %v3646
      %v3736 = vpop.f32.mrb[0].mxu0
      %v3737 = vadd.f32 %v3625, %v3736
      %v3738 = vpop.f32.mrb[0].mxu0
      %v3739 = vpop.f32.mrb[0].mxu0
      %v3740 = vadd.f32 %v3625, %v3739
      %v3741 = vpop.f32.mrb[0].mxu0
      %3742 = vmatprep.mubr.bf16.mxu0 0
      %3743 = vmatmul.mubr.bf16.gmra.mrb[0].mxu0 %v3649
      %v3744 = vpop.f32.mrb[0].mxu0
      %v3745 = vadd.f32 %v3625, %v3744
      %v3746 = vpop.f32.mrb[0].mxu0
      %v3747 = vpop.f32.mrb[0].mxu0
      %v3748 = vadd.f32 %v3625, %v3747
      %v3749 = vpop.f32.mrb[0].mxu0
      %3750 = vmatprep.mubr.bf16.mxu0 0
      %3751 = vmatmul.mubr.bf16.gmra.mrb[0].mxu0 %v3652
      %v3752 = vpop.f32.mrb[0].mxu0
      %v3753 = vadd.f32 %v3625, %v3752
      %v3754 = vpop.f32.mrb[0].mxu0
      %v3755 = vpop.f32.mrb[0].mxu0
      %v3756 = vadd.f32 %v3625, %v3755
      %v3757 = vpop.f32.mrb[0].mxu0
      %3758 = vmatprep.mubr.bf16.mxu0 0
      %3759 = vmatmul.mubr.bf16.gmra.mrb[0].mxu0 %v3655
      %v3760 = vpop.f32.mrb[0].mxu0
      %v3761 = vadd.f32 %v3625, %v3760
      %v3762 = vpop.f32.mrb[0].mxu0
      %v3763 = vpop.f32.mrb[0].mxu0
      %v3764 = vadd.f32 %v3625, %v3763
      %v3765 = vpop.f32.mrb[0].mxu0
      %3766 = vmatprep.mubr.bf16.mxu0 0
      %3767 = vmatmul.mubr.bf16.gmra.mrb[0].mxu0 %v3658
      %v3768 = vpop.f32.mrb[0].mxu0
      %v3769 = vadd.f32 %v3625, %v3768
      %v3770 = vpop.f32.mrb[0].mxu0
      %v3771 = vpop.f32.mrb[0].mxu0
      %v3772 = vadd.f32 %v3625, %v3771
      %v3773 = vpop.f32.mrb[0].mxu0
      %3774 = vmatprep.mubr.bf16.mxu0 0
      %3775 = vmatmul.mubr.bf16.gmra.mrb[0].mxu0 %v3661
      %v3776 = vpop.f32.mrb[0].mxu0
      %v3777 = vadd.f32 %v3625, %v3776
      %v3778 = vpop.f32.mrb[0].mxu0
      %v3779 = vpop.f32.mrb[0].mxu0
      %v3780 = vadd.f32 %v3625, %v3779
      %v3781 = vpop.f32.mrb[0].mxu0
      %3782 = vmatprep.mubr.bf16.mxu0 0
      %3783 = vmatmul.mubr.bf16.gmra.mrb[0].mxu0 %v3664
      %v3784 = vpop.f32.mrb[0].mxu0
      %v3785 = vadd.f32 %v3625, %v3784
      %v3786 = vpop.f32.mrb[0].mxu0
      %v3787 = vpop.f32.mrb[0].mxu0
      %v3788 = vadd.f32 %v3625, %v3787
      %v3789 = vpop.f32.mrb[0].mxu0
      %3790 = vmatprep.mubr.bf16.mxu0 0
      %3791 = vmatmul.mubr.bf16.gmra.mrb[0].mxu0 %v3667
      %v3792 = vpop.f32.mrb[0].mxu0
      %v3793 = vadd.f32 %v3625, %v3792
      %v3794 = vpop.f32.mrb[0].mxu0
      %v3795 = vpop.f32.mrb[0].mxu0
      %v3796 = vadd.f32 %v3625, %v3795
      %v3797 = vpop.f32.mrb[0].mxu0
      %3798 = vmatprep.mubr.bf16.mxu0 0
      %3799 = vmatmul.mubr.bf16.gmra.mrb[0].mxu0 %v3670
      %v3800 = vpop.f32.mrb[0].mxu0
      %v3801 = vadd.f32 %v3625, %v3800
      %v3802 = vpop.f32.mrb[0].mxu0
      %v3803 = vpop.f32.mrb[0].mxu0
      %v3804 = vadd.f32 %v3625, %v3803
      %v3805 = vpop.f32.mrb[0].mxu0
      %3806 = vmatprep.mubr.bf16.mxu0 0
      %3807 = vmatmul.mubr.bf16.gmra.mrb[0].mxu0 %v3673
      %v3808 = vpop.f32.mrb[0].mxu0
      %v3809 = vadd.f32 %v3625, %v3808
      %v3810 = vpop.f32.mrb[0].mxu0
      %v3811 = vpop.f32.mrb[0].mxu0
      %v3812 = vadd.f32 %v3625, %v3811
      %v3813 = vpop.f32.mrb[0].mxu0
      %3814 = vmatprep.mubr.bf16.mxu0 0
      %3815 = vmatmul.mubr.bf16.gmra.mrb[0].mxu0 %v3676
      %v3816 = vpop.f32.mrb[0].mxu0
      %v3817 = vadd.f32 %v3625, %v3816
      %v3818 = vpop.f32.mrb[0].mxu0
      %v3819 = vpop.f32.mrb[0].mxu0
      %v3820 = vadd.f32 %v3625, %v3819
      %v3821 = vpop.f32.mrb[0].mxu0
      %3822 = vmatprep.mubr.bf16.mxu0 0
      %3823 = vmatmul.mubr.bf16.gmra.mrb[0].mxu0 %v3679
      %v3824 = vpop.f32.mrb[0].mxu0
      %v3825 = vadd.f32 %v3625, %v3824
      %v3826 = vpop.f32.mrb[0].mxu0
      %v3827 = vpop.f32.mrb[0].mxu0
      %v3828 = vadd.f32 %v3625, %v3827
      %v3829 = vpop.f32.mrb[0].mxu0
      %3830 = vmatprep.mubr.bf16.mxu0 0
      %3831 = vmatmul.mubr.bf16.gmra.mrb[0].mxu0 %v3682
      %v3832 = vpop.f32.mrb[0].mxu0
      %v3833 = vadd.f32 %v3625, %v3832
      %v3834 = vpop.f32.mrb[0].mxu0
      %v3835 = vpop.f32.mrb[0].mxu0
      %v3836 = vadd.f32 %v3625, %v3835
      %v3837 = vpop.f32.mrb[0].mxu0
      %3838 = vmatprep.mubr.bf16.mxu0 0
      %3839 = vmatmul.mubr.bf16.gmra.mrb[0].mxu0 %v3685
      %v3840 = vpop.f32.mrb[0].mxu0
      %v3841 = vadd.f32 %v3625, %v3840
      %v3842 = vpop.f32.mrb[0].mxu0
      %v3843 = vpop.f32.mrb[0].mxu0
      %v3844 = vadd.f32 %v3625, %v3843
      %v3845 = vpop.f32.mrb[0].mxu0
      %3846 = vmatprep.mubr.bf16.mxu0 0
      %3847 = vmatmul.mubr.bf16.gmra.mrb[0].mxu0 %v3688
      %v3848 = vpop.f32.mrb[0].mxu0
      %v3849 = vadd.f32 %v3625, %v3848
      %v3850 = vpop.f32.mrb[0].mxu0
      %v3851 = vpop.f32.mrb[0].mxu0
      %v3852 = vadd.f32 %v3625, %v3851
      %v3853 = vpop.f32.mrb[0].mxu0
      %3854 = vdwg.mxu0
      %v3855 = vmax.f32 %v3729, 0.0
      %v3856 = vmax.f32 %v3732, 0.0
      %v3857 = vmax.f32 %v3737, 0.0
      %v3858 = vmax.f32 %v3740, 0.0
      %v3859 = vmax.f32 %v3745, 0.0
      %v3860 = vmax.f32 %v3748, 0.0
      %v3861 = vmax.f32 %v3753, 0.0
      %v3862 = vmax.f32 %v3756, 0.0
      %v3863 = vmax.f32 %v3761, 0.0
      %v3864 = vmax.f32 %v3764, 0.0
      %v3865 = vmax.f32 %v3769, 0.0
      %v3866 = vmax.f32 %v3772, 0.0
      %v3867 = vmax.f32 %v3777, 0.0
      %v3868 = vmax.f32 %v3780, 0.0
      %v3869 = vmax.f32 %v3785, 0.0
      %v3870 = vmax.f32 %v3788, 0.0
      %v3871 = vmax.f32 %v3793, 0.0
      %v3872 = vmax.f32 %v3796, 0.0
      %v3873 = vmax.f32 %v3801, 0.0
      %v3874 = vmax.f32 %v3804, 0.0
      %v3875 = vmax.f32 %v3809, 0.0
      %v3876 = vmax.f32 %v3812, 0.0
      %v3877 = vmax.f32 %v3817, 0.0
      %v3878 = vmax.f32 %v3820, 0.0
      %v3879 = vmax.f32 %v3825, 0.0
      %v3880 = vmax.f32 %v3828, 0.0
      %v3881 = vmax.f32 %v3833, 0.0
      %v3882 = vmax.f32 %v3836, 0.0
      %v3883 = vmax.f32 %v3841, 0.0
      %v3884 = vmax.f32 %v3844, 0.0
      %v3885 = vmax.f32 %v3849, 0.0
      %v3886 = vmax.f32 %v3852, 0.0
      %v3887 = vstv %s181
      %v3888 = vadd.f32 %v3855, %v3887
      %v3889 = vadd.f32 %v3856, %v3887
      %v3890 = vadd.f32 %v3857, %v3887
      %v3891 = vadd.f32 %v3858, %v3887
      %v3892 = vadd.f32 %v3859, %v3887
      %v3893 = vadd.f32 %v3860, %v3887
      %v3894 = vadd.f32 %v3861, %v3887
      %v3895 = vadd.f32 %v3862, %v3887
      %v3896 = vadd.f32 %v3863, %v3887
      %v3897 = vadd.f32 %v3864, %v3887
      %v3898 = vadd.f32 %v3865, %v3887
      %v3899 = vadd.f32 %v3866, %v3887
      %v3900 = vadd.f32 %v3867, %v3887
      %v3901 = vadd.f32 %v3868, %v3887
      %v3902 = vadd.f32 %v3869, %v3887
      %v3903 = vadd.f32 %v3870, %v3887
      %v3904 = vadd.f32 %v3871, %v3887
      %v3905 = vadd.f32 %v3872, %v3887
      %v3906 = vadd.f32 %v3873, %v3887
      %v3907 = vadd.f32 %v3874, %v3887
      %v3908 = vadd.f32 %v3875, %v3887
      %v3909 = vadd.f32 %v3876, %v3887
      %v3910 = vadd.f32 %v3877, %v3887
      %v3911 = vadd.f32 %v3878, %v3887
      %v3912 = vadd.f32 %v3879, %v3887
      %v3913 = vadd.f32 %v3880, %v3887
      %v3914 = vadd.f32 %v3881, %v3887
      %v3915 = vadd.f32 %v3882, %v3887
      %v3916 = vadd.f32 %v3883, %v3887
      %v3917 = vadd.f32 %v3884, %v3887
      %v3918 = vadd.f32 %v3885, %v3887
      %v3919 = vadd.f32 %v3886, %v3887
      %3920 = vst.msk [vmem:[#allocation4] sm:$0xf] %vm281, 0
      %3921 = vst.msk [vmem:[#allocation4 + $0x4] sm:$0xf] %vm281, 0
      %3922 = vst.msk [vmem:[#allocation4 + $0x8] sm:$0x1] %vm284, 0
      %s3923 = scalar_lea.vmem [#allocation4], 204
      %3924 = vst.msk [vmem:[%s3923] sm:$0xf] %vm281, 0
      %3925 = vst.msk [vmem:[%s3923 + $0x4] sm:$0xf] %vm281, 0
      %3926 = vst.msk [vmem:[%s3923 + $0x8] sm:$0x1] %vm284, 0
      %v3927 = vld [vmem:[#allocation4] sm:$0x1]
      %v3928 = vsel %vm292, 0, %v3927
      %3929 = vst [vmem:[#allocation4] sm:$0x1] %v3928
      %v3930 = vld [vmem:[#allocation4 + $0xc] sm:$0x1]
      %v3931 = vsel %vm292, 0, %v3930
      %3932 = vst [vmem:[#allocation4 + $0xc] sm:$0x1] %v3931
      %v3933 = vld [vmem:[#allocation4 + $0x18] sm:$0x1]
      %v3934 = vsel %vm292, 0, %v3933
      %3935 = vst [vmem:[#allocation4 + $0x18] sm:$0x1] %v3934
      %v3936 = vld [vmem:[#allocation4 + $0x24] sm:$0x1]
      %v3937 = vsel %vm292, 0, %v3936
      %3938 = vst [vmem:[#allocation4 + $0x24] sm:$0x1] %v3937
      %v3939 = vld [vmem:[#allocation4 + $0x30] sm:$0x1]
      %v3940 = vsel %vm292, 0, %v3939
      %3941 = vst [vmem:[#allocation4 + $0x30] sm:$0x1] %v3940
      %v3942 = vld [vmem:[#allocation4 + $0x3c] sm:$0x1]
      %v3943 = vsel %vm292, 0, %v3942
      %3944 = vst [vmem:[#allocation4 + $0x3c] sm:$0x1] %v3943
      %v3945 = vld [vmem:[#allocation4 + $0x48] sm:$0x1]
      %v3946 = vsel %vm292, 0, %v3945
      %3947 = vst [vmem:[#allocation4 + $0x48] sm:$0x1] %v3946
      %v3948 = vld [vmem:[#allocation4 + $0x54] sm:$0x1]
      %v3949 = vsel %vm292, 0, %v3948
      %3950 = vst [vmem:[#allocation4 + $0x54] sm:$0x1] %v3949
      %v3951 = vld [vmem:[#allocation4 + $0x60] sm:$0x1]
      %v3952 = vsel %vm292, 0, %v3951
      %3953 = vst [vmem:[#allocation4 + $0x60] sm:$0x1] %v3952
      %v3954 = vld [vmem:[#allocation4 + $0x6c] sm:$0x1]
      %v3955 = vsel %vm292, 0, %v3954
      %3956 = vst [vmem:[#allocation4 + $0x6c] sm:$0x1] %v3955
      %v3957 = vld [vmem:[#allocation4 + $0x78] sm:$0x1]
      %v3958 = vsel %vm292, 0, %v3957
      %3959 = vst [vmem:[#allocation4 + $0x78] sm:$0x1] %v3958
      %v3960 = vld [vmem:[#allocation4 + $0x84] sm:$0x1]
      %v3961 = vsel %vm292, 0, %v3960
      %3962 = vst [vmem:[#allocation4 + $0x84] sm:$0x1] %v3961
      %v3963 = vld [vmem:[#allocation4 + $0x90] sm:$0x1]
      %v3964 = vsel %vm292, 0, %v3963
      %3965 = vst [vmem:[#allocation4 + $0x90] sm:$0x1] %v3964
      %v3966 = vld [vmem:[#allocation4 + $0x9c] sm:$0x1]
      %v3967 = vsel %vm292, 0, %v3966
      %3968 = vst [vmem:[#allocation4 + $0x9c] sm:$0x1] %v3967
      %v3969 = vld [vmem:[#allocation4 + $0xa8] sm:$0x1]
      %v3970 = vsel %vm292, 0, %v3969
      %3971 = vst [vmem:[#allocation4 + $0xa8] sm:$0x1] %v3970
      %v3972 = vld [vmem:[#allocation4 + $0xb4] sm:$0x1]
      %v3973 = vsel %vm292, 0, %v3972
      %3974 = vst [vmem:[#allocation4 + $0xb4] sm:$0x1] %v3973
      %v3975 = vld [vmem:[#allocation4 + $0xc0] sm:$0x1]
      %v3976 = vsel %vm292, 0, %v3975
      %3977 = vst [vmem:[#allocation4 + $0xc0] sm:$0x1] %v3976
      %v3978 = vld [vmem:[#allocation4 + $0xcc] sm:$0x1]
      %v3979 = vsel %vm292, 0, %v3978
      %3980 = vst [vmem:[#allocation4 + $0xcc] sm:$0x1] %v3979
      %v3981 = vld [vmem:[#allocation4 + $0x8] sm:$0x1]
      %v3982 = vsel %vm348, 0, %v3981
      %3983 = vst [vmem:[#allocation4 + $0x8] sm:$0x1] %v3982
      %v3984 = vld [vmem:[#allocation4 + $0x14] sm:$0x1]
      %v3985 = vsel %vm348, 0, %v3984
      %3986 = vst [vmem:[#allocation4 + $0x14] sm:$0x1] %v3985
      %v3987 = vld [vmem:[#allocation4 + $0x20] sm:$0x1]
      %v3988 = vsel %vm348, 0, %v3987
      %3989 = vst [vmem:[#allocation4 + $0x20] sm:$0x1] %v3988
      %v3990 = vld [vmem:[#allocation4 + $0x2c] sm:$0x1]
      %v3991 = vsel %vm348, 0, %v3990
      %3992 = vst [vmem:[#allocation4 + $0x2c] sm:$0x1] %v3991
      %v3993 = vld [vmem:[#allocation4 + $0x38] sm:$0x1]
      %v3994 = vsel %vm348, 0, %v3993
      %3995 = vst [vmem:[#allocation4 + $0x38] sm:$0x1] %v3994
      %v3996 = vld [vmem:[#allocation4 + $0x44] sm:$0x1]
      %v3997 = vsel %vm348, 0, %v3996
      %3998 = vst [vmem:[#allocation4 + $0x44] sm:$0x1] %v3997
      %v3999 = vld [vmem:[#allocation4 + $0x50] sm:$0x1]
      %v4000 = vsel %vm348, 0, %v3999
      %4001 = vst [vmem:[#allocation4 + $0x50] sm:$0x1] %v4000
      %v4002 = vld [vmem:[#allocation4 + $0x5c] sm:$0x1]
      %v4003 = vsel %vm348, 0, %v4002
      %4004 = vst [vmem:[#allocation4 + $0x5c] sm:$0x1] %v4003
      %v4005 = vld [vmem:[#allocation4 + $0x68] sm:$0x1]
      %v4006 = vsel %vm348, 0, %v4005
      %4007 = vst [vmem:[#allocation4 + $0x68] sm:$0x1] %v4006
      %v4008 = vld [vmem:[#allocation4 + $0x74] sm:$0x1]
      %v4009 = vsel %vm348, 0, %v4008
      %4010 = vst [vmem:[#allocation4 + $0x74] sm:$0x1] %v4009
      %v4011 = vld [vmem:[#allocation4 + $0x80] sm:$0x1]
      %v4012 = vsel %vm348, 0, %v4011
      %4013 = vst [vmem:[#allocation4 + $0x80] sm:$0x1] %v4012
      %v4014 = vld [vmem:[#allocation4 + $0x8c] sm:$0x1]
      %v4015 = vsel %vm348, 0, %v4014
      %4016 = vst [vmem:[#allocation4 + $0x8c] sm:$0x1] %v4015
      %v4017 = vld [vmem:[#allocation4 + $0x98] sm:$0x1]
      %v4018 = vsel %vm348, 0, %v4017
      %4019 = vst [vmem:[#allocation4 + $0x98] sm:$0x1] %v4018
      %v4020 = vld [vmem:[#allocation4 + $0xa4] sm:$0x1]
      %v4021 = vsel %vm348, 0, %v4020
      %4022 = vst [vmem:[#allocation4 + $0xa4] sm:$0x1] %v4021
      %v4023 = vld [vmem:[#allocation4 + $0xb0] sm:$0x1]
      %v4024 = vsel %vm348, 0, %v4023
      %4025 = vst [vmem:[#allocation4 + $0xb0] sm:$0x1] %v4024
      %v4026 = vld [vmem:[#allocation4 + $0xbc] sm:$0x1]
      %v4027 = vsel %vm348, 0, %v4026
      %4028 = vst [vmem:[#allocation4 + $0xbc] sm:$0x1] %v4027
      %v4029 = vld [vmem:[#allocation4 + $0xc8] sm:$0x1]
      %v4030 = vsel %vm348, 0, %v4029
      %4031 = vst [vmem:[#allocation4 + $0xc8] sm:$0x1] %v4030
      %v4032 = vld [vmem:[#allocation4 + $0xd4] sm:$0x1]
      %v4033 = vsel %vm348, 0, %v4032
      %4034 = vst [vmem:[#allocation4 + $0xd4] sm:$0x1] %v4033
      %v4035 = vpack.c.bf16 %v3889, %v3888
      %v4036 = vpack.c.bf16 %v3891, %v3890
      %v4037 = vpack.c.bf16 %v3893, %v3892
      %v4038 = vpack.c.bf16 %v3895, %v3894
      %v4039 = vpack.c.bf16 %v3897, %v3896
      %v4040 = vpack.c.bf16 %v3899, %v3898
      %v4041 = vpack.c.bf16 %v3901, %v3900
      %v4042 = vpack.c.bf16 %v3903, %v3902
      %v4043 = vpack.c.bf16 %v3905, %v3904
      %v4044 = vpack.c.bf16 %v3907, %v3906
      %v4045 = vpack.c.bf16 %v3909, %v3908
      %v4046 = vpack.c.bf16 %v3911, %v3910
      %v4047 = vpack.c.bf16 %v3913, %v3912
      %v4048 = vpack.c.bf16 %v3915, %v3914
      %v4049 = vpack.c.bf16 %v3917, %v3916
      %v4050 = vpack.c.bf16 %v3919, %v3918
      %v4067 = vunpack.c.l.b16 %v4035
      %v4068 = vunpack.c.h.b16 %v4035
      %v4069 = vunpack.c.l.b16 %v4036
      %v4070 = vunpack.c.h.b16 %v4036
      %v4071 = vunpack.c.l.b16 %v4037
      %v4072 = vunpack.c.h.b16 %v4037
      %v4073 = vunpack.c.l.b16 %v4038
      %v4074 = vunpack.c.h.b16 %v4038
      %v4075 = vunpack.c.l.b16 %v4039
      %v4076 = vunpack.c.h.b16 %v4039
      %v4077 = vunpack.c.l.b16 %v4040
      %v4078 = vunpack.c.h.b16 %v4040
      %v4079 = vunpack.c.l.b16 %v4041
      %v4080 = vunpack.c.h.b16 %v4041
      %v4081 = vunpack.c.l.b16 %v4042
      %v4082 = vunpack.c.h.b16 %v4042
      %v4083 = vunpack.c.l.b16 %v4043
      %v4084 = vunpack.c.h.b16 %v4043
      %v4085 = vunpack.c.l.b16 %v4044
      %v4086 = vunpack.c.h.b16 %v4044
      %v4087 = vunpack.c.l.b16 %v4045
      %v4088 = vunpack.c.h.b16 %v4045
      %v4089 = vunpack.c.l.b16 %v4046
      %v4090 = vunpack.c.h.b16 %v4046
      %v4091 = vunpack.c.l.b16 %v4047
      %v4092 = vunpack.c.h.b16 %v4047
      %v4093 = vunpack.c.l.b16 %v4048
      %v4094 = vunpack.c.h.b16 %v4048
      %v4095 = vunpack.c.l.b16 %v4049
      %v4096 = vunpack.c.h.b16 %v4049
      %v4097 = vunpack.c.l.b16 %v4050
      %v4098 = vunpack.c.h.b16 %v4050
      %v4099 = vpack.c.b16 %v4067, %v4067
      %v4100 = vpack.c.b16 %v4068, %v4068
      %v4101 = vpack.c.b16 %v4069, %v4069
      %v4102 = vpack.c.b16 %v4070, %v4070
      %v4103 = vpack.c.b16 %v4071, %v4071
      %v4104 = vpack.c.b16 %v4072, %v4072
      %v4105 = vpack.c.b16 %v4073, %v4073
      %v4106 = vpack.c.b16 %v4074, %v4074
      %v4107 = vpack.c.b16 %v4075, %v4075
      %v4108 = vpack.c.b16 %v4076, %v4076
      %v4109 = vpack.c.b16 %v4077, %v4077
      %v4110 = vpack.c.b16 %v4078, %v4078
      %v4111 = vpack.c.b16 %v4079, %v4079
      %v4112 = vpack.c.b16 %v4080, %v4080
      %v4113 = vpack.c.b16 %v4081, %v4081
      %v4114 = vpack.c.b16 %v4082, %v4082
      %v4115 = vpack.c.b16 %v4083, %v4083
      %v4116 = vpack.c.b16 %v4084, %v4084
      %v4117 = vpack.c.b16 %v4085, %v4085
      %v4118 = vpack.c.b16 %v4086, %v4086
      %v4119 = vpack.c.b16 %v4087, %v4087
      %v4120 = vpack.c.b16 %v4088, %v4088
      %v4121 = vpack.c.b16 %v4089, %v4089
      %v4122 = vpack.c.b16 %v4090, %v4090
      %v4123 = vpack.c.b16 %v4091, %v4091
      %v4124 = vpack.c.b16 %v4092, %v4092
      %v4125 = vpack.c.b16 %v4093, %v4093
      %v4126 = vpack.c.b16 %v4094, %v4094
      %v4127 = vpack.c.b16 %v4095, %v4095
      %v4128 = vpack.c.b16 %v4096, %v4096
      %v4129 = vpack.c.b16 %v4097, %v4097
      %v4130 = vpack.c.b16 %v4098, %v4098
      %v4132 = vshrl.u32 %v4099, 16
      %v4134 = vrot.slane %v4132, 7
      %v4135 = vshll.u32 %v4099, 16
      %v4137 = vor.u32 %v4134, %v4135
      %v4138 = vrot.slane %v4134, 4
      %v4140 = vshrl.u32 %v4100, 16
      %v4142 = vrot.slane %v4140, 7
      %v4143 = vshll.u32 %v4100, 16
      %v4145 = vor.u32 %v4142, %v4143
      %v4146 = vsel %vm500, %v4138, %v4145
      %v4147 = vrot.slane %v4142, 4
      %v4149 = vshrl.u32 %v4101, 16
      %v4151 = vrot.slane %v4149, 7
      %v4152 = vshll.u32 %v4101, 16
      %v4154 = vor.u32 %v4151, %v4152
      %v4155 = vrot.slane %v4151, 4
      %v4157 = vshrl.u32 %v4102, 16
      %v4159 = vrot.slane %v4157, 7
      %v4160 = vshll.u32 %v4102, 16
      %v4162 = vor.u32 %v4159, %v4160
      %v4163 = vsel %vm500, %v4155, %v4162
      %v4164 = vrot.slane %v4159, 4
      %v4166 = vshrl.u32 %v4103, 16
      %v4168 = vrot.slane %v4166, 7
      %v4169 = vshll.u32 %v4103, 16
      %v4171 = vor.u32 %v4168, %v4169
      %v4172 = vrot.slane %v4168, 4
      %v4174 = vshrl.u32 %v4104, 16
      %v4176 = vrot.slane %v4174, 7
      %v4177 = vshll.u32 %v4104, 16
      %v4179 = vor.u32 %v4176, %v4177
      %v4180 = vsel %vm500, %v4172, %v4179
      %v4181 = vrot.slane %v4176, 4
      %v4183 = vshrl.u32 %v4105, 16
      %v4185 = vrot.slane %v4183, 7
      %v4186 = vshll.u32 %v4105, 16
      %v4188 = vor.u32 %v4185, %v4186
      %v4189 = vrot.slane %v4185, 4
      %v4191 = vshrl.u32 %v4106, 16
      %v4193 = vrot.slane %v4191, 7
      %v4194 = vshll.u32 %v4106, 16
      %v4196 = vor.u32 %v4193, %v4194
      %v4197 = vsel %vm500, %v4189, %v4196
      %v4198 = vrot.slane %v4193, 4
      %v4200 = vshrl.u32 %v4107, 16
      %v4202 = vrot.slane %v4200, 7
      %v4203 = vshll.u32 %v4107, 16
      %v4205 = vor.u32 %v4202, %v4203
      %v4206 = vrot.slane %v4202, 4
      %v4208 = vshrl.u32 %v4108, 16
      %v4210 = vrot.slane %v4208, 7
      %v4211 = vshll.u32 %v4108, 16
      %v4213 = vor.u32 %v4210, %v4211
      %v4214 = vsel %vm500, %v4206, %v4213
      %v4215 = vrot.slane %v4210, 4
      %v4217 = vshrl.u32 %v4109, 16
      %v4219 = vrot.slane %v4217, 7
      %v4220 = vshll.u32 %v4109, 16
      %v4222 = vor.u32 %v4219, %v4220
      %v4223 = vrot.slane %v4219, 4
      %v4225 = vshrl.u32 %v4110, 16
      %v4227 = vrot.slane %v4225, 7
      %v4228 = vshll.u32 %v4110, 16
      %v4230 = vor.u32 %v4227, %v4228
      %v4231 = vsel %vm500, %v4223, %v4230
      %v4232 = vrot.slane %v4227, 4
      %v4234 = vshrl.u32 %v4111, 16
      %v4236 = vrot.slane %v4234, 7
      %v4237 = vshll.u32 %v4111, 16
      %v4239 = vor.u32 %v4236, %v4237
      %v4240 = vrot.slane %v4236, 4
      %v4242 = vshrl.u32 %v4112, 16
      %v4244 = vrot.slane %v4242, 7
      %v4245 = vshll.u32 %v4112, 16
      %v4247 = vor.u32 %v4244, %v4245
      %v4248 = vsel %vm500, %v4240, %v4247
      %v4249 = vrot.slane %v4244, 4
      %v4251 = vshrl.u32 %v4113, 16
      %v4253 = vrot.slane %v4251, 7
      %v4254 = vshll.u32 %v4113, 16
      %v4256 = vor.u32 %v4253, %v4254
      %v4257 = vrot.slane %v4253, 4
      %v4259 = vshrl.u32 %v4114, 16
      %v4261 = vrot.slane %v4259, 7
      %v4262 = vshll.u32 %v4114, 16
      %v4264 = vor.u32 %v4261, %v4262
      %v4265 = vsel %vm500, %v4257, %v4264
      %v4266 = vrot.slane %v4261, 4
      %v4268 = vshrl.u32 %v4115, 16
      %v4270 = vrot.slane %v4268, 7
      %v4271 = vshll.u32 %v4115, 16
      %v4273 = vor.u32 %v4270, %v4271
      %v4274 = vrot.slane %v4270, 4
      %v4276 = vshrl.u32 %v4116, 16
      %v4278 = vrot.slane %v4276, 7
      %v4279 = vshll.u32 %v4116, 16
      %v4281 = vor.u32 %v4278, %v4279
      %v4282 = vsel %vm500, %v4274, %v4281
      %v4283 = vrot.slane %v4278, 4
      %v4285 = vshrl.u32 %v4117, 16
      %v4287 = vrot.slane %v4285, 7
      %v4288 = vshll.u32 %v4117, 16
      %v4290 = vor.u32 %v4287, %v4288
      %v4291 = vrot.slane %v4287, 4
      %v4293 = vshrl.u32 %v4118, 16
      %v4295 = vrot.slane %v4293, 7
      %v4296 = vshll.u32 %v4118, 16
      %v4298 = vor.u32 %v4295, %v4296
      %v4299 = vsel %vm500, %v4291, %v4298
      %v4300 = vrot.slane %v4295, 4
      %v4302 = vshrl.u32 %v4119, 16
      %v4304 = vrot.slane %v4302, 7
      %v4305 = vshll.u32 %v4119, 16
      %v4307 = vor.u32 %v4304, %v4305
      %v4308 = vrot.slane %v4304, 4
      %v4310 = vshrl.u32 %v4120, 16
      %v4312 = vrot.slane %v4310, 7
      %v4313 = vshll.u32 %v4120, 16
      %v4315 = vor.u32 %v4312, %v4313
      %v4316 = vsel %vm500, %v4308, %v4315
      %v4317 = vrot.slane %v4312, 4
      %v4319 = vshrl.u32 %v4121, 16
      %v4321 = vrot.slane %v4319, 7
      %v4322 = vshll.u32 %v4121, 16
      %v4324 = vor.u32 %v4321, %v4322
      %v4325 = vrot.slane %v4321, 4
      %v4327 = vshrl.u32 %v4122, 16
      %v4329 = vrot.slane %v4327, 7
      %v4330 = vshll.u32 %v4122, 16
      %v4332 = vor.u32 %v4329, %v4330
      %v4333 = vsel %vm500, %v4325, %v4332
      %v4334 = vrot.slane %v4329, 4
      %v4336 = vshrl.u32 %v4123, 16
      %v4338 = vrot.slane %v4336, 7
      %v4339 = vshll.u32 %v4123, 16
      %v4341 = vor.u32 %v4338, %v4339
      %v4342 = vrot.slane %v4338, 4
      %v4344 = vshrl.u32 %v4124, 16
      %v4346 = vrot.slane %v4344, 7
      %v4347 = vshll.u32 %v4124, 16
      %v4349 = vor.u32 %v4346, %v4347
      %v4350 = vsel %vm500, %v4342, %v4349
      %v4351 = vrot.slane %v4346, 4
      %v4353 = vshrl.u32 %v4125, 16
      %v4355 = vrot.slane %v4353, 7
      %v4356 = vshll.u32 %v4125, 16
      %v4358 = vor.u32 %v4355, %v4356
      %v4359 = vrot.slane %v4355, 4
      %v4361 = vshrl.u32 %v4126, 16
      %v4363 = vrot.slane %v4361, 7
      %v4364 = vshll.u32 %v4126, 16
      %v4366 = vor.u32 %v4363, %v4364
      %v4367 = vsel %vm500, %v4359, %v4366
      %v4368 = vrot.slane %v4363, 4
      %v4370 = vshrl.u32 %v4127, 16
      %v4372 = vrot.slane %v4370, 7
      %v4373 = vshll.u32 %v4127, 16
      %v4375 = vor.u32 %v4372, %v4373
      %v4376 = vrot.slane %v4372, 4
      %v4378 = vshrl.u32 %v4128, 16
      %v4380 = vrot.slane %v4378, 7
      %v4381 = vshll.u32 %v4128, 16
      %v4383 = vor.u32 %v4380, %v4381
      %v4384 = vsel %vm500, %v4376, %v4383
      %v4385 = vrot.slane %v4380, 4
      %v4387 = vshrl.u32 %v4129, 16
      %v4389 = vrot.slane %v4387, 7
      %v4390 = vshll.u32 %v4129, 16
      %v4392 = vor.u32 %v4389, %v4390
      %v4393 = vrot.slane %v4389, 4
      %v4395 = vshrl.u32 %v4130, 16
      %v4397 = vrot.slane %v4395, 7
      %v4398 = vshll.u32 %v4130, 16
      %v4400 = vor.u32 %v4397, %v4398
      %v4401 = vsel %vm500, %v4393, %v4400
      %v4402 = vrot.slane %v4397, 4
      %s4451 = scalar_lea.vmem [#allocation4], 12
      %v4452 = vld [vmem:[%s4451] sm:$0xf]
      %v4453 = vsel %vm823, %v4137, %v4452
      %4454 = vst [vmem:[%s4451] sm:$0xf] %v4453
      %4455 = vst.msk [vmem:[%s4451 + $0x4] sm:$0xf] %vm281, %v4146
      %v4456 = vld [vmem:[%s4451 + $0x8] sm:$0x1]
      %v4457 = vsel %vm292, %v4147, %v4456
      %4458 = vst [vmem:[%s4451 + $0x8] sm:$0x1] %v4457
      %v4459 = vld [vmem:[%s4451 + $0xc] sm:$0xf]
      %v4460 = vsel %vm823, %v4154, %v4459
      %4461 = vst [vmem:[%s4451 + $0xc] sm:$0xf] %v4460
      %4462 = vst.msk [vmem:[%s4451 + $0x10] sm:$0xf] %vm281, %v4163
      %v4463 = vld [vmem:[%s4451 + $0x14] sm:$0x1]
      %v4464 = vsel %vm292, %v4164, %v4463
      %4465 = vst [vmem:[%s4451 + $0x14] sm:$0x1] %v4464
      %v4466 = vld [vmem:[%s4451 + $0x18] sm:$0xf]
      %v4467 = vsel %vm823, %v4171, %v4466
      %4468 = vst [vmem:[%s4451 + $0x18] sm:$0xf] %v4467
      %4469 = vst.msk [vmem:[%s4451 + $0x1c] sm:$0xf] %vm281, %v4180
      %v4470 = vld [vmem:[%s4451 + $0x20] sm:$0x1]
      %v4471 = vsel %vm292, %v4181, %v4470
      %4472 = vst [vmem:[%s4451 + $0x20] sm:$0x1] %v4471
      %v4473 = vld [vmem:[%s4451 + $0x24] sm:$0xf]
      %v4474 = vsel %vm823, %v4188, %v4473
      %4475 = vst [vmem:[%s4451 + $0x24] sm:$0xf] %v4474
      %4476 = vst.msk [vmem:[%s4451 + $0x28] sm:$0xf] %vm281, %v4197
      %v4477 = vld [vmem:[%s4451 + $0x2c] sm:$0x1]
      %v4478 = vsel %vm292, %v4198, %v4477
      %4479 = vst [vmem:[%s4451 + $0x2c] sm:$0x1] %v4478
      %v4480 = vld [vmem:[%s4451 + $0x30] sm:$0xf]
      %v4481 = vsel %vm823, %v4205, %v4480
      %4482 = vst [vmem:[%s4451 + $0x30] sm:$0xf] %v4481
      %4483 = vst.msk [vmem:[%s4451 + $0x34] sm:$0xf] %vm281, %v4214
      %v4484 = vld [vmem:[%s4451 + $0x38] sm:$0x1]
      %v4485 = vsel %vm292, %v4215, %v4484
      %4486 = vst [vmem:[%s4451 + $0x38] sm:$0x1] %v4485
      %v4487 = vld [vmem:[%s4451 + $0x3c] sm:$0xf]
      %v4488 = vsel %vm823, %v4222, %v4487
      %4489 = vst [vmem:[%s4451 + $0x3c] sm:$0xf] %v4488
      %4490 = vst.msk [vmem:[%s4451 + $0x40] sm:$0xf] %vm281, %v4231
      %v4491 = vld [vmem:[%s4451 + $0x44] sm:$0x1]
      %v4492 = vsel %vm292, %v4232, %v4491
      %4493 = vst [vmem:[%s4451 + $0x44] sm:$0x1] %v4492
      %v4494 = vld [vmem:[%s4451 + $0x48] sm:$0xf]
      %v4495 = vsel %vm823, %v4239, %v4494
      %4496 = vst [vmem:[%s4451 + $0x48] sm:$0xf] %v4495
      %4497 = vst.msk [vmem:[%s4451 + $0x4c] sm:$0xf] %vm281, %v4248
      %v4498 = vld [vmem:[%s4451 + $0x50] sm:$0x1]
      %v4499 = vsel %vm292, %v4249, %v4498
      %4500 = vst [vmem:[%s4451 + $0x50] sm:$0x1] %v4499
      %v4501 = vld [vmem:[%s4451 + $0x54] sm:$0xf]
      %v4502 = vsel %vm823, %v4256, %v4501
      %4503 = vst [vmem:[%s4451 + $0x54] sm:$0xf] %v4502
      %4504 = vst.msk [vmem:[%s4451 + $0x58] sm:$0xf] %vm281, %v4265
      %v4505 = vld [vmem:[%s4451 + $0x5c] sm:$0x1]
      %v4506 = vsel %vm292, %v4266, %v4505
      %4507 = vst [vmem:[%s4451 + $0x5c] sm:$0x1] %v4506
      %v4508 = vld [vmem:[%s4451 + $0x60] sm:$0xf]
      %v4509 = vsel %vm823, %v4273, %v4508
      %4510 = vst [vmem:[%s4451 + $0x60] sm:$0xf] %v4509
      %4511 = vst.msk [vmem:[%s4451 + $0x64] sm:$0xf] %vm281, %v4282
      %v4512 = vld [vmem:[%s4451 + $0x68] sm:$0x1]
      %v4513 = vsel %vm292, %v4283, %v4512
      %4514 = vst [vmem:[%s4451 + $0x68] sm:$0x1] %v4513
      %v4515 = vld [vmem:[%s4451 + $0x6c] sm:$0xf]
      %v4516 = vsel %vm823, %v4290, %v4515
      %4517 = vst [vmem:[%s4451 + $0x6c] sm:$0xf] %v4516
      %4518 = vst.msk [vmem:[%s4451 + $0x70] sm:$0xf] %vm281, %v4299
      %v4519 = vld [vmem:[%s4451 + $0x74] sm:$0x1]
      %v4520 = vsel %vm292, %v4300, %v4519
      %4521 = vst [vmem:[%s4451 + $0x74] sm:$0x1] %v4520
      %v4522 = vld [vmem:[%s4451 + $0x78] sm:$0xf]
      %v4523 = vsel %vm823, %v4307, %v4522
      %4524 = vst [vmem:[%s4451 + $0x78] sm:$0xf] %v4523
      %4525 = vst.msk [vmem:[%s4451 + $0x7c] sm:$0xf] %vm281, %v4316
      %v4526 = vld [vmem:[%s4451 + $0x80] sm:$0x1]
      %v4527 = vsel %vm292, %v4317, %v4526
      %4528 = vst [vmem:[%s4451 + $0x80] sm:$0x1] %v4527
      %v4529 = vld [vmem:[%s4451 + $0x84] sm:$0xf]
      %v4530 = vsel %vm823, %v4324, %v4529
      %4531 = vst [vmem:[%s4451 + $0x84] sm:$0xf] %v4530
      %4532 = vst.msk [vmem:[%s4451 + $0x88] sm:$0xf] %vm281, %v4333
      %v4533 = vld [vmem:[%s4451 + $0x8c] sm:$0x1]
      %v4534 = vsel %vm292, %v4334, %v4533
      %4535 = vst [vmem:[%s4451 + $0x8c] sm:$0x1] %v4534
      %v4536 = vld [vmem:[%s4451 + $0x90] sm:$0xf]
      %v4537 = vsel %vm823, %v4341, %v4536
      %4538 = vst [vmem:[%s4451 + $0x90] sm:$0xf] %v4537
      %4539 = vst.msk [vmem:[%s4451 + $0x94] sm:$0xf] %vm281, %v4350
      %v4540 = vld [vmem:[%s4451 + $0x98] sm:$0x1]
      %v4541 = vsel %vm292, %v4351, %v4540
      %4542 = vst [vmem:[%s4451 + $0x98] sm:$0x1] %v4541
      %v4543 = vld [vmem:[%s4451 + $0x9c] sm:$0xf]
      %v4544 = vsel %vm823, %v4358, %v4543
      %4545 = vst [vmem:[%s4451 + $0x9c] sm:$0xf] %v4544
      %4546 = vst.msk [vmem:[%s4451 + $0xa0] sm:$0xf] %vm281, %v4367
      %v4547 = vld [vmem:[%s4451 + $0xa4] sm:$0x1]
      %v4548 = vsel %vm292, %v4368, %v4547
      %4549 = vst [vmem:[%s4451 + $0xa4] sm:$0x1] %v4548
      %v4550 = vld [vmem:[%s4451 + $0xa8] sm:$0xf]
      %v4551 = vsel %vm823, %v4375, %v4550
      %4552 = vst [vmem:[%s4451 + $0xa8] sm:$0xf] %v4551
      %4553 = vst.msk [vmem:[%s4451 + $0xac] sm:$0xf] %vm281, %v4384
      %v4554 = vld [vmem:[%s4451 + $0xb0] sm:$0x1]
      %v4555 = vsel %vm292, %v4385, %v4554
      %4556 = vst [vmem:[%s4451 + $0xb0] sm:$0x1] %v4555
      %v4557 = vld [vmem:[%s4451 + $0xb4] sm:$0xf]
      %v4558 = vsel %vm823, %v4392, %v4557
      %4559 = vst [vmem:[%s4451 + $0xb4] sm:$0xf] %v4558
      %4560 = vst.msk [vmem:[%s4451 + $0xb8] sm:$0xf] %vm281, %v4401
      %v4561 = vld [vmem:[%s4451 + $0xbc] sm:$0x1]
      %v4562 = vsel %vm292, %v4402, %v4561
      %4563 = vst [vmem:[%s4451 + $0xbc] sm:$0x1] %v4562
      %v4564 = vld [vmem:[#allocation4] sm:$0xf]
      %v4565 = vld [vmem:[#allocation4 + $0x4] sm:$0xf]
      %v4566 = vld [vmem:[#allocation4 + $0xc] sm:$0xf]
      %v4567 = vld [vmem:[#allocation4 + $0x10] sm:$0xf]
      %v4568 = vld [vmem:[#allocation4 + $0x18] sm:$0xf]
      %v4569 = vld [vmem:[#allocation4 + $0x1c] sm:$0xf]
      %v4570 = vld [vmem:[#allocation4 + $0x24] sm:$0xf]
      %v4571 = vld [vmem:[#allocation4 + $0x28] sm:$0xf]
      %v4572 = vld [vmem:[#allocation4 + $0x30] sm:$0xf]
      %v4573 = vld [vmem:[#allocation4 + $0x34] sm:$0xf]
      %v4574 = vld [vmem:[#allocation4 + $0x3c] sm:$0xf]
      %v4575 = vld [vmem:[#allocation4 + $0x40] sm:$0xf]
      %v4576 = vld [vmem:[#allocation4 + $0x48] sm:$0xf]
      %v4577 = vld [vmem:[#allocation4 + $0x4c] sm:$0xf]
      %v4578 = vld [vmem:[#allocation4 + $0x54] sm:$0xf]
      %v4579 = vld [vmem:[#allocation4 + $0x58] sm:$0xf]
      %v4580 = vld [vmem:[#allocation4 + $0x60] sm:$0xf]
      %v4581 = vld [vmem:[#allocation4 + $0x64] sm:$0xf]
      %v4582 = vld [vmem:[#allocation4 + $0x6c] sm:$0xf]
      %v4583 = vld [vmem:[#allocation4 + $0x70] sm:$0xf]
      %v4584 = vld [vmem:[#allocation4 + $0x78] sm:$0xf]
      %v4585 = vld [vmem:[#allocation4 + $0x7c] sm:$0xf]
      %v4586 = vld [vmem:[#allocation4 + $0x84] sm:$0xf]
      %v4587 = vld [vmem:[#allocation4 + $0x88] sm:$0xf]
      %v4588 = vld [vmem:[#allocation4 + $0x90] sm:$0xf]
      %v4589 = vld [vmem:[#allocation4 + $0x94] sm:$0xf]
      %v4590 = vld [vmem:[#allocation4 + $0x9c] sm:$0xf]
      %v4591 = vld [vmem:[#allocation4 + $0xa0] sm:$0xf]
      %v4592 = vld [vmem:[#allocation4 + $0xa8] sm:$0xf]
      %v4593 = vld [vmem:[#allocation4 + $0xac] sm:$0xf]
      %v4594 = vld [vmem:[#allocation4 + $0xb4] sm:$0xf]
      %v4595 = vld [vmem:[#allocation4 + $0xb8] sm:$0xf]
      %v4628 = vunpack.c.l.b16 %v4564
      %v4629 = vunpack.c.l.b16 %v4565
      %v4630 = vunpack.c.l.b16 %v4566
      %v4631 = vunpack.c.l.b16 %v4567
      %v4632 = vunpack.c.l.b16 %v4568
      %v4633 = vunpack.c.l.b16 %v4569
      %v4634 = vunpack.c.l.b16 %v4570
      %v4635 = vunpack.c.l.b16 %v4571
      %v4636 = vunpack.c.l.b16 %v4572
      %v4637 = vunpack.c.l.b16 %v4573
      %v4638 = vunpack.c.l.b16 %v4574
      %v4639 = vunpack.c.l.b16 %v4575
      %v4640 = vunpack.c.l.b16 %v4576
      %v4641 = vunpack.c.l.b16 %v4577
      %v4642 = vunpack.c.l.b16 %v4578
      %v4643 = vunpack.c.l.b16 %v4579
      %v4644 = vunpack.c.l.b16 %v4580
      %v4645 = vunpack.c.l.b16 %v4581
      %v4646 = vunpack.c.l.b16 %v4582
      %v4647 = vunpack.c.l.b16 %v4583
      %v4648 = vunpack.c.l.b16 %v4584
      %v4649 = vunpack.c.l.b16 %v4585
      %v4650 = vunpack.c.l.b16 %v4586
      %v4651 = vunpack.c.l.b16 %v4587
      %v4652 = vunpack.c.l.b16 %v4588
      %v4653 = vunpack.c.l.b16 %v4589
      %v4654 = vunpack.c.l.b16 %v4590
      %v4655 = vunpack.c.l.b16 %v4591
      %v4656 = vunpack.c.l.b16 %v4592
      %v4657 = vunpack.c.l.b16 %v4593
      %v4658 = vunpack.c.l.b16 %v4594
      %v4659 = vunpack.c.l.b16 %v4595
      %v4660 = vpack.c.b16 %v4629, %v4628
      %v4661 = vpack.c.b16 %v4631, %v4630
      %v4662 = vpack.c.b16 %v4633, %v4632
      %v4663 = vpack.c.b16 %v4635, %v4634
      %v4664 = vpack.c.b16 %v4637, %v4636
      %v4665 = vpack.c.b16 %v4639, %v4638
      %v4666 = vpack.c.b16 %v4641, %v4640
      %v4667 = vpack.c.b16 %v4643, %v4642
      %v4668 = vpack.c.b16 %v4645, %v4644
      %v4669 = vpack.c.b16 %v4647, %v4646
      %v4670 = vpack.c.b16 %v4649, %v4648
      %v4671 = vpack.c.b16 %v4651, %v4650
      %v4672 = vpack.c.b16 %v4653, %v4652
      %v4673 = vpack.c.b16 %v4655, %v4654
      %v4674 = vpack.c.b16 %v4657, %v4656
      %v4675 = vpack.c.b16 %v4659, %v4658
      %4692 = vst.msk [vmem:[#allocation5] sm:$0xff] %vm1064, %v4660
      %4693 = vst.msk [vmem:[#allocation5 + $0x8] sm:$0xff] %vm1064, %v4661
      %4694 = vst.msk [vmem:[#allocation5 + $0x10] sm:$0xff] %vm1064, %v4662
      %4695 = vst.msk [vmem:[#allocation5 + $0x18] sm:$0xff] %vm1064, %v4663
      %4696 = vst.msk [vmem:[#allocation5 + $0x20] sm:$0xff] %vm1064, %v4664
      %4697 = vst.msk [vmem:[#allocation5 + $0x28] sm:$0xff] %vm1064, %v4665
      %4698 = vst.msk [vmem:[#allocation5 + $0x30] sm:$0xff] %vm1064, %v4666
      %4699 = vst.msk [vmem:[#allocation5 + $0x38] sm:$0xff] %vm1064, %v4667
      %4700 = vst.msk [vmem:[#allocation5 + $0x40] sm:$0xff] %vm1064, %v4668
      %4701 = vst.msk [vmem:[#allocation5 + $0x48] sm:$0xff] %vm1064, %v4669
      %4702 = vst.msk [vmem:[#allocation5 + $0x50] sm:$0xff] %vm1064, %v4670
      %4703 = vst.msk [vmem:[#allocation5 + $0x58] sm:$0xff] %vm1064, %v4671
      %4704 = vst.msk [vmem:[#allocation5 + $0x60] sm:$0xff] %vm1064, %v4672
      %4705 = vst.msk [vmem:[#allocation5 + $0x68] sm:$0xff] %vm1064, %v4673
      %4706 = vst.msk [vmem:[#allocation5 + $0x70] sm:$0xff] %vm1064, %v4674
      %4707 = vst.msk [vmem:[#allocation5 + $0x78] sm:$0xff] %vm1064, %v4675
      %v4708 = vld [vmem:[#allocation4] sm:$0xf]
      %v4709 = vld [vmem:[#allocation4 + $0x4] sm:$0xf]
      %v4710 = vld [vmem:[#allocation4 + $0x8] sm:$0x1]
      %v4711 = vld [vmem:[#allocation4 + $0xc] sm:$0xf]
      %v4712 = vld [vmem:[#allocation4 + $0x10] sm:$0xf]
      %v4713 = vld [vmem:[#allocation4 + $0x14] sm:$0x1]
      %v4714 = vld [vmem:[#allocation4 + $0x18] sm:$0xf]
      %v4715 = vld [vmem:[#allocation4 + $0x1c] sm:$0xf]
      %v4716 = vld [vmem:[#allocation4 + $0x20] sm:$0x1]
      %v4717 = vld [vmem:[#allocation4 + $0x24] sm:$0xf]
      %v4718 = vld [vmem:[#allocation4 + $0x28] sm:$0xf]
      %v4719 = vld [vmem:[#allocation4 + $0x2c] sm:$0x1]
      %v4720 = vld [vmem:[#allocation4 + $0x30] sm:$0xf]
      %v4721 = vld [vmem:[#allocation4 + $0x34] sm:$0xf]
      %v4722 = vld [vmem:[#allocation4 + $0x38] sm:$0x1]
      %v4723 = vld [vmem:[#allocation4 + $0x3c] sm:$0xf]
      %v4724 = vld [vmem:[#allocation4 + $0x40] sm:$0xf]
      %v4725 = vld [vmem:[#allocation4 + $0x44] sm:$0x1]
      %v4726 = vld [vmem:[#allocation4 + $0x48] sm:$0xf]
      %v4727 = vld [vmem:[#allocation4 + $0x4c] sm:$0xf]
      %v4728 = vld [vmem:[#allocation4 + $0x50] sm:$0x1]
      %v4729 = vld [vmem:[#allocation4 + $0x54] sm:$0xf]
      %v4730 = vld [vmem:[#allocation4 + $0x58] sm:$0xf]
      %v4731 = vld [vmem:[#allocation4 + $0x5c] sm:$0x1]
      %v4732 = vld [vmem:[#allocation4 + $0x60] sm:$0xf]
      %v4733 = vld [vmem:[#allocation4 + $0x64] sm:$0xf]
      %v4734 = vld [vmem:[#allocation4 + $0x68] sm:$0x1]
      %v4735 = vld [vmem:[#allocation4 + $0x6c] sm:$0xf]
      %v4736 = vld [vmem:[#allocation4 + $0x70] sm:$0xf]
      %v4737 = vld [vmem:[#allocation4 + $0x74] sm:$0x1]
      %v4738 = vld [vmem:[#allocation4 + $0x78] sm:$0xf]
      %v4739 = vld [vmem:[#allocation4 + $0x7c] sm:$0xf]
      %v4740 = vld [vmem:[#allocation4 + $0x80] sm:$0x1]
      %v4741 = vld [vmem:[#allocation4 + $0x84] sm:$0xf]
      %v4742 = vld [vmem:[#allocation4 + $0x88] sm:$0xf]
      %v4743 = vld [vmem:[#allocation4 + $0x8c] sm:$0x1]
      %v4744 = vld [vmem:[#allocation4 + $0x90] sm:$0xf]
      %v4745 = vld [vmem:[#allocation4 + $0x94] sm:$0xf]
      %v4746 = vld [vmem:[#allocation4 + $0x98] sm:$0x1]
      %v4747 = vld [vmem:[#allocation4 + $0x9c] sm:$0xf]
      %v4748 = vld [vmem:[#allocation4 + $0xa0] sm:$0xf]
      %v4749 = vld [vmem:[#allocation4 + $0xa4] sm:$0x1]
      %v4750 = vld [vmem:[#allocation4 + $0xa8] sm:$0xf]
      %v4751 = vld [vmem:[#allocation4 + $0xac] sm:$0xf]
      %v4752 = vld [vmem:[#allocation4 + $0xb0] sm:$0x1]
      %v4753 = vld [vmem:[#allocation4 + $0xb4] sm:$0xf]
      %v4754 = vld [vmem:[#allocation4 + $0xb8] sm:$0xf]
      %v4755 = vld [vmem:[#allocation4 + $0xbc] sm:$0x1]
      %v4804 = vunpack.c.l.b16 %v4708
      %v4805 = vunpack.c.l.b16 %v4709
      %v4806 = vunpack.c.l.b16 %v4710
      %v4807 = vunpack.c.l.b16 %v4711
      %v4808 = vunpack.c.l.b16 %v4712
      %v4809 = vunpack.c.l.b16 %v4713
      %v4810 = vunpack.c.l.b16 %v4714
      %v4811 = vunpack.c.l.b16 %v4715
      %v4812 = vunpack.c.l.b16 %v4716
      %v4813 = vunpack.c.l.b16 %v4717
      %v4814 = vunpack.c.l.b16 %v4718
      %v4815 = vunpack.c.l.b16 %v4719
      %v4816 = vunpack.c.l.b16 %v4720
      %v4817 = vunpack.c.l.b16 %v4721
      %v4818 = vunpack.c.l.b16 %v4722
      %v4819 = vunpack.c.l.b16 %v4723
      %v4820 = vunpack.c.l.b16 %v4724
      %v4821 = vunpack.c.l.b16 %v4725
      %v4822 = vunpack.c.l.b16 %v4726
      %v4823 = vunpack.c.l.b16 %v4727
      %v4824 = vunpack.c.l.b16 %v4728
      %v4825 = vunpack.c.l.b16 %v4729
      %v4826 = vunpack.c.l.b16 %v4730
      %v4827 = vunpack.c.l.b16 %v4731
      %v4828 = vunpack.c.l.b16 %v4732
      %v4829 = vunpack.c.l.b16 %v4733
      %v4830 = vunpack.c.l.b16 %v4734
      %v4831 = vunpack.c.l.b16 %v4735
      %v4832 = vunpack.c.l.b16 %v4736
      %v4833 = vunpack.c.l.b16 %v4737
      %v4834 = vunpack.c.l.b16 %v4738
      %v4835 = vunpack.c.l.b16 %v4739
      %v4836 = vunpack.c.l.b16 %v4740
      %v4837 = vunpack.c.l.b16 %v4741
      %v4838 = vunpack.c.l.b16 %v4742
      %v4839 = vunpack.c.l.b16 %v4743
      %v4840 = vunpack.c.l.b16 %v4744
      %v4841 = vunpack.c.l.b16 %v4745
      %v4842 = vunpack.c.l.b16 %v4746
      %v4843 = vunpack.c.l.b16 %v4747
      %v4844 = vunpack.c.l.b16 %v4748
      %v4845 = vunpack.c.l.b16 %v4749
      %v4846 = vunpack.c.l.b16 %v4750
      %v4847 = vunpack.c.l.b16 %v4751
      %v4848 = vunpack.c.l.b16 %v4752
      %v4849 = vunpack.c.l.b16 %v4753
      %v4850 = vunpack.c.l.b16 %v4754
      %v4851 = vunpack.c.l.b16 %v4755
      %v4852 = vpack.c.b16 %v4805, %v4804
      %v4853 = vpack.c.b16 %v4806, %v4806
      %v4854 = vpack.c.b16 %v4808, %v4807
      %v4855 = vpack.c.b16 %v4809, %v4809
      %v4856 = vpack.c.b16 %v4811, %v4810
      %v4857 = vpack.c.b16 %v4812, %v4812
      %v4858 = vpack.c.b16 %v4814, %v4813
      %v4859 = vpack.c.b16 %v4815, %v4815
      %v4860 = vpack.c.b16 %v4817, %v4816
      %v4861 = vpack.c.b16 %v4818, %v4818
      %v4862 = vpack.c.b16 %v4820, %v4819
      %v4863 = vpack.c.b16 %v4821, %v4821
      %v4864 = vpack.c.b16 %v4823, %v4822
      %v4865 = vpack.c.b16 %v4824, %v4824
      %v4866 = vpack.c.b16 %v4826, %v4825
      %v4867 = vpack.c.b16 %v4827, %v4827
      %v4868 = vpack.c.b16 %v4829, %v4828
      %v4869 = vpack.c.b16 %v4830, %v4830
      %v4870 = vpack.c.b16 %v4832, %v4831
      %v4871 = vpack.c.b16 %v4833, %v4833
      %v4872 = vpack.c.b16 %v4835, %v4834
      %v4873 = vpack.c.b16 %v4836, %v4836
      %v4874 = vpack.c.b16 %v4838, %v4837
      %v4875 = vpack.c.b16 %v4839, %v4839
      %v4876 = vpack.c.b16 %v4841, %v4840
      %v4877 = vpack.c.b16 %v4842, %v4842
      %v4878 = vpack.c.b16 %v4844, %v4843
      %v4879 = vpack.c.b16 %v4845, %v4845
      %v4880 = vpack.c.b16 %v4847, %v4846
      %v4881 = vpack.c.b16 %v4848, %v4848
      %v4882 = vpack.c.b16 %v4850, %v4849
      %v4883 = vpack.c.b16 %v4851, %v4851
      %v4885 = vshrl.u32 %v4852, 16
      %v4887 = vshll.u32 %v4852, 16
      %v4889 = vrot.slane %v4887, 1
      %v4890 = vor.u32 %v4885, %v4889
      %v4892 = vshll.u32 %v4853, 16
      %v4894 = vrot.slane %v4892, 1
      %v4895 = vsel %vm1257, %v4890, %v4894
      %v4897 = vshrl.u32 %v4854, 16
      %v4899 = vshll.u32 %v4854, 16
      %v4901 = vrot.slane %v4899, 1
      %v4902 = vor.u32 %v4897, %v4901
      %v4904 = vshll.u32 %v4855, 16
      %v4906 = vrot.slane %v4904, 1
      %v4907 = vsel %vm1257, %v4902, %v4906
      %v4909 = vshrl.u32 %v4856, 16
      %v4911 = vshll.u32 %v4856, 16
      %v4913 = vrot.slane %v4911, 1
      %v4914 = vor.u32 %v4909, %v4913
      %v4916 = vshll.u32 %v4857, 16
      %v4918 = vrot.slane %v4916, 1
      %v4919 = vsel %vm1257, %v4914, %v4918
      %v4921 = vshrl.u32 %v4858, 16
      %v4923 = vshll.u32 %v4858, 16
      %v4925 = vrot.slane %v4923, 1
      %v4926 = vor.u32 %v4921, %v4925
      %v4928 = vshll.u32 %v4859, 16
      %v4930 = vrot.slane %v4928, 1
      %v4931 = vsel %vm1257, %v4926, %v4930
      %v4933 = vshrl.u32 %v4860, 16
      %v4935 = vshll.u32 %v4860, 16
      %v4937 = vrot.slane %v4935, 1
      %v4938 = vor.u32 %v4933, %v4937
      %v4940 = vshll.u32 %v4861, 16
      %v4942 = vrot.slane %v4940, 1
      %v4943 = vsel %vm1257, %v4938, %v4942
      %v4945 = vshrl.u32 %v4862, 16
      %v4947 = vshll.u32 %v4862, 16
      %v4949 = vrot.slane %v4947, 1
      %v4950 = vor.u32 %v4945, %v4949
      %v4952 = vshll.u32 %v4863, 16
      %v4954 = vrot.slane %v4952, 1
      %v4955 = vsel %vm1257, %v4950, %v4954
      %v4957 = vshrl.u32 %v4864, 16
      %v4959 = vshll.u32 %v4864, 16
      %v4961 = vrot.slane %v4959, 1
      %v4962 = vor.u32 %v4957, %v4961
      %v4964 = vshll.u32 %v4865, 16
      %v4966 = vrot.slane %v4964, 1
      %v4967 = vsel %vm1257, %v4962, %v4966
      %v4969 = vshrl.u32 %v4866, 16
      %v4971 = vshll.u32 %v4866, 16
      %v4973 = vrot.slane %v4971, 1
      %v4974 = vor.u32 %v4969, %v4973
      %v4976 = vshll.u32 %v4867, 16
      %v4978 = vrot.slane %v4976, 1
      %v4979 = vsel %vm1257, %v4974, %v4978
      %v4981 = vshrl.u32 %v4868, 16
      %v4983 = vshll.u32 %v4868, 16
      %v4985 = vrot.slane %v4983, 1
      %v4986 = vor.u32 %v4981, %v4985
      %v4988 = vshll.u32 %v4869, 16
      %v4990 = vrot.slane %v4988, 1
      %v4991 = vsel %vm1257, %v4986, %v4990
      %v4993 = vshrl.u32 %v4870, 16
      %v4995 = vshll.u32 %v4870, 16
      %v4997 = vrot.slane %v4995, 1
      %v4998 = vor.u32 %v4993, %v4997
      %v5000 = vshll.u32 %v4871, 16
      %v5002 = vrot.slane %v5000, 1
      %v5003 = vsel %vm1257, %v4998, %v5002
      %v5005 = vshrl.u32 %v4872, 16
      %v5007 = vshll.u32 %v4872, 16
      %v5009 = vrot.slane %v5007, 1
      %v5010 = vor.u32 %v5005, %v5009
      %v5012 = vshll.u32 %v4873, 16
      %v5014 = vrot.slane %v5012, 1
      %v5015 = vsel %vm1257, %v5010, %v5014
      %v5017 = vshrl.u32 %v4874, 16
      %v5019 = vshll.u32 %v4874, 16
      %v5021 = vrot.slane %v5019, 1
      %v5022 = vor.u32 %v5017, %v5021
      %v5024 = vshll.u32 %v4875, 16
      %v5026 = vrot.slane %v5024, 1
      %v5027 = vsel %vm1257, %v5022, %v5026
      %v5029 = vshrl.u32 %v4876, 16
      %v5031 = vshll.u32 %v4876, 16
      %v5033 = vrot.slane %v5031, 1
      %v5034 = vor.u32 %v5029, %v5033
      %v5036 = vshll.u32 %v4877, 16
      %v5038 = vrot.slane %v5036, 1
      %v5039 = vsel %vm1257, %v5034, %v5038
      %v5041 = vshrl.u32 %v4878, 16
      %v5043 = vshll.u32 %v4878, 16
      %v5045 = vrot.slane %v5043, 1
      %v5046 = vor.u32 %v5041, %v5045
      %v5048 = vshll.u32 %v4879, 16
      %v5050 = vrot.slane %v5048, 1
      %v5051 = vsel %vm1257, %v5046, %v5050
      %v5053 = vshrl.u32 %v4880, 16
      %v5055 = vshll.u32 %v4880, 16
      %v5057 = vrot.slane %v5055, 1
      %v5058 = vor.u32 %v5053, %v5057
      %v5060 = vshll.u32 %v4881, 16
      %v5062 = vrot.slane %v5060, 1
      %v5063 = vsel %vm1257, %v5058, %v5062
      %v5065 = vshrl.u32 %v4882, 16
      %v5067 = vshll.u32 %v4882, 16
      %v5069 = vrot.slane %v5067, 1
      %v5070 = vor.u32 %v5065, %v5069
      %v5072 = vshll.u32 %v4883, 16
      %v5074 = vrot.slane %v5072, 1
      %v5075 = vsel %vm1257, %v5070, %v5074
      %5076 = vrot.lane.b32.xlu0 %v4895, 4
      %v5077 = vpop.permute.xlu0 %5076
      %5078 = vrot.lane.b32.xlu0 %v4907, 4
      %v5079 = vpop.permute.xlu0 %5078
      %5080 = vrot.lane.b32.xlu0 %v4919, 4
      %v5081 = vpop.permute.xlu0 %5080
      %5082 = vrot.lane.b32.xlu0 %v4931, 4
      %v5083 = vpop.permute.xlu0 %5082
      %5084 = vrot.lane.b32.xlu0 %v4943, 4
      %v5085 = vpop.permute.xlu0 %5084
      %5086 = vrot.lane.b32.xlu0 %v4955, 4
      %v5087 = vpop.permute.xlu0 %5086
      %5088 = vrot.lane.b32.xlu0 %v4967, 4
      %v5089 = vpop.permute.xlu0 %5088
      %5090 = vrot.lane.b32.xlu0 %v4979, 4
      %v5091 = vpop.permute.xlu0 %5090
      %5092 = vrot.lane.b32.xlu0 %v4991, 4
      %v5093 = vpop.permute.xlu0 %5092
      %5094 = vrot.lane.b32.xlu0 %v5003, 4
      %v5095 = vpop.permute.xlu0 %5094
      %5096 = vrot.lane.b32.xlu0 %v5015, 4
      %v5097 = vpop.permute.xlu0 %5096
      %5098 = vrot.lane.b32.xlu0 %v5027, 4
      %v5099 = vpop.permute.xlu0 %5098
      %5100 = vrot.lane.b32.xlu0 %v5039, 4
      %v5101 = vpop.permute.xlu0 %5100
      %5102 = vrot.lane.b32.xlu0 %v5051, 4
      %v5103 = vpop.permute.xlu0 %5102
      %5104 = vrot.lane.b32.xlu0 %v5063, 4
      %v5105 = vpop.permute.xlu0 %5104
      %5106 = vrot.lane.b32.xlu0 %v5075, 4
      %v5107 = vpop.permute.xlu0 %5106
      %5124 = vst.msk [vmem:[#allocation5] sm:$0xff] %vm1498, %v5077
      %5125 = vst.msk [vmem:[#allocation5 + $0x8] sm:$0xff] %vm1498, %v5079
      %5126 = vst.msk [vmem:[#allocation5 + $0x10] sm:$0xff] %vm1498, %v5081
      %5127 = vst.msk [vmem:[#allocation5 + $0x18] sm:$0xff] %vm1498, %v5083
      %5128 = vst.msk [vmem:[#allocation5 + $0x20] sm:$0xff] %vm1498, %v5085
      %5129 = vst.msk [vmem:[#allocation5 + $0x28] sm:$0xff] %vm1498, %v5087
      %5130 = vst.msk [vmem:[#allocation5 + $0x30] sm:$0xff] %vm1498, %v5089
      %5131 = vst.msk [vmem:[#allocation5 + $0x38] sm:$0xff] %vm1498, %v5091
      %5132 = vst.msk [vmem:[#allocation5 + $0x40] sm:$0xff] %vm1498, %v5093
      %5133 = vst.msk [vmem:[#allocation5 + $0x48] sm:$0xff] %vm1498, %v5095
      %5134 = vst.msk [vmem:[#allocation5 + $0x50] sm:$0xff] %vm1498, %v5097
      %5135 = vst.msk [vmem:[#allocation5 + $0x58] sm:$0xff] %vm1498, %v5099
      %5136 = vst.msk [vmem:[#allocation5 + $0x60] sm:$0xff] %vm1498, %v5101
      %5137 = vst.msk [vmem:[#allocation5 + $0x68] sm:$0xff] %vm1498, %v5103
      %5138 = vst.msk [vmem:[#allocation5 + $0x70] sm:$0xff] %vm1498, %v5105
      %5139 = vst.msk [vmem:[#allocation5 + $0x78] sm:$0xff] %vm1498, %v5107
      %v5140 = vld [vmem:[#allocation4] sm:$0xe]
      %v5141 = vld [vmem:[#allocation4 + $0x4] sm:$0xf]
      %v5142 = vld [vmem:[#allocation4 + $0x8] sm:$0x1]
      %v5143 = vld [vmem:[#allocation4 + $0xc] sm:$0xe]
      %v5144 = vld [vmem:[#allocation4 + $0x10] sm:$0xf]
      %v5145 = vld [vmem:[#allocation4 + $0x14] sm:$0x1]
      %v5146 = vld [vmem:[#allocation4 + $0x18] sm:$0xe]
      %v5147 = vld [vmem:[#allocation4 + $0x1c] sm:$0xf]
      %v5148 = vld [vmem:[#allocation4 + $0x20] sm:$0x1]
      %v5149 = vld [vmem:[#allocation4 + $0x24] sm:$0xe]
      %v5150 = vld [vmem:[#allocation4 + $0x28] sm:$0xf]
      %v5151 = vld [vmem:[#allocation4 + $0x2c] sm:$0x1]
      %v5152 = vld [vmem:[#allocation4 + $0x30] sm:$0xe]
      %v5153 = vld [vmem:[#allocation4 + $0x34] sm:$0xf]
      %v5154 = vld [vmem:[#allocation4 + $0x38] sm:$0x1]
      %v5155 = vld [vmem:[#allocation4 + $0x3c] sm:$0xe]
      %v5156 = vld [vmem:[#allocation4 + $0x40] sm:$0xf]
      %v5157 = vld [vmem:[#allocation4 + $0x44] sm:$0x1]
      %v5158 = vld [vmem:[#allocation4 + $0x48] sm:$0xe]
      %v5159 = vld [vmem:[#allocation4 + $0x4c] sm:$0xf]
      %v5160 = vld [vmem:[#allocation4 + $0x50] sm:$0x1]
      %v5161 = vld [vmem:[#allocation4 + $0x54] sm:$0xe]
      %v5162 = vld [vmem:[#allocation4 + $0x58] sm:$0xf]
      %v5163 = vld [vmem:[#allocation4 + $0x5c] sm:$0x1]
      %v5164 = vld [vmem:[#allocation4 + $0x60] sm:$0xe]
      %v5165 = vld [vmem:[#allocation4 + $0x64] sm:$0xf]
      %v5166 = vld [vmem:[#allocation4 + $0x68] sm:$0x1]
      %v5167 = vld [vmem:[#allocation4 + $0x6c] sm:$0xe]
      %v5168 = vld [vmem:[#allocation4 + $0x70] sm:$0xf]
      %v5169 = vld [vmem:[#allocation4 + $0x74] sm:$0x1]
      %v5170 = vld [vmem:[#allocation4 + $0x78] sm:$0xe]
      %v5171 = vld [vmem:[#allocation4 + $0x7c] sm:$0xf]
      %v5172 = vld [vmem:[#allocation4 + $0x80] sm:$0x1]
      %v5173 = vld [vmem:[#allocation4 + $0x84] sm:$0xe]
      %v5174 = vld [vmem:[#allocation4 + $0x88] sm:$0xf]
      %v5175 = vld [vmem:[#allocation4 + $0x8c] sm:$0x1]
      %v5176 = vld [vmem:[#allocation4 + $0x90] sm:$0xe]
      %v5177 = vld [vmem:[#allocation4 + $0x94] sm:$0xf]
      %v5178 = vld [vmem:[#allocation4 + $0x98] sm:$0x1]
      %v5179 = vld [vmem:[#allocation4 + $0x9c] sm:$0xe]
      %v5180 = vld [vmem:[#allocation4 + $0xa0] sm:$0xf]
      %v5181 = vld [vmem:[#allocation4 + $0xa4] sm:$0x1]
      %v5182 = vld [vmem:[#allocation4 + $0xa8] sm:$0xe]
      %v5183 = vld [vmem:[#allocation4 + $0xac] sm:$0xf]
      %v5184 = vld [vmem:[#allocation4 + $0xb0] sm:$0x1]
      %v5185 = vld [vmem:[#allocation4 + $0xb4] sm:$0xe]
      %v5186 = vld [vmem:[#allocation4 + $0xb8] sm:$0xf]
      %v5187 = vld [vmem:[#allocation4 + $0xbc] sm:$0x1]
      %v5236 = vunpack.c.l.b16 %v5140
      %v5237 = vunpack.c.l.b16 %v5141
      %v5238 = vunpack.c.l.b16 %v5142
      %v5239 = vunpack.c.l.b16 %v5143
      %v5240 = vunpack.c.l.b16 %v5144
      %v5241 = vunpack.c.l.b16 %v5145
      %v5242 = vunpack.c.l.b16 %v5146
      %v5243 = vunpack.c.l.b16 %v5147
      %v5244 = vunpack.c.l.b16 %v5148
      %v5245 = vunpack.c.l.b16 %v5149
      %v5246 = vunpack.c.l.b16 %v5150
      %v5247 = vunpack.c.l.b16 %v5151
      %v5248 = vunpack.c.l.b16 %v5152
      %v5249 = vunpack.c.l.b16 %v5153
      %v5250 = vunpack.c.l.b16 %v5154
      %v5251 = vunpack.c.l.b16 %v5155
      %v5252 = vunpack.c.l.b16 %v5156
      %v5253 = vunpack.c.l.b16 %v5157
      %v5254 = vunpack.c.l.b16 %v5158
      %v5255 = vunpack.c.l.b16 %v5159
      %v5256 = vunpack.c.l.b16 %v5160
      %v5257 = vunpack.c.l.b16 %v5161
      %v5258 = vunpack.c.l.b16 %v5162
      %v5259 = vunpack.c.l.b16 %v5163
      %v5260 = vunpack.c.l.b16 %v5164
      %v5261 = vunpack.c.l.b16 %v5165
      %v5262 = vunpack.c.l.b16 %v5166
      %v5263 = vunpack.c.l.b16 %v5167
      %v5264 = vunpack.c.l.b16 %v5168
      %v5265 = vunpack.c.l.b16 %v5169
      %v5266 = vunpack.c.l.b16 %v5170
      %v5267 = vunpack.c.l.b16 %v5171
      %v5268 = vunpack.c.l.b16 %v5172
      %v5269 = vunpack.c.l.b16 %v5173
      %v5270 = vunpack.c.l.b16 %v5174
      %v5271 = vunpack.c.l.b16 %v5175
      %v5272 = vunpack.c.l.b16 %v5176
      %v5273 = vunpack.c.l.b16 %v5177
      %v5274 = vunpack.c.l.b16 %v5178
      %v5275 = vunpack.c.l.b16 %v5179
      %v5276 = vunpack.c.l.b16 %v5180
      %v5277 = vunpack.c.l.b16 %v5181
      %v5278 = vunpack.c.l.b16 %v5182
      %v5279 = vunpack.c.l.b16 %v5183
      %v5280 = vunpack.c.l.b16 %v5184
      %v5281 = vunpack.c.l.b16 %v5185
      %v5282 = vunpack.c.l.b16 %v5186
      %v5283 = vunpack.c.l.b16 %v5187
      %v5284 = vpack.c.b16 %v5237, %v5236
      %v5285 = vpack.c.b16 %v5238, %v5238
      %v5286 = vpack.c.b16 %v5240, %v5239
      %v5287 = vpack.c.b16 %v5241, %v5241
      %v5288 = vpack.c.b16 %v5243, %v5242
      %v5289 = vpack.c.b16 %v5244, %v5244
      %v5290 = vpack.c.b16 %v5246, %v5245
      %v5291 = vpack.c.b16 %v5247, %v5247
      %v5292 = vpack.c.b16 %v5249, %v5248
      %v5293 = vpack.c.b16 %v5250, %v5250
      %v5294 = vpack.c.b16 %v5252, %v5251
      %v5295 = vpack.c.b16 %v5253, %v5253
      %v5296 = vpack.c.b16 %v5255, %v5254
      %v5297 = vpack.c.b16 %v5256, %v5256
      %v5298 = vpack.c.b16 %v5258, %v5257
      %v5299 = vpack.c.b16 %v5259, %v5259
      %v5300 = vpack.c.b16 %v5261, %v5260
      %v5301 = vpack.c.b16 %v5262, %v5262
      %v5302 = vpack.c.b16 %v5264, %v5263
      %v5303 = vpack.c.b16 %v5265, %v5265
      %v5304 = vpack.c.b16 %v5267, %v5266
      %v5305 = vpack.c.b16 %v5268, %v5268
      %v5306 = vpack.c.b16 %v5270, %v5269
      %v5307 = vpack.c.b16 %v5271, %v5271
      %v5308 = vpack.c.b16 %v5273, %v5272
      %v5309 = vpack.c.b16 %v5274, %v5274
      %v5310 = vpack.c.b16 %v5276, %v5275
      %v5311 = vpack.c.b16 %v5277, %v5277
      %v5312 = vpack.c.b16 %v5279, %v5278
      %v5313 = vpack.c.b16 %v5280, %v5280
      %v5314 = vpack.c.b16 %v5282, %v5281
      %v5315 = vpack.c.b16 %v5283, %v5283
      %v5316 = vrot.slane %v5284, 1
      %v5317 = vrot.slane %v5285, 1
      %v5318 = vsel %vm1691, %v5316, %v5317
      %v5319 = vrot.slane %v5286, 1
      %v5320 = vrot.slane %v5287, 1
      %v5321 = vsel %vm1691, %v5319, %v5320
      %v5322 = vrot.slane %v5288, 1
      %v5323 = vrot.slane %v5289, 1
      %v5324 = vsel %vm1691, %v5322, %v5323
      %v5325 = vrot.slane %v5290, 1
      %v5326 = vrot.slane %v5291, 1
      %v5327 = vsel %vm1691, %v5325, %v5326
      %v5328 = vrot.slane %v5292, 1
      %v5329 = vrot.slane %v5293, 1
      %v5330 = vsel %vm1691, %v5328, %v5329
      %v5331 = vrot.slane %v5294, 1
      %v5332 = vrot.slane %v5295, 1
      %v5333 = vsel %vm1691, %v5331, %v5332
      %v5334 = vrot.slane %v5296, 1
      %v5335 = vrot.slane %v5297, 1
      %v5336 = vsel %vm1691, %v5334, %v5335
      %v5337 = vrot.slane %v5298, 1
      %v5338 = vrot.slane %v5299, 1
      %v5339 = vsel %vm1691, %v5337, %v5338
      %v5340 = vrot.slane %v5300, 1
      %v5341 = vrot.slane %v5301, 1
      %v5342 = vsel %vm1691, %v5340, %v5341
      %v5343 = vrot.slane %v5302, 1
      %v5344 = vrot.slane %v5303, 1
      %v5345 = vsel %vm1691, %v5343, %v5344
      %v5346 = vrot.slane %v5304, 1
      %v5347 = vrot.slane %v5305, 1
      %v5348 = vsel %vm1691, %v5346, %v5347
      %v5349 = vrot.slane %v5306, 1
      %v5350 = vrot.slane %v5307, 1
      %v5351 = vsel %vm1691, %v5349, %v5350
      %v5352 = vrot.slane %v5308, 1
      %v5353 = vrot.slane %v5309, 1
      %v5354 = vsel %vm1691, %v5352, %v5353
      %v5355 = vrot.slane %v5310, 1
      %v5356 = vrot.slane %v5311, 1
      %v5357 = vsel %vm1691, %v5355, %v5356
      %v5358 = vrot.slane %v5312, 1
      %v5359 = vrot.slane %v5313, 1
      %v5360 = vsel %vm1691, %v5358, %v5359
      %v5361 = vrot.slane %v5314, 1
      %v5362 = vrot.slane %v5315, 1
      %v5363 = vsel %vm1691, %v5361, %v5362
      %5364 = vrot.lane.b32.xlu0 %v5318, 8
      %v5365 = vpop.permute.xlu0 %5364
      %5366 = vrot.lane.b32.xlu0 %v5321, 8
      %v5367 = vpop.permute.xlu0 %5366
      %5368 = vrot.lane.b32.xlu0 %v5324, 8
      %v5369 = vpop.permute.xlu0 %5368
      %5370 = vrot.lane.b32.xlu0 %v5327, 8
      %v5371 = vpop.permute.xlu0 %5370
      %5372 = vrot.lane.b32.xlu0 %v5330, 8
      %v5373 = vpop.permute.xlu0 %5372
      %5374 = vrot.lane.b32.xlu0 %v5333, 8
      %v5375 = vpop.permute.xlu0 %5374
      %5376 = vrot.lane.b32.xlu0 %v5336, 8
      %v5377 = vpop.permute.xlu0 %5376
      %5378 = vrot.lane.b32.xlu0 %v5339, 8
      %v5379 = vpop.permute.xlu0 %5378
      %5380 = vrot.lane.b32.xlu0 %v5342, 8
      %v5381 = vpop.permute.xlu0 %5380
      %5382 = vrot.lane.b32.xlu0 %v5345, 8
      %v5383 = vpop.permute.xlu0 %5382
      %5384 = vrot.lane.b32.xlu0 %v5348, 8
      %v5385 = vpop.permute.xlu0 %5384
      %5386 = vrot.lane.b32.xlu0 %v5351, 8
      %v5387 = vpop.permute.xlu0 %5386
      %5388 = vrot.lane.b32.xlu0 %v5354, 8
      %v5389 = vpop.permute.xlu0 %5388
      %5390 = vrot.lane.b32.xlu0 %v5357, 8
      %v5391 = vpop.permute.xlu0 %5390
      %5392 = vrot.lane.b32.xlu0 %v5360, 8
      %v5393 = vpop.permute.xlu0 %5392
      %5394 = vrot.lane.b32.xlu0 %v5363, 8
      %v5395 = vpop.permute.xlu0 %5394
      %5412 = vst.msk [vmem:[#allocation5] sm:$0xff] %vm1788, %v5365
      %5413 = vst.msk [vmem:[#allocation5 + $0x8] sm:$0xff] %vm1788, %v5367
      %5414 = vst.msk [vmem:[#allocation5 + $0x10] sm:$0xff] %vm1788, %v5369
      %5415 = vst.msk [vmem:[#allocation5 + $0x18] sm:$0xff] %vm1788, %v5371
      %5416 = vst.msk [vmem:[#allocation5 + $0x20] sm:$0xff] %vm1788, %v5373
      %5417 = vst.msk [vmem:[#allocation5 + $0x28] sm:$0xff] %vm1788, %v5375
      %5418 = vst.msk [vmem:[#allocation5 + $0x30] sm:$0xff] %vm1788, %v5377
      %5419 = vst.msk [vmem:[#allocation5 + $0x38] sm:$0xff] %vm1788, %v5379
      %5420 = vst.msk [vmem:[#allocation5 + $0x40] sm:$0xff] %vm1788, %v5381
      %5421 = vst.msk [vmem:[#allocation5 + $0x48] sm:$0xff] %vm1788, %v5383
      %5422 = vst.msk [vmem:[#allocation5 + $0x50] sm:$0xff] %vm1788, %v5385
      %5423 = vst.msk [vmem:[#allocation5 + $0x58] sm:$0xff] %vm1788, %v5387
      %5424 = vst.msk [vmem:[#allocation5 + $0x60] sm:$0xff] %vm1788, %v5389
      %5425 = vst.msk [vmem:[#allocation5 + $0x68] sm:$0xff] %vm1788, %v5391
      %5426 = vst.msk [vmem:[#allocation5 + $0x70] sm:$0xff] %vm1788, %v5393
      %5427 = vst.msk [vmem:[#allocation5 + $0x78] sm:$0xff] %vm1788, %v5395
      %v5428 = vld [vmem:[%s4451] sm:$0xf]
      %v5429 = vld [vmem:[%s4451 + $0x4] sm:$0xf]
      %v5430 = vld [vmem:[%s4451 + $0xc] sm:$0xf]
      %v5431 = vld [vmem:[%s4451 + $0x10] sm:$0xf]
      %v5432 = vld [vmem:[%s4451 + $0x18] sm:$0xf]
      %v5433 = vld [vmem:[%s4451 + $0x1c] sm:$0xf]
      %v5434 = vld [vmem:[%s4451 + $0x24] sm:$0xf]
      %v5435 = vld [vmem:[%s4451 + $0x28] sm:$0xf]
      %v5436 = vld [vmem:[%s4451 + $0x30] sm:$0xf]
      %v5437 = vld [vmem:[%s4451 + $0x34] sm:$0xf]
      %v5438 = vld [vmem:[%s4451 + $0x3c] sm:$0xf]
      %v5439 = vld [vmem:[%s4451 + $0x40] sm:$0xf]
      %v5440 = vld [vmem:[%s4451 + $0x48] sm:$0xf]
      %v5441 = vld [vmem:[%s4451 + $0x4c] sm:$0xf]
      %v5442 = vld [vmem:[%s4451 + $0x54] sm:$0xf]
      %v5443 = vld [vmem:[%s4451 + $0x58] sm:$0xf]
      %v5444 = vld [vmem:[%s4451 + $0x60] sm:$0xf]
      %v5445 = vld [vmem:[%s4451 + $0x64] sm:$0xf]
      %v5446 = vld [vmem:[%s4451 + $0x6c] sm:$0xf]
      %v5447 = vld [vmem:[%s4451 + $0x70] sm:$0xf]
      %v5448 = vld [vmem:[%s4451 + $0x78] sm:$0xf]
      %v5449 = vld [vmem:[%s4451 + $0x7c] sm:$0xf]
      %v5450 = vld [vmem:[%s4451 + $0x84] sm:$0xf]
      %v5451 = vld [vmem:[%s4451 + $0x88] sm:$0xf]
      %v5452 = vld [vmem:[%s4451 + $0x90] sm:$0xf]
      %v5453 = vld [vmem:[%s4451 + $0x94] sm:$0xf]
      %v5454 = vld [vmem:[%s4451 + $0x9c] sm:$0xf]
      %v5455 = vld [vmem:[%s4451 + $0xa0] sm:$0xf]
      %v5456 = vld [vmem:[%s4451 + $0xa8] sm:$0xf]
      %v5457 = vld [vmem:[%s4451 + $0xac] sm:$0xf]
      %v5458 = vld [vmem:[%s4451 + $0xb4] sm:$0xf]
      %v5459 = vld [vmem:[%s4451 + $0xb8] sm:$0xf]
      %v5492 = vunpack.c.l.b16 %v5428
      %v5493 = vunpack.c.l.b16 %v5429
      %v5494 = vunpack.c.l.b16 %v5430
      %v5495 = vunpack.c.l.b16 %v5431
      %v5496 = vunpack.c.l.b16 %v5432
      %v5497 = vunpack.c.l.b16 %v5433
      %v5498 = vunpack.c.l.b16 %v5434
      %v5499 = vunpack.c.l.b16 %v5435
      %v5500 = vunpack.c.l.b16 %v5436
      %v5501 = vunpack.c.l.b16 %v5437
      %v5502 = vunpack.c.l.b16 %v5438
      %v5503 = vunpack.c.l.b16 %v5439
      %v5504 = vunpack.c.l.b16 %v5440
      %v5505 = vunpack.c.l.b16 %v5441
      %v5506 = vunpack.c.l.b16 %v5442
      %v5507 = vunpack.c.l.b16 %v5443
      %v5508 = vunpack.c.l.b16 %v5444
      %v5509 = vunpack.c.l.b16 %v5445
      %v5510 = vunpack.c.l.b16 %v5446
      %v5511 = vunpack.c.l.b16 %v5447
      %v5512 = vunpack.c.l.b16 %v5448
      %v5513 = vunpack.c.l.b16 %v5449
      %v5514 = vunpack.c.l.b16 %v5450
      %v5515 = vunpack.c.l.b16 %v5451
      %v5516 = vunpack.c.l.b16 %v5452
      %v5517 = vunpack.c.l.b16 %v5453
      %v5518 = vunpack.c.l.b16 %v5454
      %v5519 = vunpack.c.l.b16 %v5455
      %v5520 = vunpack.c.l.b16 %v5456
      %v5521 = vunpack.c.l.b16 %v5457
      %v5522 = vunpack.c.l.b16 %v5458
      %v5523 = vunpack.c.l.b16 %v5459
      %v5524 = vpack.c.b16 %v5493, %v5492
      %v5525 = vpack.c.b16 %v5495, %v5494
      %v5526 = vpack.c.b16 %v5497, %v5496
      %v5527 = vpack.c.b16 %v5499, %v5498
      %v5528 = vpack.c.b16 %v5501, %v5500
      %v5529 = vpack.c.b16 %v5503, %v5502
      %v5530 = vpack.c.b16 %v5505, %v5504
      %v5531 = vpack.c.b16 %v5507, %v5506
      %v5532 = vpack.c.b16 %v5509, %v5508
      %v5533 = vpack.c.b16 %v5511, %v5510
      %v5534 = vpack.c.b16 %v5513, %v5512
      %v5535 = vpack.c.b16 %v5515, %v5514
      %v5536 = vpack.c.b16 %v5517, %v5516
      %v5537 = vpack.c.b16 %v5519, %v5518
      %v5538 = vpack.c.b16 %v5521, %v5520
      %v5539 = vpack.c.b16 %v5523, %v5522
      %5540 = vrot.lane.b32.xlu0 %v5524, 12
      %v5541 = vpop.permute.xlu0 %5540
      %5542 = vrot.lane.b32.xlu0 %v5525, 12
      %v5543 = vpop.permute.xlu0 %5542
      %5544 = vrot.lane.b32.xlu0 %v5526, 12
      %v5545 = vpop.permute.xlu0 %5544
      %5546 = vrot.lane.b32.xlu0 %v5527, 12
      %v5547 = vpop.permute.xlu0 %5546
      %5548 = vrot.lane.b32.xlu0 %v5528, 12
      %v5549 = vpop.permute.xlu0 %5548
      %5550 = vrot.lane.b32.xlu0 %v5529, 12
      %v5551 = vpop.permute.xlu0 %5550
      %5552 = vrot.lane.b32.xlu0 %v5530, 12
      %v5553 = vpop.permute.xlu0 %5552
      %5554 = vrot.lane.b32.xlu0 %v5531, 12
      %v5555 = vpop.permute.xlu0 %5554
      %5556 = vrot.lane.b32.xlu0 %v5532, 12
      %v5557 = vpop.permute.xlu0 %5556
      %5558 = vrot.lane.b32.xlu0 %v5533, 12
      %v5559 = vpop.permute.xlu0 %5558
      %5560 = vrot.lane.b32.xlu0 %v5534, 12
      %v5561 = vpop.permute.xlu0 %5560
      %5562 = vrot.lane.b32.xlu0 %v5535, 12
      %v5563 = vpop.permute.xlu0 %5562
      %5564 = vrot.lane.b32.xlu0 %v5536, 12
      %v5565 = vpop.permute.xlu0 %5564
      %5566 = vrot.lane.b32.xlu0 %v5537, 12
      %v5567 = vpop.permute.xlu0 %5566
      %5568 = vrot.lane.b32.xlu0 %v5538, 12
      %v5569 = vpop.permute.xlu0 %5568
      %5570 = vrot.lane.b32.xlu0 %v5539, 12
      %v5571 = vpop.permute.xlu0 %5570
      %5588 = vst.msk [vmem:[#allocation5] sm:$0xff] %vm1965, %v5541
      %5589 = vst.msk [vmem:[#allocation5 + $0x8] sm:$0xff] %vm1965, %v5543
      %5590 = vst.msk [vmem:[#allocation5 + $0x10] sm:$0xff] %vm1965, %v5545
      %5591 = vst.msk [vmem:[#allocation5 + $0x18] sm:$0xff] %vm1965, %v5547
      %5592 = vst.msk [vmem:[#allocation5 + $0x20] sm:$0xff] %vm1965, %v5549
      %5593 = vst.msk [vmem:[#allocation5 + $0x28] sm:$0xff] %vm1965, %v5551
      %5594 = vst.msk [vmem:[#allocation5 + $0x30] sm:$0xff] %vm1965, %v5553
      %5595 = vst.msk [vmem:[#allocation5 + $0x38] sm:$0xff] %vm1965, %v5555
      %5596 = vst.msk [vmem:[#allocation5 + $0x40] sm:$0xff] %vm1965, %v5557
      %5597 = vst.msk [vmem:[#allocation5 + $0x48] sm:$0xff] %vm1965, %v5559
      %5598 = vst.msk [vmem:[#allocation5 + $0x50] sm:$0xff] %vm1965, %v5561
      %5599 = vst.msk [vmem:[#allocation5 + $0x58] sm:$0xff] %vm1965, %v5563
      %5600 = vst.msk [vmem:[#allocation5 + $0x60] sm:$0xff] %vm1965, %v5565
      %5601 = vst.msk [vmem:[#allocation5 + $0x68] sm:$0xff] %vm1965, %v5567
      %5602 = vst.msk [vmem:[#allocation5 + $0x70] sm:$0xff] %vm1965, %v5569
      %5603 = vst.msk [vmem:[#allocation5 + $0x78] sm:$0xff] %vm1965, %v5571
      %v5604 = vld [vmem:[%s4451] sm:$0xf]
      %v5605 = vld [vmem:[%s4451 + $0x4] sm:$0xf]
      %v5606 = vld [vmem:[%s4451 + $0x8] sm:$0x1]
      %v5607 = vld [vmem:[%s4451 + $0xc] sm:$0xf]
      %v5608 = vld [vmem:[%s4451 + $0x10] sm:$0xf]
      %v5609 = vld [vmem:[%s4451 + $0x14] sm:$0x1]
      %v5610 = vld [vmem:[%s4451 + $0x18] sm:$0xf]
      %v5611 = vld [vmem:[%s4451 + $0x1c] sm:$0xf]
      %v5612 = vld [vmem:[%s4451 + $0x20] sm:$0x1]
      %v5613 = vld [vmem:[%s4451 + $0x24] sm:$0xf]
      %v5614 = vld [vmem:[%s4451 + $0x28] sm:$0xf]
      %v5615 = vld [vmem:[%s4451 + $0x2c] sm:$0x1]
      %v5616 = vld [vmem:[%s4451 + $0x30] sm:$0xf]
      %v5617 = vld [vmem:[%s4451 + $0x34] sm:$0xf]
      %v5618 = vld [vmem:[%s4451 + $0x38] sm:$0x1]
      %v5619 = vld [vmem:[%s4451 + $0x3c] sm:$0xf]
      %v5620 = vld [vmem:[%s4451 + $0x40] sm:$0xf]
      %v5621 = vld [vmem:[%s4451 + $0x44] sm:$0x1]
      %v5622 = vld [vmem:[%s4451 + $0x48] sm:$0xf]
      %v5623 = vld [vmem:[%s4451 + $0x4c] sm:$0xf]
      %v5624 = vld [vmem:[%s4451 + $0x50] sm:$0x1]
      %v5625 = vld [vmem:[%s4451 + $0x54] sm:$0xf]
      %v5626 = vld [vmem:[%s4451 + $0x58] sm:$0xf]
      %v5627 = vld [vmem:[%s4451 + $0x5c] sm:$0x1]
      %v5628 = vld [vmem:[%s4451 + $0x60] sm:$0xf]
      %v5629 = vld [vmem:[%s4451 + $0x64] sm:$0xf]
      %v5630 = vld [vmem:[%s4451 + $0x68] sm:$0x1]
      %v5631 = vld [vmem:[%s4451 + $0x6c] sm:$0xf]
      %v5632 = vld [vmem:[%s4451 + $0x70] sm:$0xf]
      %v5633 = vld [vmem:[%s4451 + $0x74] sm:$0x1]
      %v5634 = vld [vmem:[%s4451 + $0x78] sm:$0xf]
      %v5635 = vld [vmem:[%s4451 + $0x7c] sm:$0xf]
      %v5636 = vld [vmem:[%s4451 + $0x80] sm:$0x1]
      %v5637 = vld [vmem:[%s4451 + $0x84] sm:$0xf]
      %v5638 = vld [vmem:[%s4451 + $0x88] sm:$0xf]
      %v5639 = vld [vmem:[%s4451 + $0x8c] sm:$0x1]
      %v5640 = vld [vmem:[%s4451 + $0x90] sm:$0xf]
      %v5641 = vld [vmem:[%s4451 + $0x94] sm:$0xf]
      %v5642 = vld [vmem:[%s4451 + $0x98] sm:$0x1]
      %v5643 = vld [vmem:[%s4451 + $0x9c] sm:$0xf]
      %v5644 = vld [vmem:[%s4451 + $0xa0] sm:$0xf]
      %v5645 = vld [vmem:[%s4451 + $0xa4] sm:$0x1]
      %v5646 = vld [vmem:[%s4451 + $0xa8] sm:$0xf]
      %v5647 = vld [vmem:[%s4451 + $0xac] sm:$0xf]
      %v5648 = vld [vmem:[%s4451 + $0xb0] sm:$0x1]
      %v5649 = vld [vmem:[%s4451 + $0xb4] sm:$0xf]
      %v5650 = vld [vmem:[%s4451 + $0xb8] sm:$0xf]
      %v5651 = vld [vmem:[%s4451 + $0xbc] sm:$0x1]
      %v5700 = vunpack.c.l.b16 %v5604
      %v5701 = vunpack.c.l.b16 %v5605
      %v5702 = vunpack.c.l.b16 %v5606
      %v5703 = vunpack.c.l.b16 %v5607
      %v5704 = vunpack.c.l.b16 %v5608
      %v5705 = vunpack.c.l.b16 %v5609
      %v5706 = vunpack.c.l.b16 %v5610
      %v5707 = vunpack.c.l.b16 %v5611
      %v5708 = vunpack.c.l.b16 %v5612
      %v5709 = vunpack.c.l.b16 %v5613
      %v5710 = vunpack.c.l.b16 %v5614
      %v5711 = vunpack.c.l.b16 %v5615
      %v5712 = vunpack.c.l.b16 %v5616
      %v5713 = vunpack.c.l.b16 %v5617
      %v5714 = vunpack.c.l.b16 %v5618
      %v5715 = vunpack.c.l.b16 %v5619
      %v5716 = vunpack.c.l.b16 %v5620
      %v5717 = vunpack.c.l.b16 %v5621
      %v5718 = vunpack.c.l.b16 %v5622
      %v5719 = vunpack.c.l.b16 %v5623
      %v5720 = vunpack.c.l.b16 %v5624
      %v5721 = vunpack.c.l.b16 %v5625
      %v5722 = vunpack.c.l.b16 %v5626
      %v5723 = vunpack.c.l.b16 %v5627
      %v5724 = vunpack.c.l.b16 %v5628
      %v5725 = vunpack.c.l.b16 %v5629
      %v5726 = vunpack.c.l.b16 %v5630
      %v5727 = vunpack.c.l.b16 %v5631
      %v5728 = vunpack.c.l.b16 %v5632
      %v5729 = vunpack.c.l.b16 %v5633
      %v5730 = vunpack.c.l.b16 %v5634
      %v5731 = vunpack.c.l.b16 %v5635
      %v5732 = vunpack.c.l.b16 %v5636
      %v5733 = vunpack.c.l.b16 %v5637
      %v5734 = vunpack.c.l.b16 %v5638
      %v5735 = vunpack.c.l.b16 %v5639
      %v5736 = vunpack.c.l.b16 %v5640
      %v5737 = vunpack.c.l.b16 %v5641
      %v5738 = vunpack.c.l.b16 %v5642
      %v5739 = vunpack.c.l.b16 %v5643
      %v5740 = vunpack.c.l.b16 %v5644
      %v5741 = vunpack.c.l.b16 %v5645
      %v5742 = vunpack.c.l.b16 %v5646
      %v5743 = vunpack.c.l.b16 %v5647
      %v5744 = vunpack.c.l.b16 %v5648
      %v5745 = vunpack.c.l.b16 %v5649
      %v5746 = vunpack.c.l.b16 %v5650
      %v5747 = vunpack.c.l.b16 %v5651
      %v5748 = vpack.c.b16 %v5701, %v5700
      %v5749 = vpack.c.b16 %v5702, %v5702
      %v5750 = vpack.c.b16 %v5704, %v5703
      %v5751 = vpack.c.b16 %v5705, %v5705
      %v5752 = vpack.c.b16 %v5707, %v5706
      %v5753 = vpack.c.b16 %v5708, %v5708
      %v5754 = vpack.c.b16 %v5710, %v5709
      %v5755 = vpack.c.b16 %v5711, %v5711
      %v5756 = vpack.c.b16 %v5713, %v5712
      %v5757 = vpack.c.b16 %v5714, %v5714
      %v5758 = vpack.c.b16 %v5716, %v5715
      %v5759 = vpack.c.b16 %v5717, %v5717
      %v5760 = vpack.c.b16 %v5719, %v5718
      %v5761 = vpack.c.b16 %v5720, %v5720
      %v5762 = vpack.c.b16 %v5722, %v5721
      %v5763 = vpack.c.b16 %v5723, %v5723
      %v5764 = vpack.c.b16 %v5725, %v5724
      %v5765 = vpack.c.b16 %v5726, %v5726
      %v5766 = vpack.c.b16 %v5728, %v5727
      %v5767 = vpack.c.b16 %v5729, %v5729
      %v5768 = vpack.c.b16 %v5731, %v5730
      %v5769 = vpack.c.b16 %v5732, %v5732
      %v5770 = vpack.c.b16 %v5734, %v5733
      %v5771 = vpack.c.b16 %v5735, %v5735
      %v5772 = vpack.c.b16 %v5737, %v5736
      %v5773 = vpack.c.b16 %v5738, %v5738
      %v5774 = vpack.c.b16 %v5740, %v5739
      %v5775 = vpack.c.b16 %v5741, %v5741
      %v5776 = vpack.c.b16 %v5743, %v5742
      %v5777 = vpack.c.b16 %v5744, %v5744
      %v5778 = vpack.c.b16 %v5746, %v5745
      %v5779 = vpack.c.b16 %v5747, %v5747
      %v5781 = vshrl.u32 %v5748, 16
      %v5783 = vshll.u32 %v5748, 16
      %v5785 = vrot.slane %v5783, 1
      %v5786 = vor.u32 %v5781, %v5785
      %v5788 = vshll.u32 %v5749, 16
      %v5790 = vrot.slane %v5788, 1
      %v5791 = vsel %vm1257, %v5786, %v5790
      %v5793 = vshrl.u32 %v5750, 16
      %v5795 = vshll.u32 %v5750, 16
      %v5797 = vrot.slane %v5795, 1
      %v5798 = vor.u32 %v5793, %v5797
      %v5800 = vshll.u32 %v5751, 16
      %v5802 = vrot.slane %v5800, 1
      %v5803 = vsel %vm1257, %v5798, %v5802
      %v5805 = vshrl.u32 %v5752, 16
      %v5807 = vshll.u32 %v5752, 16
      %v5809 = vrot.slane %v5807, 1
      %v5810 = vor.u32 %v5805, %v5809
      %v5812 = vshll.u32 %v5753, 16
      %v5814 = vrot.slane %v5812, 1
      %v5815 = vsel %vm1257, %v5810, %v5814
      %v5817 = vshrl.u32 %v5754, 16
      %v5819 = vshll.u32 %v5754, 16
      %v5821 = vrot.slane %v5819, 1
      %v5822 = vor.u32 %v5817, %v5821
      %v5824 = vshll.u32 %v5755, 16
      %v5826 = vrot.slane %v5824, 1
      %v5827 = vsel %vm1257, %v5822, %v5826
      %v5829 = vshrl.u32 %v5756, 16
      %v5831 = vshll.u32 %v5756, 16
      %v5833 = vrot.slane %v5831, 1
      %v5834 = vor.u32 %v5829, %v5833
      %v5836 = vshll.u32 %v5757, 16
      %v5838 = vrot.slane %v5836, 1
      %v5839 = vsel %vm1257, %v5834, %v5838
      %v5841 = vshrl.u32 %v5758, 16
      %v5843 = vshll.u32 %v5758, 16
      %v5845 = vrot.slane %v5843, 1
      %v5846 = vor.u32 %v5841, %v5845
      %v5848 = vshll.u32 %v5759, 16
      %v5850 = vrot.slane %v5848, 1
      %v5851 = vsel %vm1257, %v5846, %v5850
      %v5853 = vshrl.u32 %v5760, 16
      %v5855 = vshll.u32 %v5760, 16
      %v5857 = vrot.slane %v5855, 1
      %v5858 = vor.u32 %v5853, %v5857
      %v5860 = vshll.u32 %v5761, 16
      %v5862 = vrot.slane %v5860, 1
      %v5863 = vsel %vm1257, %v5858, %v5862
      %v5865 = vshrl.u32 %v5762, 16
      %v5867 = vshll.u32 %v5762, 16
      %v5869 = vrot.slane %v5867, 1
      %v5870 = vor.u32 %v5865, %v5869
      %v5872 = vshll.u32 %v5763, 16
      %v5874 = vrot.slane %v5872, 1
      %v5875 = vsel %vm1257, %v5870, %v5874
      %v5877 = vshrl.u32 %v5764, 16
      %v5879 = vshll.u32 %v5764, 16
      %v5881 = vrot.slane %v5879, 1
      %v5882 = vor.u32 %v5877, %v5881
      %v5884 = vshll.u32 %v5765, 16
      %v5886 = vrot.slane %v5884, 1
      %v5887 = vsel %vm1257, %v5882, %v5886
      %v5889 = vshrl.u32 %v5766, 16
      %v5891 = vshll.u32 %v5766, 16
      %v5893 = vrot.slane %v5891, 1
      %v5894 = vor.u32 %v5889, %v5893
      %v5896 = vshll.u32 %v5767, 16
      %v5898 = vrot.slane %v5896, 1
      %v5899 = vsel %vm1257, %v5894, %v5898
      %v5901 = vshrl.u32 %v5768, 16
      %v5903 = vshll.u32 %v5768, 16
      %v5905 = vrot.slane %v5903, 1
      %v5906 = vor.u32 %v5901, %v5905
      %v5908 = vshll.u32 %v5769, 16
      %v5910 = vrot.slane %v5908, 1
      %v5911 = vsel %vm1257, %v5906, %v5910
      %v5913 = vshrl.u32 %v5770, 16
      %v5915 = vshll.u32 %v5770, 16
      %v5917 = vrot.slane %v5915, 1
      %v5918 = vor.u32 %v5913, %v5917
      %v5920 = vshll.u32 %v5771, 16
      %v5922 = vrot.slane %v5920, 1
      %v5923 = vsel %vm1257, %v5918, %v5922
      %v5925 = vshrl.u32 %v5772, 16
      %v5927 = vshll.u32 %v5772, 16
      %v5929 = vrot.slane %v5927, 1
      %v5930 = vor.u32 %v5925, %v5929
      %v5932 = vshll.u32 %v5773, 16
      %v5934 = vrot.slane %v5932, 1
      %v5935 = vsel %vm1257, %v5930, %v5934
      %v5937 = vshrl.u32 %v5774, 16
      %v5939 = vshll.u32 %v5774, 16
      %v5941 = vrot.slane %v5939, 1
      %v5942 = vor.u32 %v5937, %v5941
      %v5944 = vshll.u32 %v5775, 16
      %v5946 = vrot.slane %v5944, 1
      %v5947 = vsel %vm1257, %v5942, %v5946
      %v5949 = vshrl.u32 %v5776, 16
      %v5951 = vshll.u32 %v5776, 16
      %v5953 = vrot.slane %v5951, 1
      %v5954 = vor.u32 %v5949, %v5953
      %v5956 = vshll.u32 %v5777, 16
      %v5958 = vrot.slane %v5956, 1
      %v5959 = vsel %vm1257, %v5954, %v5958
      %v5961 = vshrl.u32 %v5778, 16
      %v5963 = vshll.u32 %v5778, 16
      %v5965 = vrot.slane %v5963, 1
      %v5966 = vor.u32 %v5961, %v5965
      %v5968 = vshll.u32 %v5779, 16
      %v5970 = vrot.slane %v5968, 1
      %v5971 = vsel %vm1257, %v5966, %v5970
      %5972 = vrot.lane.b32.xlu0 %v5791, 16
      %v5973 = vpop.permute.xlu0 %5972
      %5974 = vrot.lane.b32.xlu0 %v5803, 16
      %v5975 = vpop.permute.xlu0 %5974
      %5976 = vrot.lane.b32.xlu0 %v5815, 16
      %v5977 = vpop.permute.xlu0 %5976
      %5978 = vrot.lane.b32.xlu0 %v5827, 16
      %v5979 = vpop.permute.xlu0 %5978
      %5980 = vrot.lane.b32.xlu0 %v5839, 16
      %v5981 = vpop.permute.xlu0 %5980
      %5982 = vrot.lane.b32.xlu0 %v5851, 16
      %v5983 = vpop.permute.xlu0 %5982
      %5984 = vrot.lane.b32.xlu0 %v5863, 16
      %v5985 = vpop.permute.xlu0 %5984
      %5986 = vrot.lane.b32.xlu0 %v5875, 16
      %v5987 = vpop.permute.xlu0 %5986
      %5988 = vrot.lane.b32.xlu0 %v5887, 16
      %v5989 = vpop.permute.xlu0 %5988
      %5990 = vrot.lane.b32.xlu0 %v5899, 16
      %v5991 = vpop.permute.xlu0 %5990
      %5992 = vrot.lane.b32.xlu0 %v5911, 16
      %v5993 = vpop.permute.xlu0 %5992
      %5994 = vrot.lane.b32.xlu0 %v5923, 16
      %v5995 = vpop.permute.xlu0 %5994
      %5996 = vrot.lane.b32.xlu0 %v5935, 16
      %v5997 = vpop.permute.xlu0 %5996
      %5998 = vrot.lane.b32.xlu0 %v5947, 16
      %v5999 = vpop.permute.xlu0 %5998
      %6000 = vrot.lane.b32.xlu0 %v5959, 16
      %v6001 = vpop.permute.xlu0 %6000
      %6002 = vrot.lane.b32.xlu0 %v5971, 16
      %v6003 = vpop.permute.xlu0 %6002
      %6020 = vst.msk [vmem:[#allocation5] sm:$0xff] %vm2398, %v5973
      %6021 = vst.msk [vmem:[#allocation5 + $0x8] sm:$0xff] %vm2398, %v5975
      %6022 = vst.msk [vmem:[#allocation5 + $0x10] sm:$0xff] %vm2398, %v5977
      %6023 = vst.msk [vmem:[#allocation5 + $0x18] sm:$0xff] %vm2398, %v5979
      %6024 = vst.msk [vmem:[#allocation5 + $0x20] sm:$0xff] %vm2398, %v5981
      %6025 = vst.msk [vmem:[#allocation5 + $0x28] sm:$0xff] %vm2398, %v5983
      %6026 = vst.msk [vmem:[#allocation5 + $0x30] sm:$0xff] %vm2398, %v5985
      %6027 = vst.msk [vmem:[#allocation5 + $0x38] sm:$0xff] %vm2398, %v5987
      %6028 = vst.msk [vmem:[#allocation5 + $0x40] sm:$0xff] %vm2398, %v5989
      %6029 = vst.msk [vmem:[#allocation5 + $0x48] sm:$0xff] %vm2398, %v5991
      %6030 = vst.msk [vmem:[#allocation5 + $0x50] sm:$0xff] %vm2398, %v5993
      %6031 = vst.msk [vmem:[#allocation5 + $0x58] sm:$0xff] %vm2398, %v5995
      %6032 = vst.msk [vmem:[#allocation5 + $0x60] sm:$0xff] %vm2398, %v5997
      %6033 = vst.msk [vmem:[#allocation5 + $0x68] sm:$0xff] %vm2398, %v5999
      %6034 = vst.msk [vmem:[#allocation5 + $0x70] sm:$0xff] %vm2398, %v6001
      %6035 = vst.msk [vmem:[#allocation5 + $0x78] sm:$0xff] %vm2398, %v6003
      %v6036 = vld [vmem:[%s4451] sm:$0xe]
      %v6037 = vld [vmem:[%s4451 + $0x4] sm:$0xf]
      %v6038 = vld [vmem:[%s4451 + $0x8] sm:$0x1]
      %v6039 = vld [vmem:[%s4451 + $0xc] sm:$0xe]
      %v6040 = vld [vmem:[%s4451 + $0x10] sm:$0xf]
      %v6041 = vld [vmem:[%s4451 + $0x14] sm:$0x1]
      %v6042 = vld [vmem:[%s4451 + $0x18] sm:$0xe]
      %v6043 = vld [vmem:[%s4451 + $0x1c] sm:$0xf]
      %v6044 = vld [vmem:[%s4451 + $0x20] sm:$0x1]
      %v6045 = vld [vmem:[%s4451 + $0x24] sm:$0xe]
      %v6046 = vld [vmem:[%s4451 + $0x28] sm:$0xf]
      %v6047 = vld [vmem:[%s4451 + $0x2c] sm:$0x1]
      %v6048 = vld [vmem:[%s4451 + $0x30] sm:$0xe]
      %v6049 = vld [vmem:[%s4451 + $0x34] sm:$0xf]
      %v6050 = vld [vmem:[%s4451 + $0x38] sm:$0x1]
      %v6051 = vld [vmem:[%s4451 + $0x3c] sm:$0xe]
      %v6052 = vld [vmem:[%s4451 + $0x40] sm:$0xf]
      %v6053 = vld [vmem:[%s4451 + $0x44] sm:$0x1]
      %v6054 = vld [vmem:[%s4451 + $0x48] sm:$0xe]
      %v6055 = vld [vmem:[%s4451 + $0x4c] sm:$0xf]
      %v6056 = vld [vmem:[%s4451 + $0x50] sm:$0x1]
      %v6057 = vld [vmem:[%s4451 + $0x54] sm:$0xe]
      %v6058 = vld [vmem:[%s4451 + $0x58] sm:$0xf]
      %v6059 = vld [vmem:[%s4451 + $0x5c] sm:$0x1]
      %v6060 = vld [vmem:[%s4451 + $0x60] sm:$0xe]
      %v6061 = vld [vmem:[%s4451 + $0x64] sm:$0xf]
      %v6062 = vld [vmem:[%s4451 + $0x68] sm:$0x1]
      %v6063 = vld [vmem:[%s4451 + $0x6c] sm:$0xe]
      %v6064 = vld [vmem:[%s4451 + $0x70] sm:$0xf]
      %v6065 = vld [vmem:[%s4451 + $0x74] sm:$0x1]
      %v6066 = vld [vmem:[%s4451 + $0x78] sm:$0xe]
      %v6067 = vld [vmem:[%s4451 + $0x7c] sm:$0xf]
      %v6068 = vld [vmem:[%s4451 + $0x80] sm:$0x1]
      %v6069 = vld [vmem:[%s4451 + $0x84] sm:$0xe]
      %v6070 = vld [vmem:[%s4451 + $0x88] sm:$0xf]
      %v6071 = vld [vmem:[%s4451 + $0x8c] sm:$0x1]
      %v6072 = vld [vmem:[%s4451 + $0x90] sm:$0xe]
      %v6073 = vld [vmem:[%s4451 + $0x94] sm:$0xf]
      %v6074 = vld [vmem:[%s4451 + $0x98] sm:$0x1]
      %v6075 = vld [vmem:[%s4451 + $0x9c] sm:$0xe]
      %v6076 = vld [vmem:[%s4451 + $0xa0] sm:$0xf]
      %v6077 = vld [vmem:[%s4451 + $0xa4] sm:$0x1]
      %v6078 = vld [vmem:[%s4451 + $0xa8] sm:$0xe]
      %v6079 = vld [vmem:[%s4451 + $0xac] sm:$0xf]
      %v6080 = vld [vmem:[%s4451 + $0xb0] sm:$0x1]
      %v6081 = vld [vmem:[%s4451 + $0xb4] sm:$0xe]
      %v6082 = vld [vmem:[%s4451 + $0xb8] sm:$0xf]
      %v6083 = vld [vmem:[%s4451 + $0xbc] sm:$0x1]
      %v6132 = vunpack.c.l.b16 %v6036
      %v6133 = vunpack.c.l.b16 %v6037
      %v6134 = vunpack.c.l.b16 %v6038
      %v6135 = vunpack.c.l.b16 %v6039
      %v6136 = vunpack.c.l.b16 %v6040
      %v6137 = vunpack.c.l.b16 %v6041
      %v6138 = vunpack.c.l.b16 %v6042
      %v6139 = vunpack.c.l.b16 %v6043
      %v6140 = vunpack.c.l.b16 %v6044
      %v6141 = vunpack.c.l.b16 %v6045
      %v6142 = vunpack.c.l.b16 %v6046
      %v6143 = vunpack.c.l.b16 %v6047
      %v6144 = vunpack.c.l.b16 %v6048
      %v6145 = vunpack.c.l.b16 %v6049
      %v6146 = vunpack.c.l.b16 %v6050
      %v6147 = vunpack.c.l.b16 %v6051
      %v6148 = vunpack.c.l.b16 %v6052
      %v6149 = vunpack.c.l.b16 %v6053
      %v6150 = vunpack.c.l.b16 %v6054
      %v6151 = vunpack.c.l.b16 %v6055
      %v6152 = vunpack.c.l.b16 %v6056
      %v6153 = vunpack.c.l.b16 %v6057
      %v6154 = vunpack.c.l.b16 %v6058
      %v6155 = vunpack.c.l.b16 %v6059
      %v6156 = vunpack.c.l.b16 %v6060
      %v6157 = vunpack.c.l.b16 %v6061
      %v6158 = vunpack.c.l.b16 %v6062
      %v6159 = vunpack.c.l.b16 %v6063
      %v6160 = vunpack.c.l.b16 %v6064
      %v6161 = vunpack.c.l.b16 %v6065
      %v6162 = vunpack.c.l.b16 %v6066
      %v6163 = vunpack.c.l.b16 %v6067
      %v6164 = vunpack.c.l.b16 %v6068
      %v6165 = vunpack.c.l.b16 %v6069
      %v6166 = vunpack.c.l.b16 %v6070
      %v6167 = vunpack.c.l.b16 %v6071
      %v6168 = vunpack.c.l.b16 %v6072
      %v6169 = vunpack.c.l.b16 %v6073
      %v6170 = vunpack.c.l.b16 %v6074
      %v6171 = vunpack.c.l.b16 %v6075
      %v6172 = vunpack.c.l.b16 %v6076
      %v6173 = vunpack.c.l.b16 %v6077
      %v6174 = vunpack.c.l.b16 %v6078
      %v6175 = vunpack.c.l.b16 %v6079
      %v6176 = vunpack.c.l.b16 %v6080
      %v6177 = vunpack.c.l.b16 %v6081
      %v6178 = vunpack.c.l.b16 %v6082
      %v6179 = vunpack.c.l.b16 %v6083
      %v6180 = vpack.c.b16 %v6133, %v6132
      %v6181 = vpack.c.b16 %v6134, %v6134
      %v6182 = vpack.c.b16 %v6136, %v6135
      %v6183 = vpack.c.b16 %v6137, %v6137
      %v6184 = vpack.c.b16 %v6139, %v6138
      %v6185 = vpack.c.b16 %v6140, %v6140
      %v6186 = vpack.c.b16 %v6142, %v6141
      %v6187 = vpack.c.b16 %v6143, %v6143
      %v6188 = vpack.c.b16 %v6145, %v6144
      %v6189 = vpack.c.b16 %v6146, %v6146
      %v6190 = vpack.c.b16 %v6148, %v6147
      %v6191 = vpack.c.b16 %v6149, %v6149
      %v6192 = vpack.c.b16 %v6151, %v6150
      %v6193 = vpack.c.b16 %v6152, %v6152
      %v6194 = vpack.c.b16 %v6154, %v6153
      %v6195 = vpack.c.b16 %v6155, %v6155
      %v6196 = vpack.c.b16 %v6157, %v6156
      %v6197 = vpack.c.b16 %v6158, %v6158
      %v6198 = vpack.c.b16 %v6160, %v6159
      %v6199 = vpack.c.b16 %v6161, %v6161
      %v6200 = vpack.c.b16 %v6163, %v6162
      %v6201 = vpack.c.b16 %v6164, %v6164
      %v6202 = vpack.c.b16 %v6166, %v6165
      %v6203 = vpack.c.b16 %v6167, %v6167
      %v6204 = vpack.c.b16 %v6169, %v6168
      %v6205 = vpack.c.b16 %v6170, %v6170
      %v6206 = vpack.c.b16 %v6172, %v6171
      %v6207 = vpack.c.b16 %v6173, %v6173
      %v6208 = vpack.c.b16 %v6175, %v6174
      %v6209 = vpack.c.b16 %v6176, %v6176
      %v6210 = vpack.c.b16 %v6178, %v6177
      %v6211 = vpack.c.b16 %v6179, %v6179
      %v6212 = vrot.slane %v6180, 1
      %v6213 = vrot.slane %v6181, 1
      %v6214 = vsel %vm1691, %v6212, %v6213
      %v6215 = vrot.slane %v6182, 1
      %v6216 = vrot.slane %v6183, 1
      %v6217 = vsel %vm1691, %v6215, %v6216
      %v6218 = vrot.slane %v6184, 1
      %v6219 = vrot.slane %v6185, 1
      %v6220 = vsel %vm1691, %v6218, %v6219
      %v6221 = vrot.slane %v6186, 1
      %v6222 = vrot.slane %v6187, 1
      %v6223 = vsel %vm1691, %v6221, %v6222
      %v6224 = vrot.slane %v6188, 1
      %v6225 = vrot.slane %v6189, 1
      %v6226 = vsel %vm1691, %v6224, %v6225
      %v6227 = vrot.slane %v6190, 1
      %v6228 = vrot.slane %v6191, 1
      %v6229 = vsel %vm1691, %v6227, %v6228
      %v6230 = vrot.slane %v6192, 1
      %v6231 = vrot.slane %v6193, 1
      %v6232 = vsel %vm1691, %v6230, %v6231
      %v6233 = vrot.slane %v6194, 1
      %v6234 = vrot.slane %v6195, 1
      %v6235 = vsel %vm1691, %v6233, %v6234
      %v6236 = vrot.slane %v6196, 1
      %v6237 = vrot.slane %v6197, 1
      %v6238 = vsel %vm1691, %v6236, %v6237
      %v6239 = vrot.slane %v6198, 1
      %v6240 = vrot.slane %v6199, 1
      %v6241 = vsel %vm1691, %v6239, %v6240
      %v6242 = vrot.slane %v6200, 1
      %v6243 = vrot.slane %v6201, 1
      %v6244 = vsel %vm1691, %v6242, %v6243
      %v6245 = vrot.slane %v6202, 1
      %v6246 = vrot.slane %v6203, 1
      %v6247 = vsel %vm1691, %v6245, %v6246
      %v6248 = vrot.slane %v6204, 1
      %v6249 = vrot.slane %v6205, 1
      %v6250 = vsel %vm1691, %v6248, %v6249
      %v6251 = vrot.slane %v6206, 1
      %v6252 = vrot.slane %v6207, 1
      %v6253 = vsel %vm1691, %v6251, %v6252
      %v6254 = vrot.slane %v6208, 1
      %v6255 = vrot.slane %v6209, 1
      %v6256 = vsel %vm1691, %v6254, %v6255
      %v6257 = vrot.slane %v6210, 1
      %v6258 = vrot.slane %v6211, 1
      %v6259 = vsel %vm1691, %v6257, %v6258
      %6260 = vrot.lane.b32.xlu0 %v6214, 20
      %v6261 = vpop.permute.xlu0 %6260
      %6262 = vrot.lane.b32.xlu0 %v6217, 20
      %v6263 = vpop.permute.xlu0 %6262
      %6264 = vrot.lane.b32.xlu0 %v6220, 20
      %v6265 = vpop.permute.xlu0 %6264
      %6266 = vrot.lane.b32.xlu0 %v6223, 20
      %v6267 = vpop.permute.xlu0 %6266
      %6268 = vrot.lane.b32.xlu0 %v6226, 20
      %v6269 = vpop.permute.xlu0 %6268
      %6270 = vrot.lane.b32.xlu0 %v6229, 20
      %v6271 = vpop.permute.xlu0 %6270
      %6272 = vrot.lane.b32.xlu0 %v6232, 20
      %v6273 = vpop.permute.xlu0 %6272
      %6274 = vrot.lane.b32.xlu0 %v6235, 20
      %v6275 = vpop.permute.xlu0 %6274
      %6276 = vrot.lane.b32.xlu0 %v6238, 20
      %v6277 = vpop.permute.xlu0 %6276
      %6278 = vrot.lane.b32.xlu0 %v6241, 20
      %v6279 = vpop.permute.xlu0 %6278
      %6280 = vrot.lane.b32.xlu0 %v6244, 20
      %v6281 = vpop.permute.xlu0 %6280
      %6282 = vrot.lane.b32.xlu0 %v6247, 20
      %v6283 = vpop.permute.xlu0 %6282
      %6284 = vrot.lane.b32.xlu0 %v6250, 20
      %v6285 = vpop.permute.xlu0 %6284
      %6286 = vrot.lane.b32.xlu0 %v6253, 20
      %v6287 = vpop.permute.xlu0 %6286
      %6288 = vrot.lane.b32.xlu0 %v6256, 20
      %v6289 = vpop.permute.xlu0 %6288
      %6290 = vrot.lane.b32.xlu0 %v6259, 20
      %v6291 = vpop.permute.xlu0 %6290
      %6308 = vst.msk [vmem:[#allocation5] sm:$0xff] %vm2687, %v6261
      %6309 = vst.msk [vmem:[#allocation5 + $0x8] sm:$0xff] %vm2687, %v6263
      %6310 = vst.msk [vmem:[#allocation5 + $0x10] sm:$0xff] %vm2687, %v6265
      %6311 = vst.msk [vmem:[#allocation5 + $0x18] sm:$0xff] %vm2687, %v6267
      %6312 = vst.msk [vmem:[#allocation5 + $0x20] sm:$0xff] %vm2687, %v6269
      %6313 = vst.msk [vmem:[#allocation5 + $0x28] sm:$0xff] %vm2687, %v6271
      %6314 = vst.msk [vmem:[#allocation5 + $0x30] sm:$0xff] %vm2687, %v6273
      %6315 = vst.msk [vmem:[#allocation5 + $0x38] sm:$0xff] %vm2687, %v6275
      %6316 = vst.msk [vmem:[#allocation5 + $0x40] sm:$0xff] %vm2687, %v6277
      %6317 = vst.msk [vmem:[#allocation5 + $0x48] sm:$0xff] %vm2687, %v6279
      %6318 = vst.msk [vmem:[#allocation5 + $0x50] sm:$0xff] %vm2687, %v6281
      %6319 = vst.msk [vmem:[#allocation5 + $0x58] sm:$0xff] %vm2687, %v6283
      %6320 = vst.msk [vmem:[#allocation5 + $0x60] sm:$0xff] %vm2687, %v6285
      %6321 = vst.msk [vmem:[#allocation5 + $0x68] sm:$0xff] %vm2687, %v6287
      %6322 = vst.msk [vmem:[#allocation5 + $0x70] sm:$0xff] %vm2687, %v6289
      %6323 = vst.msk [vmem:[#allocation5 + $0x78] sm:$0xff] %vm2687, %v6291
      %s6324 = scalar_lea.vmem [#allocation4], 24
      %v6325 = vld [vmem:[%s6324] sm:$0xf]
      %v6326 = vld [vmem:[%s6324 + $0x4] sm:$0xf]
      %v6327 = vld [vmem:[%s6324 + $0xc] sm:$0xf]
      %v6328 = vld [vmem:[%s6324 + $0x10] sm:$0xf]
      %v6329 = vld [vmem:[%s6324 + $0x18] sm:$0xf]
      %v6330 = vld [vmem:[%s6324 + $0x1c] sm:$0xf]
      %v6331 = vld [vmem:[%s6324 + $0x24] sm:$0xf]
      %v6332 = vld [vmem:[%s6324 + $0x28] sm:$0xf]
      %v6333 = vld [vmem:[%s6324 + $0x30] sm:$0xf]
      %v6334 = vld [vmem:[%s6324 + $0x34] sm:$0xf]
      %v6335 = vld [vmem:[%s6324 + $0x3c] sm:$0xf]
      %v6336 = vld [vmem:[%s6324 + $0x40] sm:$0xf]
      %v6337 = vld [vmem:[%s6324 + $0x48] sm:$0xf]
      %v6338 = vld [vmem:[%s6324 + $0x4c] sm:$0xf]
      %v6339 = vld [vmem:[%s6324 + $0x54] sm:$0xf]
      %v6340 = vld [vmem:[%s6324 + $0x58] sm:$0xf]
      %v6341 = vld [vmem:[%s6324 + $0x60] sm:$0xf]
      %v6342 = vld [vmem:[%s6324 + $0x64] sm:$0xf]
      %v6343 = vld [vmem:[%s6324 + $0x6c] sm:$0xf]
      %v6344 = vld [vmem:[%s6324 + $0x70] sm:$0xf]
      %v6345 = vld [vmem:[%s6324 + $0x78] sm:$0xf]
      %v6346 = vld [vmem:[%s6324 + $0x7c] sm:$0xf]
      %v6347 = vld [vmem:[%s6324 + $0x84] sm:$0xf]
      %v6348 = vld [vmem:[%s6324 + $0x88] sm:$0xf]
      %v6349 = vld [vmem:[%s6324 + $0x90] sm:$0xf]
      %v6350 = vld [vmem:[%s6324 + $0x94] sm:$0xf]
      %v6351 = vld [vmem:[%s6324 + $0x9c] sm:$0xf]
      %v6352 = vld [vmem:[%s6324 + $0xa0] sm:$0xf]
      %v6353 = vld [vmem:[%s6324 + $0xa8] sm:$0xf]
      %v6354 = vld [vmem:[%s6324 + $0xac] sm:$0xf]
      %v6355 = vld [vmem:[%s6324 + $0xb4] sm:$0xf]
      %v6356 = vld [vmem:[%s6324 + $0xb8] sm:$0xf]
      %v6389 = vunpack.c.l.b16 %v6325
      %v6390 = vunpack.c.l.b16 %v6326
      %v6391 = vunpack.c.l.b16 %v6327
      %v6392 = vunpack.c.l.b16 %v6328
      %v6393 = vunpack.c.l.b16 %v6329
      %v6394 = vunpack.c.l.b16 %v6330
      %v6395 = vunpack.c.l.b16 %v6331
      %v6396 = vunpack.c.l.b16 %v6332
      %v6397 = vunpack.c.l.b16 %v6333
      %v6398 = vunpack.c.l.b16 %v6334
      %v6399 = vunpack.c.l.b16 %v6335
      %v6400 = vunpack.c.l.b16 %v6336
      %v6401 = vunpack.c.l.b16 %v6337
      %v6402 = vunpack.c.l.b16 %v6338
      %v6403 = vunpack.c.l.b16 %v6339
      %v6404 = vunpack.c.l.b16 %v6340
      %v6405 = vunpack.c.l.b16 %v6341
      %v6406 = vunpack.c.l.b16 %v6342
      %v6407 = vunpack.c.l.b16 %v6343
      %v6408 = vunpack.c.l.b16 %v6344
      %v6409 = vunpack.c.l.b16 %v6345
      %v6410 = vunpack.c.l.b16 %v6346
      %v6411 = vunpack.c.l.b16 %v6347
      %v6412 = vunpack.c.l.b16 %v6348
      %v6413 = vunpack.c.l.b16 %v6349
      %v6414 = vunpack.c.l.b16 %v6350
      %v6415 = vunpack.c.l.b16 %v6351
      %v6416 = vunpack.c.l.b16 %v6352
      %v6417 = vunpack.c.l.b16 %v6353
      %v6418 = vunpack.c.l.b16 %v6354
      %v6419 = vunpack.c.l.b16 %v6355
      %v6420 = vunpack.c.l.b16 %v6356
      %v6421 = vpack.c.b16 %v6390, %v6389
      %v6422 = vpack.c.b16 %v6392, %v6391
      %v6423 = vpack.c.b16 %v6394, %v6393
      %v6424 = vpack.c.b16 %v6396, %v6395
      %v6425 = vpack.c.b16 %v6398, %v6397
      %v6426 = vpack.c.b16 %v6400, %v6399
      %v6427 = vpack.c.b16 %v6402, %v6401
      %v6428 = vpack.c.b16 %v6404, %v6403
      %v6429 = vpack.c.b16 %v6406, %v6405
      %v6430 = vpack.c.b16 %v6408, %v6407
      %v6431 = vpack.c.b16 %v6410, %v6409
      %v6432 = vpack.c.b16 %v6412, %v6411
      %v6433 = vpack.c.b16 %v6414, %v6413
      %v6434 = vpack.c.b16 %v6416, %v6415
      %v6435 = vpack.c.b16 %v6418, %v6417
      %v6436 = vpack.c.b16 %v6420, %v6419
      %6437 = vrot.lane.b32.xlu0 %v6421, 24
      %v6438 = vpop.permute.xlu0 %6437
      %6439 = vrot.lane.b32.xlu0 %v6422, 24
      %v6440 = vpop.permute.xlu0 %6439
      %6441 = vrot.lane.b32.xlu0 %v6423, 24
      %v6442 = vpop.permute.xlu0 %6441
      %6443 = vrot.lane.b32.xlu0 %v6424, 24
      %v6444 = vpop.permute.xlu0 %6443
      %6445 = vrot.lane.b32.xlu0 %v6425, 24
      %v6446 = vpop.permute.xlu0 %6445
      %6447 = vrot.lane.b32.xlu0 %v6426, 24
      %v6448 = vpop.permute.xlu0 %6447
      %6449 = vrot.lane.b32.xlu0 %v6427, 24
      %v6450 = vpop.permute.xlu0 %6449
      %6451 = vrot.lane.b32.xlu0 %v6428, 24
      %v6452 = vpop.permute.xlu0 %6451
      %6453 = vrot.lane.b32.xlu0 %v6429, 24
      %v6454 = vpop.permute.xlu0 %6453
      %6455 = vrot.lane.b32.xlu0 %v6430, 24
      %v6456 = vpop.permute.xlu0 %6455
      %6457 = vrot.lane.b32.xlu0 %v6431, 24
      %v6458 = vpop.permute.xlu0 %6457
      %6459 = vrot.lane.b32.xlu0 %v6432, 24
      %v6460 = vpop.permute.xlu0 %6459
      %6461 = vrot.lane.b32.xlu0 %v6433, 24
      %v6462 = vpop.permute.xlu0 %6461
      %6463 = vrot.lane.b32.xlu0 %v6434, 24
      %v6464 = vpop.permute.xlu0 %6463
      %6465 = vrot.lane.b32.xlu0 %v6435, 24
      %v6466 = vpop.permute.xlu0 %6465
      %6467 = vrot.lane.b32.xlu0 %v6436, 24
      %v6468 = vpop.permute.xlu0 %6467
      %6485 = vst.msk [vmem:[#allocation5] sm:$0xff] %vm2865, %v6438
      %6486 = vst.msk [vmem:[#allocation5 + $0x8] sm:$0xff] %vm2865, %v6440
      %6487 = vst.msk [vmem:[#allocation5 + $0x10] sm:$0xff] %vm2865, %v6442
      %6488 = vst.msk [vmem:[#allocation5 + $0x18] sm:$0xff] %vm2865, %v6444
      %6489 = vst.msk [vmem:[#allocation5 + $0x20] sm:$0xff] %vm2865, %v6446
      %6490 = vst.msk [vmem:[#allocation5 + $0x28] sm:$0xff] %vm2865, %v6448
      %6491 = vst.msk [vmem:[#allocation5 + $0x30] sm:$0xff] %vm2865, %v6450
      %6492 = vst.msk [vmem:[#allocation5 + $0x38] sm:$0xff] %vm2865, %v6452
      %6493 = vst.msk [vmem:[#allocation5 + $0x40] sm:$0xff] %vm2865, %v6454
      %6494 = vst.msk [vmem:[#allocation5 + $0x48] sm:$0xff] %vm2865, %v6456
      %6495 = vst.msk [vmem:[#allocation5 + $0x50] sm:$0xff] %vm2865, %v6458
      %6496 = vst.msk [vmem:[#allocation5 + $0x58] sm:$0xff] %vm2865, %v6460
      %6497 = vst.msk [vmem:[#allocation5 + $0x60] sm:$0xff] %vm2865, %v6462
      %6498 = vst.msk [vmem:[#allocation5 + $0x68] sm:$0xff] %vm2865, %v6464
      %6499 = vst.msk [vmem:[#allocation5 + $0x70] sm:$0xff] %vm2865, %v6466
      %6500 = vst.msk [vmem:[#allocation5 + $0x78] sm:$0xff] %vm2865, %v6468
      %v6501 = vld [vmem:[%s6324] sm:$0xf]
      %v6502 = vld [vmem:[%s6324 + $0x4] sm:$0xf]
      %v6503 = vld [vmem:[%s6324 + $0x8] sm:$0x1]
      %v6504 = vld [vmem:[%s6324 + $0xc] sm:$0xf]
      %v6505 = vld [vmem:[%s6324 + $0x10] sm:$0xf]
      %v6506 = vld [vmem:[%s6324 + $0x14] sm:$0x1]
      %v6507 = vld [vmem:[%s6324 + $0x18] sm:$0xf]
      %v6508 = vld [vmem:[%s6324 + $0x1c] sm:$0xf]
      %v6509 = vld [vmem:[%s6324 + $0x20] sm:$0x1]
      %v6510 = vld [vmem:[%s6324 + $0x24] sm:$0xf]
      %v6511 = vld [vmem:[%s6324 + $0x28] sm:$0xf]
      %v6512 = vld [vmem:[%s6324 + $0x2c] sm:$0x1]
      %v6513 = vld [vmem:[%s6324 + $0x30] sm:$0xf]
      %v6514 = vld [vmem:[%s6324 + $0x34] sm:$0xf]
      %v6515 = vld [vmem:[%s6324 + $0x38] sm:$0x1]
      %v6516 = vld [vmem:[%s6324 + $0x3c] sm:$0xf]
      %v6517 = vld [vmem:[%s6324 + $0x40] sm:$0xf]
      %v6518 = vld [vmem:[%s6324 + $0x44] sm:$0x1]
      %v6519 = vld [vmem:[%s6324 + $0x48] sm:$0xf]
      %v6520 = vld [vmem:[%s6324 + $0x4c] sm:$0xf]
      %v6521 = vld [vmem:[%s6324 + $0x50] sm:$0x1]
      %v6522 = vld [vmem:[%s6324 + $0x54] sm:$0xf]
      %v6523 = vld [vmem:[%s6324 + $0x58] sm:$0xf]
      %v6524 = vld [vmem:[%s6324 + $0x5c] sm:$0x1]
      %v6525 = vld [vmem:[%s6324 + $0x60] sm:$0xf]
      %v6526 = vld [vmem:[%s6324 + $0x64] sm:$0xf]
      %v6527 = vld [vmem:[%s6324 + $0x68] sm:$0x1]
      %v6528 = vld [vmem:[%s6324 + $0x6c] sm:$0xf]
      %v6529 = vld [vmem:[%s6324 + $0x70] sm:$0xf]
      %v6530 = vld [vmem:[%s6324 + $0x74] sm:$0x1]
      %v6531 = vld [vmem:[%s6324 + $0x78] sm:$0xf]
      %v6532 = vld [vmem:[%s6324 + $0x7c] sm:$0xf]
      %v6533 = vld [vmem:[%s6324 + $0x80] sm:$0x1]
      %v6534 = vld [vmem:[%s6324 + $0x84] sm:$0xf]
      %v6535 = vld [vmem:[%s6324 + $0x88] sm:$0xf]
      %v6536 = vld [vmem:[%s6324 + $0x8c] sm:$0x1]
      %v6537 = vld [vmem:[%s6324 + $0x90] sm:$0xf]
      %v6538 = vld [vmem:[%s6324 + $0x94] sm:$0xf]
      %v6539 = vld [vmem:[%s6324 + $0x98] sm:$0x1]
      %v6540 = vld [vmem:[%s6324 + $0x9c] sm:$0xf]
      %v6541 = vld [vmem:[%s6324 + $0xa0] sm:$0xf]
      %v6542 = vld [vmem:[%s6324 + $0xa4] sm:$0x1]
      %v6543 = vld [vmem:[%s6324 + $0xa8] sm:$0xf]
      %v6544 = vld [vmem:[%s6324 + $0xac] sm:$0xf]
      %v6545 = vld [vmem:[%s6324 + $0xb0] sm:$0x1]
      %v6546 = vld [vmem:[%s6324 + $0xb4] sm:$0xf]
      %v6547 = vld [vmem:[%s6324 + $0xb8] sm:$0xf]
      %v6548 = vld [vmem:[%s6324 + $0xbc] sm:$0x1]
      %v6597 = vunpack.c.l.b16 %v6501
      %v6598 = vunpack.c.l.b16 %v6502
      %v6599 = vunpack.c.l.b16 %v6503
      %v6600 = vunpack.c.l.b16 %v6504
      %v6601 = vunpack.c.l.b16 %v6505
      %v6602 = vunpack.c.l.b16 %v6506
      %v6603 = vunpack.c.l.b16 %v6507
      %v6604 = vunpack.c.l.b16 %v6508
      %v6605 = vunpack.c.l.b16 %v6509
      %v6606 = vunpack.c.l.b16 %v6510
      %v6607 = vunpack.c.l.b16 %v6511
      %v6608 = vunpack.c.l.b16 %v6512
      %v6609 = vunpack.c.l.b16 %v6513
      %v6610 = vunpack.c.l.b16 %v6514
      %v6611 = vunpack.c.l.b16 %v6515
      %v6612 = vunpack.c.l.b16 %v6516
      %v6613 = vunpack.c.l.b16 %v6517
      %v6614 = vunpack.c.l.b16 %v6518
      %v6615 = vunpack.c.l.b16 %v6519
      %v6616 = vunpack.c.l.b16 %v6520
      %v6617 = vunpack.c.l.b16 %v6521
      %v6618 = vunpack.c.l.b16 %v6522
      %v6619 = vunpack.c.l.b16 %v6523
      %v6620 = vunpack.c.l.b16 %v6524
      %v6621 = vunpack.c.l.b16 %v6525
      %v6622 = vunpack.c.l.b16 %v6526
      %v6623 = vunpack.c.l.b16 %v6527
      %v6624 = vunpack.c.l.b16 %v6528
      %v6625 = vunpack.c.l.b16 %v6529
      %v6626 = vunpack.c.l.b16 %v6530
      %v6627 = vunpack.c.l.b16 %v6531
      %v6628 = vunpack.c.l.b16 %v6532
      %v6629 = vunpack.c.l.b16 %v6533
      %v6630 = vunpack.c.l.b16 %v6534
      %v6631 = vunpack.c.l.b16 %v6535
      %v6632 = vunpack.c.l.b16 %v6536
      %v6633 = vunpack.c.l.b16 %v6537
      %v6634 = vunpack.c.l.b16 %v6538
      %v6635 = vunpack.c.l.b16 %v6539
      %v6636 = vunpack.c.l.b16 %v6540
      %v6637 = vunpack.c.l.b16 %v6541
      %v6638 = vunpack.c.l.b16 %v6542
      %v6639 = vunpack.c.l.b16 %v6543
      %v6640 = vunpack.c.l.b16 %v6544
      %v6641 = vunpack.c.l.b16 %v6545
      %v6642 = vunpack.c.l.b16 %v6546
      %v6643 = vunpack.c.l.b16 %v6547
      %v6644 = vunpack.c.l.b16 %v6548
      %v6645 = vpack.c.b16 %v6598, %v6597
      %v6646 = vpack.c.b16 %v6599, %v6599
      %v6647 = vpack.c.b16 %v6601, %v6600
      %v6648 = vpack.c.b16 %v6602, %v6602
      %v6649 = vpack.c.b16 %v6604, %v6603
      %v6650 = vpack.c.b16 %v6605, %v6605
      %v6651 = vpack.c.b16 %v6607, %v6606
      %v6652 = vpack.c.b16 %v6608, %v6608
      %v6653 = vpack.c.b16 %v6610, %v6609
      %v6654 = vpack.c.b16 %v6611, %v6611
      %v6655 = vpack.c.b16 %v6613, %v6612
      %v6656 = vpack.c.b16 %v6614, %v6614
      %v6657 = vpack.c.b16 %v6616, %v6615
      %v6658 = vpack.c.b16 %v6617, %v6617
      %v6659 = vpack.c.b16 %v6619, %v6618
      %v6660 = vpack.c.b16 %v6620, %v6620
      %v6661 = vpack.c.b16 %v6622, %v6621
      %v6662 = vpack.c.b16 %v6623, %v6623
      %v6663 = vpack.c.b16 %v6625, %v6624
      %v6664 = vpack.c.b16 %v6626, %v6626
      %v6665 = vpack.c.b16 %v6628, %v6627
      %v6666 = vpack.c.b16 %v6629, %v6629
      %v6667 = vpack.c.b16 %v6631, %v6630
      %v6668 = vpack.c.b16 %v6632, %v6632
      %v6669 = vpack.c.b16 %v6634, %v6633
      %v6670 = vpack.c.b16 %v6635, %v6635
      %v6671 = vpack.c.b16 %v6637, %v6636
      %v6672 = vpack.c.b16 %v6638, %v6638
      %v6673 = vpack.c.b16 %v6640, %v6639
      %v6674 = vpack.c.b16 %v6641, %v6641
      %v6675 = vpack.c.b16 %v6643, %v6642
      %v6676 = vpack.c.b16 %v6644, %v6644
      %v6678 = vshrl.u32 %v6645, 16
      %v6680 = vshll.u32 %v6645, 16
      %v6682 = vrot.slane %v6680, 1
      %v6683 = vor.u32 %v6678, %v6682
      %v6685 = vshll.u32 %v6646, 16
      %v6687 = vrot.slane %v6685, 1
      %v6688 = vsel %vm1257, %v6683, %v6687
      %v6690 = vshrl.u32 %v6647, 16
      %v6692 = vshll.u32 %v6647, 16
      %v6694 = vrot.slane %v6692, 1
      %v6695 = vor.u32 %v6690, %v6694
      %v6697 = vshll.u32 %v6648, 16
      %v6699 = vrot.slane %v6697, 1
      %v6700 = vsel %vm1257, %v6695, %v6699
      %v6702 = vshrl.u32 %v6649, 16
      %v6704 = vshll.u32 %v6649, 16
      %v6706 = vrot.slane %v6704, 1
      %v6707 = vor.u32 %v6702, %v6706
      %v6709 = vshll.u32 %v6650, 16
      %v6711 = vrot.slane %v6709, 1
      %v6712 = vsel %vm1257, %v6707, %v6711
      %v6714 = vshrl.u32 %v6651, 16
      %v6716 = vshll.u32 %v6651, 16
      %v6718 = vrot.slane %v6716, 1
      %v6719 = vor.u32 %v6714, %v6718
      %v6721 = vshll.u32 %v6652, 16
      %v6723 = vrot.slane %v6721, 1
      %v6724 = vsel %vm1257, %v6719, %v6723
      %v6726 = vshrl.u32 %v6653, 16
      %v6728 = vshll.u32 %v6653, 16
      %v6730 = vrot.slane %v6728, 1
      %v6731 = vor.u32 %v6726, %v6730
      %v6733 = vshll.u32 %v6654, 16
      %v6735 = vrot.slane %v6733, 1
      %v6736 = vsel %vm1257, %v6731, %v6735
      %v6738 = vshrl.u32 %v6655, 16
      %v6740 = vshll.u32 %v6655, 16
      %v6742 = vrot.slane %v6740, 1
      %v6743 = vor.u32 %v6738, %v6742
      %v6745 = vshll.u32 %v6656, 16
      %v6747 = vrot.slane %v6745, 1
      %v6748 = vsel %vm1257, %v6743, %v6747
      %v6750 = vshrl.u32 %v6657, 16
      %v6752 = vshll.u32 %v6657, 16
      %v6754 = vrot.slane %v6752, 1
      %v6755 = vor.u32 %v6750, %v6754
      %v6757 = vshll.u32 %v6658, 16
      %v6759 = vrot.slane %v6757, 1
      %v6760 = vsel %vm1257, %v6755, %v6759
      %v6762 = vshrl.u32 %v6659, 16
      %v6764 = vshll.u32 %v6659, 16
      %v6766 = vrot.slane %v6764, 1
      %v6767 = vor.u32 %v6762, %v6766
      %v6769 = vshll.u32 %v6660, 16
      %v6771 = vrot.slane %v6769, 1
      %v6772 = vsel %vm1257, %v6767, %v6771
      %v6774 = vshrl.u32 %v6661, 16
      %v6776 = vshll.u32 %v6661, 16
      %v6778 = vrot.slane %v6776, 1
      %v6779 = vor.u32 %v6774, %v6778
      %v6781 = vshll.u32 %v6662, 16
      %v6783 = vrot.slane %v6781, 1
      %v6784 = vsel %vm1257, %v6779, %v6783
      %v6786 = vshrl.u32 %v6663, 16
      %v6788 = vshll.u32 %v6663, 16
      %v6790 = vrot.slane %v6788, 1
      %v6791 = vor.u32 %v6786, %v6790
      %v6793 = vshll.u32 %v6664, 16
      %v6795 = vrot.slane %v6793, 1
      %v6796 = vsel %vm1257, %v6791, %v6795
      %v6798 = vshrl.u32 %v6665, 16
      %v6800 = vshll.u32 %v6665, 16
      %v6802 = vrot.slane %v6800, 1
      %v6803 = vor.u32 %v6798, %v6802
      %v6805 = vshll.u32 %v6666, 16
      %v6807 = vrot.slane %v6805, 1
      %v6808 = vsel %vm1257, %v6803, %v6807
      %v6810 = vshrl.u32 %v6667, 16
      %v6812 = vshll.u32 %v6667, 16
      %v6814 = vrot.slane %v6812, 1
      %v6815 = vor.u32 %v6810, %v6814
      %v6817 = vshll.u32 %v6668, 16
      %v6819 = vrot.slane %v6817, 1
      %v6820 = vsel %vm1257, %v6815, %v6819
      %v6822 = vshrl.u32 %v6669, 16
      %v6824 = vshll.u32 %v6669, 16
      %v6826 = vrot.slane %v6824, 1
      %v6827 = vor.u32 %v6822, %v6826
      %v6829 = vshll.u32 %v6670, 16
      %v6831 = vrot.slane %v6829, 1
      %v6832 = vsel %vm1257, %v6827, %v6831
      %v6834 = vshrl.u32 %v6671, 16
      %v6836 = vshll.u32 %v6671, 16
      %v6838 = vrot.slane %v6836, 1
      %v6839 = vor.u32 %v6834, %v6838
      %v6841 = vshll.u32 %v6672, 16
      %v6843 = vrot.slane %v6841, 1
      %v6844 = vsel %vm1257, %v6839, %v6843
      %v6846 = vshrl.u32 %v6673, 16
      %v6848 = vshll.u32 %v6673, 16
      %v6850 = vrot.slane %v6848, 1
      %v6851 = vor.u32 %v6846, %v6850
      %v6853 = vshll.u32 %v6674, 16
      %v6855 = vrot.slane %v6853, 1
      %v6856 = vsel %vm1257, %v6851, %v6855
      %v6858 = vshrl.u32 %v6675, 16
      %v6860 = vshll.u32 %v6675, 16
      %v6862 = vrot.slane %v6860, 1
      %v6863 = vor.u32 %v6858, %v6862
      %v6865 = vshll.u32 %v6676, 16
      %v6867 = vrot.slane %v6865, 1
      %v6868 = vsel %vm1257, %v6863, %v6867
      %6869 = vrot.lane.b32.xlu0 %v6688, 28
      %v6870 = vpop.permute.xlu0 %6869
      %6871 = vrot.lane.b32.xlu0 %v6700, 28
      %v6872 = vpop.permute.xlu0 %6871
      %6873 = vrot.lane.b32.xlu0 %v6712, 28
      %v6874 = vpop.permute.xlu0 %6873
      %6875 = vrot.lane.b32.xlu0 %v6724, 28
      %v6876 = vpop.permute.xlu0 %6875
      %6877 = vrot.lane.b32.xlu0 %v6736, 28
      %v6878 = vpop.permute.xlu0 %6877
      %6879 = vrot.lane.b32.xlu0 %v6748, 28
      %v6880 = vpop.permute.xlu0 %6879
      %6881 = vrot.lane.b32.xlu0 %v6760, 28
      %v6882 = vpop.permute.xlu0 %6881
      %6883 = vrot.lane.b32.xlu0 %v6772, 28
      %v6884 = vpop.permute.xlu0 %6883
      %6885 = vrot.lane.b32.xlu0 %v6784, 28
      %v6886 = vpop.permute.xlu0 %6885
      %6887 = vrot.lane.b32.xlu0 %v6796, 28
      %v6888 = vpop.permute.xlu0 %6887
      %6889 = vrot.lane.b32.xlu0 %v6808, 28
      %v6890 = vpop.permute.xlu0 %6889
      %6891 = vrot.lane.b32.xlu0 %v6820, 28
      %v6892 = vpop.permute.xlu0 %6891
      %6893 = vrot.lane.b32.xlu0 %v6832, 28
      %v6894 = vpop.permute.xlu0 %6893
      %6895 = vrot.lane.b32.xlu0 %v6844, 28
      %v6896 = vpop.permute.xlu0 %6895
      %6897 = vrot.lane.b32.xlu0 %v6856, 28
      %v6898 = vpop.permute.xlu0 %6897
      %6899 = vrot.lane.b32.xlu0 %v6868, 28
      %v6900 = vpop.permute.xlu0 %6899
      %6917 = vst.msk [vmem:[#allocation5] sm:$0xff] %vm3298, %v6870
      %6918 = vst.msk [vmem:[#allocation5 + $0x8] sm:$0xff] %vm3298, %v6872
      %6919 = vst.msk [vmem:[#allocation5 + $0x10] sm:$0xff] %vm3298, %v6874
      %6920 = vst.msk [vmem:[#allocation5 + $0x18] sm:$0xff] %vm3298, %v6876
      %6921 = vst.msk [vmem:[#allocation5 + $0x20] sm:$0xff] %vm3298, %v6878
      %6922 = vst.msk [vmem:[#allocation5 + $0x28] sm:$0xff] %vm3298, %v6880
      %6923 = vst.msk [vmem:[#allocation5 + $0x30] sm:$0xff] %vm3298, %v6882
      %6924 = vst.msk [vmem:[#allocation5 + $0x38] sm:$0xff] %vm3298, %v6884
      %6925 = vst.msk [vmem:[#allocation5 + $0x40] sm:$0xff] %vm3298, %v6886
      %6926 = vst.msk [vmem:[#allocation5 + $0x48] sm:$0xff] %vm3298, %v6888
      %6927 = vst.msk [vmem:[#allocation5 + $0x50] sm:$0xff] %vm3298, %v6890
      %6928 = vst.msk [vmem:[#allocation5 + $0x58] sm:$0xff] %vm3298, %v6892
      %6929 = vst.msk [vmem:[#allocation5 + $0x60] sm:$0xff] %vm3298, %v6894
      %6930 = vst.msk [vmem:[#allocation5 + $0x68] sm:$0xff] %vm3298, %v6896
      %6931 = vst.msk [vmem:[#allocation5 + $0x70] sm:$0xff] %vm3298, %v6898
      %6932 = vst.msk [vmem:[#allocation5 + $0x78] sm:$0xff] %vm3298, %v6900
      %v6933 = vld [vmem:[%s6324] sm:$0xe]
      %v6934 = vld [vmem:[%s6324 + $0x4] sm:$0xf]
      %v6935 = vld [vmem:[%s6324 + $0x8] sm:$0x1]
      %v6936 = vld [vmem:[%s6324 + $0xc] sm:$0xe]
      %v6937 = vld [vmem:[%s6324 + $0x10] sm:$0xf]
      %v6938 = vld [vmem:[%s6324 + $0x14] sm:$0x1]
      %v6939 = vld [vmem:[%s6324 + $0x18] sm:$0xe]
      %v6940 = vld [vmem:[%s6324 + $0x1c] sm:$0xf]
      %v6941 = vld [vmem:[%s6324 + $0x20] sm:$0x1]
      %v6942 = vld [vmem:[%s6324 + $0x24] sm:$0xe]
      %v6943 = vld [vmem:[%s6324 + $0x28] sm:$0xf]
      %v6944 = vld [vmem:[%s6324 + $0x2c] sm:$0x1]
      %v6945 = vld [vmem:[%s6324 + $0x30] sm:$0xe]
      %v6946 = vld [vmem:[%s6324 + $0x34] sm:$0xf]
      %v6947 = vld [vmem:[%s6324 + $0x38] sm:$0x1]
      %v6948 = vld [vmem:[%s6324 + $0x3c] sm:$0xe]
      %v6949 = vld [vmem:[%s6324 + $0x40] sm:$0xf]
      %v6950 = vld [vmem:[%s6324 + $0x44] sm:$0x1]
      %v6951 = vld [vmem:[%s6324 + $0x48] sm:$0xe]
      %v6952 = vld [vmem:[%s6324 + $0x4c] sm:$0xf]
      %v6953 = vld [vmem:[%s6324 + $0x50] sm:$0x1]
      %v6954 = vld [vmem:[%s6324 + $0x54] sm:$0xe]
      %v6955 = vld [vmem:[%s6324 + $0x58] sm:$0xf]
      %v6956 = vld [vmem:[%s6324 + $0x5c] sm:$0x1]
      %v6957 = vld [vmem:[%s6324 + $0x60] sm:$0xe]
      %v6958 = vld [vmem:[%s6324 + $0x64] sm:$0xf]
      %v6959 = vld [vmem:[%s6324 + $0x68] sm:$0x1]
      %v6960 = vld [vmem:[%s6324 + $0x6c] sm:$0xe]
      %v6961 = vld [vmem:[%s6324 + $0x70] sm:$0xf]
      %v6962 = vld [vmem:[%s6324 + $0x74] sm:$0x1]
      %v6963 = vld [vmem:[%s6324 + $0x78] sm:$0xe]
      %v6964 = vld [vmem:[%s6324 + $0x7c] sm:$0xf]
      %v6965 = vld [vmem:[%s6324 + $0x80] sm:$0x1]
      %v6966 = vld [vmem:[%s6324 + $0x84] sm:$0xe]
      %v6967 = vld [vmem:[%s6324 + $0x88] sm:$0xf]
      %v6968 = vld [vmem:[%s6324 + $0x8c] sm:$0x1]
      %v6969 = vld [vmem:[%s6324 + $0x90] sm:$0xe]
      %v6970 = vld [vmem:[%s6324 + $0x94] sm:$0xf]
      %v6971 = vld [vmem:[%s6324 + $0x98] sm:$0x1]
      %v6972 = vld [vmem:[%s6324 + $0x9c] sm:$0xe]
      %v6973 = vld [vmem:[%s6324 + $0xa0] sm:$0xf]
      %v6974 = vld [vmem:[%s6324 + $0xa4] sm:$0x1]
      %v6975 = vld [vmem:[%s6324 + $0xa8] sm:$0xe]
      %v6976 = vld [vmem:[%s6324 + $0xac] sm:$0xf]
      %v6977 = vld [vmem:[%s6324 + $0xb0] sm:$0x1]
      %v6978 = vld [vmem:[%s6324 + $0xb4] sm:$0xe]
      %v6979 = vld [vmem:[%s6324 + $0xb8] sm:$0xf]
      %v6980 = vld [vmem:[%s6324 + $0xbc] sm:$0x1]
      %v7029 = vunpack.c.l.b16 %v6933
      %v7030 = vunpack.c.l.b16 %v6934
      %v7031 = vunpack.c.l.b16 %v6935
      %v7032 = vunpack.c.l.b16 %v6936
      %v7033 = vunpack.c.l.b16 %v6937
      %v7034 = vunpack.c.l.b16 %v6938
      %v7035 = vunpack.c.l.b16 %v6939
      %v7036 = vunpack.c.l.b16 %v6940
      %v7037 = vunpack.c.l.b16 %v6941
      %v7038 = vunpack.c.l.b16 %v6942
      %v7039 = vunpack.c.l.b16 %v6943
      %v7040 = vunpack.c.l.b16 %v6944
      %v7041 = vunpack.c.l.b16 %v6945
      %v7042 = vunpack.c.l.b16 %v6946
      %v7043 = vunpack.c.l.b16 %v6947
      %v7044 = vunpack.c.l.b16 %v6948
      %v7045 = vunpack.c.l.b16 %v6949
      %v7046 = vunpack.c.l.b16 %v6950
      %v7047 = vunpack.c.l.b16 %v6951
      %v7048 = vunpack.c.l.b16 %v6952
      %v7049 = vunpack.c.l.b16 %v6953
      %v7050 = vunpack.c.l.b16 %v6954
      %v7051 = vunpack.c.l.b16 %v6955
      %v7052 = vunpack.c.l.b16 %v6956
      %v7053 = vunpack.c.l.b16 %v6957
      %v7054 = vunpack.c.l.b16 %v6958
      %v7055 = vunpack.c.l.b16 %v6959
      %v7056 = vunpack.c.l.b16 %v6960
      %v7057 = vunpack.c.l.b16 %v6961
      %v7058 = vunpack.c.l.b16 %v6962
      %v7059 = vunpack.c.l.b16 %v6963
      %v7060 = vunpack.c.l.b16 %v6964
      %v7061 = vunpack.c.l.b16 %v6965
      %v7062 = vunpack.c.l.b16 %v6966
      %v7063 = vunpack.c.l.b16 %v6967
      %v7064 = vunpack.c.l.b16 %v6968
      %v7065 = vunpack.c.l.b16 %v6969
      %v7066 = vunpack.c.l.b16 %v6970
      %v7067 = vunpack.c.l.b16 %v6971
      %v7068 = vunpack.c.l.b16 %v6972
      %v7069 = vunpack.c.l.b16 %v6973
      %v7070 = vunpack.c.l.b16 %v6974
      %v7071 = vunpack.c.l.b16 %v6975
      %v7072 = vunpack.c.l.b16 %v6976
      %v7073 = vunpack.c.l.b16 %v6977
      %v7074 = vunpack.c.l.b16 %v6978
      %v7075 = vunpack.c.l.b16 %v6979
      %v7076 = vunpack.c.l.b16 %v6980
      %v7077 = vpack.c.b16 %v7030, %v7029
      %v7078 = vpack.c.b16 %v7031, %v7031
      %v7079 = vpack.c.b16 %v7033, %v7032
      %v7080 = vpack.c.b16 %v7034, %v7034
      %v7081 = vpack.c.b16 %v7036, %v7035
      %v7082 = vpack.c.b16 %v7037, %v7037
      %v7083 = vpack.c.b16 %v7039, %v7038
      %v7084 = vpack.c.b16 %v7040, %v7040
      %v7085 = vpack.c.b16 %v7042, %v7041
      %v7086 = vpack.c.b16 %v7043, %v7043
      %v7087 = vpack.c.b16 %v7045, %v7044
      %v7088 = vpack.c.b16 %v7046, %v7046
      %v7089 = vpack.c.b16 %v7048, %v7047
      %v7090 = vpack.c.b16 %v7049, %v7049
      %v7091 = vpack.c.b16 %v7051, %v7050
      %v7092 = vpack.c.b16 %v7052, %v7052
      %v7093 = vpack.c.b16 %v7054, %v7053
      %v7094 = vpack.c.b16 %v7055, %v7055
      %v7095 = vpack.c.b16 %v7057, %v7056
      %v7096 = vpack.c.b16 %v7058, %v7058
      %v7097 = vpack.c.b16 %v7060, %v7059
      %v7098 = vpack.c.b16 %v7061, %v7061
      %v7099 = vpack.c.b16 %v7063, %v7062
      %v7100 = vpack.c.b16 %v7064, %v7064
      %v7101 = vpack.c.b16 %v7066, %v7065
      %v7102 = vpack.c.b16 %v7067, %v7067
      %v7103 = vpack.c.b16 %v7069, %v7068
      %v7104 = vpack.c.b16 %v7070, %v7070
      %v7105 = vpack.c.b16 %v7072, %v7071
      %v7106 = vpack.c.b16 %v7073, %v7073
      %v7107 = vpack.c.b16 %v7075, %v7074
      %v7108 = vpack.c.b16 %v7076, %v7076
      %v7109 = vrot.slane %v7077, 1
      %v7110 = vrot.slane %v7078, 1
      %v7111 = vsel %vm1691, %v7109, %v7110
      %v7112 = vrot.slane %v7079, 1
      %v7113 = vrot.slane %v7080, 1
      %v7114 = vsel %vm1691, %v7112, %v7113
      %v7115 = vrot.slane %v7081, 1
      %v7116 = vrot.slane %v7082, 1
      %v7117 = vsel %vm1691, %v7115, %v7116
      %v7118 = vrot.slane %v7083, 1
      %v7119 = vrot.slane %v7084, 1
      %v7120 = vsel %vm1691, %v7118, %v7119
      %v7121 = vrot.slane %v7085, 1
      %v7122 = vrot.slane %v7086, 1
      %v7123 = vsel %vm1691, %v7121, %v7122
      %v7124 = vrot.slane %v7087, 1
      %v7125 = vrot.slane %v7088, 1
      %v7126 = vsel %vm1691, %v7124, %v7125
      %v7127 = vrot.slane %v7089, 1
      %v7128 = vrot.slane %v7090, 1
      %v7129 = vsel %vm1691, %v7127, %v7128
      %v7130 = vrot.slane %v7091, 1
      %v7131 = vrot.slane %v7092, 1
      %v7132 = vsel %vm1691, %v7130, %v7131
      %v7133 = vrot.slane %v7093, 1
      %v7134 = vrot.slane %v7094, 1
      %v7135 = vsel %vm1691, %v7133, %v7134
      %v7136 = vrot.slane %v7095, 1
      %v7137 = vrot.slane %v7096, 1
      %v7138 = vsel %vm1691, %v7136, %v7137
      %v7139 = vrot.slane %v7097, 1
      %v7140 = vrot.slane %v7098, 1
      %v7141 = vsel %vm1691, %v7139, %v7140
      %v7142 = vrot.slane %v7099, 1
      %v7143 = vrot.slane %v7100, 1
      %v7144 = vsel %vm1691, %v7142, %v7143
      %v7145 = vrot.slane %v7101, 1
      %v7146 = vrot.slane %v7102, 1
      %v7147 = vsel %vm1691, %v7145, %v7146
      %v7148 = vrot.slane %v7103, 1
      %v7149 = vrot.slane %v7104, 1
      %v7150 = vsel %vm1691, %v7148, %v7149
      %v7151 = vrot.slane %v7105, 1
      %v7152 = vrot.slane %v7106, 1
      %v7153 = vsel %vm1691, %v7151, %v7152
      %v7154 = vrot.slane %v7107, 1
      %v7155 = vrot.slane %v7108, 1
      %v7156 = vsel %vm1691, %v7154, %v7155
      %7157 = vrot.lane.b32.xlu0 %v7111, 32
      %v7158 = vpop.permute.xlu0 %7157
      %7159 = vrot.lane.b32.xlu0 %v7114, 32
      %v7160 = vpop.permute.xlu0 %7159
      %7161 = vrot.lane.b32.xlu0 %v7117, 32
      %v7162 = vpop.permute.xlu0 %7161
      %7163 = vrot.lane.b32.xlu0 %v7120, 32
      %v7164 = vpop.permute.xlu0 %7163
      %7165 = vrot.lane.b32.xlu0 %v7123, 32
      %v7166 = vpop.permute.xlu0 %7165
      %7167 = vrot.lane.b32.xlu0 %v7126, 32
      %v7168 = vpop.permute.xlu0 %7167
      %7169 = vrot.lane.b32.xlu0 %v7129, 32
      %v7170 = vpop.permute.xlu0 %7169
      %7171 = vrot.lane.b32.xlu0 %v7132, 32
      %v7172 = vpop.permute.xlu0 %7171
      %7173 = vrot.lane.b32.xlu0 %v7135, 32
      %v7174 = vpop.permute.xlu0 %7173
      %7175 = vrot.lane.b32.xlu0 %v7138, 32
      %v7176 = vpop.permute.xlu0 %7175
      %7177 = vrot.lane.b32.xlu0 %v7141, 32
      %v7178 = vpop.permute.xlu0 %7177
      %7179 = vrot.lane.b32.xlu0 %v7144, 32
      %v7180 = vpop.permute.xlu0 %7179
      %7181 = vrot.lane.b32.xlu0 %v7147, 32
      %v7182 = vpop.permute.xlu0 %7181
      %7183 = vrot.lane.b32.xlu0 %v7150, 32
      %v7184 = vpop.permute.xlu0 %7183
      %7185 = vrot.lane.b32.xlu0 %v7153, 32
      %v7186 = vpop.permute.xlu0 %7185
      %7187 = vrot.lane.b32.xlu0 %v7156, 32
      %v7188 = vpop.permute.xlu0 %7187
      %7205 = vst.msk [vmem:[#allocation5] sm:$0xff] %vm3587, %v7158
      %7206 = vst.msk [vmem:[#allocation5 + $0x8] sm:$0xff] %vm3587, %v7160
      %7207 = vst.msk [vmem:[#allocation5 + $0x10] sm:$0xff] %vm3587, %v7162
      %7208 = vst.msk [vmem:[#allocation5 + $0x18] sm:$0xff] %vm3587, %v7164
      %7209 = vst.msk [vmem:[#allocation5 + $0x20] sm:$0xff] %vm3587, %v7166
      %7210 = vst.msk [vmem:[#allocation5 + $0x28] sm:$0xff] %vm3587, %v7168
      %7211 = vst.msk [vmem:[#allocation5 + $0x30] sm:$0xff] %vm3587, %v7170
      %7212 = vst.msk [vmem:[#allocation5 + $0x38] sm:$0xff] %vm3587, %v7172
      %7213 = vst.msk [vmem:[#allocation5 + $0x40] sm:$0xff] %vm3587, %v7174
      %7214 = vst.msk [vmem:[#allocation5 + $0x48] sm:$0xff] %vm3587, %v7176
      %7215 = vst.msk [vmem:[#allocation5 + $0x50] sm:$0xff] %vm3587, %v7178
      %7216 = vst.msk [vmem:[#allocation5 + $0x58] sm:$0xff] %vm3587, %v7180
      %7217 = vst.msk [vmem:[#allocation5 + $0x60] sm:$0xff] %vm3587, %v7182
      %7218 = vst.msk [vmem:[#allocation5 + $0x68] sm:$0xff] %vm3587, %v7184
      %7219 = vst.msk [vmem:[#allocation5 + $0x70] sm:$0xff] %vm3587, %v7186
      %7220 = vst.msk [vmem:[#allocation5 + $0x78] sm:$0xff] %vm3587, %v7188
      %v7221 = vld [vmem:[#allocation5] sm:$0xff]
      %v7222 = vld [vmem:[#allocation5 + $0x8] sm:$0xff]
      %v7223 = vld [vmem:[#allocation5 + $0x10] sm:$0xff]
      %v7224 = vld [vmem:[#allocation5 + $0x18] sm:$0xff]
      %v7225 = vld [vmem:[#allocation5 + $0x20] sm:$0xff]
      %v7226 = vld [vmem:[#allocation5 + $0x28] sm:$0xff]
      %v7227 = vld [vmem:[#allocation5 + $0x30] sm:$0xff]
      %v7228 = vld [vmem:[#allocation5 + $0x38] sm:$0xff]
      %v7229 = vld [vmem:[#allocation5 + $0x40] sm:$0xff]
      %v7230 = vld [vmem:[#allocation5 + $0x48] sm:$0xff]
      %v7231 = vld [vmem:[#allocation5 + $0x50] sm:$0xff]
      %v7232 = vld [vmem:[#allocation5 + $0x58] sm:$0xff]
      %v7233 = vld [vmem:[#allocation5 + $0x60] sm:$0xff]
      %v7234 = vld [vmem:[#allocation5 + $0x68] sm:$0xff]
      %v7235 = vld [vmem:[#allocation5 + $0x70] sm:$0xff]
      %v7236 = vld [vmem:[#allocation5 + $0x78] sm:$0xff]
      %v7237 = vld [vmem:[%s3] sm:$0xf]
      %v7238 = vld [vmem:[%s3 + $0x4] sm:$0xf]
      %v7239 = vld [vmem:[%s3 + $0x8] sm:$0xf]
      %v7240 = vld [vmem:[%s3 + $0xc] sm:$0xf]
      %v7241 = vld [vmem:[%s3 + $0x10] sm:$0x3]
      %v7247 = vunpack.c.l.b16 %v7237
      %v7248 = vunpack.c.l.b16 %v7238
      %v7249 = vunpack.c.l.b16 %v7239
      %v7250 = vunpack.c.l.b16 %v7240
      %v7251 = vunpack.c.l.b16 %v7241
      %v7252 = vpack.c.b16 %v7248, %v7247
      %v7253 = vpack.c.b16 %v7250, %v7249
      %v7254 = vpack.c.b16 %v7251, %v7251
      %v7258 = vsel %vm3641, %v7221, 0
      %v7261 = vsel %vm3641, %v7222, 0
      %v7264 = vsel %vm3641, %v7223, 0
      %v7267 = vsel %vm3641, %v7224, 0
      %v7270 = vsel %vm3641, %v7225, 0
      %v7273 = vsel %vm3641, %v7226, 0
      %v7276 = vsel %vm3641, %v7227, 0
      %v7279 = vsel %vm3641, %v7228, 0
      %v7282 = vsel %vm3641, %v7229, 0
      %v7285 = vsel %vm3641, %v7230, 0
      %v7288 = vsel %vm3641, %v7231, 0
      %v7291 = vsel %vm3641, %v7232, 0
      %v7294 = vsel %vm3641, %v7233, 0
      %v7297 = vsel %vm3641, %v7234, 0
      %v7300 = vsel %vm3641, %v7235, 0
      %v7303 = vsel %vm3641, %v7236, 0
      %v7306 = vsel %vm3690, %v7254, 0
      %7308 = vmatprep.subr.bf16.mxu0 0
      %7309 = vmatpush1.bf16.msra.mxu0 %v7252
      %7310 = vmatprep.subr.bf16.mxu0 0
      %7311 = vmatpush1.bf16.msra.mxu0 %v7253
      %7312 = vmatprep.subr.bf16.mxu0 0
      %7313 = vmatpush1.bf16.msra.mxu0 %v7306
      %7314 = vmatprep.subr.bf16.mxu0 0
      %7315 = vmatpush1.bf16.msra.mxu0 0
      %7316 = vmatprep.subr.bf16.mxu0 0
      %7317 = vmatpush1.bf16.msra.mxu0 0
      %7318 = vmatprep.subr.bf16.mxu0 0
      %7319 = vmatpush1.bf16.msra.mxu0 0
      %7320 = vmatprep.subr.bf16.mxu0 0
      %7321 = vmatpush1.bf16.msra.mxu0 0
      %7322 = vmatprep.subr.bf16.mxu0 0
      %7323 = vmatpush1.bf16.msra.mxu0 0
      %7324 = vmatprep.subr.bf16.mxu0 0
      %7325 = vmatpush1.bf16.msra.mxu0 0
      %7326 = vmatprep.subr.bf16.mxu0 0
      %7327 = vmatpush1.bf16.msra.mxu0 0
      %7328 = vmatprep.subr.bf16.mxu0 0
      %7329 = vmatpush1.bf16.msra.mxu0 0
      %7330 = vmatprep.subr.bf16.mxu0 0
      %7331 = vmatpush1.bf16.msra.mxu0 0
      %7332 = vmatprep.subr.bf16.mxu0 0
      %7333 = vmatpush1.bf16.msra.mxu0 0
      %7334 = vmatprep.subr.bf16.mxu0 0
      %7335 = vmatpush1.bf16.msra.mxu0 0
      %7336 = vmatprep.subr.bf16.mxu0 0
      %7337 = vmatpush1.bf16.msra.mxu0 0
      %7338 = vmatprep.subr.bf16.mxu0 0
      %7339 = vmatpush1.bf16.msra.mxu0 0
      %7340 = vmatprep.mubr.bf16.mxu0 0
      %7341 = vmatmul.mubr.bf16.gmra.mrb[0].mxu0 %v7258
      %v7342 = vpop.f32.mrb[0].mxu0
      %v7343 = vadd.f32 0.0, %v7342
      %v7344 = vpop.f32.mrb[0].mxu0
      %v7345 = vpop.f32.mrb[0].mxu0
      %v7346 = vadd.f32 0.0, %v7345
      %v7347 = vpop.f32.mrb[0].mxu0
      %7348 = vmatprep.mubr.bf16.mxu0 0
      %7349 = vmatmul.mubr.bf16.gmra.mrb[0].mxu0 %v7261
      %v7350 = vpop.f32.mrb[0].mxu0
      %v7351 = vadd.f32 0.0, %v7350
      %v7352 = vpop.f32.mrb[0].mxu0
      %v7353 = vpop.f32.mrb[0].mxu0
      %v7354 = vadd.f32 0.0, %v7353
      %v7355 = vpop.f32.mrb[0].mxu0
      %7356 = vmatprep.mubr.bf16.mxu0 0
      %7357 = vmatmul.mubr.bf16.gmra.mrb[0].mxu0 %v7264
      %v7358 = vpop.f32.mrb[0].mxu0
      %v7359 = vadd.f32 0.0, %v7358
      %v7360 = vpop.f32.mrb[0].mxu0
      %v7361 = vpop.f32.mrb[0].mxu0
      %v7362 = vadd.f32 0.0, %v7361
      %v7363 = vpop.f32.mrb[0].mxu0
      %7364 = vmatprep.mubr.bf16.mxu0 0
      %7365 = vmatmul.mubr.bf16.gmra.mrb[0].mxu0 %v7267
      %v7366 = vpop.f32.mrb[0].mxu0
      %v7367 = vadd.f32 0.0, %v7366
      %v7368 = vpop.f32.mrb[0].mxu0
      %v7369 = vpop.f32.mrb[0].mxu0
      %v7370 = vadd.f32 0.0, %v7369
      %v7371 = vpop.f32.mrb[0].mxu0
      %7372 = vmatprep.mubr.bf16.mxu0 0
      %7373 = vmatmul.mubr.bf16.gmra.mrb[0].mxu0 %v7270
      %v7374 = vpop.f32.mrb[0].mxu0
      %v7375 = vadd.f32 0.0, %v7374
      %v7376 = vpop.f32.mrb[0].mxu0
      %v7377 = vpop.f32.mrb[0].mxu0
      %v7378 = vadd.f32 0.0, %v7377
      %v7379 = vpop.f32.mrb[0].mxu0
      %7380 = vmatprep.mubr.bf16.mxu0 0
      %7381 = vmatmul.mubr.bf16.gmra.mrb[0].mxu0 %v7273
      %v7382 = vpop.f32.mrb[0].mxu0
      %v7383 = vadd.f32 0.0, %v7382
      %v7384 = vpop.f32.mrb[0].mxu0
      %v7385 = vpop.f32.mrb[0].mxu0
      %v7386 = vadd.f32 0.0, %v7385
      %v7387 = vpop.f32.mrb[0].mxu0
      %7388 = vmatprep.mubr.bf16.mxu0 0
      %7389 = vmatmul.mubr.bf16.gmra.mrb[0].mxu0 %v7276
      %v7390 = vpop.f32.mrb[0].mxu0
      %v7391 = vadd.f32 0.0, %v7390
      %v7392 = vpop.f32.mrb[0].mxu0
      %v7393 = vpop.f32.mrb[0].mxu0
      %v7394 = vadd.f32 0.0, %v7393
      %v7395 = vpop.f32.mrb[0].mxu0
      %7396 = vmatprep.mubr.bf16.mxu0 0
      %7397 = vmatmul.mubr.bf16.gmra.mrb[0].mxu0 %v7279
      %v7398 = vpop.f32.mrb[0].mxu0
      %v7399 = vadd.f32 0.0, %v7398
      %v7400 = vpop.f32.mrb[0].mxu0
      %v7401 = vpop.f32.mrb[0].mxu0
      %v7402 = vadd.f32 0.0, %v7401
      %v7403 = vpop.f32.mrb[0].mxu0
      %7404 = vmatprep.mubr.bf16.mxu0 0
      %7405 = vmatmul.mubr.bf16.gmra.mrb[0].mxu0 %v7282
      %v7406 = vpop.f32.mrb[0].mxu0
      %v7407 = vadd.f32 0.0, %v7406
      %v7408 = vpop.f32.mrb[0].mxu0
      %v7409 = vpop.f32.mrb[0].mxu0
      %v7410 = vadd.f32 0.0, %v7409
      %v7411 = vpop.f32.mrb[0].mxu0
      %7412 = vmatprep.mubr.bf16.mxu0 0
      %7413 = vmatmul.mubr.bf16.gmra.mrb[0].mxu0 %v7285
      %v7414 = vpop.f32.mrb[0].mxu0
      %v7415 = vadd.f32 0.0, %v7414
      %v7416 = vpop.f32.mrb[0].mxu0
      %v7417 = vpop.f32.mrb[0].mxu0
      %v7418 = vadd.f32 0.0, %v7417
      %v7419 = vpop.f32.mrb[0].mxu0
      %7420 = vmatprep.mubr.bf16.mxu0 0
      %7421 = vmatmul.mubr.bf16.gmra.mrb[0].mxu0 %v7288
      %v7422 = vpop.f32.mrb[0].mxu0
      %v7423 = vadd.f32 0.0, %v7422
      %v7424 = vpop.f32.mrb[0].mxu0
      %v7425 = vpop.f32.mrb[0].mxu0
      %v7426 = vadd.f32 0.0, %v7425
      %v7427 = vpop.f32.mrb[0].mxu0
      %7428 = vmatprep.mubr.bf16.mxu0 0
      %7429 = vmatmul.mubr.bf16.gmra.mrb[0].mxu0 %v7291
      %v7430 = vpop.f32.mrb[0].mxu0
      %v7431 = vadd.f32 0.0, %v7430
      %v7432 = vpop.f32.mrb[0].mxu0
      %v7433 = vpop.f32.mrb[0].mxu0
      %v7434 = vadd.f32 0.0, %v7433
      %v7435 = vpop.f32.mrb[0].mxu0
      %7436 = vmatprep.mubr.bf16.mxu0 0
      %7437 = vmatmul.mubr.bf16.gmra.mrb[0].mxu0 %v7294
      %v7438 = vpop.f32.mrb[0].mxu0
      %v7439 = vadd.f32 0.0, %v7438
      %v7440 = vpop.f32.mrb[0].mxu0
      %v7441 = vpop.f32.mrb[0].mxu0
      %v7442 = vadd.f32 0.0, %v7441
      %v7443 = vpop.f32.mrb[0].mxu0
      %7444 = vmatprep.mubr.bf16.mxu0 0
      %7445 = vmatmul.mubr.bf16.gmra.mrb[0].mxu0 %v7297
      %v7446 = vpop.f32.mrb[0].mxu0
      %v7447 = vadd.f32 0.0, %v7446
      %v7448 = vpop.f32.mrb[0].mxu0
      %v7449 = vpop.f32.mrb[0].mxu0
      %v7450 = vadd.f32 0.0, %v7449
      %v7451 = vpop.f32.mrb[0].mxu0
      %7452 = vmatprep.mubr.bf16.mxu0 0
      %7453 = vmatmul.mubr.bf16.gmra.mrb[0].mxu0 %v7300
      %v7454 = vpop.f32.mrb[0].mxu0
      %v7455 = vadd.f32 0.0, %v7454
      %v7456 = vpop.f32.mrb[0].mxu0
      %v7457 = vpop.f32.mrb[0].mxu0
      %v7458 = vadd.f32 0.0, %v7457
      %v7459 = vpop.f32.mrb[0].mxu0
      %7460 = vmatprep.mubr.bf16.mxu0 0
      %7461 = vmatmul.mubr.bf16.gmra.mrb[0].mxu0 %v7303
      %v7462 = vpop.f32.mrb[0].mxu0
      %v7463 = vadd.f32 0.0, %v7462
      %v7464 = vpop.f32.mrb[0].mxu0
      %v7465 = vpop.f32.mrb[0].mxu0
      %v7466 = vadd.f32 0.0, %v7465
      %v7467 = vpop.f32.mrb[0].mxu0
      %7468 = vdwg.mxu0
      %v7469 = vstv %s183
      %v7470 = vmul.f32 %v7343, %v7469
      %v7471 = vmul.f32 %v7346, %v7469
      %v7472 = vmul.f32 %v7351, %v7469
      %v7473 = vmul.f32 %v7354, %v7469
      %v7474 = vmul.f32 %v7359, %v7469
      %v7475 = vmul.f32 %v7362, %v7469
      %v7476 = vmul.f32 %v7367, %v7469
      %v7477 = vmul.f32 %v7370, %v7469
      %v7478 = vmul.f32 %v7375, %v7469
      %v7479 = vmul.f32 %v7378, %v7469
      %v7480 = vmul.f32 %v7383, %v7469
      %v7481 = vmul.f32 %v7386, %v7469
      %v7482 = vmul.f32 %v7391, %v7469
      %v7483 = vmul.f32 %v7394, %v7469
      %v7484 = vmul.f32 %v7399, %v7469
      %v7485 = vmul.f32 %v7402, %v7469
      %v7486 = vmul.f32 %v7407, %v7469
      %v7487 = vmul.f32 %v7410, %v7469
      %v7488 = vmul.f32 %v7415, %v7469
      %v7489 = vmul.f32 %v7418, %v7469
      %v7490 = vmul.f32 %v7423, %v7469
      %v7491 = vmul.f32 %v7426, %v7469
      %v7492 = vmul.f32 %v7431, %v7469
      %v7493 = vmul.f32 %v7434, %v7469
      %v7494 = vmul.f32 %v7439, %v7469
      %v7495 = vmul.f32 %v7442, %v7469
      %v7496 = vmul.f32 %v7447, %v7469
      %v7497 = vmul.f32 %v7450, %v7469
      %v7498 = vmul.f32 %v7455, %v7469
      %v7499 = vmul.f32 %v7458, %v7469
      %v7500 = vmul.f32 %v7463, %v7469
      %v7501 = vmul.f32 %v7466, %v7469
      %v7502 = vstv %s182
      %v7503 = vadd.f32 %v7470, %v7502
      %v7504 = vadd.f32 %v7471, %v7502
      %v7505 = vadd.f32 %v7472, %v7502
      %v7506 = vadd.f32 %v7473, %v7502
      %v7507 = vadd.f32 %v7474, %v7502
      %v7508 = vadd.f32 %v7475, %v7502
      %v7509 = vadd.f32 %v7476, %v7502
      %v7510 = vadd.f32 %v7477, %v7502
      %v7511 = vadd.f32 %v7478, %v7502
      %v7512 = vadd.f32 %v7479, %v7502
      %v7513 = vadd.f32 %v7480, %v7502
      %v7514 = vadd.f32 %v7481, %v7502
      %v7515 = vadd.f32 %v7482, %v7502
      %v7516 = vadd.f32 %v7483, %v7502
      %v7517 = vadd.f32 %v7484, %v7502
      %v7518 = vadd.f32 %v7485, %v7502
      %v7519 = vadd.f32 %v7486, %v7502
      %v7520 = vadd.f32 %v7487, %v7502
      %v7521 = vadd.f32 %v7488, %v7502
      %v7522 = vadd.f32 %v7489, %v7502
      %v7523 = vadd.f32 %v7490, %v7502
      %v7524 = vadd.f32 %v7491, %v7502
      %v7525 = vadd.f32 %v7492, %v7502
      %v7526 = vadd.f32 %v7493, %v7502
      %v7527 = vadd.f32 %v7494, %v7502
      %v7528 = vadd.f32 %v7495, %v7502
      %v7529 = vadd.f32 %v7496, %v7502
      %v7530 = vadd.f32 %v7497, %v7502
      %v7531 = vadd.f32 %v7498, %v7502
      %v7532 = vadd.f32 %v7499, %v7502
      %v7533 = vadd.f32 %v7500, %v7502
      %v7534 = vadd.f32 %v7501, %v7502
      %v7535 = vadd.f32 %v184, %v7503
      %v7536 = vadd.f32 %v185, %v7504
      %v7537 = vadd.f32 %v186, %v7505
      %v7538 = vadd.f32 %v187, %v7506
      %v7539 = vadd.f32 %v188, %v7507
      %v7540 = vadd.f32 %v189, %v7508
      %v7541 = vadd.f32 %v190, %v7509
      %v7542 = vadd.f32 %v191, %v7510
      %v7543 = vadd.f32 %v192, %v7511
      %v7544 = vadd.f32 %v193, %v7512
      %v7545 = vadd.f32 %v194, %v7513
      %v7546 = vadd.f32 %v195, %v7514
      %v7547 = vadd.f32 %v196, %v7515
      %v7548 = vadd.f32 %v197, %v7516
      %v7549 = vadd.f32 %v198, %v7517
      %v7550 = vadd.f32 %v199, %v7518
      %v7551 = vadd.f32 %v200, %v7519
      %v7552 = vadd.f32 %v201, %v7520
      %v7553 = vadd.f32 %v202, %v7521
      %v7554 = vadd.f32 %v203, %v7522
      %v7555 = vadd.f32 %v204, %v7523
      %v7556 = vadd.f32 %v205, %v7524
      %v7557 = vadd.f32 %v206, %v7525
      %v7558 = vadd.f32 %v207, %v7526
      %v7559 = vadd.f32 %v208, %v7527
      %v7560 = vadd.f32 %v209, %v7528
      %v7561 = vadd.f32 %v210, %v7529
      %v7562 = vadd.f32 %v211, %v7530
      %v7563 = vadd.f32 %v212, %v7531
      %v7564 = vadd.f32 %v213, %v7532
      %v7565 = vadd.f32 %v214, %v7533
      %v7566 = vadd.f32 %v215, %v7534
      %7567 = vst.msk [vmem:[%s177] sm:$0xff] %vm1064, %v7535
      %7568 = vst.msk [vmem:[%s177 + $0x8] sm:$0xff] %vm1064, %v7536
      %7569 = vst.msk [vmem:[%s177 + $0x10] sm:$0xff] %vm1064, %v7537
      %7570 = vst.msk [vmem:[%s177 + $0x18] sm:$0xff] %vm1064, %v7538
      %7571 = vst.msk [vmem:[%s177 + $0x20] sm:$0xff] %vm1064, %v7539
      %7572 = vst.msk [vmem:[%s177 + $0x28] sm:$0xff] %vm1064, %v7540
      %7573 = vst.msk [vmem:[%s177 + $0x30] sm:$0xff] %vm1064, %v7541
      %7574 = vst.msk [vmem:[%s177 + $0x38] sm:$0xff] %vm1064, %v7542
      %7575 = vst.msk [vmem:[%s177 + $0x40] sm:$0xff] %vm1064, %v7543
      %7576 = vst.msk [vmem:[%s177 + $0x48] sm:$0xff] %vm1064, %v7544
      %7577 = vst.msk [vmem:[%s177 + $0x50] sm:$0xff] %vm1064, %v7545
      %7578 = vst.msk [vmem:[%s177 + $0x58] sm:$0xff] %vm1064, %v7546
      %7579 = vst.msk [vmem:[%s177 + $0x60] sm:$0xff] %vm1064, %v7547
      %7580 = vst.msk [vmem:[%s177 + $0x68] sm:$0xff] %vm1064, %v7548
      %7581 = vst.msk [vmem:[%s177 + $0x70] sm:$0xff] %vm1064, %v7549
      %7582 = vst.msk [vmem:[%s177 + $0x78] sm:$0xff] %vm1064, %v7550
      %7583 = vst.msk [vmem:[%s177 + $0x80] sm:$0xff] %vm1064, %v7551
      %7584 = vst.msk [vmem:[%s177 + $0x88] sm:$0xff] %vm1064, %v7552
      %7585 = vst.msk [vmem:[%s177 + $0x90] sm:$0xff] %vm1064, %v7553
      %7586 = vst.msk [vmem:[%s177 + $0x98] sm:$0xff] %vm1064, %v7554
      %7587 = vst.msk [vmem:[%s177 + $0xa0] sm:$0xff] %vm1064, %v7555
      %7588 = vst.msk [vmem:[%s177 + $0xa8] sm:$0xff] %vm1064, %v7556
      %7589 = vst.msk [vmem:[%s177 + $0xb0] sm:$0xff] %vm1064, %v7557
      %7590 = vst.msk [vmem:[%s177 + $0xb8] sm:$0xff] %vm1064, %v7558
      %7591 = vst.msk [vmem:[%s177 + $0xc0] sm:$0xff] %vm1064, %v7559
      %7592 = vst.msk [vmem:[%s177 + $0xc8] sm:$0xff] %vm1064, %v7560
      %7593 = vst.msk [vmem:[%s177 + $0xd0] sm:$0xff] %vm1064, %v7561
      %7594 = vst.msk [vmem:[%s177 + $0xd8] sm:$0xff] %vm1064, %v7562
      %7595 = vst.msk [vmem:[%s177 + $0xe0] sm:$0xff] %vm1064, %v7563
      %7596 = vst.msk [vmem:[%s177 + $0xe8] sm:$0xff] %vm1064, %v7564
      %7597 = vst.msk [vmem:[%s177 + $0xf0] sm:$0xff] %vm1064, %v7565
      %7598 = vst.msk [vmem:[%s177 + $0xf8] sm:$0xff] %vm1064, %v7566
      %p7599 = scmp.lt.s32.totalorder %s21, 1
      %s7600 = scalar_select %p7599, %s21, 1
      %s7601 = smul.addr %s7600, 32
      %s7602 = smul.addr %s7601, 8
      %s7603 = scalar_lea.vmem %s4, %s7602
      // Predicated region
      $region33: #{tpu_custom_call.1} parent=31 // pred_check
        %p7604 = pneg %p107
      $region34: #{tpu_custom_call.1} parent=31 // pred_check_branch
        %7606 = sbr.rel (%p7604) target = $region36
      $region35: #{tpu_custom_call.1} parent=31 // pred_region
        _
      $region36: #{tpu_custom_call.1} parent=31 // pred_fallthru
        _
    $region32: #{tpu_custom_call.1} parent=5 // pred_fallthru
      _
    %p7607 = scmp.le.s32.totalorder 2, %s16
    // Predicated region
    $region37: #{tpu_custom_call.1} parent=5 // pred_check
      %p7608 = pneg %p7607
    $region38: #{tpu_custom_call.1} parent=5 // pred_check_branch
      %7610 = sbr.rel (%p7608) target = $region40
    $region39: #{tpu_custom_call.1} parent=5 // pred_region
      %s7611 = ssub.s32 %s16, 2
      // Predicated region
      $region41: #{tpu_custom_call.1} parent=39 // pred_check
        %p7612 = pneg %p113
      $region42: #{tpu_custom_call.1} parent=39 // pred_check_branch
        %7614 = sbr.rel (%p7612) target = $region44
      $region43: #{tpu_custom_call.1} parent=39 // pred_region
        %p7615 = scmp.lt.s32.totalorder %s22, 1
        %s7616 = scalar_select %p7615, %s22, 1
        %s7617 = smul.addr %s7616, 32
        %s7618 = smul.addr %s7617, 8
        %s7619 = scalar_lea.vmem %s4, %s7618
      $region44: #{tpu_custom_call.1} parent=39 // pred_fallthru
        _
    $region40: #{tpu_custom_call.1} parent=5 // pred_fallthru
      _
  $region6: #{tpu_custom_call.1} parent=0 // loop_footer
    %s20 = sadd.s32 1, %s16
  $region7: #{tpu_custom_call.1} parent=0 // loop_footer_branch
    %15 = sbr.rel target = $region3
  $region8: #{tpu_custom_call.1} parent=0 // loop_exit
    _

</llo_original>
